<compile_context>
chip_gen: v7x
topology: tpu7x:2x2x1
jax: 0.10.0
libtpu: 0.0.40
codegen_flags: <defaults>
</compile_context>

<pallas_src>
import functools

import jax
import jax.numpy as jnp
from jax import lax
from jax.experimental import pallas as pl
from jax.experimental.pallas import tpu as pltpu

EPS = 1e-5


def _round_up(x, m):
    return ((x + m - 1) // m) * m


# ----------------------------------------------------------------------------
# Kernel 1: batched pairwise KNN scores.
#   d[g, i, j] = ||x_j||^2 - 2 * x_i . x_j      (row-constant ||x_i||^2 dropped;
#                                                per-row ordering is unchanged)
# ----------------------------------------------------------------------------
def _pdist_kernel(xi_ref, xj_ref, d_ref):
    xi = xi_ref[...]                                          # (gt, N, F) f32
    xj = xj_ref[...]                                          # (gt, tj, F) f32
    sqj = jnp.sum(xj * xj, axis=2)                            # (gt, tj)
    gram = jnp.einsum("gnf,gmf->gnm", xi, xj,
                      preferred_element_type=jnp.float32)     # (gt, N, tj)
    d_ref[...] = sqj[:, None, :] - 2.0 * gram


def pairwise_sqdist(x_bt):
    """x_bt: (G, N, F) f32 -> (G, N, N) f32 KNN scores (same ordering as sq dist)."""
    G, N, F = x_bt.shape
    # Lane-tile the j axis when N is 128-aligned; keep the per-step output block small
    # so v5e's 16 MiB default scoped VMEM is never the binding constraint.
    tj = N
    if N % 128 == 0:
        cap = max(128, (4 << 20) // (4 * N))                  # out block <= ~4 MiB
        for c in (512, 256, 128):
            if c <= cap and N > c and N % c == 0:
                tj = c
                break
    # TODO(synk): very large, non-128-aligned N still falls back to a full (N, N) block;
    # pad N (or fuse a streaming per-row top-k into this kernel) for that regime.
    per_g = 8 * (N * F + tj * F + N * tj)                     # f32, double buffered
    gt = max(1, min(G, (8 << 20) // max(1, per_g)))
    while G % gt:
        gt -= 1
    return pl.pallas_call(
        _pdist_kernel,
        grid=(G // gt, N // tj),
        in_specs=[pl.BlockSpec((gt, N, F), lambda i, j: (i, 0, 0)),
                  pl.BlockSpec((gt, tj, F), lambda i, j: (i, j, 0))],
        out_specs=pl.BlockSpec((gt, N, tj), lambda i, j: (i, 0, j)),
        out_shape=jax.ShapeDtypeStruct((G, N, N), jnp.float32),
        compiler_params=pltpu.CompilerParams(
            dimension_semantics=("parallel", "arbitrary")),
    )(x_bt, x_bt)


def knn_indices(x_bt, K):
    """(G, N, F) -> (G, N, K) neighbour indices with self excluded."""
    dist = pairwise_sqdist(x_bt)
    # TODO(synk): K-selection stays in XLA; a streaming in-kernel top-(K+1) would avoid
    # the (G, N, N) HBM round trip at large N.
    _, idx = lax.top_k(-dist, K + 1)
    # Drop self (rank 0).  Assumes the query point wins ties, as in the torch reference.
    return idx[:, :, 1:]


# ----------------------------------------------------------------------------
# Kernel 2: fused MLP stack + max-over-K pooling (channels-first, lane-dense).
# ----------------------------------------------------------------------------
def _make_mlp_pool_kernel(channels, F, T, K, tn):
    """Per grid step: one (F, T*K*tn) knn tile (lane order (t_chunk, k, n_local)) and one
    (F, T*tn) x1 tile (lane order (t_chunk, n_local)).  Per conv_bn_block:
        y = relu((W @ h) * s1 + t1)                            # 1x1 conv + BN + ReLU
        z = relu((sum_j W2[j] @ y[t-1+j]) * s2 + t2)           # (3,1) conv (pad 1) + BN + ReLU
    streamed one t-chunk at a time through bf16 VMEM scratch; the last block max-pools
    the K lane-aligned neighbour chunks and writes a dense (an, tn) slab per t-chunk."""
    tw = K * tn
    nblk = len(channels)

    def kernel(*refs):
        x1_ref, knn_ref = refs[0], refs[1]
        out_ref = refs[-3]
        ybuf = refs[-2]                                       # (cmax, T*tw) bf16
        hbuf = refs[-1]                                       # (cmax, T*tw) bf16

        pos = 2
        for i, cout in enumerate(channels):
            if i == 0:
                wd, wb, w2, st = refs[pos:pos + 4]
                pos += 4
            else:
                w1, w2, st = refs[pos:pos + 3]
                pos += 3
            s1, t1 = st[:, 0:1], st[:, 1:2]
            s2, t2 = st[:, 2:3], st[:, 3:4]

            # --- 1x1 conv + BN(eval) + ReLU, one t-chunk at a time ---------------
            for t in range(T):
                if i == 0:
                    # 2F concat folded away: [x1, knn-x1] @ W == x1@(Wa-Wb) + knn@Wb.
                    y = jnp.dot(wb[...], knn_ref[0, :, t * tw:(t + 1) * tw],
                                preferred_element_type=jnp.float32)
                    y0 = jnp.dot(wd[...], x1_ref[0, :, t * tn:(t + 1) * tn],
                                 preferred_element_type=jnp.float32)
                    y = y + jnp.concatenate([y0] * K, axis=1)  # replicate over K chunks
                else:
                    y = jnp.dot(w1[...], hbuf[0:channels[i - 1], t * tw:(t + 1) * tw],
                                preferred_element_type=jnp.float32)
                y = jnp.maximum(y * s1 + t1, 0.0)              # conv bias folded into t1
                ybuf[0:cout, t * tw:(t + 1) * tw] = y.astype(jnp.bfloat16)

            # --- (3,1) conv over t-chunks + BN + ReLU (+ K-pool on last block) -----
            for t in range(T):
                z = None
                for j in range(3):                             # tap j reads y[t - 1 + j]
                    tt = t - 1 + j
                    if 0 <= tt < T:                            # boundary-aware, no zero halo
                        zz = jnp.dot(w2[j], ybuf[0:cout, tt * tw:(tt + 1) * tw],
                                     preferred_element_type=jnp.float32)
                        z = zz if z is None else z + zz
                z = jnp.maximum(z * s2 + t2, 0.0)
                if i + 1 < nblk:
                    hbuf[0:cout, t * tw:(t + 1) * tw] = z.astype(jnp.bfloat16)
                else:
                    # Fused MaxPool1d(K): neighbours sit in K lane-aligned width-tn chunks.
                    acc = z[:, 0:tn]
                    for k in range(1, K):
                        acc = jnp.maximum(acc, z[:, k * tn:(k + 1) * tn])
                    out_ref[0, t, :, :] = acc.astype(out_ref.dtype)   # dense (an, tn) store

    return kernel


def fused_mlp_pool(x1_t, knn_t, kparams, T, K, tn):
    """x1_t: (G, F, T*tn) bf16; knn_t: (G, F, T*K*tn) bf16 -> (G, T, an, tn) f32."""
    G, F, _ = x1_t.shape
    tw = K * tn
    channels = [blk["st"].shape[0] for blk in kparams]
    an = channels[-1]
    cmax = max(channels)

    args = [x1_t, knn_t]
    in_specs = [pl.BlockSpec((1, F, T * tn), lambda g: (g, 0, 0)),
                pl.BlockSpec((1, F, T * tw), lambda g: (g, 0, 0))]
    for i, blk in enumerate(kparams):
        ops = ([blk["wd"], blk["wb"]] if i == 0 else [blk["w1"]]) + [blk["w2"], blk["st"]]
        for op in ops:
            args.append(op)
            in_specs.append(pl.BlockSpec(op.shape, lambda g, _nd=op.ndim: (0,) * _nd))

    kernel = _make_mlp_pool_kernel(channels, F, T, K, tn)
    return pl.pallas_call(
        kernel,
        grid=(G,),
        in_specs=in_specs,
        out_specs=pl.BlockSpec((1, T, an, tn), lambda g: (g, 0, 0, 0)),
        out_shape=jax.ShapeDtypeStruct((G, T, an, tn), jnp.float32),
        scratch_shapes=[pltpu.VMEM((cmax, T * tw), jnp.bfloat16),   # y (pre temporal conv)
                        pltpu.VMEM((cmax, T * tw), jnp.bfloat16)],  # block output -> next block
        compiler_params=pltpu.CompilerParams(dimension_semantics=("parallel",)),
    )(*args)


# ----------------------------------------------------------------------------
# Parameter preparation and EdgeConv forward
# ----------------------------------------------------------------------------
def prepare_kernel_params(params, F):
    """(cout, cin) bf16 matmul weights (transposed), conv biases folded into the BN(eval)
    shifts, and per-block scale/shift packed into one (cout, 4) f32 array [s1,t1,s2,t2]."""
    kp = []
    for i, blk in enumerate(params):
        st = jnp.stack([blk["s1"], blk["b1"] * blk["s1"] + blk["t1"],
                        blk["s2"], blk["b2"] * blk["s2"] + blk["t2"]],
                       axis=1).astype(jnp.float32)                        # (cout, 4)
        d = dict(st=st,
                 w2=jnp.transpose(blk["w2"], (0, 2, 1)).astype(jnp.bfloat16))  # (3, cout, cin)
        if i == 0:
            w1 = blk["w1"]                                                # (2F, cout)
            d["wd"] = (w1[:F] - w1[F:]).T.astype(jnp.bfloat16)            # (cout, F): x1 path
            d["wb"] = w1[F:].T.astype(jnp.bfloat16)                       # (cout, F): knn path
        else:
            d["w1"] = blk["w1"].T.astype(jnp.bfloat16)                    # (cout, cin)
        kp.append(d)
    return kp


def edgeconv_forward(X, params, K, tn_max=512):
    """X: (B, T, N, F) f32 -> (B, T, N, an) f32 (same semantics as the torch forward,
    including its permute/reshape into the [B, 2F, T, N*K] mlp layout)."""
    B, T, N, F = X.shape
    x_bt = X.reshape(B * T, N, F).astype(jnp.float32)

    # --- KNN graph ---------------------------------------------------------------
    idx = knn_indices(x_bt, K)                                  # (B*T, N, K)

    # --- build kernel-layout tiles -------------------------------------------------
    # Torch maps flat = n*T*K + t*K + k onto (t_chunk, w') with w' = n2*K + k and
    # n*T + t = t_chunk*N + n2.  Per tile, lanes are ordered (t_chunk, k, n_local) with
    # n2 = tile*tn + n_local; n2 is padded so tn is a multiple of 128 (dense vregs /
    # unmasked stores), and the pad is sliced off after the kernel.  tn is capped so
    # tiles stay VMEM-friendly on v7x (64 MiB) while keeping the grid >= 2.
    tn = min(tn_max, _round_up(N, 128))
    Np = _round_up(N, tn)
    nw = Np // tn

    Xb = X.astype(jnp.bfloat16)
    # Gather neighbours directly in (B, N, T, K, F) order so only ONE big shuffle of the
    # K-duplicated data is needed; x1 is NOT duplicated K-fold in HBM at all.
    # TODO(synk): the neighbour gather has no clean Pallas equivalent; kept in XLA.
    idx_nt = jnp.transpose(idx.reshape(B, T, N, K), (0, 2, 1, 3))     # (B, N, T, K)
    b_ix = jnp.arange(B)[:, None, None, None]
    t_ix = jnp.arange(T)[None, None, :, None]
    knn_nt = Xb[b_ix, t_ix, idx_nt]                                    # (B, N, T, K, F) bf16

    knn_ch = knn_nt.reshape(B, T, N, K, F)              # reinterpret (n, t) -> (t_chunk, n2)
    knn_ch = jnp.pad(knn_ch, ((0, 0), (0, 0), (0, Np - N), (0, 0), (0, 0)))
    knn_t = jnp.transpose(knn_ch.reshape(B, T, nw, tn, K, F), (0, 2, 5, 1, 4, 3))
    knn_t = knn_t.reshape(B * nw, F, T * K * tn)        # lanes: (t_chunk, k, n_local)

    x1_ch = jnp.transpose(Xb, (0, 2, 1, 3)).reshape(B, T, N, F)        # (t_chunk, n2)
    x1_ch = jnp.pad(x1_ch, ((0, 0), (0, 0), (0, Np - N), (0, 0)))
    x1_t = jnp.transpose(x1_ch.reshape(B, T, nw, tn, F), (0, 2, 4, 1, 3))
    x1_t = x1_t.reshape(B * nw, F, T * tn)              # lanes: (t_chunk, n_local)

    # --- fused mlp stack + max-over-K pooling --------------------------------------
    kparams = prepare_kernel_params(params, F)
    out = fused_mlp_pool(x1_t, knn_t, kparams, T, K, tn)     # (B*nw, T, an, tn) f32
    an = out.shape[2]

    # Un-tile, drop the pad, finish with torch's output permutes.
    out = out.reshape(B, nw, T, an, tn)
    out = jnp.transpose(out, (0, 2, 3, 1, 4)).reshape(B, T, an, Np)[:, :, :, :N]
    return jnp.transpose(out, (0, 1, 3, 2))              # (B, T, N, an)


# ----------------------------------------------------------------------------
# Pure-JAX f32 reference (mirrors the torch ops exactly) for a tolerance check.
# ----------------------------------------------------------------------------
def edgeconv_reference(X, params, K):
    B, T, N, F = X.shape
    x_bt = X.reshape(B * T, N, F)
    idx = knn_indices(x_bt, K)
    knn = jax.vmap(lambda xg, ig: xg[ig])(x_bt, idx).reshape(B, T, N, K, F)
    x1 = jnp.broadcast_to(X[:, :, :, None, :], (B, T, N, K, F))
    x_in = jnp.concatenate([x1, knn - x1], axis=4)
    h = jnp.transpose(x_in, (0, 4, 2, 1, 3)).reshape(B, 2 * F, T, N * K)
    for blk in params:
        h = jnp.einsum("bcts,co->bots", h, blk["w1"]) + blk["b1"][None, :, None, None]
        h = jnp.maximum(h * blk["s1"][None, :, None, None] + blk["t1"][None, :, None, None], 0.0)
        hp = jnp.pad(h, ((0, 0), (0, 0), (1, 1), (0, 0)))
        z = sum(jnp.einsum("bcts,co->bots", hp[:, :, j:j + T, :], blk["w2"][j])
                for j in range(3))
        z = z + blk["b2"][None, :, None, None]
        h = jnp.maximum(z * blk["s2"][None, :, None, None] + blk["t2"][None, :, None, None], 0.0)
    an = h.shape[1]
    out = h.reshape(B, an, T, N, K).max(axis=4)
    return jnp.transpose(out, (0, 2, 3, 1))               # (B, T, N, an)


def init_params(layers, key):
    """Deterministic synthetic parameters for the conv_bn_block stack."""
    blocks = []
    for i in range(len(layers) - 1):
        cin = 2 * layers[0] if i == 0 else layers[i]
        cout = layers[i + 1]
        key, k1, k2, k3, k4, k5, k6, k7, k8 = jax.random.split(key, 9)
        g1 = 1.0 + 0.1 * jax.random.normal(k3, (cout,), jnp.float32)
        g2 = 1.0 + 0.1 * jax.random.normal(k7, (cout,), jnp.float32)
        blocks.append(dict(
            w1=0.1 * jax.random.normal(k1, (cin, cout), jnp.float32),      # Conv2d 1x1
            b1=0.1 * jax.random.normal(k2, (cout,), jnp.float32),
            s1=g1 / jnp.sqrt(1.0 + EPS),                                   # BN eval: rm=0, rv=1
            t1=0.1 * jax.random.normal(k4, (cout,), jnp.float32),
            w2=0.1 * jax.random.normal(k5, (3, cout, cout), jnp.float32),  # Conv2d (3,1)
            b2=0.1 * jax.random.normal(k6, (cout,), jnp.float32),
            s2=g2 / jnp.sqrt(1.0 + EPS),
            t2=0.1 * jax.random.normal(k8, (cout,), jnp.float32),
        ))
    return blocks


if __name__ == "__main__":
    layers = [3, 8, 8]      # [F, a1, an]
    K, T, B, N = 3, 3, 2, 16
    F = layers[0]

    key = jax.random.PRNGKey(0)
    kx, kp = jax.random.split(key)
    X = jax.random.normal(kx, (B, T, N, F), jnp.float32)
    params = init_params(layers, kp)

    fwd = jax.jit(functools.partial(edgeconv_forward, K=K))
    out = jax.block_until_ready(fwd(X, params))

    assert out.shape == (B, T, N, layers[-1]), out.shape
    assert bool(jnp.all(jnp.isfinite(out)))

    # Tolerance check against a pure-JAX f32 reference (kernel uses bf16 matmuls).
    ref = jax.block_until_ready(edgeconv_reference(X, params, K))
    err = float(jnp.max(jnp.abs(out - ref)))
    assert err < 0.1, f"max abs err vs reference: {err}"
    print("KERNEL_OK")
</pallas_src>

<mosaic_0001>
module attributes {stable_mosaic.version = 11 : i64} {
  func.func @_pdist_kernel(%arg0: i32, %arg1: i32, %arg2: memref<6x16x3xf32, #tpu.memory_space<vmem>>, %arg3: memref<6x16x3xf32, #tpu.memory_space<vmem>>, %arg4: memref<6x16x16xf32, #tpu.memory_space<vmem>>) attributes {dimension_semantics = [#tpu.dimension_semantics<parallel>, #tpu.dimension_semantics<arbitrary>], iteration_bounds = array<i64: 1, 1>, scalar_prefetch = 0 : i64, scratch_operands = 0 : i64, tpu.core_type = #tpu.core_type<tc>, window_params = [{transform_indices = @transform_0, window_bounds = array<i64: 6, 16, 3>}, {transform_indices = @transform_1, window_bounds = array<i64: 6, 16, 3>}, {transform_indices = @transform_2, window_bounds = array<i64: 6, 16, 16>}]} {
    %c0 = arith.constant 0 : index
    %c0_0 = arith.constant 0 : index
    %c0_1 = arith.constant 0 : index
    %0 = vector.load %arg2[%c0, %c0_0, %c0_1] : memref<6x16x3xf32, #tpu.memory_space<vmem>>, vector<6x16x3xf32>
    %c0_2 = arith.constant 0 : index
    %c0_3 = arith.constant 0 : index
    %c0_4 = arith.constant 0 : index
    %1 = vector.load %arg3[%c0_2, %c0_3, %c0_4] : memref<6x16x3xf32, #tpu.memory_space<vmem>>, vector<6x16x3xf32>
    %2 = arith.mulf %1, %1 : vector<6x16x3xf32>
    %cst = arith.constant dense<0.000000e+00> : vector<6x16xf32>
    %3 = vector.multi_reduction <add>, %2, %cst [2] : vector<6x16x3xf32> to vector<6x16xf32>
    "tpu.trace_start"() <{level = 10 : i32, message = "gnf,gmf->gnm"}> : () -> ()
    %cst_5 = arith.constant dense<0.000000e+00> : vector<6x16x16xf32>
    %4 = tpu.matmul %0, %1, %cst_5 {dimension_numbers = #tpu.dot_dimension_numbers<[2], [2], [1], [1], [0, 0, 0, 1, 1, 1], [0], [0]>} : vector<6x16x3xf32>, vector<6x16x3xf32>, vector<6x16x16xf32> -> vector<6x16x16xf32>
    "tpu.trace_stop"() : () -> ()
    %5 = vector.shape_cast %3 : vector<6x16xf32> to vector<6x1x16xf32>
    %cst_6 = arith.constant 2.000000e+00 : f32
    %6 = vector.broadcast %cst_6 : f32 to vector<6x16x16xf32>
    %7 = arith.mulf %6, %4 : vector<6x16x16xf32>
    %8 = vector.broadcast %5 : vector<6x1x16xf32> to vector<6x16x16xf32>
    %9 = arith.subf %8, %7 : vector<6x16x16xf32>
    %c0_7 = arith.constant 0 : index
    %c0_8 = arith.constant 0 : index
    %c0_9 = arith.constant 0 : index
    %10 = vector.load %arg4[%c0_7, %c0_8, %c0_9] : memref<6x16x16xf32, #tpu.memory_space<vmem>>, vector<6x16x16xf32>
    tpu.vector_store %arg4[%c0_7, %c0_8, %c0_9], %9 {strides = array<i32>} : memref<6x16x16xf32, #tpu.memory_space<vmem>>, vector<6x16x16xf32>,
    return
  }
  func.func @transform_0(%arg0: i32, %arg1: i32) -> (i32, i32, i32) {
    %c0_i32 = arith.constant 0 : i32
    %c0_i32_0 = arith.constant 0 : i32
    %c0_i32_1 = arith.constant 0 : i32
    return %arg0, %c0_i32, %c0_i32_0 : i32, i32, i32
  }
  func.func @transform_1(%arg0: i32, %arg1: i32) -> (i32, i32, i32) {
    %c0_i32 = arith.constant 0 : i32
    %c0_i32_0 = arith.constant 0 : i32
    return %arg0, %arg1, %c0_i32 : i32, i32, i32
  }
  func.func @transform_2(%arg0: i32, %arg1: i32) -> (i32, i32, i32) {
    %c0_i32 = arith.constant 0 : i32
    %c0_i32_0 = arith.constant 0 : i32
    return %arg0, %c0_i32, %arg1 : i32, i32, i32
  }
}

module attributes {stable_mosaic.version = 11 : i64} {
  func.func @kernel(%arg0: i32, %arg1: memref<1x3x384xbf16, #tpu.memory_space<vmem>>, %arg2: memref<1x3x1152xbf16, #tpu.memory_space<vmem>>, %arg3: memref<8x3xbf16, #tpu.memory_space<vmem>>, %arg4: memref<8x3xbf16, #tpu.memory_space<vmem>>, %arg5: memref<3x8x8xbf16, #tpu.memory_space<vmem>>, %arg6: memref<8x4xf32, #tpu.memory_space<vmem>>, %arg7: memref<8x8xbf16, #tpu.memory_space<vmem>>, %arg8: memref<3x8x8xbf16, #tpu.memory_space<vmem>>, %arg9: memref<8x4xf32, #tpu.memory_space<vmem>>, %arg10: memref<1x3x8x128xf32, #tpu.memory_space<vmem>>, %arg11: memref<8x1152xbf16, #tpu.memory_space<vmem>>, %arg12: memref<8x1152xbf16, #tpu.memory_space<vmem>>) attributes {dimension_semantics = [#tpu.dimension_semantics<parallel>], iteration_bounds = array<i64: 2>, scalar_prefetch = 0 : i64, scratch_operands = 2 : i64, tpu.core_type = #tpu.core_type<tc>, window_params = [{transform_indices = @transform_0, window_bounds = array<i64: 1, 3, 384>}, {transform_indices = @transform_1, window_bounds = array<i64: 1, 3, 1152>}, {pipeline_mode = #tpu.pipeline_mode<synchronous>, transform_indices = @transform_2, window_bounds = array<i64: 8, 3>}, {pipeline_mode = #tpu.pipeline_mode<synchronous>, transform_indices = @transform_3, window_bounds = array<i64: 8, 3>}, {pipeline_mode = #tpu.pipeline_mode<synchronous>, transform_indices = @transform_4, window_bounds = array<i64: 3, 8, 8>}, {pipeline_mode = #tpu.pipeline_mode<synchronous>, transform_indices = @transform_5, window_bounds = array<i64: 8, 4>}, {pipeline_mode = #tpu.pipeline_mode<synchronous>, transform_indices = @transform_6, window_bounds = array<i64: 8, 8>}, {pipeline_mode = #tpu.pipeline_mode<synchronous>, transform_indices = @transform_7, window_bounds = array<i64: 3, 8, 8>}, {pipeline_mode = #tpu.pipeline_mode<synchronous>, transform_indices = @transform_8, window_bounds = array<i64: 8, 4>}, {transform_indices = @transform_9, window_bounds = array<i64: 1, 3, 8, 128>}]} {
    %c0 = arith.constant 0 : index
    %c0_0 = arith.constant 0 : index
    %0 = vector.load %arg6[%c0, %c0_0] : memref<8x4xf32, #tpu.memory_space<vmem>>, vector<8x1xf32>
    %c0_1 = arith.constant 0 : index
    %c1 = arith.constant 1 : index
    %1 = vector.load %arg6[%c0_1, %c1] : memref<8x4xf32, #tpu.memory_space<vmem>>, vector<8x1xf32>
    %c0_2 = arith.constant 0 : index
    %c2 = arith.constant 2 : index
    %2 = vector.load %arg6[%c0_2, %c2] : memref<8x4xf32, #tpu.memory_space<vmem>>, vector<8x1xf32>
    %c0_3 = arith.constant 0 : index
    %c3 = arith.constant 3 : index
    %3 = vector.load %arg6[%c0_3, %c3] : memref<8x4xf32, #tpu.memory_space<vmem>>, vector<8x1xf32>
    %c0_4 = arith.constant 0 : index
    %c0_5 = arith.constant 0 : index
    %4 = vector.load %arg4[%c0_4, %c0_5] : memref<8x3xbf16, #tpu.memory_space<vmem>>, vector<8x3xbf16>
    %c0_6 = arith.constant 0 : index
    %c0_7 = arith.constant 0 : index
    %c0_8 = arith.constant 0 : index
    %5 = vector.load %arg2[%c0_6, %c0_7, %c0_8] : memref<1x3x1152xbf16, #tpu.memory_space<vmem>>, vector<1x3x384xbf16>
    %6 = vector.shape_cast %5 : vector<1x3x384xbf16> to vector<3x384xbf16>
    %cst = arith.constant dense<0.000000e+00> : vector<8x384xf32>
    %7 = tpu.matmul %4, %6, %cst {dimension_numbers = #tpu.dot_dimension_numbers<[1], [0], [0], [1], [0, 0, 1, 1], [], []>} : vector<8x3xbf16>, vector<3x384xbf16>, vector<8x384xf32> -> vector<8x384xf32>
    %c0_9 = arith.constant 0 : index
    %c0_10 = arith.constant 0 : index
    %8 = vector.load %arg3[%c0_9, %c0_10] : memref<8x3xbf16, #tpu.memory_space<vmem>>, vector<8x3xbf16>
    %c0_11 = arith.constant 0 : index
    %c0_12 = arith.constant 0 : index
    %c0_13 = arith.constant 0 : index
    %9 = vector.load %arg1[%c0_11, %c0_12, %c0_13] : memref<1x3x384xbf16, #tpu.memory_space<vmem>>, vector<1x3x128xbf16>
    %10 = vector.shape_cast %9 : vector<1x3x128xbf16> to vector<3x128xbf16>
    %cst_14 = arith.constant dense<0.000000e+00> : vector<8x128xf32>
    %11 = tpu.matmul %8, %10, %cst_14 {dimension_numbers = #tpu.dot_dimension_numbers<[1], [0], [0], [1], [0, 0, 1, 1], [], []>} : vector<8x3xbf16>, vector<3x128xbf16>, vector<8x128xf32> -> vector<8x128xf32>
    %12 = tpu.concatenate %11, %11, %11 in 1 : vector<8x128xf32>, vector<8x128xf32>, vector<8x128xf32> -> vector<8x384xf32>
    %13 = arith.addf %7, %12 : vector<8x384xf32>
    %14 = vector.broadcast %0 : vector<8x1xf32> to vector<8x384xf32>
    %15 = arith.mulf %13, %14 : vector<8x384xf32>
    %16 = vector.broadcast %1 : vector<8x1xf32> to vector<8x384xf32>
    %17 = arith.addf %15, %16 : vector<8x384xf32>
    %cst_15 = arith.constant 0.000000e+00 : f32
    %18 = vector.broadcast %cst_15 : f32 to vector<8x384xf32>
    %19 = arith.maximumf %17, %18 : vector<8x384xf32>
    %20 = arith.truncf %19 : vector<8x384xf32> to vector<8x384xbf16>
    %c0_16 = arith.constant 0 : index
    %c0_17 = arith.constant 0 : index
    %21 = vector.load %arg11[%c0_16, %c0_17] : memref<8x1152xbf16, #tpu.memory_space<vmem>>, vector<8x384xbf16>
    tpu.vector_store %arg11[%c0_16, %c0_17], %20 {strides = array<i32>} : memref<8x1152xbf16, #tpu.memory_space<vmem>>, vector<8x384xbf16>,
    %c0_18 = arith.constant 0 : index
    %c0_19 = arith.constant 0 : index
    %22 = vector.load %arg4[%c0_18, %c0_19] : memref<8x3xbf16, #tpu.memory_space<vmem>>, vector<8x3xbf16>
    %c0_20 = arith.constant 0 : index
    %c0_21 = arith.constant 0 : index
    %c384 = arith.constant 384 : index
    %23 = vector.load %arg2[%c0_20, %c0_21, %c384] : memref<1x3x1152xbf16, #tpu.memory_space<vmem>>, vector<1x3x384xbf16>
    %24 = vector.shape_cast %23 : vector<1x3x384xbf16> to vector<3x384xbf16>
    %cst_22 = arith.constant dense<0.000000e+00> : vector<8x384xf32>
    %25 = tpu.matmul %22, %24, %cst_22 {dimension_numbers = #tpu.dot_dimension_numbers<[1], [0], [0], [1], [0, 0, 1, 1], [], []>} : vector<8x3xbf16>, vector<3x384xbf16>, vector<8x384xf32> -> vector<8x384xf32>
    %c0_23 = arith.constant 0 : index
    %c0_24 = arith.constant 0 : index
    %26 = vector.load %arg3[%c0_23, %c0_24] : memref<8x3xbf16, #tpu.memory_space<vmem>>, vector<8x3xbf16>
    %c0_25 = arith.constant 0 : index
    %c0_26 = arith.constant 0 : index
    %c128 = arith.constant 128 : index
    %27 = vector.load %arg1[%c0_25, %c0_26, %c128] : memref<1x3x384xbf16, #tpu.memory_space<vmem>>, vector<1x3x128xbf16>
    %28 = vector.shape_cast %27 : vector<1x3x128xbf16> to vector<3x128xbf16>
    %cst_27 = arith.constant dense<0.000000e+00> : vector<8x128xf32>
    %29 = tpu.matmul %26, %28, %cst_27 {dimension_numbers = #tpu.dot_dimension_numbers<[1], [0], [0], [1], [0, 0, 1, 1], [], []>} : vector<8x3xbf16>, vector<3x128xbf16>, vector<8x128xf32> -> vector<8x128xf32>
    %30 = tpu.concatenate %29, %29, %29 in 1 : vector<8x128xf32>, vector<8x128xf32>, vector<8x128xf32> -> vector<8x384xf32>
    %31 = arith.addf %25, %30 : vector<8x384xf32>
    %32 = vector.broadcast %0 : vector<8x1xf32> to vector<8x384xf32>
    %33 = arith.mulf %31, %32 : vector<8x384xf32>
    %34 = vector.broadcast %1 : vector<8x1xf32> to vector<8x384xf32>
    %35 = arith.addf %33, %34 : vector<8x384xf32>
    %cst_28 = arith.constant 0.000000e+00 : f32
    %36 = vector.broadcast %cst_28 : f32 to vector<8x384xf32>
    %37 = arith.maximumf %35, %36 : vector<8x384xf32>
    %38 = arith.truncf %37 : vector<8x384xf32> to vector<8x384xbf16>
    %c0_29 = arith.constant 0 : index
    %c384_30 = arith.constant 384 : index
    %39 = vector.load %arg11[%c0_29, %c384_30] : memref<8x1152xbf16, #tpu.memory_space<vmem>>, vector<8x384xbf16>
    tpu.vector_store %arg11[%c0_29, %c384_30], %38 {strides = array<i32>} : memref<8x1152xbf16, #tpu.memory_space<vmem>>, vector<8x384xbf16>,
    %c0_31 = arith.constant 0 : index
    %c0_32 = arith.constant 0 : index
    %40 = vector.load %arg4[%c0_31, %c0_32] : memref<8x3xbf16, #tpu.memory_space<vmem>>, vector<8x3xbf16>
    %c0_33 = arith.constant 0 : index
    %c0_34 = arith.constant 0 : index
    %c768 = arith.constant 768 : index
    %41 = vector.load %arg2[%c0_33, %c0_34, %c768] : memref<1x3x1152xbf16, #tpu.memory_space<vmem>>, vector<1x3x384xbf16>
    %42 = vector.shape_cast %41 : vector<1x3x384xbf16> to vector<3x384xbf16>
    %cst_35 = arith.constant dense<0.000000e+00> : vector<8x384xf32>
    %43 = tpu.matmul %40, %42, %cst_35 {dimension_numbers = #tpu.dot_dimension_numbers<[1], [0], [0], [1], [0, 0, 1, 1], [], []>} : vector<8x3xbf16>, vector<3x384xbf16>, vector<8x384xf32> -> vector<8x384xf32>
    %c0_36 = arith.constant 0 : index
    %c0_37 = arith.constant 0 : index
    %44 = vector.load %arg3[%c0_36, %c0_37] : memref<8x3xbf16, #tpu.memory_space<vmem>>, vector<8x3xbf16>
    %c0_38 = arith.constant 0 : index
    %c0_39 = arith.constant 0 : index
    %c256 = arith.constant 256 : index
    %45 = vector.load %arg1[%c0_38, %c0_39, %c256] : memref<1x3x384xbf16, #tpu.memory_space<vmem>>, vector<1x3x128xbf16>
    %46 = vector.shape_cast %45 : vector<1x3x128xbf16> to vector<3x128xbf16>
    %cst_40 = arith.constant dense<0.000000e+00> : vector<8x128xf32>
    %47 = tpu.matmul %44, %46, %cst_40 {dimension_numbers = #tpu.dot_dimension_numbers<[1], [0], [0], [1], [0, 0, 1, 1], [], []>} : vector<8x3xbf16>, vector<3x128xbf16>, vector<8x128xf32> -> vector<8x128xf32>
    %48 = tpu.concatenate %47, %47, %47 in 1 : vector<8x128xf32>, vector<8x128xf32>, vector<8x128xf32> -> vector<8x384xf32>
    %49 = arith.addf %43, %48 : vector<8x384xf32>
    %50 = vector.broadcast %0 : vector<8x1xf32> to vector<8x384xf32>
    %51 = arith.mulf %49, %50 : vector<8x384xf32>
    %52 = vector.broadcast %1 : vector<8x1xf32> to vector<8x384xf32>
    %53 = arith.addf %51, %52 : vector<8x384xf32>
    %cst_41 = arith.constant 0.000000e+00 : f32
    %54 = vector.broadcast %cst_41 : f32 to vector<8x384xf32>
    %55 = arith.maximumf %53, %54 : vector<8x384xf32>
    %56 = arith.truncf %55 : vector<8x384xf32> to vector<8x384xbf16>
    %c0_42 = arith.constant 0 : index
    %c768_43 = arith.constant 768 : index
    %57 = vector.load %arg11[%c0_42, %c768_43] : memref<8x1152xbf16, #tpu.memory_space<vmem>>, vector<8x384xbf16>
    tpu.vector_store %arg11[%c0_42, %c768_43], %56 {strides = array<i32>} : memref<8x1152xbf16, #tpu.memory_space<vmem>>, vector<8x384xbf16>,
    %c1_44 = arith.constant 1 : index
    %c0_45 = arith.constant 0 : index
    %c0_46 = arith.constant 0 : index
    %58 = vector.load %arg5[%c1_44, %c0_45, %c0_46] : memref<3x8x8xbf16, #tpu.memory_space<vmem>>, vector<1x8x8xbf16>
    %59 = vector.shape_cast %58 : vector<1x8x8xbf16> to vector<8x8xbf16>
    %c0_47 = arith.constant 0 : index
    %c0_48 = arith.constant 0 : index
    %60 = vector.load %arg11[%c0_47, %c0_48] : memref<8x1152xbf16, #tpu.memory_space<vmem>>, vector<8x384xbf16>
    %cst_49 = arith.constant dense<0.000000e+00> : vector<8x384xf32>
    %61 = tpu.matmul %59, %60, %cst_49 {dimension_numbers = #tpu.dot_dimension_numbers<[1], [0], [0], [1], [0, 0, 1, 1], [], []>} : vector<8x8xbf16>, vector<8x384xbf16>, vector<8x384xf32> -> vector<8x384xf32>
    %c2_50 = arith.constant 2 : index
    %c0_51 = arith.constant 0 : index
    %c0_52 = arith.constant 0 : index
    %62 = vector.load %arg5[%c2_50, %c0_51, %c0_52] : memref<3x8x8xbf16, #tpu.memory_space<vmem>>, vector<1x8x8xbf16>
    %63 = vector.shape_cast %62 : vector<1x8x8xbf16> to vector<8x8xbf16>
    %c0_53 = arith.constant 0 : index
    %c384_54 = arith.constant 384 : index
    %64 = vector.load %arg11[%c0_53, %c384_54] : memref<8x1152xbf16, #tpu.memory_space<vmem>>, vector<8x384xbf16>
    %cst_55 = arith.constant dense<0.000000e+00> : vector<8x384xf32>
    %65 = tpu.matmul %63, %64, %cst_55 {dimension_numbers = #tpu.dot_dimension_numbers<[1], [0], [0], [1], [0, 0, 1, 1], [], []>} : vector<8x8xbf16>, vector<8x384xbf16>, vector<8x384xf32> -> vector<8x384xf32>
    %66 = arith.addf %61, %65 : vector<8x384xf32>
    %67 = vector.broadcast %2 : vector<8x1xf32> to vector<8x384xf32>
    %68 = arith.mulf %66, %67 : vector<8x384xf32>
    %69 = vector.broadcast %3 : vector<8x1xf32> to vector<8x384xf32>
    %70 = arith.addf %68, %69 : vector<8x384xf32>
    %cst_56 = arith.constant 0.000000e+00 : f32
    %71 = vector.broadcast %cst_56 : f32 to vector<8x384xf32>
    %72 = arith.maximumf %70, %71 : vector<8x384xf32>
    %73 = arith.truncf %72 : vector<8x384xf32> to vector<8x384xbf16>
    %c0_57 = arith.constant 0 : index
    %c0_58 = arith.constant 0 : index
    %74 = vector.load %arg12[%c0_57, %c0_58] : memref<8x1152xbf16, #tpu.memory_space<vmem>>, vector<8x384xbf16>
    tpu.vector_store %arg12[%c0_57, %c0_58], %73 {strides = array<i32>} : memref<8x1152xbf16, #tpu.memory_space<vmem>>, vector<8x384xbf16>,
    %c0_59 = arith.constant 0 : index
    %c0_60 = arith.constant 0 : index
    %c0_61 = arith.constant 0 : index
    %75 = vector.load %arg5[%c0_59, %c0_60, %c0_61] : memref<3x8x8xbf16, #tpu.memory_space<vmem>>, vector<1x8x8xbf16>
    %76 = vector.shape_cast %75 : vector<1x8x8xbf16> to vector<8x8xbf16>
    %c0_62 = arith.constant 0 : index
    %c0_63 = arith.constant 0 : index
    %77 = vector.load %arg11[%c0_62, %c0_63] : memref<8x1152xbf16, #tpu.memory_space<vmem>>, vector<8x384xbf16>
    %cst_64 = arith.constant dense<0.000000e+00> : vector<8x384xf32>
    %78 = tpu.matmul %76, %77, %cst_64 {dimension_numbers = #tpu.dot_dimension_numbers<[1], [0], [0], [1], [0, 0, 1, 1], [], []>} : vector<8x8xbf16>, vector<8x384xbf16>, vector<8x384xf32> -> vector<8x384xf32>
    %c1_65 = arith.constant 1 : index
    %c0_66 = arith.constant 0 : index
    %c0_67 = arith.constant 0 : index
    %79 = vector.load %arg5[%c1_65, %c0_66, %c0_67] : memref<3x8x8xbf16, #tpu.memory_space<vmem>>, vector<1x8x8xbf16>
    %80 = vector.shape_cast %79 : vector<1x8x8xbf16> to vector<8x8xbf16>
    %c0_68 = arith.constant 0 : index
    %c384_69 = arith.constant 384 : index
    %81 = vector.load %arg11[%c0_68, %c384_69] : memref<8x1152xbf16, #tpu.memory_space<vmem>>, vector<8x384xbf16>
    %cst_70 = arith.constant dense<0.000000e+00> : vector<8x384xf32>
    %82 = tpu.matmul %80, %81, %cst_70 {dimension_numbers = #tpu.dot_dimension_numbers<[1], [0], [0], [1], [0, 0, 1, 1], [], []>} : vector<8x8xbf16>, vector<8x384xbf16>, vector<8x384xf32> -> vector<8x384xf32>
    %83 = arith.addf %78, %82 : vector<8x384xf32>
    %c2_71 = arith.constant 2 : index
    %c0_72 = arith.constant 0 : index
    %c0_73 = arith.constant 0 : index
    %84 = vector.load %arg5[%c2_71, %c0_72, %c0_73] : memref<3x8x8xbf16, #tpu.memory_space<vmem>>, vector<1x8x8xbf16>
    %85 = vector.shape_cast %84 : vector<1x8x8xbf16> to vector<8x8xbf16>
    %c0_74 = arith.constant 0 : index
    %c768_75 = arith.constant 768 : index
    %86 = vector.load %arg11[%c0_74, %c768_75] : memref<8x1152xbf16, #tpu.memory_space<vmem>>, vector<8x384xbf16>
    %cst_76 = arith.constant dense<0.000000e+00> : vector<8x384xf32>
    %87 = tpu.matmul %85, %86, %cst_76 {dimension_numbers = #tpu.dot_dimension_numbers<[1], [0], [0], [1], [0, 0, 1, 1], [], []>} : vector<8x8xbf16>, vector<8x384xbf16>, vector<8x384xf32> -> vector<8x384xf32>
    %88 = arith.addf %83, %87 : vector<8x384xf32>
    %89 = vector.broadcast %2 : vector<8x1xf32> to vector<8x384xf32>
    %90 = arith.mulf %88, %89 : vector<8x384xf32>
    %91 = vector.broadcast %3 : vector<8x1xf32> to vector<8x384xf32>
    %92 = arith.addf %90, %91 : vector<8x384xf32>
    %cst_77 = arith.constant 0.000000e+00 : f32
    %93 = vector.broadcast %cst_77 : f32 to vector<8x384xf32>
    %94 = arith.maximumf %92, %93 : vector<8x384xf32>
    %95 = arith.truncf %94 : vector<8x384xf32> to vector<8x384xbf16>
    %c0_78 = arith.constant 0 : index
    %c384_79 = arith.constant 384 : index
    %96 = vector.load %arg12[%c0_78, %c384_79] : memref<8x1152xbf16, #tpu.memory_space<vmem>>, vector<8x384xbf16>
    tpu.vector_store %arg12[%c0_78, %c384_79], %95 {strides = array<i32>} : memref<8x1152xbf16, #tpu.memory_space<vmem>>, vector<8x384xbf16>,
    %c0_80 = arith.constant 0 : index
    %c0_81 = arith.constant 0 : index
    %c0_82 = arith.constant 0 : index
    %97 = vector.load %arg5[%c0_80, %c0_81, %c0_82] : memref<3x8x8xbf16, #tpu.memory_space<vmem>>, vector<1x8x8xbf16>
    %98 = vector.shape_cast %97 : vector<1x8x8xbf16> to vector<8x8xbf16>
    %c0_83 = arith.constant 0 : index
    %c384_84 = arith.constant 384 : index
    %99 = vector.load %arg11[%c0_83, %c384_84] : memref<8x1152xbf16, #tpu.memory_space<vmem>>, vector<8x384xbf16>
    %cst_85 = arith.constant dense<0.000000e+00> : vector<8x384xf32>
    %100 = tpu.matmul %98, %99, %cst_85 {dimension_numbers = #tpu.dot_dimension_numbers<[1], [0], [0], [1], [0, 0, 1, 1], [], []>} : vector<8x8xbf16>, vector<8x384xbf16>, vector<8x384xf32> -> vector<8x384xf32>
    %c1_86 = arith.constant 1 : index
    %c0_87 = arith.constant 0 : index
    %c0_88 = arith.constant 0 : index
    %101 = vector.load %arg5[%c1_86, %c0_87, %c0_88] : memref<3x8x8xbf16, #tpu.memory_space<vmem>>, vector<1x8x8xbf16>
    %102 = vector.shape_cast %101 : vector<1x8x8xbf16> to vector<8x8xbf16>
    %c0_89 = arith.constant 0 : index
    %c768_90 = arith.constant 768 : index
    %103 = vector.load %arg11[%c0_89, %c768_90] : memref<8x1152xbf16, #tpu.memory_space<vmem>>, vector<8x384xbf16>
    %cst_91 = arith.constant dense<0.000000e+00> : vector<8x384xf32>
    %104 = tpu.matmul %102, %103, %cst_91 {dimension_numbers = #tpu.dot_dimension_numbers<[1], [0], [0], [1], [0, 0, 1, 1], [], []>} : vector<8x8xbf16>, vector<8x384xbf16>, vector<8x384xf32> -> vector<8x384xf32>
    %105 = arith.addf %100, %104 : vector<8x384xf32>
    %106 = vector.broadcast %2 : vector<8x1xf32> to vector<8x384xf32>
    %107 = arith.mulf %105, %106 : vector<8x384xf32>
    %108 = vector.broadcast %3 : vector<8x1xf32> to vector<8x384xf32>
    %109 = arith.addf %107, %108 : vector<8x384xf32>
    %cst_92 = arith.constant 0.000000e+00 : f32
    %110 = vector.broadcast %cst_92 : f32 to vector<8x384xf32>
    %111 = arith.maximumf %109, %110 : vector<8x384xf32>
    %112 = arith.truncf %111 : vector<8x384xf32> to vector<8x384xbf16>
    %c0_93 = arith.constant 0 : index
    %c768_94 = arith.constant 768 : index
    %113 = vector.load %arg12[%c0_93, %c768_94] : memref<8x1152xbf16, #tpu.memory_space<vmem>>, vector<8x384xbf16>
    tpu.vector_store %arg12[%c0_93, %c768_94], %112 {strides = array<i32>} : memref<8x1152xbf16, #tpu.memory_space<vmem>>, vector<8x384xbf16>,
    %c0_95 = arith.constant 0 : index
    %c0_96 = arith.constant 0 : index
    %114 = vector.load %arg9[%c0_95, %c0_96] : memref<8x4xf32, #tpu.memory_space<vmem>>, vector<8x1xf32>
    %c0_97 = arith.constant 0 : index
    %c1_98 = arith.constant 1 : index
    %115 = vector.load %arg9[%c0_97, %c1_98] : memref<8x4xf32, #tpu.memory_space<vmem>>, vector<8x1xf32>
    %c0_99 = arith.constant 0 : index
    %c2_100 = arith.constant 2 : index
    %116 = vector.load %arg9[%c0_99, %c2_100] : memref<8x4xf32, #tpu.memory_space<vmem>>, vector<8x1xf32>
    %c0_101 = arith.constant 0 : index
    %c3_102 = arith.constant 3 : index
    %117 = vector.load %arg9[%c0_101, %c3_102] : memref<8x4xf32, #tpu.memory_space<vmem>>, vector<8x1xf32>
    %c0_103 = arith.constant 0 : index
    %c0_104 = arith.constant 0 : index
    %118 = vector.load %arg7[%c0_103, %c0_104] : memref<8x8xbf16, #tpu.memory_space<vmem>>, vector<8x8xbf16>
    %c0_105 = arith.constant 0 : index
    %c0_106 = arith.constant 0 : index
    %119 = vector.load %arg12[%c0_105, %c0_106] : memref<8x1152xbf16, #tpu.memory_space<vmem>>, vector<8x384xbf16>
    %cst_107 = arith.constant dense<0.000000e+00> : vector<8x384xf32>
    %120 = tpu.matmul %118, %119, %cst_107 {dimension_numbers = #tpu.dot_dimension_numbers<[1], [0], [0], [1], [0, 0, 1, 1], [], []>} : vector<8x8xbf16>, vector<8x384xbf16>, vector<8x384xf32> -> vector<8x384xf32>
    %121 = vector.broadcast %114 : vector<8x1xf32> to vector<8x384xf32>
    %122 = arith.mulf %120, %121 : vector<8x384xf32>
    %123 = vector.broadcast %115 : vector<8x1xf32> to vector<8x384xf32>
    %124 = arith.addf %122, %123 : vector<8x384xf32>
    %cst_108 = arith.constant 0.000000e+00 : f32
    %125 = vector.broadcast %cst_108 : f32 to vector<8x384xf32>
    %126 = arith.maximumf %124, %125 : vector<8x384xf32>
    %127 = arith.truncf %126 : vector<8x384xf32> to vector<8x384xbf16>
    %c0_109 = arith.constant 0 : index
    %c0_110 = arith.constant 0 : index
    %128 = vector.load %arg11[%c0_109, %c0_110] : memref<8x1152xbf16, #tpu.memory_space<vmem>>, vector<8x384xbf16>
    tpu.vector_store %arg11[%c0_109, %c0_110], %127 {strides = array<i32>} : memref<8x1152xbf16, #tpu.memory_space<vmem>>, vector<8x384xbf16>,
    %c0_111 = arith.constant 0 : index
    %c0_112 = arith.constant 0 : index
    %129 = vector.load %arg7[%c0_111, %c0_112] : memref<8x8xbf16, #tpu.memory_space<vmem>>, vector<8x8xbf16>
    %c0_113 = arith.constant 0 : index
    %c384_114 = arith.constant 384 : index
    %130 = vector.load %arg12[%c0_113, %c384_114] : memref<8x1152xbf16, #tpu.memory_space<vmem>>, vector<8x384xbf16>
    %cst_115 = arith.constant dense<0.000000e+00> : vector<8x384xf32>
    %131 = tpu.matmul %129, %130, %cst_115 {dimension_numbers = #tpu.dot_dimension_numbers<[1], [0], [0], [1], [0, 0, 1, 1], [], []>} : vector<8x8xbf16>, vector<8x384xbf16>, vector<8x384xf32> -> vector<8x384xf32>
    %132 = vector.broadcast %114 : vector<8x1xf32> to vector<8x384xf32>
    %133 = arith.mulf %131, %132 : vector<8x384xf32>
    %134 = vector.broadcast %115 : vector<8x1xf32> to vector<8x384xf32>
    %135 = arith.addf %133, %134 : vector<8x384xf32>
    %cst_116 = arith.constant 0.000000e+00 : f32
    %136 = vector.broadcast %cst_116 : f32 to vector<8x384xf32>
    %137 = arith.maximumf %135, %136 : vector<8x384xf32>
    %138 = arith.truncf %137 : vector<8x384xf32> to vector<8x384xbf16>
    %c0_117 = arith.constant 0 : index
    %c384_118 = arith.constant 384 : index
    %139 = vector.load %arg11[%c0_117, %c384_118] : memref<8x1152xbf16, #tpu.memory_space<vmem>>, vector<8x384xbf16>
    tpu.vector_store %arg11[%c0_117, %c384_118], %138 {strides = array<i32>} : memref<8x1152xbf16, #tpu.memory_space<vmem>>, vector<8x384xbf16>,
    %c0_119 = arith.constant 0 : index
    %c0_120 = arith.constant 0 : index
    %140 = vector.load %arg7[%c0_119, %c0_120] : memref<8x8xbf16, #tpu.memory_space<vmem>>, vector<8x8xbf16>
    %c0_121 = arith.constant 0 : index
    %c768_122 = arith.constant 768 : index
    %141 = vector.load %arg12[%c0_121, %c768_122] : memref<8x1152xbf16, #tpu.memory_space<vmem>>, vector<8x384xbf16>
    %cst_123 = arith.constant dense<0.000000e+00> : vector<8x384xf32>
    %142 = tpu.matmul %140, %141, %cst_123 {dimension_numbers = #tpu.dot_dimension_numbers<[1], [0], [0], [1], [0, 0, 1, 1], [], []>} : vector<8x8xbf16>, vector<8x384xbf16>, vector<8x384xf32> -> vector<8x384xf32>
    %143 = vector.broadcast %114 : vector<8x1xf32> to vector<8x384xf32>
    %144 = arith.mulf %142, %143 : vector<8x384xf32>
    %145 = vector.broadcast %115 : vector<8x1xf32> to vector<8x384xf32>
    %146 = arith.addf %144, %145 : vector<8x384xf32>
    %cst_124 = arith.constant 0.000000e+00 : f32
    %147 = vector.broadcast %cst_124 : f32 to vector<8x384xf32>
    %148 = arith.maximumf %146, %147 : vector<8x384xf32>
    %149 = arith.truncf %148 : vector<8x384xf32> to vector<8x384xbf16>
    %c0_125 = arith.constant 0 : index
    %c768_126 = arith.constant 768 : index
    %150 = vector.load %arg11[%c0_125, %c768_126] : memref<8x1152xbf16, #tpu.memory_space<vmem>>, vector<8x384xbf16>
    tpu.vector_store %arg11[%c0_125, %c768_126], %149 {strides = array<i32>} : memref<8x1152xbf16, #tpu.memory_space<vmem>>, vector<8x384xbf16>,
    %c1_127 = arith.constant 1 : index
    %c0_128 = arith.constant 0 : index
    %c0_129 = arith.constant 0 : index
    %151 = vector.load %arg8[%c1_127, %c0_128, %c0_129] : memref<3x8x8xbf16, #tpu.memory_space<vmem>>, vector<1x8x8xbf16>
    %152 = vector.shape_cast %151 : vector<1x8x8xbf16> to vector<8x8xbf16>
    %c0_130 = arith.constant 0 : index
    %c0_131 = arith.constant 0 : index
    %153 = vector.load %arg11[%c0_130, %c0_131] : memref<8x1152xbf16, #tpu.memory_space<vmem>>, vector<8x384xbf16>
    %cst_132 = arith.constant dense<0.000000e+00> : vector<8x384xf32>
    %154 = tpu.matmul %152, %153, %cst_132 {dimension_numbers = #tpu.dot_dimension_numbers<[1], [0], [0], [1], [0, 0, 1, 1], [], []>} : vector<8x8xbf16>, vector<8x384xbf16>, vector<8x384xf32> -> vector<8x384xf32>
    %c2_133 = arith.constant 2 : index
    %c0_134 = arith.constant 0 : index
    %c0_135 = arith.constant 0 : index
    %155 = vector.load %arg8[%c2_133, %c0_134, %c0_135] : memref<3x8x8xbf16, #tpu.memory_space<vmem>>, vector<1x8x8xbf16>
    %156 = vector.shape_cast %155 : vector<1x8x8xbf16> to vector<8x8xbf16>
    %c0_136 = arith.constant 0 : index
    %c384_137 = arith.constant 384 : index
    %157 = vector.load %arg11[%c0_136, %c384_137] : memref<8x1152xbf16, #tpu.memory_space<vmem>>, vector<8x384xbf16>
    %cst_138 = arith.constant dense<0.000000e+00> : vector<8x384xf32>
    %158 = tpu.matmul %156, %157, %cst_138 {dimension_numbers = #tpu.dot_dimension_numbers<[1], [0], [0], [1], [0, 0, 1, 1], [], []>} : vector<8x8xbf16>, vector<8x384xbf16>, vector<8x384xf32> -> vector<8x384xf32>
    %159 = arith.addf %154, %158 : vector<8x384xf32>
    %160 = vector.broadcast %116 : vector<8x1xf32> to vector<8x384xf32>
    %161 = arith.mulf %159, %160 : vector<8x384xf32>
    %162 = vector.broadcast %117 : vector<8x1xf32> to vector<8x384xf32>
    %163 = arith.addf %161, %162 : vector<8x384xf32>
    %cst_139 = arith.constant 0.000000e+00 : f32
    %164 = vector.broadcast %cst_139 : f32 to vector<8x384xf32>
    %165 = arith.maximumf %163, %164 : vector<8x384xf32>
    %166 = vector.extract_strided_slice %165 {offsets = [0, 0], sizes = [8, 128], strides = [1, 1]} : vector<8x384xf32> to vector<8x128xf32>
    %167 = vector.extract_strided_slice %165 {offsets = [0, 128], sizes = [8, 128], strides = [1, 1]} : vector<8x384xf32> to vector<8x128xf32>
    %168 = arith.maximumf %166, %167 : vector<8x128xf32>
    %169 = vector.extract_strided_slice %165 {offsets = [0, 256], sizes = [8, 128], strides = [1, 1]} : vector<8x384xf32> to vector<8x128xf32>
    %170 = arith.maximumf %168, %169 : vector<8x128xf32>
    %c0_140 = arith.constant 0 : index
    %c0_141 = arith.constant 0 : index
    %c0_142 = arith.constant 0 : index
    %c0_143 = arith.constant 0 : index
    %171 = vector.load %arg10[%c0_140, %c0_141, %c0_142, %c0_143] : memref<1x3x8x128xf32, #tpu.memory_space<vmem>>, vector<1x1x8x128xf32>
    %172 = vector.shape_cast %171 : vector<1x1x8x128xf32> to vector<8x128xf32>
    %173 = vector.shape_cast %170 : vector<8x128xf32> to vector<1x1x8x128xf32>
    tpu.vector_store %arg10[%c0_140, %c0_141, %c0_142, %c0_143], %173 {strides = array<i32>} : memref<1x3x8x128xf32, #tpu.memory_space<vmem>>, vector<1x1x8x128xf32>,
    %c0_144 = arith.constant 0 : index
    %c0_145 = arith.constant 0 : index
    %c0_146 = arith.constant 0 : index
    %174 = vector.load %arg8[%c0_144, %c0_145, %c0_146] : memref<3x8x8xbf16, #tpu.memory_space<vmem>>, vector<1x8x8xbf16>
    %175 = vector.shape_cast %174 : vector<1x8x8xbf16> to vector<8x8xbf16>
    %c0_147 = arith.constant 0 : index
    %c0_148 = arith.constant 0 : index
    %176 = vector.load %arg11[%c0_147, %c0_148] : memref<8x1152xbf16, #tpu.memory_space<vmem>>, vector<8x384xbf16>
    %cst_149 = arith.constant dense<0.000000e+00> : vector<8x384xf32>
    %177 = tpu.matmul %175, %176, %cst_149 {dimension_numbers = #tpu.dot_dimension_numbers<[1], [0], [0], [1], [0, 0, 1, 1], [], []>} : vector<8x8xbf16>, vector<8x384xbf16>, vector<8x384xf32> -> vector<8x384xf32>
    %c1_150 = arith.constant 1 : index
    %c0_151 = arith.constant 0 : index
    %c0_152 = arith.constant 0 : index
    %178 = vector.load %arg8[%c1_150, %c0_151, %c0_152] : memref<3x8x8xbf16, #tpu.memory_space<vmem>>, vector<1x8x8xbf16>
    %179 = vector.shape_cast %178 : vector<1x8x8xbf16> to vector<8x8xbf16>
    %c0_153 = arith.constant 0 : index
    %c384_154 = arith.constant 384 : index
    %180 = vector.load %arg11[%c0_153, %c384_154] : memref<8x1152xbf16, #tpu.memory_space<vmem>>, vector<8x384xbf16>
    %cst_155 = arith.constant dense<0.000000e+00> : vector<8x384xf32>
    %181 = tpu.matmul %179, %180, %cst_155 {dimension_numbers = #tpu.dot_dimension_numbers<[1], [0], [0], [1], [0, 0, 1, 1], [], []>} : vector<8x8xbf16>, vector<8x384xbf16>, vector<8x384xf32> -> vector<8x384xf32>
    %182 = arith.addf %177, %181 : vector<8x384xf32>
    %c2_156 = arith.constant 2 : index
    %c0_157 = arith.constant 0 : index
    %c0_158 = arith.constant 0 : index
    %183 = vector.load %arg8[%c2_156, %c0_157, %c0_158] : memref<3x8x8xbf16, #tpu.memory_space<vmem>>, vector<1x8x8xbf16>
    %184 = vector.shape_cast %183 : vector<1x8x8xbf16> to vector<8x8xbf16>
    %c0_159 = arith.constant 0 : index
    %c768_160 = arith.constant 768 : index
    %185 = vector.load %arg11[%c0_159, %c768_160] : memref<8x1152xbf16, #tpu.memory_space<vmem>>, vector<8x384xbf16>
    %cst_161 = arith.constant dense<0.000000e+00> : vector<8x384xf32>
    %186 = tpu.matmul %184, %185, %cst_161 {dimension_numbers = #tpu.dot_dimension_numbers<[1], [0], [0], [1], [0, 0, 1, 1], [], []>} : vector<8x8xbf16>, vector<8x384xbf16>, vector<8x384xf32> -> vector<8x384xf32>
    %187 = arith.addf %182, %186 : vector<8x384xf32>
    %188 = vector.broadcast %116 : vector<8x1xf32> to vector<8x384xf32>
    %189 = arith.mulf %187, %188 : vector<8x384xf32>
    %190 = vector.broadcast %117 : vector<8x1xf32> to vector<8x384xf32>
    %191 = arith.addf %189, %190 : vector<8x384xf32>
    %cst_162 = arith.constant 0.000000e+00 : f32
    %192 = vector.broadcast %cst_162 : f32 to vector<8x384xf32>
    %193 = arith.maximumf %191, %192 : vector<8x384xf32>
    %194 = vector.extract_strided_slice %193 {offsets = [0, 0], sizes = [8, 128], strides = [1, 1]} : vector<8x384xf32> to vector<8x128xf32>
    %195 = vector.extract_strided_slice %193 {offsets = [0, 128], sizes = [8, 128], strides = [1, 1]} : vector<8x384xf32> to vector<8x128xf32>
    %196 = arith.maximumf %194, %195 : vector<8x128xf32>
    %197 = vector.extract_strided_slice %193 {offsets = [0, 256], sizes = [8, 128], strides = [1, 1]} : vector<8x384xf32> to vector<8x128xf32>
    %198 = arith.maximumf %196, %197 : vector<8x128xf32>
    %c0_163 = arith.constant 0 : index
    %c1_164 = arith.constant 1 : index
    %c0_165 = arith.constant 0 : index
    %c0_166 = arith.constant 0 : index
    %199 = vector.load %arg10[%c0_163, %c1_164, %c0_165, %c0_166] : memref<1x3x8x128xf32, #tpu.memory_space<vmem>>, vector<1x1x8x128xf32>
    %200 = vector.shape_cast %199 : vector<1x1x8x128xf32> to vector<8x128xf32>
    %201 = vector.shape_cast %198 : vector<8x128xf32> to vector<1x1x8x128xf32>
    tpu.vector_store %arg10[%c0_163, %c1_164, %c0_165, %c0_166], %201 {strides = array<i32>} : memref<1x3x8x128xf32, #tpu.memory_space<vmem>>, vector<1x1x8x128xf32>,
    %c0_167 = arith.constant 0 : index
    %c0_168 = arith.constant 0 : index
    %c0_169 = arith.constant 0 : index
    %202 = vector.load %arg8[%c0_167, %c0_168, %c0_169] : memref<3x8x8xbf16, #tpu.memory_space<vmem>>, vector<1x8x8xbf16>
    %203 = vector.shape_cast %202 : vector<1x8x8xbf16> to vector<8x8xbf16>
    %c0_170 = arith.constant 0 : index
    %c384_171 = arith.constant 384 : index
    %204 = vector.load %arg11[%c0_170, %c384_171] : memref<8x1152xbf16, #tpu.memory_space<vmem>>, vector<8x384xbf16>
    %cst_172 = arith.constant dense<0.000000e+00> : vector<8x384xf32>
    %205 = tpu.matmul %203, %204, %cst_172 {dimension_numbers = #tpu.dot_dimension_numbers<[1], [0], [0], [1], [0, 0, 1, 1], [], []>} : vector<8x8xbf16>, vector<8x384xbf16>, vector<8x384xf32> -> vector<8x384xf32>
    %c1_173 = arith.constant 1 : index
    %c0_174 = arith.constant 0 : index
    %c0_175 = arith.constant 0 : index
    %206 = vector.load %arg8[%c1_173, %c0_174, %c0_175] : memref<3x8x8xbf16, #tpu.memory_space<vmem>>, vector<1x8x8xbf16>
    %207 = vector.shape_cast %206 : vector<1x8x8xbf16> to vector<8x8xbf16>
    %c0_176 = arith.constant 0 : index
    %c768_177 = arith.constant 768 : index
    %208 = vector.load %arg11[%c0_176, %c768_177] : memref<8x1152xbf16, #tpu.memory_space<vmem>>, vector<8x384xbf16>
    %cst_178 = arith.constant dense<0.000000e+00> : vector<8x384xf32>
    %209 = tpu.matmul %207, %208, %cst_178 {dimension_numbers = #tpu.dot_dimension_numbers<[1], [0], [0], [1], [0, 0, 1, 1], [], []>} : vector<8x8xbf16>, vector<8x384xbf16>, vector<8x384xf32> -> vector<8x384xf32>
    %210 = arith.addf %205, %209 : vector<8x384xf32>
    %211 = vector.broadcast %116 : vector<8x1xf32> to vector<8x384xf32>
    %212 = arith.mulf %210, %211 : vector<8x384xf32>
    %213 = vector.broadcast %117 : vector<8x1xf32> to vector<8x384xf32>
    %214 = arith.addf %212, %213 : vector<8x384xf32>
    %cst_179 = arith.constant 0.000000e+00 : f32
    %215 = vector.broadcast %cst_179 : f32 to vector<8x384xf32>
    %216 = arith.maximumf %214, %215 : vector<8x384xf32>
    %217 = vector.extract_strided_slice %216 {offsets = [0, 0], sizes = [8, 128], strides = [1, 1]} : vector<8x384xf32> to vector<8x128xf32>
    %218 = vector.extract_strided_slice %216 {offsets = [0, 128], sizes = [8, 128], strides = [1, 1]} : vector<8x384xf32> to vector<8x128xf32>
    %219 = arith.maximumf %217, %218 : vector<8x128xf32>
    %220 = vector.extract_strided_slice %216 {offsets = [0, 256], sizes = [8, 128], strides = [1, 1]} : vector<8x384xf32> to vector<8x128xf32>
    %221 = arith.maximumf %219, %220 : vector<8x128xf32>
    %c0_180 = arith.constant 0 : index
    %c2_181 = arith.constant 2 : index
    %c0_182 = arith.constant 0 : index
    %c0_183 = arith.constant 0 : index
    %222 = vector.load %arg10[%c0_180, %c2_181, %c0_182, %c0_183] : memref<1x3x8x128xf32, #tpu.memory_space<vmem>>, vector<1x1x8x128xf32>
    %223 = vector.shape_cast %222 : vector<1x1x8x128xf32> to vector<8x128xf32>
    %224 = vector.shape_cast %221 : vector<8x128xf32> to vector<1x1x8x128xf32>
    tpu.vector_store %arg10[%c0_180, %c2_181, %c0_182, %c0_183], %224 {strides = array<i32>} : memref<1x3x8x128xf32, #tpu.memory_space<vmem>>, vector<1x1x8x128xf32>,
    return
  }
  func.func @transform_0(%arg0: i32) -> (i32, i32, i32) {
    %c0_i32 = arith.constant 0 : i32
    %c0_i32_0 = arith.constant 0 : i32
    %c0_i32_1 = arith.constant 0 : i32
    return %arg0, %c0_i32, %c0_i32_0 : i32, i32, i32
  }
  func.func @transform_1(%arg0: i32) -> (i32, i32, i32) {
    %c0_i32 = arith.constant 0 : i32
    %c0_i32_0 = arith.constant 0 : i32
    %c0_i32_1 = arith.constant 0 : i32
    return %arg0, %c0_i32, %c0_i32_0 : i32, i32, i32
  }
  func.func @transform_2(%arg0: i32) -> (i32, i32) {
    %c0_i32 = arith.constant 0 : i32
    %c0_i32_0 = arith.constant 0 : i32
    %c0_i32_1 = arith.constant 0 : i32
    return %c0_i32, %c0_i32_0 : i32, i32
  }
  func.func @transform_3(%arg0: i32) -> (i32, i32) {
    %c0_i32 = arith.constant 0 : i32
    %c0_i32_0 = arith.constant 0 : i32
    %c0_i32_1 = arith.constant 0 : i32
    return %c0_i32, %c0_i32_0 : i32, i32
  }
  func.func @transform_4(%arg0: i32) -> (i32, i32, i32) {
    %c0_i32 = arith.constant 0 : i32
    %c0_i32_0 = arith.constant 0 : i32
    %c0_i32_1 = arith.constant 0 : i32
    %c0_i32_2 = arith.constant 0 : i32
    return %c0_i32, %c0_i32_0, %c0_i32_1 : i32, i32, i32
  }
  func.func @transform_5(%arg0: i32) -> (i32, i32) {
    %c0_i32 = arith.constant 0 : i32
    %c0_i32_0 = arith.constant 0 : i32
    %c0_i32_1 = arith.constant 0 : i32
    return %c0_i32, %c0_i32_0 : i32, i32
  }
  func.func @transform_6(%arg0: i32) -> (i32, i32) {
    %c0_i32 = arith.constant 0 : i32
    %c0_i32_0 = arith.constant 0 : i32
    %c0_i32_1 = arith.constant 0 : i32
    return %c0_i32, %c0_i32_0 : i32, i32
  }
  func.func @transform_7(%arg0: i32) -> (i32, i32, i32) {
    %c0_i32 = arith.constant 0 : i32
    %c0_i32_0 = arith.constant 0 : i32
    %c0_i32_1 = arith.constant 0 : i32
    %c0_i32_2 = arith.constant 0 : i32
    return %c0_i32, %c0_i32_0, %c0_i32_1 : i32, i32, i32
  }
  func.func @transform_8(%arg0: i32) -> (i32, i32) {
    %c0_i32 = arith.constant 0 : i32
    %c0_i32_0 = arith.constant 0 : i32
    %c0_i32_1 = arith.constant 0 : i32
    return %c0_i32, %c0_i32_0 : i32, i32
  }
  func.func @transform_9(%arg0: i32) -> (i32, i32, i32, i32) {
    %c0_i32 = arith.constant 0 : i32
    %c0_i32_0 = arith.constant 0 : i32
    %c0_i32_1 = arith.constant 0 : i32
    %c0_i32_2 = arith.constant 0 : i32
    return %arg0, %c0_i32, %c0_i32_0, %c0_i32_1 : i32, i32, i32, i32
  }
}

</mosaic_0001>

<llo_original>
// kernel: neg.1
$region0: #{neg.1}
  #allocation0 [shape = 's32[1]{0}', space=sflag, size = 0x4, scoped, tag = 'scoped memory for neg.1']
  %s0 = inlined_call_operand.vmem [shape: f32[6,16,16], index: 0, kind: input, shape index: {}]
  %s1 = inlined_call_operand.vmem [shape: f32[6,16,16], index: 1, kind: output, shape index: {}]
  %v2 = vld [vmem:[%s0] sm:$0xff]
  %3 = xla_tuple %v2
  %4 = xla_tuple %3
  %v5 = vxor.u32 %v2, 2147483648
  %6 = xla_tuple %v5
  %7 = vst [vmem:[%s1] sm:$0xff] %v5
  %s8 = scalar_lea.vmem %s0, 16
  %v9 = vld [vmem:[%s8] sm:$0xff]
  %10 = xla_tuple %v9
  %11 = xla_tuple %10
  %v12 = vxor.u32 %v9, 2147483648
  %13 = xla_tuple %v12
  %s14 = scalar_lea.vmem %s1, 16
  %15 = vst [vmem:[%s14] sm:$0xff] %v12
  %s16 = scalar_lea.vmem %s0, 32
  %v17 = vld [vmem:[%s16] sm:$0xff]
  %18 = xla_tuple %v17
  %19 = xla_tuple %18
  %v20 = vxor.u32 %v17, 2147483648
  %21 = xla_tuple %v20
  %s22 = scalar_lea.vmem %s1, 32
  %23 = vst [vmem:[%s22] sm:$0xff] %v20
  %s24 = scalar_lea.vmem %s0, 48
  %v25 = vld [vmem:[%s24] sm:$0xff]
  %26 = xla_tuple %v25
  %27 = xla_tuple %26
  %v28 = vxor.u32 %v25, 2147483648
  %29 = xla_tuple %v28
  %s30 = scalar_lea.vmem %s1, 48
  %31 = vst [vmem:[%s30] sm:$0xff] %v28
  %s32 = scalar_lea.vmem %s0, 64
  %v33 = vld [vmem:[%s32] sm:$0xff]
  %34 = xla_tuple %v33
  %35 = xla_tuple %34
  %v36 = vxor.u32 %v33, 2147483648
  %37 = xla_tuple %v36
  %s38 = scalar_lea.vmem %s1, 64
  %39 = vst [vmem:[%s38] sm:$0xff] %v36
  %s40 = scalar_lea.vmem %s0, 80
  %v41 = vld [vmem:[%s40] sm:$0xff]
  %42 = xla_tuple %v41
  %43 = xla_tuple %42
  %v44 = vxor.u32 %v41, 2147483648
  %45 = xla_tuple %v44
  %s46 = scalar_lea.vmem %s1, 80
  %47 = vst [vmem:[%s46] sm:$0xff] %v44
  %s48 = scalar_lea.vmem %s0, 8
  %v49 = vld [vmem:[%s48] sm:$0xff]
  %50 = xla_tuple %v49
  %51 = xla_tuple %50
  %v52 = vxor.u32 %v49, 2147483648
  %53 = xla_tuple %v52
  %s54 = scalar_lea.vmem %s1, 8
  %55 = vst [vmem:[%s54] sm:$0xff] %v52
  %s56 = scalar_lea.vmem %s0, 24
  %v57 = vld [vmem:[%s56] sm:$0xff]
  %58 = xla_tuple %v57
  %59 = xla_tuple %58
  %v60 = vxor.u32 %v57, 2147483648
  %61 = xla_tuple %v60
  %s62 = scalar_lea.vmem %s1, 24
  %63 = vst [vmem:[%s62] sm:$0xff] %v60
  %s64 = scalar_lea.vmem %s0, 40
  %v65 = vld [vmem:[%s64] sm:$0xff]
  %66 = xla_tuple %v65
  %67 = xla_tuple %66
  %v68 = vxor.u32 %v65, 2147483648
  %69 = xla_tuple %v68
  %s70 = scalar_lea.vmem %s1, 40
  %71 = vst [vmem:[%s70] sm:$0xff] %v68
  %s72 = scalar_lea.vmem %s0, 56
  %v73 = vld [vmem:[%s72] sm:$0xff]
  %74 = xla_tuple %v73
  %75 = xla_tuple %74
  %v76 = vxor.u32 %v73, 2147483648
  %77 = xla_tuple %v76
  %s78 = scalar_lea.vmem %s1, 56
  %79 = vst [vmem:[%s78] sm:$0xff] %v76
  %s80 = scalar_lea.vmem %s0, 72
  %v81 = vld [vmem:[%s80] sm:$0xff]
  %82 = xla_tuple %v81
  %83 = xla_tuple %82
  %v84 = vxor.u32 %v81, 2147483648
  %85 = xla_tuple %v84
  %s86 = scalar_lea.vmem %s1, 72
  %87 = vst [vmem:[%s86] sm:$0xff] %v84
  %s88 = scalar_lea.vmem %s0, 88
  %v89 = vld [vmem:[%s88] sm:$0xff]
  %90 = xla_tuple %v89
  %91 = xla_tuple %90
  %v92 = vxor.u32 %v89, 2147483648
  %93 = xla_tuple %v92
  %s94 = scalar_lea.vmem %s1, 88
  %95 = vst [vmem:[%s94] sm:$0xff] %v92

// kernel: edgeconv_forward.2
$region0: #{edgeconv_forward.2}
  #allocation0 [shape = 'u32[]', space=smem, size = 0x4, offset = 0x4, fixed_abs, tag = 'smem constant byte address 0x4 - core index']
  #allocation1 [shape = 'u32[144,128]{1,0:T(1,128)}', space=vmem, size = 0x12000, scoped, tag = 'internal scratch']
  %s0 = inlined_call_operand.vmem [shape: f32[6,16,3], index: 0, kind: input, shape index: {}, may-alias: {0,1}]
  %s1 = inlined_call_operand.vmem [shape: f32[6,16,3], index: 1, kind: input, shape index: {}, may-alias: {0,1}]
  %s2 = inlined_call_operand.vmem [shape: f32[6,16,16], index: 2, kind: output, shape index: {}]
  %s3 = sld [smem:[#allocation0]]
  $region18: #{edgeconv_forward.2} parent=0
    _
  %s5 = ssub.s32 1, %s3
  %s6 = scalar_select 0, %s5, %s3
  // Predicated region
  $region2: #{edgeconv_forward.2} parent=0 // pred_check
    _
  $region3: #{edgeconv_forward.2} parent=0 // pred_check_branch
    %8 = sbr.rel (0) target = $region5
  $region4: #{edgeconv_forward.2} parent=0 // pred_region
    _
  $region5: #{edgeconv_forward.2} parent=0 // pred_fallthru
    _
  // Predicated region
  $region6: #{edgeconv_forward.2} parent=0 // pred_check
    _
  $region7: #{edgeconv_forward.2} parent=0 // pred_check_branch
    %10 = sbr.rel (0) target = $region9
  $region8: #{edgeconv_forward.2} parent=0 // pred_region
    _
  $region9: #{edgeconv_forward.2} parent=0 // pred_fallthru
    _
  %v11 = vld [vmem:[%s0] sm:$0xff]
  %v12 = vld [vmem:[%s0 + $0x8] sm:$0xff]
  %v13 = vld [vmem:[%s0 + $0x10] sm:$0xff]
  %v14 = vld [vmem:[%s0 + $0x18] sm:$0xff]
  %v15 = vld [vmem:[%s0 + $0x20] sm:$0xff]
  %v16 = vld [vmem:[%s0 + $0x28] sm:$0xff]
  %v17 = vld [vmem:[%s0 + $0x30] sm:$0xff]
  %v18 = vld [vmem:[%s0 + $0x38] sm:$0xff]
  %v19 = vld [vmem:[%s0 + $0x40] sm:$0xff]
  %v20 = vld [vmem:[%s0 + $0x48] sm:$0xff]
  %v21 = vld [vmem:[%s0 + $0x50] sm:$0xff]
  %v22 = vld [vmem:[%s0 + $0x58] sm:$0xff]
  %v23 = vld [vmem:[%s1] sm:$0xff]
  %v24 = vld [vmem:[%s1 + $0x8] sm:$0xff]
  %v25 = vld [vmem:[%s1 + $0x10] sm:$0xff]
  %v26 = vld [vmem:[%s1 + $0x18] sm:$0xff]
  %v27 = vld [vmem:[%s1 + $0x20] sm:$0xff]
  %v28 = vld [vmem:[%s1 + $0x28] sm:$0xff]
  %v29 = vld [vmem:[%s1 + $0x30] sm:$0xff]
  %v30 = vld [vmem:[%s1 + $0x38] sm:$0xff]
  %v31 = vld [vmem:[%s1 + $0x40] sm:$0xff]
  %v32 = vld [vmem:[%s1 + $0x48] sm:$0xff]
  %v33 = vld [vmem:[%s1 + $0x50] sm:$0xff]
  %v34 = vld [vmem:[%s1 + $0x58] sm:$0xff]
  %v35 = vmul.f32 %v23, %v23
  %v36 = vmul.f32 %v24, %v24
  %v37 = vmul.f32 %v25, %v25
  %v38 = vmul.f32 %v26, %v26
  %v39 = vmul.f32 %v27, %v27
  %v40 = vmul.f32 %v28, %v28
  %v41 = vmul.f32 %v29, %v29
  %v42 = vmul.f32 %v30, %v30
  %v43 = vmul.f32 %v31, %v31
  %v44 = vmul.f32 %v32, %v32
  %v45 = vmul.f32 %v33, %v33
  %v46 = vmul.f32 %v34, %v34
  %vm47 = vcmask 23552
  %v48 = vsel %vm47, %v35, 0.0
  %49 = vadd.xlane.f32.xlu0 %v48
  %v50 = vpop.xlane.xlu0 %49
  %v51 = vsel %vm47, %v36, 0.0
  %52 = vadd.xlane.f32.xlu0 %v51
  %v53 = vpop.xlane.xlu0 %52
  %v54 = vsel %vm47, %v37, 0.0
  %55 = vadd.xlane.f32.xlu0 %v54
  %v56 = vpop.xlane.xlu0 %55
  %v57 = vsel %vm47, %v38, 0.0
  %58 = vadd.xlane.f32.xlu0 %v57
  %v59 = vpop.xlane.xlu0 %58
  %v60 = vsel %vm47, %v39, 0.0
  %61 = vadd.xlane.f32.xlu0 %v60
  %v62 = vpop.xlane.xlu0 %61
  %v63 = vsel %vm47, %v40, 0.0
  %64 = vadd.xlane.f32.xlu0 %v63
  %v65 = vpop.xlane.xlu0 %64
  %v66 = vsel %vm47, %v41, 0.0
  %67 = vadd.xlane.f32.xlu0 %v66
  %v68 = vpop.xlane.xlu0 %67
  %v69 = vsel %vm47, %v42, 0.0
  %70 = vadd.xlane.f32.xlu0 %v69
  %v71 = vpop.xlane.xlu0 %70
  %v72 = vsel %vm47, %v43, 0.0
  %73 = vadd.xlane.f32.xlu0 %v72
  %v74 = vpop.xlane.xlu0 %73
  %v75 = vsel %vm47, %v44, 0.0
  %76 = vadd.xlane.f32.xlu0 %v75
  %v77 = vpop.xlane.xlu0 %76
  %v78 = vsel %vm47, %v45, 0.0
  %79 = vadd.xlane.f32.xlu0 %v78
  %v80 = vpop.xlane.xlu0 %79
  %v81 = vsel %vm47, %v46, 0.0
  %82 = vadd.xlane.f32.xlu0 %v81
  %v83 = vpop.xlane.xlu0 %82
  %v85 = vsel %vm47, %v11, 0
  %v88 = vsel %vm47, %v12, 0
  %v91 = vsel %vm47, %v23, 0
  %v94 = vsel %vm47, %v24, 0
  %96 = vmatprep.subr.mxu0 0.0
  %97 = vmatpush1.xpose.msra.mxu0 %v91
  %98 = vmatprep.subr.mxu0 0.0
  %99 = vmatpush1.xpose.msra.mxu0 %v94
  %100 = vmatprep.subr.mxu0 0.0
  %101 = vmatpush1.xpose.msra.mxu0 0.0
  %102 = vmatprep.subr.mxu0 0.0
  %103 = vmatpush1.xpose.msra.mxu0 0.0
  %104 = vmatprep.subr.mxu0 0.0
  %105 = vmatpush1.xpose.msra.mxu0 0.0
  %106 = vmatprep.subr.mxu0 0.0
  %107 = vmatpush1.xpose.msra.mxu0 0.0
  %108 = vmatprep.subr.mxu0 0.0
  %109 = vmatpush1.xpose.msra.mxu0 0.0
  %110 = vmatprep.subr.mxu0 0.0
  %111 = vmatpush1.xpose.msra.mxu0 0.0
  %112 = vmatprep.subr.mxu0 0.0
  %113 = vmatpush1.xpose.msra.mxu0 0.0
  %114 = vmatprep.subr.mxu0 0.0
  %115 = vmatpush1.xpose.msra.mxu0 0.0
  %116 = vmatprep.subr.mxu0 0.0
  %117 = vmatpush1.xpose.msra.mxu0 0.0
  %118 = vmatprep.subr.mxu0 0.0
  %119 = vmatpush1.xpose.msra.mxu0 0.0
  %120 = vmatprep.subr.mxu0 0.0
  %121 = vmatpush1.xpose.msra.mxu0 0.0
  %122 = vmatprep.subr.mxu0 0.0
  %123 = vmatpush1.xpose.msra.mxu0 0.0
  %124 = vmatprep.subr.mxu0 0.0
  %125 = vmatpush1.xpose.msra.mxu0 0.0
  %126 = vmatprep.subr.mxu0 0.0
  %127 = vmatpush1.xpose.msra.mxu0 0.0
  %128 = vmatprep.subr.mxu0 0.0
  %129 = vmatpush1.xpose.msra.mxu0 0.0
  %130 = vmatprep.subr.mxu0 0.0
  %131 = vmatpush1.xpose.msra.mxu0 0.0
  %132 = vmatprep.subr.mxu0 0.0
  %133 = vmatpush1.xpose.msra.mxu0 0.0
  %134 = vmatprep.subr.mxu0 0.0
  %135 = vmatpush1.xpose.msra.mxu0 0.0
  %136 = vmatprep.subr.mxu0 0.0
  %137 = vmatpush1.xpose.msra.mxu0 0.0
  %138 = vmatprep.subr.mxu0 0.0
  %139 = vmatpush1.xpose.msra.mxu0 0.0
  %140 = vmatprep.subr.mxu0 0.0
  %141 = vmatpush1.xpose.msra.mxu0 0.0
  %142 = vmatprep.subr.mxu0 0.0
  %143 = vmatpush1.xpose.msra.mxu0 0.0
  %144 = vmatprep.subr.mxu0 0.0
  %145 = vmatpush1.xpose.msra.mxu0 0.0
  %146 = vmatprep.subr.mxu0 0.0
  %147 = vmatpush1.xpose.msra.mxu0 0.0
  %148 = vmatprep.subr.mxu0 0.0
  %149 = vmatpush1.xpose.msra.mxu0 0.0
  %150 = vmatprep.subr.mxu0 0.0
  %151 = vmatpush1.xpose.msra.mxu0 0.0
  %152 = vmatprep.subr.mxu0 0.0
  %153 = vmatpush1.xpose.msra.mxu0 0.0
  %154 = vmatprep.subr.mxu0 0.0
  %155 = vmatpush1.xpose.msra.mxu0 0.0
  %156 = vmatprep.subr.mxu0 0.0
  %157 = vmatpush1.xpose.msra.mxu0 0.0
  %158 = vmatprep.subr.mxu0 0.0
  %159 = vmatpush1.xpose.msra.mxu0 0.0
  %160 = vmatprep.mubr.f32.mxu0 0.0
  %161 = vmatmul.mubr.f32.gmra.mrb[0].mxu0 %v85
  %v162 = vpop.f32.mrb[0].mxu0
  %v163 = vadd.f32 0.0, %v162
  %v164 = vpop.f32.mrb[0].mxu0
  %165 = vmatprep.mubr.f32.mxu0 0.0
  %166 = vmatmul.mubr.f32.gmra.mrb[0].mxu0 %v88
  %v167 = vpop.f32.mrb[0].mxu0
  %v168 = vadd.f32 0.0, %v167
  %v169 = vpop.f32.mrb[0].mxu0
  %170 = vdwg.mxu0
  %v172 = vsel %vm47, %v13, 0
  %v175 = vsel %vm47, %v14, 0
  %v178 = vsel %vm47, %v25, 0
  %v181 = vsel %vm47, %v26, 0
  %183 = vmatprep.subr.mxu0 0.0
  %184 = vmatpush1.xpose.msra.mxu0 %v178
  %185 = vmatprep.subr.mxu0 0.0
  %186 = vmatpush1.xpose.msra.mxu0 %v181
  %187 = vmatprep.subr.mxu0 0.0
  %188 = vmatpush1.xpose.msra.mxu0 0.0
  %189 = vmatprep.subr.mxu0 0.0
  %190 = vmatpush1.xpose.msra.mxu0 0.0
  %191 = vmatprep.subr.mxu0 0.0
  %192 = vmatpush1.xpose.msra.mxu0 0.0
  %193 = vmatprep.subr.mxu0 0.0
  %194 = vmatpush1.xpose.msra.mxu0 0.0
  %195 = vmatprep.subr.mxu0 0.0
  %196 = vmatpush1.xpose.msra.mxu0 0.0
  %197 = vmatprep.subr.mxu0 0.0
  %198 = vmatpush1.xpose.msra.mxu0 0.0
  %199 = vmatprep.subr.mxu0 0.0
  %200 = vmatpush1.xpose.msra.mxu0 0.0
  %201 = vmatprep.subr.mxu0 0.0
  %202 = vmatpush1.xpose.msra.mxu0 0.0
  %203 = vmatprep.subr.mxu0 0.0
  %204 = vmatpush1.xpose.msra.mxu0 0.0
  %205 = vmatprep.subr.mxu0 0.0
  %206 = vmatpush1.xpose.msra.mxu0 0.0
  %207 = vmatprep.subr.mxu0 0.0
  %208 = vmatpush1.xpose.msra.mxu0 0.0
  %209 = vmatprep.subr.mxu0 0.0
  %210 = vmatpush1.xpose.msra.mxu0 0.0
  %211 = vmatprep.subr.mxu0 0.0
  %212 = vmatpush1.xpose.msra.mxu0 0.0
  %213 = vmatprep.subr.mxu0 0.0
  %214 = vmatpush1.xpose.msra.mxu0 0.0
  %215 = vmatprep.subr.mxu0 0.0
  %216 = vmatpush1.xpose.msra.mxu0 0.0
  %217 = vmatprep.subr.mxu0 0.0
  %218 = vmatpush1.xpose.msra.mxu0 0.0
  %219 = vmatprep.subr.mxu0 0.0
  %220 = vmatpush1.xpose.msra.mxu0 0.0
  %221 = vmatprep.subr.mxu0 0.0
  %222 = vmatpush1.xpose.msra.mxu0 0.0
  %223 = vmatprep.subr.mxu0 0.0
  %224 = vmatpush1.xpose.msra.mxu0 0.0
  %225 = vmatprep.subr.mxu0 0.0
  %226 = vmatpush1.xpose.msra.mxu0 0.0
  %227 = vmatprep.subr.mxu0 0.0
  %228 = vmatpush1.xpose.msra.mxu0 0.0
  %229 = vmatprep.subr.mxu0 0.0
  %230 = vmatpush1.xpose.msra.mxu0 0.0
  %231 = vmatprep.subr.mxu0 0.0
  %232 = vmatpush1.xpose.msra.mxu0 0.0
  %233 = vmatprep.subr.mxu0 0.0
  %234 = vmatpush1.xpose.msra.mxu0 0.0
  %235 = vmatprep.subr.mxu0 0.0
  %236 = vmatpush1.xpose.msra.mxu0 0.0
  %237 = vmatprep.subr.mxu0 0.0
  %238 = vmatpush1.xpose.msra.mxu0 0.0
  %239 = vmatprep.subr.mxu0 0.0
  %240 = vmatpush1.xpose.msra.mxu0 0.0
  %241 = vmatprep.subr.mxu0 0.0
  %242 = vmatpush1.xpose.msra.mxu0 0.0
  %243 = vmatprep.subr.mxu0 0.0
  %244 = vmatpush1.xpose.msra.mxu0 0.0
  %245 = vmatprep.subr.mxu0 0.0
  %246 = vmatpush1.xpose.msra.mxu0 0.0
  %247 = vmatprep.mubr.f32.mxu0 0.0
  %248 = vmatmul.mubr.f32.gmra.mrb[0].mxu0 %v172
  %v249 = vpop.f32.mrb[0].mxu0
  %v250 = vadd.f32 0.0, %v249
  %v251 = vpop.f32.mrb[0].mxu0
  %252 = vmatprep.mubr.f32.mxu0 0.0
  %253 = vmatmul.mubr.f32.gmra.mrb[0].mxu0 %v175
  %v254 = vpop.f32.mrb[0].mxu0
  %v255 = vadd.f32 0.0, %v254
  %v256 = vpop.f32.mrb[0].mxu0
  %257 = vdwg.mxu0
  %v259 = vsel %vm47, %v15, 0
  %v262 = vsel %vm47, %v16, 0
  %v265 = vsel %vm47, %v27, 0
  %v268 = vsel %vm47, %v28, 0
  %270 = vmatprep.subr.mxu0 0.0
  %271 = vmatpush1.xpose.msra.mxu0 %v265
  %272 = vmatprep.subr.mxu0 0.0
  %273 = vmatpush1.xpose.msra.mxu0 %v268
  %274 = vmatprep.subr.mxu0 0.0
  %275 = vmatpush1.xpose.msra.mxu0 0.0
  %276 = vmatprep.subr.mxu0 0.0
  %277 = vmatpush1.xpose.msra.mxu0 0.0
  %278 = vmatprep.subr.mxu0 0.0
  %279 = vmatpush1.xpose.msra.mxu0 0.0
  %280 = vmatprep.subr.mxu0 0.0
  %281 = vmatpush1.xpose.msra.mxu0 0.0
  %282 = vmatprep.subr.mxu0 0.0
  %283 = vmatpush1.xpose.msra.mxu0 0.0
  %284 = vmatprep.subr.mxu0 0.0
  %285 = vmatpush1.xpose.msra.mxu0 0.0
  %286 = vmatprep.subr.mxu0 0.0
  %287 = vmatpush1.xpose.msra.mxu0 0.0
  %288 = vmatprep.subr.mxu0 0.0
  %289 = vmatpush1.xpose.msra.mxu0 0.0
  %290 = vmatprep.subr.mxu0 0.0
  %291 = vmatpush1.xpose.msra.mxu0 0.0
  %292 = vmatprep.subr.mxu0 0.0
  %293 = vmatpush1.xpose.msra.mxu0 0.0
  %294 = vmatprep.subr.mxu0 0.0
  %295 = vmatpush1.xpose.msra.mxu0 0.0
  %296 = vmatprep.subr.mxu0 0.0
  %297 = vmatpush1.xpose.msra.mxu0 0.0
  %298 = vmatprep.subr.mxu0 0.0
  %299 = vmatpush1.xpose.msra.mxu0 0.0
  %300 = vmatprep.subr.mxu0 0.0
  %301 = vmatpush1.xpose.msra.mxu0 0.0
  %302 = vmatprep.subr.mxu0 0.0
  %303 = vmatpush1.xpose.msra.mxu0 0.0
  %304 = vmatprep.subr.mxu0 0.0
  %305 = vmatpush1.xpose.msra.mxu0 0.0
  %306 = vmatprep.subr.mxu0 0.0
  %307 = vmatpush1.xpose.msra.mxu0 0.0
  %308 = vmatprep.subr.mxu0 0.0
  %309 = vmatpush1.xpose.msra.mxu0 0.0
  %310 = vmatprep.subr.mxu0 0.0
  %311 = vmatpush1.xpose.msra.mxu0 0.0
  %312 = vmatprep.subr.mxu0 0.0
  %313 = vmatpush1.xpose.msra.mxu0 0.0
  %314 = vmatprep.subr.mxu0 0.0
  %315 = vmatpush1.xpose.msra.mxu0 0.0
  %316 = vmatprep.subr.mxu0 0.0
  %317 = vmatpush1.xpose.msra.mxu0 0.0
  %318 = vmatprep.subr.mxu0 0.0
  %319 = vmatpush1.xpose.msra.mxu0 0.0
  %320 = vmatprep.subr.mxu0 0.0
  %321 = vmatpush1.xpose.msra.mxu0 0.0
  %322 = vmatprep.subr.mxu0 0.0
  %323 = vmatpush1.xpose.msra.mxu0 0.0
  %324 = vmatprep.subr.mxu0 0.0
  %325 = vmatpush1.xpose.msra.mxu0 0.0
  %326 = vmatprep.subr.mxu0 0.0
  %327 = vmatpush1.xpose.msra.mxu0 0.0
  %328 = vmatprep.subr.mxu0 0.0
  %329 = vmatpush1.xpose.msra.mxu0 0.0
  %330 = vmatprep.subr.mxu0 0.0
  %331 = vmatpush1.xpose.msra.mxu0 0.0
  %332 = vmatprep.subr.mxu0 0.0
  %333 = vmatpush1.xpose.msra.mxu0 0.0
  %334 = vmatprep.mubr.f32.mxu0 0.0
  %335 = vmatmul.mubr.f32.gmra.mrb[0].mxu0 %v259
  %v336 = vpop.f32.mrb[0].mxu0
  %v337 = vadd.f32 0.0, %v336
  %v338 = vpop.f32.mrb[0].mxu0
  %339 = vmatprep.mubr.f32.mxu0 0.0
  %340 = vmatmul.mubr.f32.gmra.mrb[0].mxu0 %v262
  %v341 = vpop.f32.mrb[0].mxu0
  %v342 = vadd.f32 0.0, %v341
  %v343 = vpop.f32.mrb[0].mxu0
  %344 = vdwg.mxu0
  %v346 = vsel %vm47, %v17, 0
  %v349 = vsel %vm47, %v18, 0
  %v352 = vsel %vm47, %v29, 0
  %v355 = vsel %vm47, %v30, 0
  %357 = vmatprep.subr.mxu0 0.0
  %358 = vmatpush1.xpose.msra.mxu0 %v352
  %359 = vmatprep.subr.mxu0 0.0
  %360 = vmatpush1.xpose.msra.mxu0 %v355
  %361 = vmatprep.subr.mxu0 0.0
  %362 = vmatpush1.xpose.msra.mxu0 0.0
  %363 = vmatprep.subr.mxu0 0.0
  %364 = vmatpush1.xpose.msra.mxu0 0.0
  %365 = vmatprep.subr.mxu0 0.0
  %366 = vmatpush1.xpose.msra.mxu0 0.0
  %367 = vmatprep.subr.mxu0 0.0
  %368 = vmatpush1.xpose.msra.mxu0 0.0
  %369 = vmatprep.subr.mxu0 0.0
  %370 = vmatpush1.xpose.msra.mxu0 0.0
  %371 = vmatprep.subr.mxu0 0.0
  %372 = vmatpush1.xpose.msra.mxu0 0.0
  %373 = vmatprep.subr.mxu0 0.0
  %374 = vmatpush1.xpose.msra.mxu0 0.0
  %375 = vmatprep.subr.mxu0 0.0
  %376 = vmatpush1.xpose.msra.mxu0 0.0
  %377 = vmatprep.subr.mxu0 0.0
  %378 = vmatpush1.xpose.msra.mxu0 0.0
  %379 = vmatprep.subr.mxu0 0.0
  %380 = vmatpush1.xpose.msra.mxu0 0.0
  %381 = vmatprep.subr.mxu0 0.0
  %382 = vmatpush1.xpose.msra.mxu0 0.0
  %383 = vmatprep.subr.mxu0 0.0
  %384 = vmatpush1.xpose.msra.mxu0 0.0
  %385 = vmatprep.subr.mxu0 0.0
  %386 = vmatpush1.xpose.msra.mxu0 0.0
  %387 = vmatprep.subr.mxu0 0.0
  %388 = vmatpush1.xpose.msra.mxu0 0.0
  %389 = vmatprep.subr.mxu0 0.0
  %390 = vmatpush1.xpose.msra.mxu0 0.0
  %391 = vmatprep.subr.mxu0 0.0
  %392 = vmatpush1.xpose.msra.mxu0 0.0
  %393 = vmatprep.subr.mxu0 0.0
  %394 = vmatpush1.xpose.msra.mxu0 0.0
  %395 = vmatprep.subr.mxu0 0.0
  %396 = vmatpush1.xpose.msra.mxu0 0.0
  %397 = vmatprep.subr.mxu0 0.0
  %398 = vmatpush1.xpose.msra.mxu0 0.0
  %399 = vmatprep.subr.mxu0 0.0
  %400 = vmatpush1.xpose.msra.mxu0 0.0
  %401 = vmatprep.subr.mxu0 0.0
  %402 = vmatpush1.xpose.msra.mxu0 0.0
  %403 = vmatprep.subr.mxu0 0.0
  %404 = vmatpush1.xpose.msra.mxu0 0.0
  %405 = vmatprep.subr.mxu0 0.0
  %406 = vmatpush1.xpose.msra.mxu0 0.0
  %407 = vmatprep.subr.mxu0 0.0
  %408 = vmatpush1.xpose.msra.mxu0 0.0
  %409 = vmatprep.subr.mxu0 0.0
  %410 = vmatpush1.xpose.msra.mxu0 0.0
  %411 = vmatprep.subr.mxu0 0.0
  %412 = vmatpush1.xpose.msra.mxu0 0.0
  %413 = vmatprep.subr.mxu0 0.0
  %414 = vmatpush1.xpose.msra.mxu0 0.0
  %415 = vmatprep.subr.mxu0 0.0
  %416 = vmatpush1.xpose.msra.mxu0 0.0
  %417 = vmatprep.subr.mxu0 0.0
  %418 = vmatpush1.xpose.msra.mxu0 0.0
  %419 = vmatprep.subr.mxu0 0.0
  %420 = vmatpush1.xpose.msra.mxu0 0.0
  %421 = vmatprep.mubr.f32.mxu0 0.0
  %422 = vmatmul.mubr.f32.gmra.mrb[0].mxu0 %v346
  %v423 = vpop.f32.mrb[0].mxu0
  %v424 = vadd.f32 0.0, %v423
  %v425 = vpop.f32.mrb[0].mxu0
  %426 = vmatprep.mubr.f32.mxu0 0.0
  %427 = vmatmul.mubr.f32.gmra.mrb[0].mxu0 %v349
  %v428 = vpop.f32.mrb[0].mxu0
  %v429 = vadd.f32 0.0, %v428
  %v430 = vpop.f32.mrb[0].mxu0
  %431 = vdwg.mxu0
  %v433 = vsel %vm47, %v19, 0
  %v436 = vsel %vm47, %v20, 0
  %v439 = vsel %vm47, %v31, 0
  %v442 = vsel %vm47, %v32, 0
  %444 = vmatprep.subr.mxu0 0.0
  %445 = vmatpush1.xpose.msra.mxu0 %v439
  %446 = vmatprep.subr.mxu0 0.0
  %447 = vmatpush1.xpose.msra.mxu0 %v442
  %448 = vmatprep.subr.mxu0 0.0
  %449 = vmatpush1.xpose.msra.mxu0 0.0
  %450 = vmatprep.subr.mxu0 0.0
  %451 = vmatpush1.xpose.msra.mxu0 0.0
  %452 = vmatprep.subr.mxu0 0.0
  %453 = vmatpush1.xpose.msra.mxu0 0.0
  %454 = vmatprep.subr.mxu0 0.0
  %455 = vmatpush1.xpose.msra.mxu0 0.0
  %456 = vmatprep.subr.mxu0 0.0
  %457 = vmatpush1.xpose.msra.mxu0 0.0
  %458 = vmatprep.subr.mxu0 0.0
  %459 = vmatpush1.xpose.msra.mxu0 0.0
  %460 = vmatprep.subr.mxu0 0.0
  %461 = vmatpush1.xpose.msra.mxu0 0.0
  %462 = vmatprep.subr.mxu0 0.0
  %463 = vmatpush1.xpose.msra.mxu0 0.0
  %464 = vmatprep.subr.mxu0 0.0
  %465 = vmatpush1.xpose.msra.mxu0 0.0
  %466 = vmatprep.subr.mxu0 0.0
  %467 = vmatpush1.xpose.msra.mxu0 0.0
  %468 = vmatprep.subr.mxu0 0.0
  %469 = vmatpush1.xpose.msra.mxu0 0.0
  %470 = vmatprep.subr.mxu0 0.0
  %471 = vmatpush1.xpose.msra.mxu0 0.0
  %472 = vmatprep.subr.mxu0 0.0
  %473 = vmatpush1.xpose.msra.mxu0 0.0
  %474 = vmatprep.subr.mxu0 0.0
  %475 = vmatpush1.xpose.msra.mxu0 0.0
  %476 = vmatprep.subr.mxu0 0.0
  %477 = vmatpush1.xpose.msra.mxu0 0.0
  %478 = vmatprep.subr.mxu0 0.0
  %479 = vmatpush1.xpose.msra.mxu0 0.0
  %480 = vmatprep.subr.mxu0 0.0
  %481 = vmatpush1.xpose.msra.mxu0 0.0
  %482 = vmatprep.subr.mxu0 0.0
  %483 = vmatpush1.xpose.msra.mxu0 0.0
  %484 = vmatprep.subr.mxu0 0.0
  %485 = vmatpush1.xpose.msra.mxu0 0.0
  %486 = vmatprep.subr.mxu0 0.0
  %487 = vmatpush1.xpose.msra.mxu0 0.0
  %488 = vmatprep.subr.mxu0 0.0
  %489 = vmatpush1.xpose.msra.mxu0 0.0
  %490 = vmatprep.subr.mxu0 0.0
  %491 = vmatpush1.xpose.msra.mxu0 0.0
  %492 = vmatprep.subr.mxu0 0.0
  %493 = vmatpush1.xpose.msra.mxu0 0.0
  %494 = vmatprep.subr.mxu0 0.0
  %495 = vmatpush1.xpose.msra.mxu0 0.0
  %496 = vmatprep.subr.mxu0 0.0
  %497 = vmatpush1.xpose.msra.mxu0 0.0
  %498 = vmatprep.subr.mxu0 0.0
  %499 = vmatpush1.xpose.msra.mxu0 0.0
  %500 = vmatprep.subr.mxu0 0.0
  %501 = vmatpush1.xpose.msra.mxu0 0.0
  %502 = vmatprep.subr.mxu0 0.0
  %503 = vmatpush1.xpose.msra.mxu0 0.0
  %504 = vmatprep.subr.mxu0 0.0
  %505 = vmatpush1.xpose.msra.mxu0 0.0
  %506 = vmatprep.subr.mxu0 0.0
  %507 = vmatpush1.xpose.msra.mxu0 0.0
  %508 = vmatprep.mubr.f32.mxu0 0.0
  %509 = vmatmul.mubr.f32.gmra.mrb[0].mxu0 %v433
  %v510 = vpop.f32.mrb[0].mxu0
  %v511 = vadd.f32 0.0, %v510
  %v512 = vpop.f32.mrb[0].mxu0
  %513 = vmatprep.mubr.f32.mxu0 0.0
  %514 = vmatmul.mubr.f32.gmra.mrb[0].mxu0 %v436
  %v515 = vpop.f32.mrb[0].mxu0
  %v516 = vadd.f32 0.0, %v515
  %v517 = vpop.f32.mrb[0].mxu0
  %518 = vdwg.mxu0
  %v520 = vsel %vm47, %v21, 0
  %v523 = vsel %vm47, %v22, 0
  %v526 = vsel %vm47, %v33, 0
  %v529 = vsel %vm47, %v34, 0
  %531 = vmatprep.subr.mxu0 0.0
  %532 = vmatpush1.xpose.msra.mxu0 %v526
  %533 = vmatprep.subr.mxu0 0.0
  %534 = vmatpush1.xpose.msra.mxu0 %v529
  %535 = vmatprep.subr.mxu0 0.0
  %536 = vmatpush1.xpose.msra.mxu0 0.0
  %537 = vmatprep.subr.mxu0 0.0
  %538 = vmatpush1.xpose.msra.mxu0 0.0
  %539 = vmatprep.subr.mxu0 0.0
  %540 = vmatpush1.xpose.msra.mxu0 0.0
  %541 = vmatprep.subr.mxu0 0.0
  %542 = vmatpush1.xpose.msra.mxu0 0.0
  %543 = vmatprep.subr.mxu0 0.0
  %544 = vmatpush1.xpose.msra.mxu0 0.0
  %545 = vmatprep.subr.mxu0 0.0
  %546 = vmatpush1.xpose.msra.mxu0 0.0
  %547 = vmatprep.subr.mxu0 0.0
  %548 = vmatpush1.xpose.msra.mxu0 0.0
  %549 = vmatprep.subr.mxu0 0.0
  %550 = vmatpush1.xpose.msra.mxu0 0.0
  %551 = vmatprep.subr.mxu0 0.0
  %552 = vmatpush1.xpose.msra.mxu0 0.0
  %553 = vmatprep.subr.mxu0 0.0
  %554 = vmatpush1.xpose.msra.mxu0 0.0
  %555 = vmatprep.subr.mxu0 0.0
  %556 = vmatpush1.xpose.msra.mxu0 0.0
  %557 = vmatprep.subr.mxu0 0.0
  %558 = vmatpush1.xpose.msra.mxu0 0.0
  %559 = vmatprep.subr.mxu0 0.0
  %560 = vmatpush1.xpose.msra.mxu0 0.0
  %561 = vmatprep.subr.mxu0 0.0
  %562 = vmatpush1.xpose.msra.mxu0 0.0
  %563 = vmatprep.subr.mxu0 0.0
  %564 = vmatpush1.xpose.msra.mxu0 0.0
  %565 = vmatprep.subr.mxu0 0.0
  %566 = vmatpush1.xpose.msra.mxu0 0.0
  %567 = vmatprep.subr.mxu0 0.0
  %568 = vmatpush1.xpose.msra.mxu0 0.0
  %569 = vmatprep.subr.mxu0 0.0
  %570 = vmatpush1.xpose.msra.mxu0 0.0
  %571 = vmatprep.subr.mxu0 0.0
  %572 = vmatpush1.xpose.msra.mxu0 0.0
  %573 = vmatprep.subr.mxu0 0.0
  %574 = vmatpush1.xpose.msra.mxu0 0.0
  %575 = vmatprep.subr.mxu0 0.0
  %576 = vmatpush1.xpose.msra.mxu0 0.0
  %577 = vmatprep.subr.mxu0 0.0
  %578 = vmatpush1.xpose.msra.mxu0 0.0
  %579 = vmatprep.subr.mxu0 0.0
  %580 = vmatpush1.xpose.msra.mxu0 0.0
  %581 = vmatprep.subr.mxu0 0.0
  %582 = vmatpush1.xpose.msra.mxu0 0.0
  %583 = vmatprep.subr.mxu0 0.0
  %584 = vmatpush1.xpose.msra.mxu0 0.0
  %585 = vmatprep.subr.mxu0 0.0
  %586 = vmatpush1.xpose.msra.mxu0 0.0
  %587 = vmatprep.subr.mxu0 0.0
  %588 = vmatpush1.xpose.msra.mxu0 0.0
  %589 = vmatprep.subr.mxu0 0.0
  %590 = vmatpush1.xpose.msra.mxu0 0.0
  %591 = vmatprep.subr.mxu0 0.0
  %592 = vmatpush1.xpose.msra.mxu0 0.0
  %593 = vmatprep.subr.mxu0 0.0
  %594 = vmatpush1.xpose.msra.mxu0 0.0
  %595 = vmatprep.mubr.f32.mxu0 0.0
  %596 = vmatmul.mubr.f32.gmra.mrb[0].mxu0 %v520
  %v597 = vpop.f32.mrb[0].mxu0
  %v598 = vadd.f32 0.0, %v597
  %v599 = vpop.f32.mrb[0].mxu0
  %600 = vmatprep.mubr.f32.mxu0 0.0
  %601 = vmatmul.mubr.f32.gmra.mrb[0].mxu0 %v523
  %v602 = vpop.f32.mrb[0].mxu0
  %v603 = vadd.f32 0.0, %v602
  %v604 = vpop.f32.mrb[0].mxu0
  %605 = vdwg.mxu0
  %v606 = vmul.f32 %v163, 2.0
  %v607 = vmul.f32 %v168, 2.0
  %v608 = vmul.f32 %v250, 2.0
  %v609 = vmul.f32 %v255, 2.0
  %v610 = vmul.f32 %v337, 2.0
  %v611 = vmul.f32 %v342, 2.0
  %v612 = vmul.f32 %v424, 2.0
  %v613 = vmul.f32 %v429, 2.0
  %v614 = vmul.f32 %v511, 2.0
  %v615 = vmul.f32 %v516, 2.0
  %v616 = vmul.f32 %v598, 2.0
  %v617 = vmul.f32 %v603, 2.0
  %v630 = vlaneseq
  %v631 = vshrl.u32 %v630, 7
  %v632 = vsub.s32 0, %v631
  %v633 = vrot.slane %v606, %v632
  %635 = vbcast.lane.b32.xlu0 %v633, 256
  %v636 = vpop.permute.xlu0 %635
  %s638 = sor.u32 256, 8
  %639 = vbcast.lane.b32.xlu0 %v633, %s638
  %v640 = vpop.permute.xlu0 %639
  %v641 = vlaneseq
  %v642 = vshrl.u32 %v641, 7
  %v643 = vsub.s32 1, %v642
  %v644 = vrot.slane %v606, %v643
  %646 = vbcast.lane.b32.xlu0 %v644, 256
  %v647 = vpop.permute.xlu0 %646
  %s649 = sor.u32 256, 8
  %650 = vbcast.lane.b32.xlu0 %v644, %s649
  %v651 = vpop.permute.xlu0 %650
  %v652 = vlaneseq
  %v653 = vshrl.u32 %v652, 7
  %v654 = vsub.s32 2, %v653
  %v655 = vrot.slane %v606, %v654
  %657 = vbcast.lane.b32.xlu0 %v655, 256
  %v658 = vpop.permute.xlu0 %657
  %s660 = sor.u32 256, 8
  %661 = vbcast.lane.b32.xlu0 %v655, %s660
  %v662 = vpop.permute.xlu0 %661
  %v663 = vlaneseq
  %v664 = vshrl.u32 %v663, 7
  %v665 = vsub.s32 3, %v664
  %v666 = vrot.slane %v606, %v665
  %668 = vbcast.lane.b32.xlu0 %v666, 256
  %v669 = vpop.permute.xlu0 %668
  %s671 = sor.u32 256, 8
  %672 = vbcast.lane.b32.xlu0 %v666, %s671
  %v673 = vpop.permute.xlu0 %672
  %v674 = vlaneseq
  %v675 = vshrl.u32 %v674, 7
  %v676 = vsub.s32 4, %v675
  %v677 = vrot.slane %v606, %v676
  %679 = vbcast.lane.b32.xlu0 %v677, 256
  %v680 = vpop.permute.xlu0 %679
  %s682 = sor.u32 256, 8
  %683 = vbcast.lane.b32.xlu0 %v677, %s682
  %v684 = vpop.permute.xlu0 %683
  %v685 = vlaneseq
  %v686 = vshrl.u32 %v685, 7
  %v687 = vsub.s32 5, %v686
  %v688 = vrot.slane %v606, %v687
  %690 = vbcast.lane.b32.xlu0 %v688, 256
  %v691 = vpop.permute.xlu0 %690
  %s693 = sor.u32 256, 8
  %694 = vbcast.lane.b32.xlu0 %v688, %s693
  %v695 = vpop.permute.xlu0 %694
  %v696 = vlaneseq
  %v697 = vshrl.u32 %v696, 7
  %v698 = vsub.s32 6, %v697
  %v699 = vrot.slane %v606, %v698
  %701 = vbcast.lane.b32.xlu0 %v699, 256
  %v702 = vpop.permute.xlu0 %701
  %s704 = sor.u32 256, 8
  %705 = vbcast.lane.b32.xlu0 %v699, %s704
  %v706 = vpop.permute.xlu0 %705
  %v707 = vlaneseq
  %v708 = vshrl.u32 %v707, 7
  %v709 = vsub.s32 7, %v708
  %v710 = vrot.slane %v606, %v709
  %712 = vbcast.lane.b32.xlu0 %v710, 256
  %v713 = vpop.permute.xlu0 %712
  %s715 = sor.u32 256, 8
  %716 = vbcast.lane.b32.xlu0 %v710, %s715
  %v717 = vpop.permute.xlu0 %716
  %v718 = vlaneseq
  %v719 = vshrl.u32 %v718, 7
  %v720 = vsub.s32 0, %v719
  %v721 = vrot.slane %v607, %v720
  %723 = vbcast.lane.b32.xlu0 %v721, 256
  %v724 = vpop.permute.xlu0 %723
  %s726 = sor.u32 256, 8
  %727 = vbcast.lane.b32.xlu0 %v721, %s726
  %v728 = vpop.permute.xlu0 %727
  %v729 = vlaneseq
  %v730 = vshrl.u32 %v729, 7
  %v731 = vsub.s32 1, %v730
  %v732 = vrot.slane %v607, %v731
  %734 = vbcast.lane.b32.xlu0 %v732, 256
  %v735 = vpop.permute.xlu0 %734
  %s737 = sor.u32 256, 8
  %738 = vbcast.lane.b32.xlu0 %v732, %s737
  %v739 = vpop.permute.xlu0 %738
  %v740 = vlaneseq
  %v741 = vshrl.u32 %v740, 7
  %v742 = vsub.s32 2, %v741
  %v743 = vrot.slane %v607, %v742
  %745 = vbcast.lane.b32.xlu0 %v743, 256
  %v746 = vpop.permute.xlu0 %745
  %s748 = sor.u32 256, 8
  %749 = vbcast.lane.b32.xlu0 %v743, %s748
  %v750 = vpop.permute.xlu0 %749
  %v751 = vlaneseq
  %v752 = vshrl.u32 %v751, 7
  %v753 = vsub.s32 3, %v752
  %v754 = vrot.slane %v607, %v753
  %756 = vbcast.lane.b32.xlu0 %v754, 256
  %v757 = vpop.permute.xlu0 %756
  %s759 = sor.u32 256, 8
  %760 = vbcast.lane.b32.xlu0 %v754, %s759
  %v761 = vpop.permute.xlu0 %760
  %v762 = vlaneseq
  %v763 = vshrl.u32 %v762, 7
  %v764 = vsub.s32 4, %v763
  %v765 = vrot.slane %v607, %v764
  %767 = vbcast.lane.b32.xlu0 %v765, 256
  %v768 = vpop.permute.xlu0 %767
  %s770 = sor.u32 256, 8
  %771 = vbcast.lane.b32.xlu0 %v765, %s770
  %v772 = vpop.permute.xlu0 %771
  %v773 = vlaneseq
  %v774 = vshrl.u32 %v773, 7
  %v775 = vsub.s32 5, %v774
  %v776 = vrot.slane %v607, %v775
  %778 = vbcast.lane.b32.xlu0 %v776, 256
  %v779 = vpop.permute.xlu0 %778
  %s781 = sor.u32 256, 8
  %782 = vbcast.lane.b32.xlu0 %v776, %s781
  %v783 = vpop.permute.xlu0 %782
  %v784 = vlaneseq
  %v785 = vshrl.u32 %v784, 7
  %v786 = vsub.s32 6, %v785
  %v787 = vrot.slane %v607, %v786
  %789 = vbcast.lane.b32.xlu0 %v787, 256
  %v790 = vpop.permute.xlu0 %789
  %s792 = sor.u32 256, 8
  %793 = vbcast.lane.b32.xlu0 %v787, %s792
  %v794 = vpop.permute.xlu0 %793
  %v795 = vlaneseq
  %v796 = vshrl.u32 %v795, 7
  %v797 = vsub.s32 7, %v796
  %v798 = vrot.slane %v607, %v797
  %800 = vbcast.lane.b32.xlu0 %v798, 256
  %v801 = vpop.permute.xlu0 %800
  %s803 = sor.u32 256, 8
  %804 = vbcast.lane.b32.xlu0 %v798, %s803
  %v805 = vpop.permute.xlu0 %804
  %v806 = vlaneseq
  %v807 = vshrl.u32 %v806, 7
  %v808 = vsub.s32 0, %v807
  %v809 = vrot.slane %v608, %v808
  %811 = vbcast.lane.b32.xlu0 %v809, 256
  %v812 = vpop.permute.xlu0 %811
  %s814 = sor.u32 256, 8
  %815 = vbcast.lane.b32.xlu0 %v809, %s814
  %v816 = vpop.permute.xlu0 %815
  %v817 = vlaneseq
  %v818 = vshrl.u32 %v817, 7
  %v819 = vsub.s32 1, %v818
  %v820 = vrot.slane %v608, %v819
  %822 = vbcast.lane.b32.xlu0 %v820, 256
  %v823 = vpop.permute.xlu0 %822
  %s825 = sor.u32 256, 8
  %826 = vbcast.lane.b32.xlu0 %v820, %s825
  %v827 = vpop.permute.xlu0 %826
  %v828 = vlaneseq
  %v829 = vshrl.u32 %v828, 7
  %v830 = vsub.s32 2, %v829
  %v831 = vrot.slane %v608, %v830
  %833 = vbcast.lane.b32.xlu0 %v831, 256
  %v834 = vpop.permute.xlu0 %833
  %s836 = sor.u32 256, 8
  %837 = vbcast.lane.b32.xlu0 %v831, %s836
  %v838 = vpop.permute.xlu0 %837
  %v839 = vlaneseq
  %v840 = vshrl.u32 %v839, 7
  %v841 = vsub.s32 3, %v840
  %v842 = vrot.slane %v608, %v841
  %844 = vbcast.lane.b32.xlu0 %v842, 256
  %v845 = vpop.permute.xlu0 %844
  %s847 = sor.u32 256, 8
  %848 = vbcast.lane.b32.xlu0 %v842, %s847
  %v849 = vpop.permute.xlu0 %848
  %v850 = vlaneseq
  %v851 = vshrl.u32 %v850, 7
  %v852 = vsub.s32 4, %v851
  %v853 = vrot.slane %v608, %v852
  %855 = vbcast.lane.b32.xlu0 %v853, 256
  %v856 = vpop.permute.xlu0 %855
  %s858 = sor.u32 256, 8
  %859 = vbcast.lane.b32.xlu0 %v853, %s858
  %v860 = vpop.permute.xlu0 %859
  %v861 = vlaneseq
  %v862 = vshrl.u32 %v861, 7
  %v863 = vsub.s32 5, %v862
  %v864 = vrot.slane %v608, %v863
  %866 = vbcast.lane.b32.xlu0 %v864, 256
  %v867 = vpop.permute.xlu0 %866
  %s869 = sor.u32 256, 8
  %870 = vbcast.lane.b32.xlu0 %v864, %s869
  %v871 = vpop.permute.xlu0 %870
  %v872 = vlaneseq
  %v873 = vshrl.u32 %v872, 7
  %v874 = vsub.s32 6, %v873
  %v875 = vrot.slane %v608, %v874
  %877 = vbcast.lane.b32.xlu0 %v875, 256
  %v878 = vpop.permute.xlu0 %877
  %s880 = sor.u32 256, 8
  %881 = vbcast.lane.b32.xlu0 %v875, %s880
  %v882 = vpop.permute.xlu0 %881
  %v883 = vlaneseq
  %v884 = vshrl.u32 %v883, 7
  %v885 = vsub.s32 7, %v884
  %v886 = vrot.slane %v608, %v885
  %888 = vbcast.lane.b32.xlu0 %v886, 256
  %v889 = vpop.permute.xlu0 %888
  %s891 = sor.u32 256, 8
  %892 = vbcast.lane.b32.xlu0 %v886, %s891
  %v893 = vpop.permute.xlu0 %892
  %v894 = vlaneseq
  %v895 = vshrl.u32 %v894, 7
  %v896 = vsub.s32 0, %v895
  %v897 = vrot.slane %v609, %v896
  %899 = vbcast.lane.b32.xlu0 %v897, 256
  %v900 = vpop.permute.xlu0 %899
  %s902 = sor.u32 256, 8
  %903 = vbcast.lane.b32.xlu0 %v897, %s902
  %v904 = vpop.permute.xlu0 %903
  %v905 = vlaneseq
  %v906 = vshrl.u32 %v905, 7
  %v907 = vsub.s32 1, %v906
  %v908 = vrot.slane %v609, %v907
  %910 = vbcast.lane.b32.xlu0 %v908, 256
  %v911 = vpop.permute.xlu0 %910
  %s913 = sor.u32 256, 8
  %914 = vbcast.lane.b32.xlu0 %v908, %s913
  %v915 = vpop.permute.xlu0 %914
  %v916 = vlaneseq
  %v917 = vshrl.u32 %v916, 7
  %v918 = vsub.s32 2, %v917
  %v919 = vrot.slane %v609, %v918
  %921 = vbcast.lane.b32.xlu0 %v919, 256
  %v922 = vpop.permute.xlu0 %921
  %s924 = sor.u32 256, 8
  %925 = vbcast.lane.b32.xlu0 %v919, %s924
  %v926 = vpop.permute.xlu0 %925
  %v927 = vlaneseq
  %v928 = vshrl.u32 %v927, 7
  %v929 = vsub.s32 3, %v928
  %v930 = vrot.slane %v609, %v929
  %932 = vbcast.lane.b32.xlu0 %v930, 256
  %v933 = vpop.permute.xlu0 %932
  %s935 = sor.u32 256, 8
  %936 = vbcast.lane.b32.xlu0 %v930, %s935
  %v937 = vpop.permute.xlu0 %936
  %v938 = vlaneseq
  %v939 = vshrl.u32 %v938, 7
  %v940 = vsub.s32 4, %v939
  %v941 = vrot.slane %v609, %v940
  %943 = vbcast.lane.b32.xlu0 %v941, 256
  %v944 = vpop.permute.xlu0 %943
  %s946 = sor.u32 256, 8
  %947 = vbcast.lane.b32.xlu0 %v941, %s946
  %v948 = vpop.permute.xlu0 %947
  %v949 = vlaneseq
  %v950 = vshrl.u32 %v949, 7
  %v951 = vsub.s32 5, %v950
  %v952 = vrot.slane %v609, %v951
  %954 = vbcast.lane.b32.xlu0 %v952, 256
  %v955 = vpop.permute.xlu0 %954
  %s957 = sor.u32 256, 8
  %958 = vbcast.lane.b32.xlu0 %v952, %s957
  %v959 = vpop.permute.xlu0 %958
  %v960 = vlaneseq
  %v961 = vshrl.u32 %v960, 7
  %v962 = vsub.s32 6, %v961
  %v963 = vrot.slane %v609, %v962
  %965 = vbcast.lane.b32.xlu0 %v963, 256
  %v966 = vpop.permute.xlu0 %965
  %s968 = sor.u32 256, 8
  %969 = vbcast.lane.b32.xlu0 %v963, %s968
  %v970 = vpop.permute.xlu0 %969
  %v971 = vlaneseq
  %v972 = vshrl.u32 %v971, 7
  %v973 = vsub.s32 7, %v972
  %v974 = vrot.slane %v609, %v973
  %976 = vbcast.lane.b32.xlu0 %v974, 256
  %v977 = vpop.permute.xlu0 %976
  %s979 = sor.u32 256, 8
  %980 = vbcast.lane.b32.xlu0 %v974, %s979
  %v981 = vpop.permute.xlu0 %980
  %v982 = vlaneseq
  %v983 = vshrl.u32 %v982, 7
  %v984 = vsub.s32 0, %v983
  %v985 = vrot.slane %v610, %v984
  %987 = vbcast.lane.b32.xlu0 %v985, 256
  %v988 = vpop.permute.xlu0 %987
  %s990 = sor.u32 256, 8
  %991 = vbcast.lane.b32.xlu0 %v985, %s990
  %v992 = vpop.permute.xlu0 %991
  %v993 = vlaneseq
  %v994 = vshrl.u32 %v993, 7
  %v995 = vsub.s32 1, %v994
  %v996 = vrot.slane %v610, %v995
  %998 = vbcast.lane.b32.xlu0 %v996, 256
  %v999 = vpop.permute.xlu0 %998
  %s1001 = sor.u32 256, 8
  %1002 = vbcast.lane.b32.xlu0 %v996, %s1001
  %v1003 = vpop.permute.xlu0 %1002
  %v1004 = vlaneseq
  %v1005 = vshrl.u32 %v1004, 7
  %v1006 = vsub.s32 2, %v1005
  %v1007 = vrot.slane %v610, %v1006
  %1009 = vbcast.lane.b32.xlu0 %v1007, 256
  %v1010 = vpop.permute.xlu0 %1009
  %s1012 = sor.u32 256, 8
  %1013 = vbcast.lane.b32.xlu0 %v1007, %s1012
  %v1014 = vpop.permute.xlu0 %1013
  %v1015 = vlaneseq
  %v1016 = vshrl.u32 %v1015, 7
  %v1017 = vsub.s32 3, %v1016
  %v1018 = vrot.slane %v610, %v1017
  %1020 = vbcast.lane.b32.xlu0 %v1018, 256
  %v1021 = vpop.permute.xlu0 %1020
  %s1023 = sor.u32 256, 8
  %1024 = vbcast.lane.b32.xlu0 %v1018, %s1023
  %v1025 = vpop.permute.xlu0 %1024
  %v1026 = vlaneseq
  %v1027 = vshrl.u32 %v1026, 7
  %v1028 = vsub.s32 4, %v1027
  %v1029 = vrot.slane %v610, %v1028
  %1031 = vbcast.lane.b32.xlu0 %v1029, 256
  %v1032 = vpop.permute.xlu0 %1031
  %s1034 = sor.u32 256, 8
  %1035 = vbcast.lane.b32.xlu0 %v1029, %s1034
  %v1036 = vpop.permute.xlu0 %1035
  %v1037 = vlaneseq
  %v1038 = vshrl.u32 %v1037, 7
  %v1039 = vsub.s32 5, %v1038
  %v1040 = vrot.slane %v610, %v1039
  %1042 = vbcast.lane.b32.xlu0 %v1040, 256
  %v1043 = vpop.permute.xlu0 %1042
  %s1045 = sor.u32 256, 8
  %1046 = vbcast.lane.b32.xlu0 %v1040, %s1045
  %v1047 = vpop.permute.xlu0 %1046
  %v1048 = vlaneseq
  %v1049 = vshrl.u32 %v1048, 7
  %v1050 = vsub.s32 6, %v1049
  %v1051 = vrot.slane %v610, %v1050
  %1053 = vbcast.lane.b32.xlu0 %v1051, 256
  %v1054 = vpop.permute.xlu0 %1053
  %s1056 = sor.u32 256, 8
  %1057 = vbcast.lane.b32.xlu0 %v1051, %s1056
  %v1058 = vpop.permute.xlu0 %1057
  %v1059 = vlaneseq
  %v1060 = vshrl.u32 %v1059, 7
  %v1061 = vsub.s32 7, %v1060
  %v1062 = vrot.slane %v610, %v1061
  %1064 = vbcast.lane.b32.xlu0 %v1062, 256
  %v1065 = vpop.permute.xlu0 %1064
  %s1067 = sor.u32 256, 8
  %1068 = vbcast.lane.b32.xlu0 %v1062, %s1067
  %v1069 = vpop.permute.xlu0 %1068
  %v1070 = vlaneseq
  %v1071 = vshrl.u32 %v1070, 7
  %v1072 = vsub.s32 0, %v1071
  %v1073 = vrot.slane %v611, %v1072
  %1075 = vbcast.lane.b32.xlu0 %v1073, 256
  %v1076 = vpop.permute.xlu0 %1075
  %s1078 = sor.u32 256, 8
  %1079 = vbcast.lane.b32.xlu0 %v1073, %s1078
  %v1080 = vpop.permute.xlu0 %1079
  %v1081 = vlaneseq
  %v1082 = vshrl.u32 %v1081, 7
  %v1083 = vsub.s32 1, %v1082
  %v1084 = vrot.slane %v611, %v1083
  %1086 = vbcast.lane.b32.xlu0 %v1084, 256
  %v1087 = vpop.permute.xlu0 %1086
  %s1089 = sor.u32 256, 8
  %1090 = vbcast.lane.b32.xlu0 %v1084, %s1089
  %v1091 = vpop.permute.xlu0 %1090
  %v1092 = vlaneseq
  %v1093 = vshrl.u32 %v1092, 7
  %v1094 = vsub.s32 2, %v1093
  %v1095 = vrot.slane %v611, %v1094
  %1097 = vbcast.lane.b32.xlu0 %v1095, 256
  %v1098 = vpop.permute.xlu0 %1097
  %s1100 = sor.u32 256, 8
  %1101 = vbcast.lane.b32.xlu0 %v1095, %s1100
  %v1102 = vpop.permute.xlu0 %1101
  %v1103 = vlaneseq
  %v1104 = vshrl.u32 %v1103, 7
  %v1105 = vsub.s32 3, %v1104
  %v1106 = vrot.slane %v611, %v1105
  %1108 = vbcast.lane.b32.xlu0 %v1106, 256
  %v1109 = vpop.permute.xlu0 %1108
  %s1111 = sor.u32 256, 8
  %1112 = vbcast.lane.b32.xlu0 %v1106, %s1111
  %v1113 = vpop.permute.xlu0 %1112
  %v1114 = vlaneseq
  %v1115 = vshrl.u32 %v1114, 7
  %v1116 = vsub.s32 4, %v1115
  %v1117 = vrot.slane %v611, %v1116
  %1119 = vbcast.lane.b32.xlu0 %v1117, 256
  %v1120 = vpop.permute.xlu0 %1119
  %s1122 = sor.u32 256, 8
  %1123 = vbcast.lane.b32.xlu0 %v1117, %s1122
  %v1124 = vpop.permute.xlu0 %1123
  %v1125 = vlaneseq
  %v1126 = vshrl.u32 %v1125, 7
  %v1127 = vsub.s32 5, %v1126
  %v1128 = vrot.slane %v611, %v1127
  %1130 = vbcast.lane.b32.xlu0 %v1128, 256
  %v1131 = vpop.permute.xlu0 %1130
  %s1133 = sor.u32 256, 8
  %1134 = vbcast.lane.b32.xlu0 %v1128, %s1133
  %v1135 = vpop.permute.xlu0 %1134
  %v1136 = vlaneseq
  %v1137 = vshrl.u32 %v1136, 7
  %v1138 = vsub.s32 6, %v1137
  %v1139 = vrot.slane %v611, %v1138
  %1141 = vbcast.lane.b32.xlu0 %v1139, 256
  %v1142 = vpop.permute.xlu0 %1141
  %s1144 = sor.u32 256, 8
  %1145 = vbcast.lane.b32.xlu0 %v1139, %s1144
  %v1146 = vpop.permute.xlu0 %1145
  %v1147 = vlaneseq
  %v1148 = vshrl.u32 %v1147, 7
  %v1149 = vsub.s32 7, %v1148
  %v1150 = vrot.slane %v611, %v1149
  %1152 = vbcast.lane.b32.xlu0 %v1150, 256
  %v1153 = vpop.permute.xlu0 %1152
  %s1155 = sor.u32 256, 8
  %1156 = vbcast.lane.b32.xlu0 %v1150, %s1155
  %v1157 = vpop.permute.xlu0 %1156
  %v1158 = vlaneseq
  %v1159 = vshrl.u32 %v1158, 7
  %v1160 = vsub.s32 0, %v1159
  %v1161 = vrot.slane %v612, %v1160
  %1163 = vbcast.lane.b32.xlu0 %v1161, 256
  %v1164 = vpop.permute.xlu0 %1163
  %s1166 = sor.u32 256, 8
  %1167 = vbcast.lane.b32.xlu0 %v1161, %s1166
  %v1168 = vpop.permute.xlu0 %1167
  %v1169 = vlaneseq
  %v1170 = vshrl.u32 %v1169, 7
  %v1171 = vsub.s32 1, %v1170
  %v1172 = vrot.slane %v612, %v1171
  %1174 = vbcast.lane.b32.xlu0 %v1172, 256
  %v1175 = vpop.permute.xlu0 %1174
  %s1177 = sor.u32 256, 8
  %1178 = vbcast.lane.b32.xlu0 %v1172, %s1177
  %v1179 = vpop.permute.xlu0 %1178
  %v1180 = vlaneseq
  %v1181 = vshrl.u32 %v1180, 7
  %v1182 = vsub.s32 2, %v1181
  %v1183 = vrot.slane %v612, %v1182
  %1185 = vbcast.lane.b32.xlu0 %v1183, 256
  %v1186 = vpop.permute.xlu0 %1185
  %s1188 = sor.u32 256, 8
  %1189 = vbcast.lane.b32.xlu0 %v1183, %s1188
  %v1190 = vpop.permute.xlu0 %1189
  %v1191 = vlaneseq
  %v1192 = vshrl.u32 %v1191, 7
  %v1193 = vsub.s32 3, %v1192
  %v1194 = vrot.slane %v612, %v1193
  %1196 = vbcast.lane.b32.xlu0 %v1194, 256
  %v1197 = vpop.permute.xlu0 %1196
  %s1199 = sor.u32 256, 8
  %1200 = vbcast.lane.b32.xlu0 %v1194, %s1199
  %v1201 = vpop.permute.xlu0 %1200
  %v1202 = vlaneseq
  %v1203 = vshrl.u32 %v1202, 7
  %v1204 = vsub.s32 4, %v1203
  %v1205 = vrot.slane %v612, %v1204
  %1207 = vbcast.lane.b32.xlu0 %v1205, 256
  %v1208 = vpop.permute.xlu0 %1207
  %s1210 = sor.u32 256, 8
  %1211 = vbcast.lane.b32.xlu0 %v1205, %s1210
  %v1212 = vpop.permute.xlu0 %1211
  %v1213 = vlaneseq
  %v1214 = vshrl.u32 %v1213, 7
  %v1215 = vsub.s32 5, %v1214
  %v1216 = vrot.slane %v612, %v1215
  %1218 = vbcast.lane.b32.xlu0 %v1216, 256
  %v1219 = vpop.permute.xlu0 %1218
  %s1221 = sor.u32 256, 8
  %1222 = vbcast.lane.b32.xlu0 %v1216, %s1221
  %v1223 = vpop.permute.xlu0 %1222
  %v1224 = vlaneseq
  %v1225 = vshrl.u32 %v1224, 7
  %v1226 = vsub.s32 6, %v1225
  %v1227 = vrot.slane %v612, %v1226
  %1229 = vbcast.lane.b32.xlu0 %v1227, 256
  %v1230 = vpop.permute.xlu0 %1229
  %s1232 = sor.u32 256, 8
  %1233 = vbcast.lane.b32.xlu0 %v1227, %s1232
  %v1234 = vpop.permute.xlu0 %1233
  %v1235 = vlaneseq
  %v1236 = vshrl.u32 %v1235, 7
  %v1237 = vsub.s32 7, %v1236
  %v1238 = vrot.slane %v612, %v1237
  %1240 = vbcast.lane.b32.xlu0 %v1238, 256
  %v1241 = vpop.permute.xlu0 %1240
  %s1243 = sor.u32 256, 8
  %1244 = vbcast.lane.b32.xlu0 %v1238, %s1243
  %v1245 = vpop.permute.xlu0 %1244
  %v1246 = vlaneseq
  %v1247 = vshrl.u32 %v1246, 7
  %v1248 = vsub.s32 0, %v1247
  %v1249 = vrot.slane %v613, %v1248
  %1251 = vbcast.lane.b32.xlu0 %v1249, 256
  %v1252 = vpop.permute.xlu0 %1251
  %s1254 = sor.u32 256, 8
  %1255 = vbcast.lane.b32.xlu0 %v1249, %s1254
  %v1256 = vpop.permute.xlu0 %1255
  %v1257 = vlaneseq
  %v1258 = vshrl.u32 %v1257, 7
  %v1259 = vsub.s32 1, %v1258
  %v1260 = vrot.slane %v613, %v1259
  %1262 = vbcast.lane.b32.xlu0 %v1260, 256
  %v1263 = vpop.permute.xlu0 %1262
  %s1265 = sor.u32 256, 8
  %1266 = vbcast.lane.b32.xlu0 %v1260, %s1265
  %v1267 = vpop.permute.xlu0 %1266
  %v1268 = vlaneseq
  %v1269 = vshrl.u32 %v1268, 7
  %v1270 = vsub.s32 2, %v1269
  %v1271 = vrot.slane %v613, %v1270
  %1273 = vbcast.lane.b32.xlu0 %v1271, 256
  %v1274 = vpop.permute.xlu0 %1273
  %s1276 = sor.u32 256, 8
  %1277 = vbcast.lane.b32.xlu0 %v1271, %s1276
  %v1278 = vpop.permute.xlu0 %1277
  %v1279 = vlaneseq
  %v1280 = vshrl.u32 %v1279, 7
  %v1281 = vsub.s32 3, %v1280
  %v1282 = vrot.slane %v613, %v1281
  %1284 = vbcast.lane.b32.xlu0 %v1282, 256
  %v1285 = vpop.permute.xlu0 %1284
  %s1287 = sor.u32 256, 8
  %1288 = vbcast.lane.b32.xlu0 %v1282, %s1287
  %v1289 = vpop.permute.xlu0 %1288
  %v1290 = vlaneseq
  %v1291 = vshrl.u32 %v1290, 7
  %v1292 = vsub.s32 4, %v1291
  %v1293 = vrot.slane %v613, %v1292
  %1295 = vbcast.lane.b32.xlu0 %v1293, 256
  %v1296 = vpop.permute.xlu0 %1295
  %s1298 = sor.u32 256, 8
  %1299 = vbcast.lane.b32.xlu0 %v1293, %s1298
  %v1300 = vpop.permute.xlu0 %1299
  %v1301 = vlaneseq
  %v1302 = vshrl.u32 %v1301, 7
  %v1303 = vsub.s32 5, %v1302
  %v1304 = vrot.slane %v613, %v1303
  %1306 = vbcast.lane.b32.xlu0 %v1304, 256
  %v1307 = vpop.permute.xlu0 %1306
  %s1309 = sor.u32 256, 8
  %1310 = vbcast.lane.b32.xlu0 %v1304, %s1309
  %v1311 = vpop.permute.xlu0 %1310
  %v1312 = vlaneseq
  %v1313 = vshrl.u32 %v1312, 7
  %v1314 = vsub.s32 6, %v1313
  %v1315 = vrot.slane %v613, %v1314
  %1317 = vbcast.lane.b32.xlu0 %v1315, 256
  %v1318 = vpop.permute.xlu0 %1317
  %s1320 = sor.u32 256, 8
  %1321 = vbcast.lane.b32.xlu0 %v1315, %s1320
  %v1322 = vpop.permute.xlu0 %1321
  %v1323 = vlaneseq
  %v1324 = vshrl.u32 %v1323, 7
  %v1325 = vsub.s32 7, %v1324
  %v1326 = vrot.slane %v613, %v1325
  %1328 = vbcast.lane.b32.xlu0 %v1326, 256
  %v1329 = vpop.permute.xlu0 %1328
  %s1331 = sor.u32 256, 8
  %1332 = vbcast.lane.b32.xlu0 %v1326, %s1331
  %v1333 = vpop.permute.xlu0 %1332
  %v1334 = vlaneseq
  %v1335 = vshrl.u32 %v1334, 7
  %v1336 = vsub.s32 0, %v1335
  %v1337 = vrot.slane %v614, %v1336
  %1339 = vbcast.lane.b32.xlu0 %v1337, 256
  %v1340 = vpop.permute.xlu0 %1339
  %s1342 = sor.u32 256, 8
  %1343 = vbcast.lane.b32.xlu0 %v1337, %s1342
  %v1344 = vpop.permute.xlu0 %1343
  %v1345 = vlaneseq
  %v1346 = vshrl.u32 %v1345, 7
  %v1347 = vsub.s32 1, %v1346
  %v1348 = vrot.slane %v614, %v1347
  %1350 = vbcast.lane.b32.xlu0 %v1348, 256
  %v1351 = vpop.permute.xlu0 %1350
  %s1353 = sor.u32 256, 8
  %1354 = vbcast.lane.b32.xlu0 %v1348, %s1353
  %v1355 = vpop.permute.xlu0 %1354
  %v1356 = vlaneseq
  %v1357 = vshrl.u32 %v1356, 7
  %v1358 = vsub.s32 2, %v1357
  %v1359 = vrot.slane %v614, %v1358
  %1361 = vbcast.lane.b32.xlu0 %v1359, 256
  %v1362 = vpop.permute.xlu0 %1361
  %s1364 = sor.u32 256, 8
  %1365 = vbcast.lane.b32.xlu0 %v1359, %s1364
  %v1366 = vpop.permute.xlu0 %1365
  %v1367 = vlaneseq
  %v1368 = vshrl.u32 %v1367, 7
  %v1369 = vsub.s32 3, %v1368
  %v1370 = vrot.slane %v614, %v1369
  %1372 = vbcast.lane.b32.xlu0 %v1370, 256
  %v1373 = vpop.permute.xlu0 %1372
  %s1375 = sor.u32 256, 8
  %1376 = vbcast.lane.b32.xlu0 %v1370, %s1375
  %v1377 = vpop.permute.xlu0 %1376
  %v1378 = vlaneseq
  %v1379 = vshrl.u32 %v1378, 7
  %v1380 = vsub.s32 4, %v1379
  %v1381 = vrot.slane %v614, %v1380
  %1383 = vbcast.lane.b32.xlu0 %v1381, 256
  %v1384 = vpop.permute.xlu0 %1383
  %s1386 = sor.u32 256, 8
  %1387 = vbcast.lane.b32.xlu0 %v1381, %s1386
  %v1388 = vpop.permute.xlu0 %1387
  %v1389 = vlaneseq
  %v1390 = vshrl.u32 %v1389, 7
  %v1391 = vsub.s32 5, %v1390
  %v1392 = vrot.slane %v614, %v1391
  %1394 = vbcast.lane.b32.xlu0 %v1392, 256
  %v1395 = vpop.permute.xlu0 %1394
  %s1397 = sor.u32 256, 8
  %1398 = vbcast.lane.b32.xlu0 %v1392, %s1397
  %v1399 = vpop.permute.xlu0 %1398
  %v1400 = vlaneseq
  %v1401 = vshrl.u32 %v1400, 7
  %v1402 = vsub.s32 6, %v1401
  %v1403 = vrot.slane %v614, %v1402
  %1405 = vbcast.lane.b32.xlu0 %v1403, 256
  %v1406 = vpop.permute.xlu0 %1405
  %s1408 = sor.u32 256, 8
  %1409 = vbcast.lane.b32.xlu0 %v1403, %s1408
  %v1410 = vpop.permute.xlu0 %1409
  %v1411 = vlaneseq
  %v1412 = vshrl.u32 %v1411, 7
  %v1413 = vsub.s32 7, %v1412
  %v1414 = vrot.slane %v614, %v1413
  %1416 = vbcast.lane.b32.xlu0 %v1414, 256
  %v1417 = vpop.permute.xlu0 %1416
  %s1419 = sor.u32 256, 8
  %1420 = vbcast.lane.b32.xlu0 %v1414, %s1419
  %v1421 = vpop.permute.xlu0 %1420
  %v1422 = vlaneseq
  %v1423 = vshrl.u32 %v1422, 7
  %v1424 = vsub.s32 0, %v1423
  %v1425 = vrot.slane %v615, %v1424
  %1427 = vbcast.lane.b32.xlu0 %v1425, 256
  %v1428 = vpop.permute.xlu0 %1427
  %s1430 = sor.u32 256, 8
  %1431 = vbcast.lane.b32.xlu0 %v1425, %s1430
  %v1432 = vpop.permute.xlu0 %1431
  %v1433 = vlaneseq
  %v1434 = vshrl.u32 %v1433, 7
  %v1435 = vsub.s32 1, %v1434
  %v1436 = vrot.slane %v615, %v1435
  %1438 = vbcast.lane.b32.xlu0 %v1436, 256
  %v1439 = vpop.permute.xlu0 %1438
  %s1441 = sor.u32 256, 8
  %1442 = vbcast.lane.b32.xlu0 %v1436, %s1441
  %v1443 = vpop.permute.xlu0 %1442
  %v1444 = vlaneseq
  %v1445 = vshrl.u32 %v1444, 7
  %v1446 = vsub.s32 2, %v1445
  %v1447 = vrot.slane %v615, %v1446
  %1449 = vbcast.lane.b32.xlu0 %v1447, 256
  %v1450 = vpop.permute.xlu0 %1449
  %s1452 = sor.u32 256, 8
  %1453 = vbcast.lane.b32.xlu0 %v1447, %s1452
  %v1454 = vpop.permute.xlu0 %1453
  %v1455 = vlaneseq
  %v1456 = vshrl.u32 %v1455, 7
  %v1457 = vsub.s32 3, %v1456
  %v1458 = vrot.slane %v615, %v1457
  %1460 = vbcast.lane.b32.xlu0 %v1458, 256
  %v1461 = vpop.permute.xlu0 %1460
  %s1463 = sor.u32 256, 8
  %1464 = vbcast.lane.b32.xlu0 %v1458, %s1463
  %v1465 = vpop.permute.xlu0 %1464
  %v1466 = vlaneseq
  %v1467 = vshrl.u32 %v1466, 7
  %v1468 = vsub.s32 4, %v1467
  %v1469 = vrot.slane %v615, %v1468
  %1471 = vbcast.lane.b32.xlu0 %v1469, 256
  %v1472 = vpop.permute.xlu0 %1471
  %s1474 = sor.u32 256, 8
  %1475 = vbcast.lane.b32.xlu0 %v1469, %s1474
  %v1476 = vpop.permute.xlu0 %1475
  %v1477 = vlaneseq
  %v1478 = vshrl.u32 %v1477, 7
  %v1479 = vsub.s32 5, %v1478
  %v1480 = vrot.slane %v615, %v1479
  %1482 = vbcast.lane.b32.xlu0 %v1480, 256
  %v1483 = vpop.permute.xlu0 %1482
  %s1485 = sor.u32 256, 8
  %1486 = vbcast.lane.b32.xlu0 %v1480, %s1485
  %v1487 = vpop.permute.xlu0 %1486
  %v1488 = vlaneseq
  %v1489 = vshrl.u32 %v1488, 7
  %v1490 = vsub.s32 6, %v1489
  %v1491 = vrot.slane %v615, %v1490
  %1493 = vbcast.lane.b32.xlu0 %v1491, 256
  %v1494 = vpop.permute.xlu0 %1493
  %s1496 = sor.u32 256, 8
  %1497 = vbcast.lane.b32.xlu0 %v1491, %s1496
  %v1498 = vpop.permute.xlu0 %1497
  %v1499 = vlaneseq
  %v1500 = vshrl.u32 %v1499, 7
  %v1501 = vsub.s32 7, %v1500
  %v1502 = vrot.slane %v615, %v1501
  %1504 = vbcast.lane.b32.xlu0 %v1502, 256
  %v1505 = vpop.permute.xlu0 %1504
  %s1507 = sor.u32 256, 8
  %1508 = vbcast.lane.b32.xlu0 %v1502, %s1507
  %v1509 = vpop.permute.xlu0 %1508
  %v1510 = vlaneseq
  %v1511 = vshrl.u32 %v1510, 7
  %v1512 = vsub.s32 0, %v1511
  %v1513 = vrot.slane %v616, %v1512
  %1515 = vbcast.lane.b32.xlu0 %v1513, 256
  %v1516 = vpop.permute.xlu0 %1515
  %s1518 = sor.u32 256, 8
  %1519 = vbcast.lane.b32.xlu0 %v1513, %s1518
  %v1520 = vpop.permute.xlu0 %1519
  %v1521 = vlaneseq
  %v1522 = vshrl.u32 %v1521, 7
  %v1523 = vsub.s32 1, %v1522
  %v1524 = vrot.slane %v616, %v1523
  %1526 = vbcast.lane.b32.xlu0 %v1524, 256
  %v1527 = vpop.permute.xlu0 %1526
  %s1529 = sor.u32 256, 8
  %1530 = vbcast.lane.b32.xlu0 %v1524, %s1529
  %v1531 = vpop.permute.xlu0 %1530
  %v1532 = vlaneseq
  %v1533 = vshrl.u32 %v1532, 7
  %v1534 = vsub.s32 2, %v1533
  %v1535 = vrot.slane %v616, %v1534
  %1537 = vbcast.lane.b32.xlu0 %v1535, 256
  %v1538 = vpop.permute.xlu0 %1537
  %s1540 = sor.u32 256, 8
  %1541 = vbcast.lane.b32.xlu0 %v1535, %s1540
  %v1542 = vpop.permute.xlu0 %1541
  %v1543 = vlaneseq
  %v1544 = vshrl.u32 %v1543, 7
  %v1545 = vsub.s32 3, %v1544
  %v1546 = vrot.slane %v616, %v1545
  %1548 = vbcast.lane.b32.xlu0 %v1546, 256
  %v1549 = vpop.permute.xlu0 %1548
  %s1551 = sor.u32 256, 8
  %1552 = vbcast.lane.b32.xlu0 %v1546, %s1551
  %v1553 = vpop.permute.xlu0 %1552
  %v1554 = vlaneseq
  %v1555 = vshrl.u32 %v1554, 7
  %v1556 = vsub.s32 4, %v1555
  %v1557 = vrot.slane %v616, %v1556
  %1559 = vbcast.lane.b32.xlu0 %v1557, 256
  %v1560 = vpop.permute.xlu0 %1559
  %s1562 = sor.u32 256, 8
  %1563 = vbcast.lane.b32.xlu0 %v1557, %s1562
  %v1564 = vpop.permute.xlu0 %1563
  %v1565 = vlaneseq
  %v1566 = vshrl.u32 %v1565, 7
  %v1567 = vsub.s32 5, %v1566
  %v1568 = vrot.slane %v616, %v1567
  %1570 = vbcast.lane.b32.xlu0 %v1568, 256
  %v1571 = vpop.permute.xlu0 %1570
  %s1573 = sor.u32 256, 8
  %1574 = vbcast.lane.b32.xlu0 %v1568, %s1573
  %v1575 = vpop.permute.xlu0 %1574
  %v1576 = vlaneseq
  %v1577 = vshrl.u32 %v1576, 7
  %v1578 = vsub.s32 6, %v1577
  %v1579 = vrot.slane %v616, %v1578
  %1581 = vbcast.lane.b32.xlu0 %v1579, 256
  %v1582 = vpop.permute.xlu0 %1581
  %s1584 = sor.u32 256, 8
  %1585 = vbcast.lane.b32.xlu0 %v1579, %s1584
  %v1586 = vpop.permute.xlu0 %1585
  %v1587 = vlaneseq
  %v1588 = vshrl.u32 %v1587, 7
  %v1589 = vsub.s32 7, %v1588
  %v1590 = vrot.slane %v616, %v1589
  %1592 = vbcast.lane.b32.xlu0 %v1590, 256
  %v1593 = vpop.permute.xlu0 %1592
  %s1595 = sor.u32 256, 8
  %1596 = vbcast.lane.b32.xlu0 %v1590, %s1595
  %v1597 = vpop.permute.xlu0 %1596
  %v1598 = vlaneseq
  %v1599 = vshrl.u32 %v1598, 7
  %v1600 = vsub.s32 0, %v1599
  %v1601 = vrot.slane %v617, %v1600
  %1603 = vbcast.lane.b32.xlu0 %v1601, 256
  %v1604 = vpop.permute.xlu0 %1603
  %s1606 = sor.u32 256, 8
  %1607 = vbcast.lane.b32.xlu0 %v1601, %s1606
  %v1608 = vpop.permute.xlu0 %1607
  %v1609 = vlaneseq
  %v1610 = vshrl.u32 %v1609, 7
  %v1611 = vsub.s32 1, %v1610
  %v1612 = vrot.slane %v617, %v1611
  %1614 = vbcast.lane.b32.xlu0 %v1612, 256
  %v1615 = vpop.permute.xlu0 %1614
  %s1617 = sor.u32 256, 8
  %1618 = vbcast.lane.b32.xlu0 %v1612, %s1617
  %v1619 = vpop.permute.xlu0 %1618
  %v1620 = vlaneseq
  %v1621 = vshrl.u32 %v1620, 7
  %v1622 = vsub.s32 2, %v1621
  %v1623 = vrot.slane %v617, %v1622
  %1625 = vbcast.lane.b32.xlu0 %v1623, 256
  %v1626 = vpop.permute.xlu0 %1625
  %s1628 = sor.u32 256, 8
  %1629 = vbcast.lane.b32.xlu0 %v1623, %s1628
  %v1630 = vpop.permute.xlu0 %1629
  %v1631 = vlaneseq
  %v1632 = vshrl.u32 %v1631, 7
  %v1633 = vsub.s32 3, %v1632
  %v1634 = vrot.slane %v617, %v1633
  %1636 = vbcast.lane.b32.xlu0 %v1634, 256
  %v1637 = vpop.permute.xlu0 %1636
  %s1639 = sor.u32 256, 8
  %1640 = vbcast.lane.b32.xlu0 %v1634, %s1639
  %v1641 = vpop.permute.xlu0 %1640
  %v1642 = vlaneseq
  %v1643 = vshrl.u32 %v1642, 7
  %v1644 = vsub.s32 4, %v1643
  %v1645 = vrot.slane %v617, %v1644
  %1647 = vbcast.lane.b32.xlu0 %v1645, 256
  %v1648 = vpop.permute.xlu0 %1647
  %s1650 = sor.u32 256, 8
  %1651 = vbcast.lane.b32.xlu0 %v1645, %s1650
  %v1652 = vpop.permute.xlu0 %1651
  %v1653 = vlaneseq
  %v1654 = vshrl.u32 %v1653, 7
  %v1655 = vsub.s32 5, %v1654
  %v1656 = vrot.slane %v617, %v1655
  %1658 = vbcast.lane.b32.xlu0 %v1656, 256
  %v1659 = vpop.permute.xlu0 %1658
  %s1661 = sor.u32 256, 8
  %1662 = vbcast.lane.b32.xlu0 %v1656, %s1661
  %v1663 = vpop.permute.xlu0 %1662
  %v1664 = vlaneseq
  %v1665 = vshrl.u32 %v1664, 7
  %v1666 = vsub.s32 6, %v1665
  %v1667 = vrot.slane %v617, %v1666
  %1669 = vbcast.lane.b32.xlu0 %v1667, 256
  %v1670 = vpop.permute.xlu0 %1669
  %s1672 = sor.u32 256, 8
  %1673 = vbcast.lane.b32.xlu0 %v1667, %s1672
  %v1674 = vpop.permute.xlu0 %1673
  %v1675 = vlaneseq
  %v1676 = vshrl.u32 %v1675, 7
  %v1677 = vsub.s32 7, %v1676
  %v1678 = vrot.slane %v617, %v1677
  %1680 = vbcast.lane.b32.xlu0 %v1678, 256
  %v1681 = vpop.permute.xlu0 %1680
  %s1683 = sor.u32 256, 8
  %1684 = vbcast.lane.b32.xlu0 %v1678, %s1683
  %v1685 = vpop.permute.xlu0 %1684
  %v1878 = vsub.f32 %v50, %v636
  %v1879 = vsub.f32 %v53, %v640
  %v1880 = vsub.f32 %v50, %v647
  %v1881 = vsub.f32 %v53, %v651
  %v1882 = vsub.f32 %v50, %v658
  %v1883 = vsub.f32 %v53, %v662
  %v1884 = vsub.f32 %v50, %v669
  %v1885 = vsub.f32 %v53, %v673
  %v1886 = vsub.f32 %v50, %v680
  %v1887 = vsub.f32 %v53, %v684
  %v1888 = vsub.f32 %v50, %v691
  %v1889 = vsub.f32 %v53, %v695
  %v1890 = vsub.f32 %v50, %v702
  %v1891 = vsub.f32 %v53, %v706
  %v1892 = vsub.f32 %v50, %v713
  %v1893 = vsub.f32 %v53, %v717
  %v1894 = vsub.f32 %v50, %v724
  %v1895 = vsub.f32 %v53, %v728
  %v1896 = vsub.f32 %v50, %v735
  %v1897 = vsub.f32 %v53, %v739
  %v1898 = vsub.f32 %v50, %v746
  %v1899 = vsub.f32 %v53, %v750
  %v1900 = vsub.f32 %v50, %v757
  %v1901 = vsub.f32 %v53, %v761
  %v1902 = vsub.f32 %v50, %v768
  %v1903 = vsub.f32 %v53, %v772
  %v1904 = vsub.f32 %v50, %v779
  %v1905 = vsub.f32 %v53, %v783
  %v1906 = vsub.f32 %v50, %v790
  %v1907 = vsub.f32 %v53, %v794
  %v1908 = vsub.f32 %v50, %v801
  %v1909 = vsub.f32 %v53, %v805
  %v1910 = vsub.f32 %v56, %v812
  %v1911 = vsub.f32 %v59, %v816
  %v1912 = vsub.f32 %v56, %v823
  %v1913 = vsub.f32 %v59, %v827
  %v1914 = vsub.f32 %v56, %v834
  %v1915 = vsub.f32 %v59, %v838
  %v1916 = vsub.f32 %v56, %v845
  %v1917 = vsub.f32 %v59, %v849
  %v1918 = vsub.f32 %v56, %v856
  %v1919 = vsub.f32 %v59, %v860
  %v1920 = vsub.f32 %v56, %v867
  %v1921 = vsub.f32 %v59, %v871
  %v1922 = vsub.f32 %v56, %v878
  %v1923 = vsub.f32 %v59, %v882
  %v1924 = vsub.f32 %v56, %v889
  %v1925 = vsub.f32 %v59, %v893
  %v1926 = vsub.f32 %v56, %v900
  %v1927 = vsub.f32 %v59, %v904
  %v1928 = vsub.f32 %v56, %v911
  %v1929 = vsub.f32 %v59, %v915
  %v1930 = vsub.f32 %v56, %v922
  %v1931 = vsub.f32 %v59, %v926
  %v1932 = vsub.f32 %v56, %v933
  %v1933 = vsub.f32 %v59, %v937
  %v1934 = vsub.f32 %v56, %v944
  %v1935 = vsub.f32 %v59, %v948
  %v1936 = vsub.f32 %v56, %v955
  %v1937 = vsub.f32 %v59, %v959
  %v1938 = vsub.f32 %v56, %v966
  %v1939 = vsub.f32 %v59, %v970
  %v1940 = vsub.f32 %v56, %v977
  %v1941 = vsub.f32 %v59, %v981
  %v1942 = vsub.f32 %v62, %v988
  %v1943 = vsub.f32 %v65, %v992
  %v1944 = vsub.f32 %v62, %v999
  %v1945 = vsub.f32 %v65, %v1003
  %v1946 = vsub.f32 %v62, %v1010
  %v1947 = vsub.f32 %v65, %v1014
  %v1948 = vsub.f32 %v62, %v1021
  %v1949 = vsub.f32 %v65, %v1025
  %v1950 = vsub.f32 %v62, %v1032
  %v1951 = vsub.f32 %v65, %v1036
  %v1952 = vsub.f32 %v62, %v1043
  %v1953 = vsub.f32 %v65, %v1047
  %v1954 = vsub.f32 %v62, %v1054
  %v1955 = vsub.f32 %v65, %v1058
  %v1956 = vsub.f32 %v62, %v1065
  %v1957 = vsub.f32 %v65, %v1069
  %v1958 = vsub.f32 %v62, %v1076
  %v1959 = vsub.f32 %v65, %v1080
  %v1960 = vsub.f32 %v62, %v1087
  %v1961 = vsub.f32 %v65, %v1091
  %v1962 = vsub.f32 %v62, %v1098
  %v1963 = vsub.f32 %v65, %v1102
  %v1964 = vsub.f32 %v62, %v1109
  %v1965 = vsub.f32 %v65, %v1113
  %v1966 = vsub.f32 %v62, %v1120
  %v1967 = vsub.f32 %v65, %v1124
  %v1968 = vsub.f32 %v62, %v1131
  %v1969 = vsub.f32 %v65, %v1135
  %v1970 = vsub.f32 %v62, %v1142
  %v1971 = vsub.f32 %v65, %v1146
  %v1972 = vsub.f32 %v62, %v1153
  %v1973 = vsub.f32 %v65, %v1157
  %v1974 = vsub.f32 %v68, %v1164
  %v1975 = vsub.f32 %v71, %v1168
  %v1976 = vsub.f32 %v68, %v1175
  %v1977 = vsub.f32 %v71, %v1179
  %v1978 = vsub.f32 %v68, %v1186
  %v1979 = vsub.f32 %v71, %v1190
  %v1980 = vsub.f32 %v68, %v1197
  %v1981 = vsub.f32 %v71, %v1201
  %v1982 = vsub.f32 %v68, %v1208
  %v1983 = vsub.f32 %v71, %v1212
  %v1984 = vsub.f32 %v68, %v1219
  %v1985 = vsub.f32 %v71, %v1223
  %v1986 = vsub.f32 %v68, %v1230
  %v1987 = vsub.f32 %v71, %v1234
  %v1988 = vsub.f32 %v68, %v1241
  %v1989 = vsub.f32 %v71, %v1245
  %v1990 = vsub.f32 %v68, %v1252
  %v1991 = vsub.f32 %v71, %v1256
  %v1992 = vsub.f32 %v68, %v1263
  %v1993 = vsub.f32 %v71, %v1267
  %v1994 = vsub.f32 %v68, %v1274
  %v1995 = vsub.f32 %v71, %v1278
  %v1996 = vsub.f32 %v68, %v1285
  %v1997 = vsub.f32 %v71, %v1289
  %v1998 = vsub.f32 %v68, %v1296
  %v1999 = vsub.f32 %v71, %v1300
  %v2000 = vsub.f32 %v68, %v1307
  %v2001 = vsub.f32 %v71, %v1311
  %v2002 = vsub.f32 %v68, %v1318
  %v2003 = vsub.f32 %v71, %v1322
  %v2004 = vsub.f32 %v68, %v1329
  %v2005 = vsub.f32 %v71, %v1333
  %v2006 = vsub.f32 %v74, %v1340
  %v2007 = vsub.f32 %v77, %v1344
  %v2008 = vsub.f32 %v74, %v1351
  %v2009 = vsub.f32 %v77, %v1355
  %v2010 = vsub.f32 %v74, %v1362
  %v2011 = vsub.f32 %v77, %v1366
  %v2012 = vsub.f32 %v74, %v1373
  %v2013 = vsub.f32 %v77, %v1377
  %v2014 = vsub.f32 %v74, %v1384
  %v2015 = vsub.f32 %v77, %v1388
  %v2016 = vsub.f32 %v74, %v1395
  %v2017 = vsub.f32 %v77, %v1399
  %v2018 = vsub.f32 %v74, %v1406
  %v2019 = vsub.f32 %v77, %v1410
  %v2020 = vsub.f32 %v74, %v1417
  %v2021 = vsub.f32 %v77, %v1421
  %v2022 = vsub.f32 %v74, %v1428
  %v2023 = vsub.f32 %v77, %v1432
  %v2024 = vsub.f32 %v74, %v1439
  %v2025 = vsub.f32 %v77, %v1443
  %v2026 = vsub.f32 %v74, %v1450
  %v2027 = vsub.f32 %v77, %v1454
  %v2028 = vsub.f32 %v74, %v1461
  %v2029 = vsub.f32 %v77, %v1465
  %v2030 = vsub.f32 %v74, %v1472
  %v2031 = vsub.f32 %v77, %v1476
  %v2032 = vsub.f32 %v74, %v1483
  %v2033 = vsub.f32 %v77, %v1487
  %v2034 = vsub.f32 %v74, %v1494
  %v2035 = vsub.f32 %v77, %v1498
  %v2036 = vsub.f32 %v74, %v1505
  %v2037 = vsub.f32 %v77, %v1509
  %v2038 = vsub.f32 %v80, %v1516
  %v2039 = vsub.f32 %v83, %v1520
  %v2040 = vsub.f32 %v80, %v1527
  %v2041 = vsub.f32 %v83, %v1531
  %v2042 = vsub.f32 %v80, %v1538
  %v2043 = vsub.f32 %v83, %v1542
  %v2044 = vsub.f32 %v80, %v1549
  %v2045 = vsub.f32 %v83, %v1553
  %v2046 = vsub.f32 %v80, %v1560
  %v2047 = vsub.f32 %v83, %v1564
  %v2048 = vsub.f32 %v80, %v1571
  %v2049 = vsub.f32 %v83, %v1575
  %v2050 = vsub.f32 %v80, %v1582
  %v2051 = vsub.f32 %v83, %v1586
  %v2052 = vsub.f32 %v80, %v1593
  %v2053 = vsub.f32 %v83, %v1597
  %v2054 = vsub.f32 %v80, %v1604
  %v2055 = vsub.f32 %v83, %v1608
  %v2056 = vsub.f32 %v80, %v1615
  %v2057 = vsub.f32 %v83, %v1619
  %v2058 = vsub.f32 %v80, %v1626
  %v2059 = vsub.f32 %v83, %v1630
  %v2060 = vsub.f32 %v80, %v1637
  %v2061 = vsub.f32 %v83, %v1641
  %v2062 = vsub.f32 %v80, %v1648
  %v2063 = vsub.f32 %v83, %v1652
  %v2064 = vsub.f32 %v80, %v1659
  %v2065 = vsub.f32 %v83, %v1663
  %v2066 = vsub.f32 %v80, %v1670
  %v2067 = vsub.f32 %v83, %v1674
  %v2068 = vsub.f32 %v80, %v1681
  %v2069 = vsub.f32 %v83, %v1685
  %2262 = vset.pattern.permute.xlu0 0
  %2263 = vperm.xlu0 %2262, %v1878
  %v2264 = vpop.permute.xlu0 %2263
  %2265 = vset.pattern.permute.xlu0 0
  %2266 = vperm.xlu0 %2265, %v1879
  %v2267 = vpop.permute.xlu0 %2266
  %2268 = vset.pattern.permute.xlu0 0
  %2269 = vperm.xlu0 %2268, %v1880
  %v2270 = vpop.permute.xlu0 %2269
  %2271 = vset.pattern.permute.xlu0 0
  %2272 = vperm.xlu0 %2271, %v1881
  %v2273 = vpop.permute.xlu0 %2272
  %2274 = vset.pattern.permute.xlu0 0
  %2275 = vperm.xlu0 %2274, %v1882
  %v2276 = vpop.permute.xlu0 %2275
  %2277 = vset.pattern.permute.xlu0 0
  %2278 = vperm.xlu0 %2277, %v1883
  %v2279 = vpop.permute.xlu0 %2278
  %2280 = vset.pattern.permute.xlu0 0
  %2281 = vperm.xlu0 %2280, %v1884
  %v2282 = vpop.permute.xlu0 %2281
  %2283 = vset.pattern.permute.xlu0 0
  %2284 = vperm.xlu0 %2283, %v1885
  %v2285 = vpop.permute.xlu0 %2284
  %2286 = vset.pattern.permute.xlu0 0
  %2287 = vperm.xlu0 %2286, %v1886
  %v2288 = vpop.permute.xlu0 %2287
  %2289 = vset.pattern.permute.xlu0 0
  %2290 = vperm.xlu0 %2289, %v1887
  %v2291 = vpop.permute.xlu0 %2290
  %2292 = vset.pattern.permute.xlu0 0
  %2293 = vperm.xlu0 %2292, %v1888
  %v2294 = vpop.permute.xlu0 %2293
  %2295 = vset.pattern.permute.xlu0 0
  %2296 = vperm.xlu0 %2295, %v1889
  %v2297 = vpop.permute.xlu0 %2296
  %2298 = vset.pattern.permute.xlu0 0
  %2299 = vperm.xlu0 %2298, %v1890
  %v2300 = vpop.permute.xlu0 %2299
  %2301 = vset.pattern.permute.xlu0 0
  %2302 = vperm.xlu0 %2301, %v1891
  %v2303 = vpop.permute.xlu0 %2302
  %2304 = vset.pattern.permute.xlu0 0
  %2305 = vperm.xlu0 %2304, %v1892
  %v2306 = vpop.permute.xlu0 %2305
  %2307 = vset.pattern.permute.xlu0 0
  %2308 = vperm.xlu0 %2307, %v1893
  %v2309 = vpop.permute.xlu0 %2308
  %2310 = vset.pattern.permute.xlu0 0
  %2311 = vperm.xlu0 %2310, %v1894
  %v2312 = vpop.permute.xlu0 %2311
  %2313 = vset.pattern.permute.xlu0 0
  %2314 = vperm.xlu0 %2313, %v1895
  %v2315 = vpop.permute.xlu0 %2314
  %2316 = vset.pattern.permute.xlu0 0
  %2317 = vperm.xlu0 %2316, %v1896
  %v2318 = vpop.permute.xlu0 %2317
  %2319 = vset.pattern.permute.xlu0 0
  %2320 = vperm.xlu0 %2319, %v1897
  %v2321 = vpop.permute.xlu0 %2320
  %2322 = vset.pattern.permute.xlu0 0
  %2323 = vperm.xlu0 %2322, %v1898
  %v2324 = vpop.permute.xlu0 %2323
  %2325 = vset.pattern.permute.xlu0 0
  %2326 = vperm.xlu0 %2325, %v1899
  %v2327 = vpop.permute.xlu0 %2326
  %2328 = vset.pattern.permute.xlu0 0
  %2329 = vperm.xlu0 %2328, %v1900
  %v2330 = vpop.permute.xlu0 %2329
  %2331 = vset.pattern.permute.xlu0 0
  %2332 = vperm.xlu0 %2331, %v1901
  %v2333 = vpop.permute.xlu0 %2332
  %2334 = vset.pattern.permute.xlu0 0
  %2335 = vperm.xlu0 %2334, %v1902
  %v2336 = vpop.permute.xlu0 %2335
  %2337 = vset.pattern.permute.xlu0 0
  %2338 = vperm.xlu0 %2337, %v1903
  %v2339 = vpop.permute.xlu0 %2338
  %2340 = vset.pattern.permute.xlu0 0
  %2341 = vperm.xlu0 %2340, %v1904
  %v2342 = vpop.permute.xlu0 %2341
  %2343 = vset.pattern.permute.xlu0 0
  %2344 = vperm.xlu0 %2343, %v1905
  %v2345 = vpop.permute.xlu0 %2344
  %2346 = vset.pattern.permute.xlu0 0
  %2347 = vperm.xlu0 %2346, %v1906
  %v2348 = vpop.permute.xlu0 %2347
  %2349 = vset.pattern.permute.xlu0 0
  %2350 = vperm.xlu0 %2349, %v1907
  %v2351 = vpop.permute.xlu0 %2350
  %2352 = vset.pattern.permute.xlu0 0
  %2353 = vperm.xlu0 %2352, %v1908
  %v2354 = vpop.permute.xlu0 %2353
  %2355 = vset.pattern.permute.xlu0 0
  %2356 = vperm.xlu0 %2355, %v1909
  %v2357 = vpop.permute.xlu0 %2356
  %2358 = vset.pattern.permute.xlu0 0
  %2359 = vperm.xlu0 %2358, %v1910
  %v2360 = vpop.permute.xlu0 %2359
  %2361 = vset.pattern.permute.xlu0 0
  %2362 = vperm.xlu0 %2361, %v1911
  %v2363 = vpop.permute.xlu0 %2362
  %2364 = vset.pattern.permute.xlu0 0
  %2365 = vperm.xlu0 %2364, %v1912
  %v2366 = vpop.permute.xlu0 %2365
  %2367 = vset.pattern.permute.xlu0 0
  %2368 = vperm.xlu0 %2367, %v1913
  %v2369 = vpop.permute.xlu0 %2368
  %2370 = vset.pattern.permute.xlu0 0
  %2371 = vperm.xlu0 %2370, %v1914
  %v2372 = vpop.permute.xlu0 %2371
  %2373 = vset.pattern.permute.xlu0 0
  %2374 = vperm.xlu0 %2373, %v1915
  %v2375 = vpop.permute.xlu0 %2374
  %2376 = vset.pattern.permute.xlu0 0
  %2377 = vperm.xlu0 %2376, %v1916
  %v2378 = vpop.permute.xlu0 %2377
  %2379 = vset.pattern.permute.xlu0 0
  %2380 = vperm.xlu0 %2379, %v1917
  %v2381 = vpop.permute.xlu0 %2380
  %2382 = vset.pattern.permute.xlu0 0
  %2383 = vperm.xlu0 %2382, %v1918
  %v2384 = vpop.permute.xlu0 %2383
  %2385 = vset.pattern.permute.xlu0 0
  %2386 = vperm.xlu0 %2385, %v1919
  %v2387 = vpop.permute.xlu0 %2386
  %2388 = vset.pattern.permute.xlu0 0
  %2389 = vperm.xlu0 %2388, %v1920
  %v2390 = vpop.permute.xlu0 %2389
  %2391 = vset.pattern.permute.xlu0 0
  %2392 = vperm.xlu0 %2391, %v1921
  %v2393 = vpop.permute.xlu0 %2392
  %2394 = vset.pattern.permute.xlu0 0
  %2395 = vperm.xlu0 %2394, %v1922
  %v2396 = vpop.permute.xlu0 %2395
  %2397 = vset.pattern.permute.xlu0 0
  %2398 = vperm.xlu0 %2397, %v1923
  %v2399 = vpop.permute.xlu0 %2398
  %2400 = vset.pattern.permute.xlu0 0
  %2401 = vperm.xlu0 %2400, %v1924
  %v2402 = vpop.permute.xlu0 %2401
  %2403 = vset.pattern.permute.xlu0 0
  %2404 = vperm.xlu0 %2403, %v1925
  %v2405 = vpop.permute.xlu0 %2404
  %2406 = vset.pattern.permute.xlu0 0
  %2407 = vperm.xlu0 %2406, %v1926
  %v2408 = vpop.permute.xlu0 %2407
  %2409 = vset.pattern.permute.xlu0 0
  %2410 = vperm.xlu0 %2409, %v1927
  %v2411 = vpop.permute.xlu0 %2410
  %2412 = vset.pattern.permute.xlu0 0
  %2413 = vperm.xlu0 %2412, %v1928
  %v2414 = vpop.permute.xlu0 %2413
  %2415 = vset.pattern.permute.xlu0 0
  %2416 = vperm.xlu0 %2415, %v1929
  %v2417 = vpop.permute.xlu0 %2416
  %2418 = vset.pattern.permute.xlu0 0
  %2419 = vperm.xlu0 %2418, %v1930
  %v2420 = vpop.permute.xlu0 %2419
  %2421 = vset.pattern.permute.xlu0 0
  %2422 = vperm.xlu0 %2421, %v1931
  %v2423 = vpop.permute.xlu0 %2422
  %2424 = vset.pattern.permute.xlu0 0
  %2425 = vperm.xlu0 %2424, %v1932
  %v2426 = vpop.permute.xlu0 %2425
  %2427 = vset.pattern.permute.xlu0 0
  %2428 = vperm.xlu0 %2427, %v1933
  %v2429 = vpop.permute.xlu0 %2428
  %2430 = vset.pattern.permute.xlu0 0
  %2431 = vperm.xlu0 %2430, %v1934
  %v2432 = vpop.permute.xlu0 %2431
  %2433 = vset.pattern.permute.xlu0 0
  %2434 = vperm.xlu0 %2433, %v1935
  %v2435 = vpop.permute.xlu0 %2434
  %2436 = vset.pattern.permute.xlu0 0
  %2437 = vperm.xlu0 %2436, %v1936
  %v2438 = vpop.permute.xlu0 %2437
  %2439 = vset.pattern.permute.xlu0 0
  %2440 = vperm.xlu0 %2439, %v1937
  %v2441 = vpop.permute.xlu0 %2440
  %2442 = vset.pattern.permute.xlu0 0
  %2443 = vperm.xlu0 %2442, %v1938
  %v2444 = vpop.permute.xlu0 %2443
  %2445 = vset.pattern.permute.xlu0 0
  %2446 = vperm.xlu0 %2445, %v1939
  %v2447 = vpop.permute.xlu0 %2446
  %2448 = vset.pattern.permute.xlu0 0
  %2449 = vperm.xlu0 %2448, %v1940
  %v2450 = vpop.permute.xlu0 %2449
  %2451 = vset.pattern.permute.xlu0 0
  %2452 = vperm.xlu0 %2451, %v1941
  %v2453 = vpop.permute.xlu0 %2452
  %2454 = vset.pattern.permute.xlu0 0
  %2455 = vperm.xlu0 %2454, %v1942
  %v2456 = vpop.permute.xlu0 %2455
  %2457 = vset.pattern.permute.xlu0 0
  %2458 = vperm.xlu0 %2457, %v1943
  %v2459 = vpop.permute.xlu0 %2458
  %2460 = vset.pattern.permute.xlu0 0
  %2461 = vperm.xlu0 %2460, %v1944
  %v2462 = vpop.permute.xlu0 %2461
  %2463 = vset.pattern.permute.xlu0 0
  %2464 = vperm.xlu0 %2463, %v1945
  %v2465 = vpop.permute.xlu0 %2464
  %2466 = vset.pattern.permute.xlu0 0
  %2467 = vperm.xlu0 %2466, %v1946
  %v2468 = vpop.permute.xlu0 %2467
  %2469 = vset.pattern.permute.xlu0 0
  %2470 = vperm.xlu0 %2469, %v1947
  %v2471 = vpop.permute.xlu0 %2470
  %2472 = vset.pattern.permute.xlu0 0
  %2473 = vperm.xlu0 %2472, %v1948
  %v2474 = vpop.permute.xlu0 %2473
  %2475 = vset.pattern.permute.xlu0 0
  %2476 = vperm.xlu0 %2475, %v1949
  %v2477 = vpop.permute.xlu0 %2476
  %2478 = vset.pattern.permute.xlu0 0
  %2479 = vperm.xlu0 %2478, %v1950
  %v2480 = vpop.permute.xlu0 %2479
  %2481 = vset.pattern.permute.xlu0 0
  %2482 = vperm.xlu0 %2481, %v1951
  %v2483 = vpop.permute.xlu0 %2482
  %2484 = vset.pattern.permute.xlu0 0
  %2485 = vperm.xlu0 %2484, %v1952
  %v2486 = vpop.permute.xlu0 %2485
  %2487 = vset.pattern.permute.xlu0 0
  %2488 = vperm.xlu0 %2487, %v1953
  %v2489 = vpop.permute.xlu0 %2488
  %2490 = vset.pattern.permute.xlu0 0
  %2491 = vperm.xlu0 %2490, %v1954
  %v2492 = vpop.permute.xlu0 %2491
  %2493 = vset.pattern.permute.xlu0 0
  %2494 = vperm.xlu0 %2493, %v1955
  %v2495 = vpop.permute.xlu0 %2494
  %2496 = vset.pattern.permute.xlu0 0
  %2497 = vperm.xlu0 %2496, %v1956
  %v2498 = vpop.permute.xlu0 %2497
  %2499 = vset.pattern.permute.xlu0 0
  %2500 = vperm.xlu0 %2499, %v1957
  %v2501 = vpop.permute.xlu0 %2500
  %2502 = vset.pattern.permute.xlu0 0
  %2503 = vperm.xlu0 %2502, %v1958
  %v2504 = vpop.permute.xlu0 %2503
  %2505 = vset.pattern.permute.xlu0 0
  %2506 = vperm.xlu0 %2505, %v1959
  %v2507 = vpop.permute.xlu0 %2506
  %2508 = vset.pattern.permute.xlu0 0
  %2509 = vperm.xlu0 %2508, %v1960
  %v2510 = vpop.permute.xlu0 %2509
  %2511 = vset.pattern.permute.xlu0 0
  %2512 = vperm.xlu0 %2511, %v1961
  %v2513 = vpop.permute.xlu0 %2512
  %2514 = vset.pattern.permute.xlu0 0
  %2515 = vperm.xlu0 %2514, %v1962
  %v2516 = vpop.permute.xlu0 %2515
  %2517 = vset.pattern.permute.xlu0 0
  %2518 = vperm.xlu0 %2517, %v1963
  %v2519 = vpop.permute.xlu0 %2518
  %2520 = vset.pattern.permute.xlu0 0
  %2521 = vperm.xlu0 %2520, %v1964
  %v2522 = vpop.permute.xlu0 %2521
  %2523 = vset.pattern.permute.xlu0 0
  %2524 = vperm.xlu0 %2523, %v1965
  %v2525 = vpop.permute.xlu0 %2524
  %2526 = vset.pattern.permute.xlu0 0
  %2527 = vperm.xlu0 %2526, %v1966
  %v2528 = vpop.permute.xlu0 %2527
  %2529 = vset.pattern.permute.xlu0 0
  %2530 = vperm.xlu0 %2529, %v1967
  %v2531 = vpop.permute.xlu0 %2530
  %2532 = vset.pattern.permute.xlu0 0
  %2533 = vperm.xlu0 %2532, %v1968
  %v2534 = vpop.permute.xlu0 %2533
  %2535 = vset.pattern.permute.xlu0 0
  %2536 = vperm.xlu0 %2535, %v1969
  %v2537 = vpop.permute.xlu0 %2536
  %2538 = vset.pattern.permute.xlu0 0
  %2539 = vperm.xlu0 %2538, %v1970
  %v2540 = vpop.permute.xlu0 %2539
  %2541 = vset.pattern.permute.xlu0 0
  %2542 = vperm.xlu0 %2541, %v1971
  %v2543 = vpop.permute.xlu0 %2542
  %2544 = vset.pattern.permute.xlu0 0
  %2545 = vperm.xlu0 %2544, %v1972
  %v2546 = vpop.permute.xlu0 %2545
  %2547 = vset.pattern.permute.xlu0 0
  %2548 = vperm.xlu0 %2547, %v1973
  %v2549 = vpop.permute.xlu0 %2548
  %2550 = vset.pattern.permute.xlu0 0
  %2551 = vperm.xlu0 %2550, %v1974
  %v2552 = vpop.permute.xlu0 %2551
  %2553 = vset.pattern.permute.xlu0 0
  %2554 = vperm.xlu0 %2553, %v1975
  %v2555 = vpop.permute.xlu0 %2554
  %2556 = vset.pattern.permute.xlu0 0
  %2557 = vperm.xlu0 %2556, %v1976
  %v2558 = vpop.permute.xlu0 %2557
  %2559 = vset.pattern.permute.xlu0 0
  %2560 = vperm.xlu0 %2559, %v1977
  %v2561 = vpop.permute.xlu0 %2560
  %2562 = vset.pattern.permute.xlu0 0
  %2563 = vperm.xlu0 %2562, %v1978
  %v2564 = vpop.permute.xlu0 %2563
  %2565 = vset.pattern.permute.xlu0 0
  %2566 = vperm.xlu0 %2565, %v1979
  %v2567 = vpop.permute.xlu0 %2566
  %2568 = vset.pattern.permute.xlu0 0
  %2569 = vperm.xlu0 %2568, %v1980
  %v2570 = vpop.permute.xlu0 %2569
  %2571 = vset.pattern.permute.xlu0 0
  %2572 = vperm.xlu0 %2571, %v1981
  %v2573 = vpop.permute.xlu0 %2572
  %2574 = vset.pattern.permute.xlu0 0
  %2575 = vperm.xlu0 %2574, %v1982
  %v2576 = vpop.permute.xlu0 %2575
  %2577 = vset.pattern.permute.xlu0 0
  %2578 = vperm.xlu0 %2577, %v1983
  %v2579 = vpop.permute.xlu0 %2578
  %2580 = vset.pattern.permute.xlu0 0
  %2581 = vperm.xlu0 %2580, %v1984
  %v2582 = vpop.permute.xlu0 %2581
  %2583 = vset.pattern.permute.xlu0 0
  %2584 = vperm.xlu0 %2583, %v1985
  %v2585 = vpop.permute.xlu0 %2584
  %2586 = vset.pattern.permute.xlu0 0
  %2587 = vperm.xlu0 %2586, %v1986
  %v2588 = vpop.permute.xlu0 %2587
  %2589 = vset.pattern.permute.xlu0 0
  %2590 = vperm.xlu0 %2589, %v1987
  %v2591 = vpop.permute.xlu0 %2590
  %2592 = vset.pattern.permute.xlu0 0
  %2593 = vperm.xlu0 %2592, %v1988
  %v2594 = vpop.permute.xlu0 %2593
  %2595 = vset.pattern.permute.xlu0 0
  %2596 = vperm.xlu0 %2595, %v1989
  %v2597 = vpop.permute.xlu0 %2596
  %2598 = vset.pattern.permute.xlu0 0
  %2599 = vperm.xlu0 %2598, %v1990
  %v2600 = vpop.permute.xlu0 %2599
  %2601 = vset.pattern.permute.xlu0 0
  %2602 = vperm.xlu0 %2601, %v1991
  %v2603 = vpop.permute.xlu0 %2602
  %2604 = vset.pattern.permute.xlu0 0
  %2605 = vperm.xlu0 %2604, %v1992
  %v2606 = vpop.permute.xlu0 %2605
  %2607 = vset.pattern.permute.xlu0 0
  %2608 = vperm.xlu0 %2607, %v1993
  %v2609 = vpop.permute.xlu0 %2608
  %2610 = vset.pattern.permute.xlu0 0
  %2611 = vperm.xlu0 %2610, %v1994
  %v2612 = vpop.permute.xlu0 %2611
  %2613 = vset.pattern.permute.xlu0 0
  %2614 = vperm.xlu0 %2613, %v1995
  %v2615 = vpop.permute.xlu0 %2614
  %2616 = vset.pattern.permute.xlu0 0
  %2617 = vperm.xlu0 %2616, %v1996
  %v2618 = vpop.permute.xlu0 %2617
  %2619 = vset.pattern.permute.xlu0 0
  %2620 = vperm.xlu0 %2619, %v1997
  %v2621 = vpop.permute.xlu0 %2620
  %2622 = vset.pattern.permute.xlu0 0
  %2623 = vperm.xlu0 %2622, %v1998
  %v2624 = vpop.permute.xlu0 %2623
  %2625 = vset.pattern.permute.xlu0 0
  %2626 = vperm.xlu0 %2625, %v1999
  %v2627 = vpop.permute.xlu0 %2626
  %2628 = vset.pattern.permute.xlu0 0
  %2629 = vperm.xlu0 %2628, %v2000
  %v2630 = vpop.permute.xlu0 %2629
  %2631 = vset.pattern.permute.xlu0 0
  %2632 = vperm.xlu0 %2631, %v2001
  %v2633 = vpop.permute.xlu0 %2632
  %2634 = vset.pattern.permute.xlu0 0
  %2635 = vperm.xlu0 %2634, %v2002
  %v2636 = vpop.permute.xlu0 %2635
  %2637 = vset.pattern.permute.xlu0 0
  %2638 = vperm.xlu0 %2637, %v2003
  %v2639 = vpop.permute.xlu0 %2638
  %2640 = vset.pattern.permute.xlu0 0
  %2641 = vperm.xlu0 %2640, %v2004
  %v2642 = vpop.permute.xlu0 %2641
  %2643 = vset.pattern.permute.xlu0 0
  %2644 = vperm.xlu0 %2643, %v2005
  %v2645 = vpop.permute.xlu0 %2644
  %2646 = vset.pattern.permute.xlu0 0
  %2647 = vperm.xlu0 %2646, %v2006
  %v2648 = vpop.permute.xlu0 %2647
  %2649 = vset.pattern.permute.xlu0 0
  %2650 = vperm.xlu0 %2649, %v2007
  %v2651 = vpop.permute.xlu0 %2650
  %2652 = vset.pattern.permute.xlu0 0
  %2653 = vperm.xlu0 %2652, %v2008
  %v2654 = vpop.permute.xlu0 %2653
  %2655 = vset.pattern.permute.xlu0 0
  %2656 = vperm.xlu0 %2655, %v2009
  %v2657 = vpop.permute.xlu0 %2656
  %2658 = vset.pattern.permute.xlu0 0
  %2659 = vperm.xlu0 %2658, %v2010
  %v2660 = vpop.permute.xlu0 %2659
  %2661 = vset.pattern.permute.xlu0 0
  %2662 = vperm.xlu0 %2661, %v2011
  %v2663 = vpop.permute.xlu0 %2662
  %2664 = vset.pattern.permute.xlu0 0
  %2665 = vperm.xlu0 %2664, %v2012
  %v2666 = vpop.permute.xlu0 %2665
  %2667 = vset.pattern.permute.xlu0 0
  %2668 = vperm.xlu0 %2667, %v2013
  %v2669 = vpop.permute.xlu0 %2668
  %2670 = vset.pattern.permute.xlu0 0
  %2671 = vperm.xlu0 %2670, %v2014
  %v2672 = vpop.permute.xlu0 %2671
  %2673 = vset.pattern.permute.xlu0 0
  %2674 = vperm.xlu0 %2673, %v2015
  %v2675 = vpop.permute.xlu0 %2674
  %2676 = vset.pattern.permute.xlu0 0
  %2677 = vperm.xlu0 %2676, %v2016
  %v2678 = vpop.permute.xlu0 %2677
  %2679 = vset.pattern.permute.xlu0 0
  %2680 = vperm.xlu0 %2679, %v2017
  %v2681 = vpop.permute.xlu0 %2680
  %2682 = vset.pattern.permute.xlu0 0
  %2683 = vperm.xlu0 %2682, %v2018
  %v2684 = vpop.permute.xlu0 %2683
  %2685 = vset.pattern.permute.xlu0 0
  %2686 = vperm.xlu0 %2685, %v2019
  %v2687 = vpop.permute.xlu0 %2686
  %2688 = vset.pattern.permute.xlu0 0
  %2689 = vperm.xlu0 %2688, %v2020
  %v2690 = vpop.permute.xlu0 %2689
  %2691 = vset.pattern.permute.xlu0 0
  %2692 = vperm.xlu0 %2691, %v2021
  %v2693 = vpop.permute.xlu0 %2692
  %2694 = vset.pattern.permute.xlu0 0
  %2695 = vperm.xlu0 %2694, %v2022
  %v2696 = vpop.permute.xlu0 %2695
  %2697 = vset.pattern.permute.xlu0 0
  %2698 = vperm.xlu0 %2697, %v2023
  %v2699 = vpop.permute.xlu0 %2698
  %2700 = vset.pattern.permute.xlu0 0
  %2701 = vperm.xlu0 %2700, %v2024
  %v2702 = vpop.permute.xlu0 %2701
  %2703 = vset.pattern.permute.xlu0 0
  %2704 = vperm.xlu0 %2703, %v2025
  %v2705 = vpop.permute.xlu0 %2704
  %2706 = vset.pattern.permute.xlu0 0
  %2707 = vperm.xlu0 %2706, %v2026
  %v2708 = vpop.permute.xlu0 %2707
  %2709 = vset.pattern.permute.xlu0 0
  %2710 = vperm.xlu0 %2709, %v2027
  %v2711 = vpop.permute.xlu0 %2710
  %2712 = vset.pattern.permute.xlu0 0
  %2713 = vperm.xlu0 %2712, %v2028
  %v2714 = vpop.permute.xlu0 %2713
  %2715 = vset.pattern.permute.xlu0 0
  %2716 = vperm.xlu0 %2715, %v2029
  %v2717 = vpop.permute.xlu0 %2716
  %2718 = vset.pattern.permute.xlu0 0
  %2719 = vperm.xlu0 %2718, %v2030
  %v2720 = vpop.permute.xlu0 %2719
  %2721 = vset.pattern.permute.xlu0 0
  %2722 = vperm.xlu0 %2721, %v2031
  %v2723 = vpop.permute.xlu0 %2722
  %2724 = vset.pattern.permute.xlu0 0
  %2725 = vperm.xlu0 %2724, %v2032
  %v2726 = vpop.permute.xlu0 %2725
  %2727 = vset.pattern.permute.xlu0 0
  %2728 = vperm.xlu0 %2727, %v2033
  %v2729 = vpop.permute.xlu0 %2728
  %2730 = vset.pattern.permute.xlu0 0
  %2731 = vperm.xlu0 %2730, %v2034
  %v2732 = vpop.permute.xlu0 %2731
  %2733 = vset.pattern.permute.xlu0 0
  %2734 = vperm.xlu0 %2733, %v2035
  %v2735 = vpop.permute.xlu0 %2734
  %2736 = vset.pattern.permute.xlu0 0
  %2737 = vperm.xlu0 %2736, %v2036
  %v2738 = vpop.permute.xlu0 %2737
  %2739 = vset.pattern.permute.xlu0 0
  %2740 = vperm.xlu0 %2739, %v2037
  %v2741 = vpop.permute.xlu0 %2740
  %2742 = vset.pattern.permute.xlu0 0
  %2743 = vperm.xlu0 %2742, %v2038
  %v2744 = vpop.permute.xlu0 %2743
  %2745 = vset.pattern.permute.xlu0 0
  %2746 = vperm.xlu0 %2745, %v2039
  %v2747 = vpop.permute.xlu0 %2746
  %2748 = vset.pattern.permute.xlu0 0
  %2749 = vperm.xlu0 %2748, %v2040
  %v2750 = vpop.permute.xlu0 %2749
  %2751 = vset.pattern.permute.xlu0 0
  %2752 = vperm.xlu0 %2751, %v2041
  %v2753 = vpop.permute.xlu0 %2752
  %2754 = vset.pattern.permute.xlu0 0
  %2755 = vperm.xlu0 %2754, %v2042
  %v2756 = vpop.permute.xlu0 %2755
  %2757 = vset.pattern.permute.xlu0 0
  %2758 = vperm.xlu0 %2757, %v2043
  %v2759 = vpop.permute.xlu0 %2758
  %2760 = vset.pattern.permute.xlu0 0
  %2761 = vperm.xlu0 %2760, %v2044
  %v2762 = vpop.permute.xlu0 %2761
  %2763 = vset.pattern.permute.xlu0 0
  %2764 = vperm.xlu0 %2763, %v2045
  %v2765 = vpop.permute.xlu0 %2764
  %2766 = vset.pattern.permute.xlu0 0
  %2767 = vperm.xlu0 %2766, %v2046
  %v2768 = vpop.permute.xlu0 %2767
  %2769 = vset.pattern.permute.xlu0 0
  %2770 = vperm.xlu0 %2769, %v2047
  %v2771 = vpop.permute.xlu0 %2770
  %2772 = vset.pattern.permute.xlu0 0
  %2773 = vperm.xlu0 %2772, %v2048
  %v2774 = vpop.permute.xlu0 %2773
  %2775 = vset.pattern.permute.xlu0 0
  %2776 = vperm.xlu0 %2775, %v2049
  %v2777 = vpop.permute.xlu0 %2776
  %2778 = vset.pattern.permute.xlu0 0
  %2779 = vperm.xlu0 %2778, %v2050
  %v2780 = vpop.permute.xlu0 %2779
  %2781 = vset.pattern.permute.xlu0 0
  %2782 = vperm.xlu0 %2781, %v2051
  %v2783 = vpop.permute.xlu0 %2782
  %2784 = vset.pattern.permute.xlu0 0
  %2785 = vperm.xlu0 %2784, %v2052
  %v2786 = vpop.permute.xlu0 %2785
  %2787 = vset.pattern.permute.xlu0 0
  %2788 = vperm.xlu0 %2787, %v2053
  %v2789 = vpop.permute.xlu0 %2788
  %2790 = vset.pattern.permute.xlu0 0
  %2791 = vperm.xlu0 %2790, %v2054
  %v2792 = vpop.permute.xlu0 %2791
  %2793 = vset.pattern.permute.xlu0 0
  %2794 = vperm.xlu0 %2793, %v2055
  %v2795 = vpop.permute.xlu0 %2794
  %2796 = vset.pattern.permute.xlu0 0
  %2797 = vperm.xlu0 %2796, %v2056
  %v2798 = vpop.permute.xlu0 %2797
  %2799 = vset.pattern.permute.xlu0 0
  %2800 = vperm.xlu0 %2799, %v2057
  %v2801 = vpop.permute.xlu0 %2800
  %2802 = vset.pattern.permute.xlu0 0
  %2803 = vperm.xlu0 %2802, %v2058
  %v2804 = vpop.permute.xlu0 %2803
  %2805 = vset.pattern.permute.xlu0 0
  %2806 = vperm.xlu0 %2805, %v2059
  %v2807 = vpop.permute.xlu0 %2806
  %2808 = vset.pattern.permute.xlu0 0
  %2809 = vperm.xlu0 %2808, %v2060
  %v2810 = vpop.permute.xlu0 %2809
  %2811 = vset.pattern.permute.xlu0 0
  %2812 = vperm.xlu0 %2811, %v2061
  %v2813 = vpop.permute.xlu0 %2812
  %2814 = vset.pattern.permute.xlu0 0
  %2815 = vperm.xlu0 %2814, %v2062
  %v2816 = vpop.permute.xlu0 %2815
  %2817 = vset.pattern.permute.xlu0 0
  %2818 = vperm.xlu0 %2817, %v2063
  %v2819 = vpop.permute.xlu0 %2818
  %2820 = vset.pattern.permute.xlu0 0
  %2821 = vperm.xlu0 %2820, %v2064
  %v2822 = vpop.permute.xlu0 %2821
  %2823 = vset.pattern.permute.xlu0 0
  %2824 = vperm.xlu0 %2823, %v2065
  %v2825 = vpop.permute.xlu0 %2824
  %2826 = vset.pattern.permute.xlu0 0
  %2827 = vperm.xlu0 %2826, %v2066
  %v2828 = vpop.permute.xlu0 %2827
  %2829 = vset.pattern.permute.xlu0 0
  %2830 = vperm.xlu0 %2829, %v2067
  %v2831 = vpop.permute.xlu0 %2830
  %2832 = vset.pattern.permute.xlu0 0
  %2833 = vperm.xlu0 %2832, %v2068
  %v2834 = vpop.permute.xlu0 %2833
  %2835 = vset.pattern.permute.xlu0 0
  %2836 = vperm.xlu0 %2835, %v2069
  %v2837 = vpop.permute.xlu0 %2836
  %v2838 = vlaneseq
  %v2839 = vand.u32 %v2838, 127
  %v2840 = vlaneseq
  %v2841 = vshrl.u32 %v2840, 7
  %v2842 = vsub.s32 %v2839, %v2841
  %v2843 = vrot.slane %v2264, %v2842
  %v2844 = vadd.s32 %v2839, 4294967288
  %v2845 = vlaneseq
  %v2846 = vshrl.u32 %v2845, 7
  %v2847 = vsub.s32 %v2844, %v2846
  %v2848 = vrot.slane %v2267, %v2847
  %vm2849 = vcmask 130112
  %v2850 = vsel %vm2849, %v2848, %v2843
  %v2851 = vlaneseq
  %v2852 = vshrl.u32 %v2851, 7
  %v2853 = vsub.s32 %v2839, %v2852
  %v2854 = vrot.slane %v2270, %v2853
  %v2855 = vlaneseq
  %v2856 = vshrl.u32 %v2855, 7
  %v2857 = vsub.s32 %v2844, %v2856
  %v2858 = vrot.slane %v2273, %v2857
  %v2859 = vsel %vm2849, %v2858, %v2854
  %v2860 = vlaneseq
  %v2861 = vshrl.u32 %v2860, 7
  %v2862 = vsub.s32 %v2839, %v2861
  %v2863 = vrot.slane %v2276, %v2862
  %v2864 = vlaneseq
  %v2865 = vshrl.u32 %v2864, 7
  %v2866 = vsub.s32 %v2844, %v2865
  %v2867 = vrot.slane %v2279, %v2866
  %v2868 = vsel %vm2849, %v2867, %v2863
  %v2869 = vlaneseq
  %v2870 = vshrl.u32 %v2869, 7
  %v2871 = vsub.s32 %v2839, %v2870
  %v2872 = vrot.slane %v2282, %v2871
  %v2873 = vlaneseq
  %v2874 = vshrl.u32 %v2873, 7
  %v2875 = vsub.s32 %v2844, %v2874
  %v2876 = vrot.slane %v2285, %v2875
  %v2877 = vsel %vm2849, %v2876, %v2872
  %v2878 = vlaneseq
  %v2879 = vshrl.u32 %v2878, 7
  %v2880 = vsub.s32 %v2839, %v2879
  %v2881 = vrot.slane %v2288, %v2880
  %v2882 = vlaneseq
  %v2883 = vshrl.u32 %v2882, 7
  %v2884 = vsub.s32 %v2844, %v2883
  %v2885 = vrot.slane %v2291, %v2884
  %v2886 = vsel %vm2849, %v2885, %v2881
  %v2887 = vlaneseq
  %v2888 = vshrl.u32 %v2887, 7
  %v2889 = vsub.s32 %v2839, %v2888
  %v2890 = vrot.slane %v2294, %v2889
  %v2891 = vlaneseq
  %v2892 = vshrl.u32 %v2891, 7
  %v2893 = vsub.s32 %v2844, %v2892
  %v2894 = vrot.slane %v2297, %v2893
  %v2895 = vsel %vm2849, %v2894, %v2890
  %v2896 = vlaneseq
  %v2897 = vshrl.u32 %v2896, 7
  %v2898 = vsub.s32 %v2839, %v2897
  %v2899 = vrot.slane %v2300, %v2898
  %v2900 = vlaneseq
  %v2901 = vshrl.u32 %v2900, 7
  %v2902 = vsub.s32 %v2844, %v2901
  %v2903 = vrot.slane %v2303, %v2902
  %v2904 = vsel %vm2849, %v2903, %v2899
  %v2905 = vlaneseq
  %v2906 = vshrl.u32 %v2905, 7
  %v2907 = vsub.s32 %v2839, %v2906
  %v2908 = vrot.slane %v2306, %v2907
  %v2909 = vlaneseq
  %v2910 = vshrl.u32 %v2909, 7
  %v2911 = vsub.s32 %v2844, %v2910
  %v2912 = vrot.slane %v2309, %v2911
  %v2913 = vsel %vm2849, %v2912, %v2908
  %v2914 = vlaneseq
  %v2915 = vshrl.u32 %v2914, 7
  %v2916 = vsub.s32 %v2839, %v2915
  %v2917 = vrot.slane %v2312, %v2916
  %v2918 = vlaneseq
  %v2919 = vshrl.u32 %v2918, 7
  %v2920 = vsub.s32 %v2844, %v2919
  %v2921 = vrot.slane %v2315, %v2920
  %v2922 = vsel %vm2849, %v2921, %v2917
  %v2923 = vlaneseq
  %v2924 = vshrl.u32 %v2923, 7
  %v2925 = vsub.s32 %v2839, %v2924
  %v2926 = vrot.slane %v2318, %v2925
  %v2927 = vlaneseq
  %v2928 = vshrl.u32 %v2927, 7
  %v2929 = vsub.s32 %v2844, %v2928
  %v2930 = vrot.slane %v2321, %v2929
  %v2931 = vsel %vm2849, %v2930, %v2926
  %v2932 = vlaneseq
  %v2933 = vshrl.u32 %v2932, 7
  %v2934 = vsub.s32 %v2839, %v2933
  %v2935 = vrot.slane %v2324, %v2934
  %v2936 = vlaneseq
  %v2937 = vshrl.u32 %v2936, 7
  %v2938 = vsub.s32 %v2844, %v2937
  %v2939 = vrot.slane %v2327, %v2938
  %v2940 = vsel %vm2849, %v2939, %v2935
  %v2941 = vlaneseq
  %v2942 = vshrl.u32 %v2941, 7
  %v2943 = vsub.s32 %v2839, %v2942
  %v2944 = vrot.slane %v2330, %v2943
  %v2945 = vlaneseq
  %v2946 = vshrl.u32 %v2945, 7
  %v2947 = vsub.s32 %v2844, %v2946
  %v2948 = vrot.slane %v2333, %v2947
  %v2949 = vsel %vm2849, %v2948, %v2944
  %v2950 = vlaneseq
  %v2951 = vshrl.u32 %v2950, 7
  %v2952 = vsub.s32 %v2839, %v2951
  %v2953 = vrot.slane %v2336, %v2952
  %v2954 = vlaneseq
  %v2955 = vshrl.u32 %v2954, 7
  %v2956 = vsub.s32 %v2844, %v2955
  %v2957 = vrot.slane %v2339, %v2956
  %v2958 = vsel %vm2849, %v2957, %v2953
  %v2959 = vlaneseq
  %v2960 = vshrl.u32 %v2959, 7
  %v2961 = vsub.s32 %v2839, %v2960
  %v2962 = vrot.slane %v2342, %v2961
  %v2963 = vlaneseq
  %v2964 = vshrl.u32 %v2963, 7
  %v2965 = vsub.s32 %v2844, %v2964
  %v2966 = vrot.slane %v2345, %v2965
  %v2967 = vsel %vm2849, %v2966, %v2962
  %v2968 = vlaneseq
  %v2969 = vshrl.u32 %v2968, 7
  %v2970 = vsub.s32 %v2839, %v2969
  %v2971 = vrot.slane %v2348, %v2970
  %v2972 = vlaneseq
  %v2973 = vshrl.u32 %v2972, 7
  %v2974 = vsub.s32 %v2844, %v2973
  %v2975 = vrot.slane %v2351, %v2974
  %v2976 = vsel %vm2849, %v2975, %v2971
  %v2977 = vlaneseq
  %v2978 = vshrl.u32 %v2977, 7
  %v2979 = vsub.s32 %v2839, %v2978
  %v2980 = vrot.slane %v2354, %v2979
  %v2981 = vlaneseq
  %v2982 = vshrl.u32 %v2981, 7
  %v2983 = vsub.s32 %v2844, %v2982
  %v2984 = vrot.slane %v2357, %v2983
  %v2985 = vsel %vm2849, %v2984, %v2980
  %v2986 = vlaneseq
  %v2987 = vshrl.u32 %v2986, 7
  %v2988 = vsub.s32 %v2839, %v2987
  %v2989 = vrot.slane %v2360, %v2988
  %v2990 = vlaneseq
  %v2991 = vshrl.u32 %v2990, 7
  %v2992 = vsub.s32 %v2844, %v2991
  %v2993 = vrot.slane %v2363, %v2992
  %v2994 = vsel %vm2849, %v2993, %v2989
  %v2995 = vlaneseq
  %v2996 = vshrl.u32 %v2995, 7
  %v2997 = vsub.s32 %v2839, %v2996
  %v2998 = vrot.slane %v2366, %v2997
  %v2999 = vlaneseq
  %v3000 = vshrl.u32 %v2999, 7
  %v3001 = vsub.s32 %v2844, %v3000
  %v3002 = vrot.slane %v2369, %v3001
  %v3003 = vsel %vm2849, %v3002, %v2998
  %v3004 = vlaneseq
  %v3005 = vshrl.u32 %v3004, 7
  %v3006 = vsub.s32 %v2839, %v3005
  %v3007 = vrot.slane %v2372, %v3006
  %v3008 = vlaneseq
  %v3009 = vshrl.u32 %v3008, 7
  %v3010 = vsub.s32 %v2844, %v3009
  %v3011 = vrot.slane %v2375, %v3010
  %v3012 = vsel %vm2849, %v3011, %v3007
  %v3013 = vlaneseq
  %v3014 = vshrl.u32 %v3013, 7
  %v3015 = vsub.s32 %v2839, %v3014
  %v3016 = vrot.slane %v2378, %v3015
  %v3017 = vlaneseq
  %v3018 = vshrl.u32 %v3017, 7
  %v3019 = vsub.s32 %v2844, %v3018
  %v3020 = vrot.slane %v2381, %v3019
  %v3021 = vsel %vm2849, %v3020, %v3016
  %v3022 = vlaneseq
  %v3023 = vshrl.u32 %v3022, 7
  %v3024 = vsub.s32 %v2839, %v3023
  %v3025 = vrot.slane %v2384, %v3024
  %v3026 = vlaneseq
  %v3027 = vshrl.u32 %v3026, 7
  %v3028 = vsub.s32 %v2844, %v3027
  %v3029 = vrot.slane %v2387, %v3028
  %v3030 = vsel %vm2849, %v3029, %v3025
  %v3031 = vlaneseq
  %v3032 = vshrl.u32 %v3031, 7
  %v3033 = vsub.s32 %v2839, %v3032
  %v3034 = vrot.slane %v2390, %v3033
  %v3035 = vlaneseq
  %v3036 = vshrl.u32 %v3035, 7
  %v3037 = vsub.s32 %v2844, %v3036
  %v3038 = vrot.slane %v2393, %v3037
  %v3039 = vsel %vm2849, %v3038, %v3034
  %v3040 = vlaneseq
  %v3041 = vshrl.u32 %v3040, 7
  %v3042 = vsub.s32 %v2839, %v3041
  %v3043 = vrot.slane %v2396, %v3042
  %v3044 = vlaneseq
  %v3045 = vshrl.u32 %v3044, 7
  %v3046 = vsub.s32 %v2844, %v3045
  %v3047 = vrot.slane %v2399, %v3046
  %v3048 = vsel %vm2849, %v3047, %v3043
  %v3049 = vlaneseq
  %v3050 = vshrl.u32 %v3049, 7
  %v3051 = vsub.s32 %v2839, %v3050
  %v3052 = vrot.slane %v2402, %v3051
  %v3053 = vlaneseq
  %v3054 = vshrl.u32 %v3053, 7
  %v3055 = vsub.s32 %v2844, %v3054
  %v3056 = vrot.slane %v2405, %v3055
  %v3057 = vsel %vm2849, %v3056, %v3052
  %v3058 = vlaneseq
  %v3059 = vshrl.u32 %v3058, 7
  %v3060 = vsub.s32 %v2839, %v3059
  %v3061 = vrot.slane %v2408, %v3060
  %v3062 = vlaneseq
  %v3063 = vshrl.u32 %v3062, 7
  %v3064 = vsub.s32 %v2844, %v3063
  %v3065 = vrot.slane %v2411, %v3064
  %v3066 = vsel %vm2849, %v3065, %v3061
  %v3067 = vlaneseq
  %v3068 = vshrl.u32 %v3067, 7
  %v3069 = vsub.s32 %v2839, %v3068
  %v3070 = vrot.slane %v2414, %v3069
  %v3071 = vlaneseq
  %v3072 = vshrl.u32 %v3071, 7
  %v3073 = vsub.s32 %v2844, %v3072
  %v3074 = vrot.slane %v2417, %v3073
  %v3075 = vsel %vm2849, %v3074, %v3070
  %v3076 = vlaneseq
  %v3077 = vshrl.u32 %v3076, 7
  %v3078 = vsub.s32 %v2839, %v3077
  %v3079 = vrot.slane %v2420, %v3078
  %v3080 = vlaneseq
  %v3081 = vshrl.u32 %v3080, 7
  %v3082 = vsub.s32 %v2844, %v3081
  %v3083 = vrot.slane %v2423, %v3082
  %v3084 = vsel %vm2849, %v3083, %v3079
  %v3085 = vlaneseq
  %v3086 = vshrl.u32 %v3085, 7
  %v3087 = vsub.s32 %v2839, %v3086
  %v3088 = vrot.slane %v2426, %v3087
  %v3089 = vlaneseq
  %v3090 = vshrl.u32 %v3089, 7
  %v3091 = vsub.s32 %v2844, %v3090
  %v3092 = vrot.slane %v2429, %v3091
  %v3093 = vsel %vm2849, %v3092, %v3088
  %v3094 = vlaneseq
  %v3095 = vshrl.u32 %v3094, 7
  %v3096 = vsub.s32 %v2839, %v3095
  %v3097 = vrot.slane %v2432, %v3096
  %v3098 = vlaneseq
  %v3099 = vshrl.u32 %v3098, 7
  %v3100 = vsub.s32 %v2844, %v3099
  %v3101 = vrot.slane %v2435, %v3100
  %v3102 = vsel %vm2849, %v3101, %v3097
  %v3103 = vlaneseq
  %v3104 = vshrl.u32 %v3103, 7
  %v3105 = vsub.s32 %v2839, %v3104
  %v3106 = vrot.slane %v2438, %v3105
  %v3107 = vlaneseq
  %v3108 = vshrl.u32 %v3107, 7
  %v3109 = vsub.s32 %v2844, %v3108
  %v3110 = vrot.slane %v2441, %v3109
  %v3111 = vsel %vm2849, %v3110, %v3106
  %v3112 = vlaneseq
  %v3113 = vshrl.u32 %v3112, 7
  %v3114 = vsub.s32 %v2839, %v3113
  %v3115 = vrot.slane %v2444, %v3114
  %v3116 = vlaneseq
  %v3117 = vshrl.u32 %v3116, 7
  %v3118 = vsub.s32 %v2844, %v3117
  %v3119 = vrot.slane %v2447, %v3118
  %v3120 = vsel %vm2849, %v3119, %v3115
  %v3121 = vlaneseq
  %v3122 = vshrl.u32 %v3121, 7
  %v3123 = vsub.s32 %v2839, %v3122
  %v3124 = vrot.slane %v2450, %v3123
  %v3125 = vlaneseq
  %v3126 = vshrl.u32 %v3125, 7
  %v3127 = vsub.s32 %v2844, %v3126
  %v3128 = vrot.slane %v2453, %v3127
  %v3129 = vsel %vm2849, %v3128, %v3124
  %v3130 = vlaneseq
  %v3131 = vshrl.u32 %v3130, 7
  %v3132 = vsub.s32 %v2839, %v3131
  %v3133 = vrot.slane %v2456, %v3132
  %v3134 = vlaneseq
  %v3135 = vshrl.u32 %v3134, 7
  %v3136 = vsub.s32 %v2844, %v3135
  %v3137 = vrot.slane %v2459, %v3136
  %v3138 = vsel %vm2849, %v3137, %v3133
  %v3139 = vlaneseq
  %v3140 = vshrl.u32 %v3139, 7
  %v3141 = vsub.s32 %v2839, %v3140
  %v3142 = vrot.slane %v2462, %v3141
  %v3143 = vlaneseq
  %v3144 = vshrl.u32 %v3143, 7
  %v3145 = vsub.s32 %v2844, %v3144
  %v3146 = vrot.slane %v2465, %v3145
  %v3147 = vsel %vm2849, %v3146, %v3142
  %v3148 = vlaneseq
  %v3149 = vshrl.u32 %v3148, 7
  %v3150 = vsub.s32 %v2839, %v3149
  %v3151 = vrot.slane %v2468, %v3150
  %v3152 = vlaneseq
  %v3153 = vshrl.u32 %v3152, 7
  %v3154 = vsub.s32 %v2844, %v3153
  %v3155 = vrot.slane %v2471, %v3154
  %v3156 = vsel %vm2849, %v3155, %v3151
  %v3157 = vlaneseq
  %v3158 = vshrl.u32 %v3157, 7
  %v3159 = vsub.s32 %v2839, %v3158
  %v3160 = vrot.slane %v2474, %v3159
  %v3161 = vlaneseq
  %v3162 = vshrl.u32 %v3161, 7
  %v3163 = vsub.s32 %v2844, %v3162
  %v3164 = vrot.slane %v2477, %v3163
  %v3165 = vsel %vm2849, %v3164, %v3160
  %v3166 = vlaneseq
  %v3167 = vshrl.u32 %v3166, 7
  %v3168 = vsub.s32 %v2839, %v3167
  %v3169 = vrot.slane %v2480, %v3168
  %v3170 = vlaneseq
  %v3171 = vshrl.u32 %v3170, 7
  %v3172 = vsub.s32 %v2844, %v3171
  %v3173 = vrot.slane %v2483, %v3172
  %v3174 = vsel %vm2849, %v3173, %v3169
  %v3175 = vlaneseq
  %v3176 = vshrl.u32 %v3175, 7
  %v3177 = vsub.s32 %v2839, %v3176
  %v3178 = vrot.slane %v2486, %v3177
  %v3179 = vlaneseq
  %v3180 = vshrl.u32 %v3179, 7
  %v3181 = vsub.s32 %v2844, %v3180
  %v3182 = vrot.slane %v2489, %v3181
  %v3183 = vsel %vm2849, %v3182, %v3178
  %v3184 = vlaneseq
  %v3185 = vshrl.u32 %v3184, 7
  %v3186 = vsub.s32 %v2839, %v3185
  %v3187 = vrot.slane %v2492, %v3186
  %v3188 = vlaneseq
  %v3189 = vshrl.u32 %v3188, 7
  %v3190 = vsub.s32 %v2844, %v3189
  %v3191 = vrot.slane %v2495, %v3190
  %v3192 = vsel %vm2849, %v3191, %v3187
  %v3193 = vlaneseq
  %v3194 = vshrl.u32 %v3193, 7
  %v3195 = vsub.s32 %v2839, %v3194
  %v3196 = vrot.slane %v2498, %v3195
  %v3197 = vlaneseq
  %v3198 = vshrl.u32 %v3197, 7
  %v3199 = vsub.s32 %v2844, %v3198
  %v3200 = vrot.slane %v2501, %v3199
  %v3201 = vsel %vm2849, %v3200, %v3196
  %v3202 = vlaneseq
  %v3203 = vshrl.u32 %v3202, 7
  %v3204 = vsub.s32 %v2839, %v3203
  %v3205 = vrot.slane %v2504, %v3204
  %v3206 = vlaneseq
  %v3207 = vshrl.u32 %v3206, 7
  %v3208 = vsub.s32 %v2844, %v3207
  %v3209 = vrot.slane %v2507, %v3208
  %v3210 = vsel %vm2849, %v3209, %v3205
  %v3211 = vlaneseq
  %v3212 = vshrl.u32 %v3211, 7
  %v3213 = vsub.s32 %v2839, %v3212
  %v3214 = vrot.slane %v2510, %v3213
  %v3215 = vlaneseq
  %v3216 = vshrl.u32 %v3215, 7
  %v3217 = vsub.s32 %v2844, %v3216
  %v3218 = vrot.slane %v2513, %v3217
  %v3219 = vsel %vm2849, %v3218, %v3214
  %v3220 = vlaneseq
  %v3221 = vshrl.u32 %v3220, 7
  %v3222 = vsub.s32 %v2839, %v3221
  %v3223 = vrot.slane %v2516, %v3222
  %v3224 = vlaneseq
  %v3225 = vshrl.u32 %v3224, 7
  %v3226 = vsub.s32 %v2844, %v3225
  %v3227 = vrot.slane %v2519, %v3226
  %v3228 = vsel %vm2849, %v3227, %v3223
  %v3229 = vlaneseq
  %v3230 = vshrl.u32 %v3229, 7
  %v3231 = vsub.s32 %v2839, %v3230
  %v3232 = vrot.slane %v2522, %v3231
  %v3233 = vlaneseq
  %v3234 = vshrl.u32 %v3233, 7
  %v3235 = vsub.s32 %v2844, %v3234
  %v3236 = vrot.slane %v2525, %v3235
  %v3237 = vsel %vm2849, %v3236, %v3232
  %v3238 = vlaneseq
  %v3239 = vshrl.u32 %v3238, 7
  %v3240 = vsub.s32 %v2839, %v3239
  %v3241 = vrot.slane %v2528, %v3240
  %v3242 = vlaneseq
  %v3243 = vshrl.u32 %v3242, 7
  %v3244 = vsub.s32 %v2844, %v3243
  %v3245 = vrot.slane %v2531, %v3244
  %v3246 = vsel %vm2849, %v3245, %v3241
  %v3247 = vlaneseq
  %v3248 = vshrl.u32 %v3247, 7
  %v3249 = vsub.s32 %v2839, %v3248
  %v3250 = vrot.slane %v2534, %v3249
  %v3251 = vlaneseq
  %v3252 = vshrl.u32 %v3251, 7
  %v3253 = vsub.s32 %v2844, %v3252
  %v3254 = vrot.slane %v2537, %v3253
  %v3255 = vsel %vm2849, %v3254, %v3250
  %v3256 = vlaneseq
  %v3257 = vshrl.u32 %v3256, 7
  %v3258 = vsub.s32 %v2839, %v3257
  %v3259 = vrot.slane %v2540, %v3258
  %v3260 = vlaneseq
  %v3261 = vshrl.u32 %v3260, 7
  %v3262 = vsub.s32 %v2844, %v3261
  %v3263 = vrot.slane %v2543, %v3262
  %v3264 = vsel %vm2849, %v3263, %v3259
  %v3265 = vlaneseq
  %v3266 = vshrl.u32 %v3265, 7
  %v3267 = vsub.s32 %v2839, %v3266
  %v3268 = vrot.slane %v2546, %v3267
  %v3269 = vlaneseq
  %v3270 = vshrl.u32 %v3269, 7
  %v3271 = vsub.s32 %v2844, %v3270
  %v3272 = vrot.slane %v2549, %v3271
  %v3273 = vsel %vm2849, %v3272, %v3268
  %v3274 = vlaneseq
  %v3275 = vshrl.u32 %v3274, 7
  %v3276 = vsub.s32 %v2839, %v3275
  %v3277 = vrot.slane %v2552, %v3276
  %v3278 = vlaneseq
  %v3279 = vshrl.u32 %v3278, 7
  %v3280 = vsub.s32 %v2844, %v3279
  %v3281 = vrot.slane %v2555, %v3280
  %v3282 = vsel %vm2849, %v3281, %v3277
  %v3283 = vlaneseq
  %v3284 = vshrl.u32 %v3283, 7
  %v3285 = vsub.s32 %v2839, %v3284
  %v3286 = vrot.slane %v2558, %v3285
  %v3287 = vlaneseq
  %v3288 = vshrl.u32 %v3287, 7
  %v3289 = vsub.s32 %v2844, %v3288
  %v3290 = vrot.slane %v2561, %v3289
  %v3291 = vsel %vm2849, %v3290, %v3286
  %v3292 = vlaneseq
  %v3293 = vshrl.u32 %v3292, 7
  %v3294 = vsub.s32 %v2839, %v3293
  %v3295 = vrot.slane %v2564, %v3294
  %v3296 = vlaneseq
  %v3297 = vshrl.u32 %v3296, 7
  %v3298 = vsub.s32 %v2844, %v3297
  %v3299 = vrot.slane %v2567, %v3298
  %v3300 = vsel %vm2849, %v3299, %v3295
  %v3301 = vlaneseq
  %v3302 = vshrl.u32 %v3301, 7
  %v3303 = vsub.s32 %v2839, %v3302
  %v3304 = vrot.slane %v2570, %v3303
  %v3305 = vlaneseq
  %v3306 = vshrl.u32 %v3305, 7
  %v3307 = vsub.s32 %v2844, %v3306
  %v3308 = vrot.slane %v2573, %v3307
  %v3309 = vsel %vm2849, %v3308, %v3304
  %v3310 = vlaneseq
  %v3311 = vshrl.u32 %v3310, 7
  %v3312 = vsub.s32 %v2839, %v3311
  %v3313 = vrot.slane %v2576, %v3312
  %v3314 = vlaneseq
  %v3315 = vshrl.u32 %v3314, 7
  %v3316 = vsub.s32 %v2844, %v3315
  %v3317 = vrot.slane %v2579, %v3316
  %v3318 = vsel %vm2849, %v3317, %v3313
  %v3319 = vlaneseq
  %v3320 = vshrl.u32 %v3319, 7
  %v3321 = vsub.s32 %v2839, %v3320
  %v3322 = vrot.slane %v2582, %v3321
  %v3323 = vlaneseq
  %v3324 = vshrl.u32 %v3323, 7
  %v3325 = vsub.s32 %v2844, %v3324
  %v3326 = vrot.slane %v2585, %v3325
  %v3327 = vsel %vm2849, %v3326, %v3322
  %v3328 = vlaneseq
  %v3329 = vshrl.u32 %v3328, 7
  %v3330 = vsub.s32 %v2839, %v3329
  %v3331 = vrot.slane %v2588, %v3330
  %v3332 = vlaneseq
  %v3333 = vshrl.u32 %v3332, 7
  %v3334 = vsub.s32 %v2844, %v3333
  %v3335 = vrot.slane %v2591, %v3334
  %v3336 = vsel %vm2849, %v3335, %v3331
  %v3337 = vlaneseq
  %v3338 = vshrl.u32 %v3337, 7
  %v3339 = vsub.s32 %v2839, %v3338
  %v3340 = vrot.slane %v2594, %v3339
  %v3341 = vlaneseq
  %v3342 = vshrl.u32 %v3341, 7
  %v3343 = vsub.s32 %v2844, %v3342
  %v3344 = vrot.slane %v2597, %v3343
  %v3345 = vsel %vm2849, %v3344, %v3340
  %v3346 = vlaneseq
  %v3347 = vshrl.u32 %v3346, 7
  %v3348 = vsub.s32 %v2839, %v3347
  %v3349 = vrot.slane %v2600, %v3348
  %v3350 = vlaneseq
  %v3351 = vshrl.u32 %v3350, 7
  %v3352 = vsub.s32 %v2844, %v3351
  %v3353 = vrot.slane %v2603, %v3352
  %v3354 = vsel %vm2849, %v3353, %v3349
  %v3355 = vlaneseq
  %v3356 = vshrl.u32 %v3355, 7
  %v3357 = vsub.s32 %v2839, %v3356
  %v3358 = vrot.slane %v2606, %v3357
  %v3359 = vlaneseq
  %v3360 = vshrl.u32 %v3359, 7
  %v3361 = vsub.s32 %v2844, %v3360
  %v3362 = vrot.slane %v2609, %v3361
  %v3363 = vsel %vm2849, %v3362, %v3358
  %v3364 = vlaneseq
  %v3365 = vshrl.u32 %v3364, 7
  %v3366 = vsub.s32 %v2839, %v3365
  %v3367 = vrot.slane %v2612, %v3366
  %v3368 = vlaneseq
  %v3369 = vshrl.u32 %v3368, 7
  %v3370 = vsub.s32 %v2844, %v3369
  %v3371 = vrot.slane %v2615, %v3370
  %v3372 = vsel %vm2849, %v3371, %v3367
  %v3373 = vlaneseq
  %v3374 = vshrl.u32 %v3373, 7
  %v3375 = vsub.s32 %v2839, %v3374
  %v3376 = vrot.slane %v2618, %v3375
  %v3377 = vlaneseq
  %v3378 = vshrl.u32 %v3377, 7
  %v3379 = vsub.s32 %v2844, %v3378
  %v3380 = vrot.slane %v2621, %v3379
  %v3381 = vsel %vm2849, %v3380, %v3376
  %v3382 = vlaneseq
  %v3383 = vshrl.u32 %v3382, 7
  %v3384 = vsub.s32 %v2839, %v3383
  %v3385 = vrot.slane %v2624, %v3384
  %v3386 = vlaneseq
  %v3387 = vshrl.u32 %v3386, 7
  %v3388 = vsub.s32 %v2844, %v3387
  %v3389 = vrot.slane %v2627, %v3388
  %v3390 = vsel %vm2849, %v3389, %v3385
  %v3391 = vlaneseq
  %v3392 = vshrl.u32 %v3391, 7
  %v3393 = vsub.s32 %v2839, %v3392
  %v3394 = vrot.slane %v2630, %v3393
  %v3395 = vlaneseq
  %v3396 = vshrl.u32 %v3395, 7
  %v3397 = vsub.s32 %v2844, %v3396
  %v3398 = vrot.slane %v2633, %v3397
  %v3399 = vsel %vm2849, %v3398, %v3394
  %v3400 = vlaneseq
  %v3401 = vshrl.u32 %v3400, 7
  %v3402 = vsub.s32 %v2839, %v3401
  %v3403 = vrot.slane %v2636, %v3402
  %v3404 = vlaneseq
  %v3405 = vshrl.u32 %v3404, 7
  %v3406 = vsub.s32 %v2844, %v3405
  %v3407 = vrot.slane %v2639, %v3406
  %v3408 = vsel %vm2849, %v3407, %v3403
  %v3409 = vlaneseq
  %v3410 = vshrl.u32 %v3409, 7
  %v3411 = vsub.s32 %v2839, %v3410
  %v3412 = vrot.slane %v2642, %v3411
  %v3413 = vlaneseq
  %v3414 = vshrl.u32 %v3413, 7
  %v3415 = vsub.s32 %v2844, %v3414
  %v3416 = vrot.slane %v2645, %v3415
  %v3417 = vsel %vm2849, %v3416, %v3412
  %v3418 = vlaneseq
  %v3419 = vshrl.u32 %v3418, 7
  %v3420 = vsub.s32 %v2839, %v3419
  %v3421 = vrot.slane %v2648, %v3420
  %v3422 = vlaneseq
  %v3423 = vshrl.u32 %v3422, 7
  %v3424 = vsub.s32 %v2844, %v3423
  %v3425 = vrot.slane %v2651, %v3424
  %v3426 = vsel %vm2849, %v3425, %v3421
  %v3427 = vlaneseq
  %v3428 = vshrl.u32 %v3427, 7
  %v3429 = vsub.s32 %v2839, %v3428
  %v3430 = vrot.slane %v2654, %v3429
  %v3431 = vlaneseq
  %v3432 = vshrl.u32 %v3431, 7
  %v3433 = vsub.s32 %v2844, %v3432
  %v3434 = vrot.slane %v2657, %v3433
  %v3435 = vsel %vm2849, %v3434, %v3430
  %v3436 = vlaneseq
  %v3437 = vshrl.u32 %v3436, 7
  %v3438 = vsub.s32 %v2839, %v3437
  %v3439 = vrot.slane %v2660, %v3438
  %v3440 = vlaneseq
  %v3441 = vshrl.u32 %v3440, 7
  %v3442 = vsub.s32 %v2844, %v3441
  %v3443 = vrot.slane %v2663, %v3442
  %v3444 = vsel %vm2849, %v3443, %v3439
  %v3445 = vlaneseq
  %v3446 = vshrl.u32 %v3445, 7
  %v3447 = vsub.s32 %v2839, %v3446
  %v3448 = vrot.slane %v2666, %v3447
  %v3449 = vlaneseq
  %v3450 = vshrl.u32 %v3449, 7
  %v3451 = vsub.s32 %v2844, %v3450
  %v3452 = vrot.slane %v2669, %v3451
  %v3453 = vsel %vm2849, %v3452, %v3448
  %v3454 = vlaneseq
  %v3455 = vshrl.u32 %v3454, 7
  %v3456 = vsub.s32 %v2839, %v3455
  %v3457 = vrot.slane %v2672, %v3456
  %v3458 = vlaneseq
  %v3459 = vshrl.u32 %v3458, 7
  %v3460 = vsub.s32 %v2844, %v3459
  %v3461 = vrot.slane %v2675, %v3460
  %v3462 = vsel %vm2849, %v3461, %v3457
  %v3463 = vlaneseq
  %v3464 = vshrl.u32 %v3463, 7
  %v3465 = vsub.s32 %v2839, %v3464
  %v3466 = vrot.slane %v2678, %v3465
  %v3467 = vlaneseq
  %v3468 = vshrl.u32 %v3467, 7
  %v3469 = vsub.s32 %v2844, %v3468
  %v3470 = vrot.slane %v2681, %v3469
  %v3471 = vsel %vm2849, %v3470, %v3466
  %v3472 = vlaneseq
  %v3473 = vshrl.u32 %v3472, 7
  %v3474 = vsub.s32 %v2839, %v3473
  %v3475 = vrot.slane %v2684, %v3474
  %v3476 = vlaneseq
  %v3477 = vshrl.u32 %v3476, 7
  %v3478 = vsub.s32 %v2844, %v3477
  %v3479 = vrot.slane %v2687, %v3478
  %v3480 = vsel %vm2849, %v3479, %v3475
  %v3481 = vlaneseq
  %v3482 = vshrl.u32 %v3481, 7
  %v3483 = vsub.s32 %v2839, %v3482
  %v3484 = vrot.slane %v2690, %v3483
  %v3485 = vlaneseq
  %v3486 = vshrl.u32 %v3485, 7
  %v3487 = vsub.s32 %v2844, %v3486
  %v3488 = vrot.slane %v2693, %v3487
  %v3489 = vsel %vm2849, %v3488, %v3484
  %v3490 = vlaneseq
  %v3491 = vshrl.u32 %v3490, 7
  %v3492 = vsub.s32 %v2839, %v3491
  %v3493 = vrot.slane %v2696, %v3492
  %v3494 = vlaneseq
  %v3495 = vshrl.u32 %v3494, 7
  %v3496 = vsub.s32 %v2844, %v3495
  %v3497 = vrot.slane %v2699, %v3496
  %v3498 = vsel %vm2849, %v3497, %v3493
  %v3499 = vlaneseq
  %v3500 = vshrl.u32 %v3499, 7
  %v3501 = vsub.s32 %v2839, %v3500
  %v3502 = vrot.slane %v2702, %v3501
  %v3503 = vlaneseq
  %v3504 = vshrl.u32 %v3503, 7
  %v3505 = vsub.s32 %v2844, %v3504
  %v3506 = vrot.slane %v2705, %v3505
  %v3507 = vsel %vm2849, %v3506, %v3502
  %v3508 = vlaneseq
  %v3509 = vshrl.u32 %v3508, 7
  %v3510 = vsub.s32 %v2839, %v3509
  %v3511 = vrot.slane %v2708, %v3510
  %v3512 = vlaneseq
  %v3513 = vshrl.u32 %v3512, 7
  %v3514 = vsub.s32 %v2844, %v3513
  %v3515 = vrot.slane %v2711, %v3514
  %v3516 = vsel %vm2849, %v3515, %v3511
  %v3517 = vlaneseq
  %v3518 = vshrl.u32 %v3517, 7
  %v3519 = vsub.s32 %v2839, %v3518
  %v3520 = vrot.slane %v2714, %v3519
  %v3521 = vlaneseq
  %v3522 = vshrl.u32 %v3521, 7
  %v3523 = vsub.s32 %v2844, %v3522
  %v3524 = vrot.slane %v2717, %v3523
  %v3525 = vsel %vm2849, %v3524, %v3520
  %v3526 = vlaneseq
  %v3527 = vshrl.u32 %v3526, 7
  %v3528 = vsub.s32 %v2839, %v3527
  %v3529 = vrot.slane %v2720, %v3528
  %v3530 = vlaneseq
  %v3531 = vshrl.u32 %v3530, 7
  %v3532 = vsub.s32 %v2844, %v3531
  %v3533 = vrot.slane %v2723, %v3532
  %v3534 = vsel %vm2849, %v3533, %v3529
  %v3535 = vlaneseq
  %v3536 = vshrl.u32 %v3535, 7
  %v3537 = vsub.s32 %v2839, %v3536
  %v3538 = vrot.slane %v2726, %v3537
  %v3539 = vlaneseq
  %v3540 = vshrl.u32 %v3539, 7
  %v3541 = vsub.s32 %v2844, %v3540
  %v3542 = vrot.slane %v2729, %v3541
  %v3543 = vsel %vm2849, %v3542, %v3538
  %v3544 = vlaneseq
  %v3545 = vshrl.u32 %v3544, 7
  %v3546 = vsub.s32 %v2839, %v3545
  %v3547 = vrot.slane %v2732, %v3546
  %v3548 = vlaneseq
  %v3549 = vshrl.u32 %v3548, 7
  %v3550 = vsub.s32 %v2844, %v3549
  %v3551 = vrot.slane %v2735, %v3550
  %v3552 = vsel %vm2849, %v3551, %v3547
  %v3553 = vlaneseq
  %v3554 = vshrl.u32 %v3553, 7
  %v3555 = vsub.s32 %v2839, %v3554
  %v3556 = vrot.slane %v2738, %v3555
  %v3557 = vlaneseq
  %v3558 = vshrl.u32 %v3557, 7
  %v3559 = vsub.s32 %v2844, %v3558
  %v3560 = vrot.slane %v2741, %v3559
  %v3561 = vsel %vm2849, %v3560, %v3556
  %v3562 = vlaneseq
  %v3563 = vshrl.u32 %v3562, 7
  %v3564 = vsub.s32 %v2839, %v3563
  %v3565 = vrot.slane %v2744, %v3564
  %v3566 = vlaneseq
  %v3567 = vshrl.u32 %v3566, 7
  %v3568 = vsub.s32 %v2844, %v3567
  %v3569 = vrot.slane %v2747, %v3568
  %v3570 = vsel %vm2849, %v3569, %v3565
  %v3571 = vlaneseq
  %v3572 = vshrl.u32 %v3571, 7
  %v3573 = vsub.s32 %v2839, %v3572
  %v3574 = vrot.slane %v2750, %v3573
  %v3575 = vlaneseq
  %v3576 = vshrl.u32 %v3575, 7
  %v3577 = vsub.s32 %v2844, %v3576
  %v3578 = vrot.slane %v2753, %v3577
  %v3579 = vsel %vm2849, %v3578, %v3574
  %v3580 = vlaneseq
  %v3581 = vshrl.u32 %v3580, 7
  %v3582 = vsub.s32 %v2839, %v3581
  %v3583 = vrot.slane %v2756, %v3582
  %v3584 = vlaneseq
  %v3585 = vshrl.u32 %v3584, 7
  %v3586 = vsub.s32 %v2844, %v3585
  %v3587 = vrot.slane %v2759, %v3586
  %v3588 = vsel %vm2849, %v3587, %v3583
  %v3589 = vlaneseq
  %v3590 = vshrl.u32 %v3589, 7
  %v3591 = vsub.s32 %v2839, %v3590
  %v3592 = vrot.slane %v2762, %v3591
  %v3593 = vlaneseq
  %v3594 = vshrl.u32 %v3593, 7
  %v3595 = vsub.s32 %v2844, %v3594
  %v3596 = vrot.slane %v2765, %v3595
  %v3597 = vsel %vm2849, %v3596, %v3592
  %v3598 = vlaneseq
  %v3599 = vshrl.u32 %v3598, 7
  %v3600 = vsub.s32 %v2839, %v3599
  %v3601 = vrot.slane %v2768, %v3600
  %v3602 = vlaneseq
  %v3603 = vshrl.u32 %v3602, 7
  %v3604 = vsub.s32 %v2844, %v3603
  %v3605 = vrot.slane %v2771, %v3604
  %v3606 = vsel %vm2849, %v3605, %v3601
  %v3607 = vlaneseq
  %v3608 = vshrl.u32 %v3607, 7
  %v3609 = vsub.s32 %v2839, %v3608
  %v3610 = vrot.slane %v2774, %v3609
  %v3611 = vlaneseq
  %v3612 = vshrl.u32 %v3611, 7
  %v3613 = vsub.s32 %v2844, %v3612
  %v3614 = vrot.slane %v2777, %v3613
  %v3615 = vsel %vm2849, %v3614, %v3610
  %v3616 = vlaneseq
  %v3617 = vshrl.u32 %v3616, 7
  %v3618 = vsub.s32 %v2839, %v3617
  %v3619 = vrot.slane %v2780, %v3618
  %v3620 = vlaneseq
  %v3621 = vshrl.u32 %v3620, 7
  %v3622 = vsub.s32 %v2844, %v3621
  %v3623 = vrot.slane %v2783, %v3622
  %v3624 = vsel %vm2849, %v3623, %v3619
  %v3625 = vlaneseq
  %v3626 = vshrl.u32 %v3625, 7
  %v3627 = vsub.s32 %v2839, %v3626
  %v3628 = vrot.slane %v2786, %v3627
  %v3629 = vlaneseq
  %v3630 = vshrl.u32 %v3629, 7
  %v3631 = vsub.s32 %v2844, %v3630
  %v3632 = vrot.slane %v2789, %v3631
  %v3633 = vsel %vm2849, %v3632, %v3628
  %v3634 = vlaneseq
  %v3635 = vshrl.u32 %v3634, 7
  %v3636 = vsub.s32 %v2839, %v3635
  %v3637 = vrot.slane %v2792, %v3636
  %v3638 = vlaneseq
  %v3639 = vshrl.u32 %v3638, 7
  %v3640 = vsub.s32 %v2844, %v3639
  %v3641 = vrot.slane %v2795, %v3640
  %v3642 = vsel %vm2849, %v3641, %v3637
  %v3643 = vlaneseq
  %v3644 = vshrl.u32 %v3643, 7
  %v3645 = vsub.s32 %v2839, %v3644
  %v3646 = vrot.slane %v2798, %v3645
  %v3647 = vlaneseq
  %v3648 = vshrl.u32 %v3647, 7
  %v3649 = vsub.s32 %v2844, %v3648
  %v3650 = vrot.slane %v2801, %v3649
  %v3651 = vsel %vm2849, %v3650, %v3646
  %v3652 = vlaneseq
  %v3653 = vshrl.u32 %v3652, 7
  %v3654 = vsub.s32 %v2839, %v3653
  %v3655 = vrot.slane %v2804, %v3654
  %v3656 = vlaneseq
  %v3657 = vshrl.u32 %v3656, 7
  %v3658 = vsub.s32 %v2844, %v3657
  %v3659 = vrot.slane %v2807, %v3658
  %v3660 = vsel %vm2849, %v3659, %v3655
  %v3661 = vlaneseq
  %v3662 = vshrl.u32 %v3661, 7
  %v3663 = vsub.s32 %v2839, %v3662
  %v3664 = vrot.slane %v2810, %v3663
  %v3665 = vlaneseq
  %v3666 = vshrl.u32 %v3665, 7
  %v3667 = vsub.s32 %v2844, %v3666
  %v3668 = vrot.slane %v2813, %v3667
  %v3669 = vsel %vm2849, %v3668, %v3664
  %v3670 = vlaneseq
  %v3671 = vshrl.u32 %v3670, 7
  %v3672 = vsub.s32 %v2839, %v3671
  %v3673 = vrot.slane %v2816, %v3672
  %v3674 = vlaneseq
  %v3675 = vshrl.u32 %v3674, 7
  %v3676 = vsub.s32 %v2844, %v3675
  %v3677 = vrot.slane %v2819, %v3676
  %v3678 = vsel %vm2849, %v3677, %v3673
  %v3679 = vlaneseq
  %v3680 = vshrl.u32 %v3679, 7
  %v3681 = vsub.s32 %v2839, %v3680
  %v3682 = vrot.slane %v2822, %v3681
  %v3683 = vlaneseq
  %v3684 = vshrl.u32 %v3683, 7
  %v3685 = vsub.s32 %v2844, %v3684
  %v3686 = vrot.slane %v2825, %v3685
  %v3687 = vsel %vm2849, %v3686, %v3682
  %v3688 = vlaneseq
  %v3689 = vshrl.u32 %v3688, 7
  %v3690 = vsub.s32 %v2839, %v3689
  %v3691 = vrot.slane %v2828, %v3690
  %v3692 = vlaneseq
  %v3693 = vshrl.u32 %v3692, 7
  %v3694 = vsub.s32 %v2844, %v3693
  %v3695 = vrot.slane %v2831, %v3694
  %v3696 = vsel %vm2849, %v3695, %v3691
  %v3697 = vlaneseq
  %v3698 = vshrl.u32 %v3697, 7
  %v3699 = vsub.s32 %v2839, %v3698
  %v3700 = vrot.slane %v2834, %v3699
  %v3701 = vlaneseq
  %v3702 = vshrl.u32 %v3701, 7
  %v3703 = vsub.s32 %v2844, %v3702
  %v3704 = vrot.slane %v2837, %v3703
  %v3705 = vsel %vm2849, %v3704, %v3700
  %vm3706 = vcmask 1041409
  %v3707 = vsel %vm3706, %v2859, %v2850
  %vm3708 = vcmask 1042434
  %v3709 = vsel %vm3708, %v2868, %v3707
  %vm3710 = vcmask 1043459
  %v3711 = vsel %vm3710, %v2877, %v3709
  %vm3712 = vcmask 1044484
  %v3713 = vsel %vm3712, %v2886, %v3711
  %vm3714 = vcmask 1045509
  %v3715 = vsel %vm3714, %v2895, %v3713
  %vm3716 = vcmask 1046534
  %v3717 = vsel %vm3716, %v2904, %v3715
  %vm3718 = vcmask 1047559
  %v3719 = vsel %vm3718, %v2913, %v3717
  %v3720 = vsel %vm3706, %v2931, %v2922
  %v3721 = vsel %vm3708, %v2940, %v3720
  %v3722 = vsel %vm3710, %v2949, %v3721
  %v3723 = vsel %vm3712, %v2958, %v3722
  %v3724 = vsel %vm3714, %v2967, %v3723
  %v3725 = vsel %vm3716, %v2976, %v3724
  %v3726 = vsel %vm3718, %v2985, %v3725
  %v3727 = vsel %vm3706, %v3003, %v2994
  %v3728 = vsel %vm3708, %v3012, %v3727
  %v3729 = vsel %vm3710, %v3021, %v3728
  %v3730 = vsel %vm3712, %v3030, %v3729
  %v3731 = vsel %vm3714, %v3039, %v3730
  %v3732 = vsel %vm3716, %v3048, %v3731
  %v3733 = vsel %vm3718, %v3057, %v3732
  %v3734 = vsel %vm3706, %v3075, %v3066
  %v3735 = vsel %vm3708, %v3084, %v3734
  %v3736 = vsel %vm3710, %v3093, %v3735
  %v3737 = vsel %vm3712, %v3102, %v3736
  %v3738 = vsel %vm3714, %v3111, %v3737
  %v3739 = vsel %vm3716, %v3120, %v3738
  %v3740 = vsel %vm3718, %v3129, %v3739
  %v3741 = vsel %vm3706, %v3147, %v3138
  %v3742 = vsel %vm3708, %v3156, %v3741
  %v3743 = vsel %vm3710, %v3165, %v3742
  %v3744 = vsel %vm3712, %v3174, %v3743
  %v3745 = vsel %vm3714, %v3183, %v3744
  %v3746 = vsel %vm3716, %v3192, %v3745
  %v3747 = vsel %vm3718, %v3201, %v3746
  %v3748 = vsel %vm3706, %v3219, %v3210
  %v3749 = vsel %vm3708, %v3228, %v3748
  %v3750 = vsel %vm3710, %v3237, %v3749
  %v3751 = vsel %vm3712, %v3246, %v3750
  %v3752 = vsel %vm3714, %v3255, %v3751
  %v3753 = vsel %vm3716, %v3264, %v3752
  %v3754 = vsel %vm3718, %v3273, %v3753
  %v3755 = vsel %vm3706, %v3291, %v3282
  %v3756 = vsel %vm3708, %v3300, %v3755
  %v3757 = vsel %vm3710, %v3309, %v3756
  %v3758 = vsel %vm3712, %v3318, %v3757
  %v3759 = vsel %vm3714, %v3327, %v3758
  %v3760 = vsel %vm3716, %v3336, %v3759
  %v3761 = vsel %vm3718, %v3345, %v3760
  %v3762 = vsel %vm3706, %v3363, %v3354
  %v3763 = vsel %vm3708, %v3372, %v3762
  %v3764 = vsel %vm3710, %v3381, %v3763
  %v3765 = vsel %vm3712, %v3390, %v3764
  %v3766 = vsel %vm3714, %v3399, %v3765
  %v3767 = vsel %vm3716, %v3408, %v3766
  %v3768 = vsel %vm3718, %v3417, %v3767
  %v3769 = vsel %vm3706, %v3435, %v3426
  %v3770 = vsel %vm3708, %v3444, %v3769
  %v3771 = vsel %vm3710, %v3453, %v3770
  %v3772 = vsel %vm3712, %v3462, %v3771
  %v3773 = vsel %vm3714, %v3471, %v3772
  %v3774 = vsel %vm3716, %v3480, %v3773
  %v3775 = vsel %vm3718, %v3489, %v3774
  %v3776 = vsel %vm3706, %v3507, %v3498
  %v3777 = vsel %vm3708, %v3516, %v3776
  %v3778 = vsel %vm3710, %v3525, %v3777
  %v3779 = vsel %vm3712, %v3534, %v3778
  %v3780 = vsel %vm3714, %v3543, %v3779
  %v3781 = vsel %vm3716, %v3552, %v3780
  %v3782 = vsel %vm3718, %v3561, %v3781
  %v3783 = vsel %vm3706, %v3579, %v3570
  %v3784 = vsel %vm3708, %v3588, %v3783
  %v3785 = vsel %vm3710, %v3597, %v3784
  %v3786 = vsel %vm3712, %v3606, %v3785
  %v3787 = vsel %vm3714, %v3615, %v3786
  %v3788 = vsel %vm3716, %v3624, %v3787
  %v3789 = vsel %vm3718, %v3633, %v3788
  %v3790 = vsel %vm3706, %v3651, %v3642
  %v3791 = vsel %vm3708, %v3660, %v3790
  %v3792 = vsel %vm3710, %v3669, %v3791
  %v3793 = vsel %vm3712, %v3678, %v3792
  %v3794 = vsel %vm3714, %v3687, %v3793
  %v3795 = vsel %vm3716, %v3696, %v3794
  %v3796 = vsel %vm3718, %v3705, %v3795
  %vm3809 = vcmask 130048
  %3810 = vst.msk [vmem:[%s2] sm:$0xff] %vm3809, %v3719
  %3811 = vst.msk [vmem:[%s2 + $0x8] sm:$0xff] %vm3809, %v3726
  %3812 = vst.msk [vmem:[%s2 + $0x10] sm:$0xff] %vm3809, %v3733
  %3813 = vst.msk [vmem:[%s2 + $0x18] sm:$0xff] %vm3809, %v3740
  %3814 = vst.msk [vmem:[%s2 + $0x20] sm:$0xff] %vm3809, %v3747
  %3815 = vst.msk [vmem:[%s2 + $0x28] sm:$0xff] %vm3809, %v3754
  %3816 = vst.msk [vmem:[%s2 + $0x30] sm:$0xff] %vm3809, %v3761
  %3817 = vst.msk [vmem:[%s2 + $0x38] sm:$0xff] %vm3809, %v3768
  %3818 = vst.msk [vmem:[%s2 + $0x40] sm:$0xff] %vm3809, %v3775
  %3819 = vst.msk [vmem:[%s2 + $0x48] sm:$0xff] %vm3809, %v3782
  %3820 = vst.msk [vmem:[%s2 + $0x50] sm:$0xff] %vm3809, %v3789
  %3821 = vst.msk [vmem:[%s2 + $0x58] sm:$0xff] %vm3809, %v3796
  // Predicated region
  $region10: #{edgeconv_forward.2} parent=0 // pred_check
    _
  $region11: #{edgeconv_forward.2} parent=0 // pred_check_branch
    %3823 = sbr.rel (0) target = $region13
  $region12: #{edgeconv_forward.2} parent=0 // pred_region
    _
  $region13: #{edgeconv_forward.2} parent=0 // pred_fallthru
    _
  // Predicated region
  $region14: #{edgeconv_forward.2} parent=0 // pred_check
    _
  $region15: #{edgeconv_forward.2} parent=0 // pred_check_branch
    %3825 = sbr.rel (0) target = $region17
  $region16: #{edgeconv_forward.2} parent=0 // pred_region
    _
  $region17: #{edgeconv_forward.2} parent=0 // pred_fallthru
    _

// kernel: edgeconv_forward.3
$region0: #{edgeconv_forward.3}
  #allocation0 [shape = 'u32[]', space=smem, size = 0x4, offset = 0x4, fixed_abs, tag = 'smem constant byte address 0x4 - core index']
  #allocation1 [shape = 'u32[144,128]{1,0:T(1,128)}', space=vmem, size = 0x12000, scoped, tag = 'internal scratch']
  #allocation2 [shape = 'bf16[8,1152]{1,0:T(8,128)(2,1)}', space=vmem, size = 0x4800, scoped, tag = 'scratch operand']
  #allocation3 [shape = 'bf16[8,1152]{1,0:T(8,128)(2,1)}', space=vmem, size = 0x4800, scoped, tag = 'scratch operand']
  %s0 = inlined_call_operand.vmem [shape: bf16[2,3,384], index: 0, kind: input, shape index: {}]
  %s1 = inlined_call_operand.vmem [shape: bf16[2,3,1152], index: 1, kind: input, shape index: {}]
  %s2 = inlined_call_operand.vmem [shape: bf16[8,3], index: 2, kind: input, shape index: {}]
  %s3 = inlined_call_operand.vmem [shape: bf16[8,3], index: 3, kind: input, shape index: {}]
  %s4 = inlined_call_operand.vmem [shape: bf16[3,8,8], index: 4, kind: input, shape index: {}]
  %s5 = inlined_call_operand.vmem [shape: f32[8,4], index: 5, kind: input, shape index: {}]
  %s6 = inlined_call_operand.vmem [shape: bf16[8,8], index: 6, kind: input, shape index: {}]
  %s7 = inlined_call_operand.vmem [shape: bf16[3,8,8], index: 7, kind: input, shape index: {}]
  %s8 = inlined_call_operand.vmem [shape: f32[8,4], index: 8, kind: input, shape index: {}]
  %s9 = inlined_call_operand.vmem [shape: f32[2,3,8,128], index: 9, kind: output, shape index: {}]
  %s10 = sld [smem:[#allocation0]]
  $region69: #{edgeconv_forward.3} parent=0
    _
  %s12 = ssub.s32 1, %s10
  %s13 = scalar_select 0, %s12, %s10
  loop: start=0, step=1, limit=4
  $region2: #{edgeconv_forward.3} parent=0 // loop_pre_header
    _
  $region3: #{edgeconv_forward.3} parent=0 // loop_header
    %s15 = sphi 0, %s19
    %p16 = scmp.ge.s32.totalorder %s15, 4
    %s25 = sphi 0, %s27
    %s28 = sphi 0, %s25
    %s29 = sphi 0, %s28
    %s45 = sphi 0, %s29
    %s51 = sphi 0, %s53
    %s54 = sphi 0, %s51
    %s55 = sphi 0, %s54
    %s71 = sphi 0, %s55
    %s75 = sphi 0, %s75
    %s77 = sphi 0, %s75
    %s78 = sphi 0, %s77
    %s92 = sphi 0, %s78
    %s96 = sphi 0, %s96
    %s98 = sphi 0, %s96
    %s99 = sphi 0, %s98
    %s113 = sphi 0, %s99
    %s117 = sphi 0, %s117
    %s119 = sphi 0, %s117
    %s120 = sphi 0, %s119
    %s134 = sphi 0, %s120
    %s138 = sphi 0, %s138
    %s140 = sphi 0, %s138
    %s141 = sphi 0, %s140
    %s155 = sphi 0, %s141
    %s159 = sphi 0, %s159
    %s161 = sphi 0, %s159
    %s162 = sphi 0, %s161
    %s176 = sphi 0, %s162
    %s180 = sphi 0, %s180
    %s182 = sphi 0, %s180
    %s183 = sphi 0, %s182
    %s197 = sphi 0, %s183
    %s201 = sphi 0, %s201
    %s203 = sphi 0, %s201
    %s204 = sphi 0, %s203
    %s218 = sphi 0, %s204
    %s224 = sphi 0, %s226
    %s227 = sphi 0, %s224
    %s228 = sphi 0, %s227
    %s244 = sphi 0, %s228
  $region4: #{edgeconv_forward.3} parent=0 // loop_header_branch
    %18 = sbr.rel (%p16) target = $region8
  $region5: #{edgeconv_forward.3} parent=0 // loop_body
    %s20 = ssub.s32 %s15, 1
    %s21 = ssub.s32 %s15, 2
    %s22 = sadd.s32 %s15, 1
    %s23 = ssub.s32 %s15, %s22
    %p24 = scmp.eq.s32.totalorder %s23, 0
    %s26 = sadd.s32 %s25, 1
    %s27 = scalar_select %p24, %s25, %s26
    %p30 = pneg %p24
    %p31 = scmp.eq.s32.totalorder %s15, 1
    %p32 = por %p30, %p31
    %p33 = scmp.ne.s32.totalorder %s25, %s28
    %p34 = scmp.eq.s32.totalorder %s15, 0
    %p35 = por %p33, %p34
    %p36 = scmp.ne.s32.totalorder %s25, %s28
    %p37 = scmp.eq.s32.totalorder %s20, 1
    %p38 = por %p36, %p37
    %p39 = scmp.ne.s32.totalorder %s28, %s29
    %p40 = scmp.eq.s32.totalorder %s20, 0
    %p41 = por %p39, %p40
    %p42 = scmp.ne.s32.totalorder %s28, %s29
    %p43 = scmp.eq.s32.totalorder %s21, 1
    %p44 = por %p42, %p43
    %p46 = scmp.ne.s32.totalorder %s29, %s45
    %p47 = scmp.eq.s32.totalorder %s21, 0
    %p48 = por %p46, %p47
    %s49 = ssub.s32 %s15, %s22
    %p50 = scmp.eq.s32.totalorder %s49, 0
    %s52 = sadd.s32 %s51, 1
    %s53 = scalar_select %p50, %s51, %s52
    %p56 = pneg %p50
    %p57 = scmp.eq.s32.totalorder %s15, 1
    %p58 = por %p56, %p57
    %p59 = scmp.ne.s32.totalorder %s51, %s54
    %p60 = scmp.eq.s32.totalorder %s15, 0
    %p61 = por %p59, %p60
    %p62 = scmp.ne.s32.totalorder %s51, %s54
    %p63 = scmp.eq.s32.totalorder %s20, 1
    %p64 = por %p62, %p63
    %p65 = scmp.ne.s32.totalorder %s54, %s55
    %p66 = scmp.eq.s32.totalorder %s20, 0
    %p67 = por %p65, %p66
    %p68 = scmp.ne.s32.totalorder %s54, %s55
    %p69 = scmp.eq.s32.totalorder %s21, 1
    %p70 = por %p68, %p69
    %p72 = scmp.ne.s32.totalorder %s55, %s71
    %p73 = scmp.eq.s32.totalorder %s21, 0
    %p74 = por %p72, %p73
    %s76 = sadd.s32 %s75, 1
    %p79 = scmp.eq.s32.totalorder %s15, 1
    %p80 = scmp.ne.s32.totalorder %s75, %s77
    %p81 = scmp.eq.s32.totalorder %s15, 0
    %p82 = por %p80, %p81
    %p83 = scmp.ne.s32.totalorder %s75, %s77
    %p84 = scmp.eq.s32.totalorder %s20, 1
    %p85 = por %p83, %p84
    %p86 = scmp.ne.s32.totalorder %s77, %s78
    %p87 = scmp.eq.s32.totalorder %s20, 0
    %p88 = por %p86, %p87
    %p89 = scmp.ne.s32.totalorder %s77, %s78
    %p90 = scmp.eq.s32.totalorder %s21, 1
    %p91 = por %p89, %p90
    %p93 = scmp.ne.s32.totalorder %s78, %s92
    %p94 = scmp.eq.s32.totalorder %s21, 0
    %p95 = por %p93, %p94
    %s97 = sadd.s32 %s96, 1
    %p100 = scmp.eq.s32.totalorder %s15, 1
    %p101 = scmp.ne.s32.totalorder %s96, %s98
    %p102 = scmp.eq.s32.totalorder %s15, 0
    %p103 = por %p101, %p102
    %p104 = scmp.ne.s32.totalorder %s96, %s98
    %p105 = scmp.eq.s32.totalorder %s20, 1
    %p106 = por %p104, %p105
    %p107 = scmp.ne.s32.totalorder %s98, %s99
    %p108 = scmp.eq.s32.totalorder %s20, 0
    %p109 = por %p107, %p108
    %p110 = scmp.ne.s32.totalorder %s98, %s99
    %p111 = scmp.eq.s32.totalorder %s21, 1
    %p112 = por %p110, %p111
    %p114 = scmp.ne.s32.totalorder %s99, %s113
    %p115 = scmp.eq.s32.totalorder %s21, 0
    %p116 = por %p114, %p115
    %s118 = sadd.s32 %s117, 1
    %p121 = scmp.eq.s32.totalorder %s15, 1
    %p122 = scmp.ne.s32.totalorder %s117, %s119
    %p123 = scmp.eq.s32.totalorder %s15, 0
    %p124 = por %p122, %p123
    %p125 = scmp.ne.s32.totalorder %s117, %s119
    %p126 = scmp.eq.s32.totalorder %s20, 1
    %p127 = por %p125, %p126
    %p128 = scmp.ne.s32.totalorder %s119, %s120
    %p129 = scmp.eq.s32.totalorder %s20, 0
    %p130 = por %p128, %p129
    %p131 = scmp.ne.s32.totalorder %s119, %s120
    %p132 = scmp.eq.s32.totalorder %s21, 1
    %p133 = por %p131, %p132
    %p135 = scmp.ne.s32.totalorder %s120, %s134
    %p136 = scmp.eq.s32.totalorder %s21, 0
    %p137 = por %p135, %p136
    %s139 = sadd.s32 %s138, 1
    %p142 = scmp.eq.s32.totalorder %s15, 1
    %p143 = scmp.ne.s32.totalorder %s138, %s140
    %p144 = scmp.eq.s32.totalorder %s15, 0
    %p145 = por %p143, %p144
    %p146 = scmp.ne.s32.totalorder %s138, %s140
    %p147 = scmp.eq.s32.totalorder %s20, 1
    %p148 = por %p146, %p147
    %p149 = scmp.ne.s32.totalorder %s140, %s141
    %p150 = scmp.eq.s32.totalorder %s20, 0
    %p151 = por %p149, %p150
    %p152 = scmp.ne.s32.totalorder %s140, %s141
    %p153 = scmp.eq.s32.totalorder %s21, 1
    %p154 = por %p152, %p153
    %p156 = scmp.ne.s32.totalorder %s141, %s155
    %p157 = scmp.eq.s32.totalorder %s21, 0
    %p158 = por %p156, %p157
    %s160 = sadd.s32 %s159, 1
    %p163 = scmp.eq.s32.totalorder %s15, 1
    %p164 = scmp.ne.s32.totalorder %s159, %s161
    %p165 = scmp.eq.s32.totalorder %s15, 0
    %p166 = por %p164, %p165
    %p167 = scmp.ne.s32.totalorder %s159, %s161
    %p168 = scmp.eq.s32.totalorder %s20, 1
    %p169 = por %p167, %p168
    %p170 = scmp.ne.s32.totalorder %s161, %s162
    %p171 = scmp.eq.s32.totalorder %s20, 0
    %p172 = por %p170, %p171
    %p173 = scmp.ne.s32.totalorder %s161, %s162
    %p174 = scmp.eq.s32.totalorder %s21, 1
    %p175 = por %p173, %p174
    %p177 = scmp.ne.s32.totalorder %s162, %s176
    %p178 = scmp.eq.s32.totalorder %s21, 0
    %p179 = por %p177, %p178
    %s181 = sadd.s32 %s180, 1
    %p184 = scmp.eq.s32.totalorder %s15, 1
    %p185 = scmp.ne.s32.totalorder %s180, %s182
    %p186 = scmp.eq.s32.totalorder %s15, 0
    %p187 = por %p185, %p186
    %p188 = scmp.ne.s32.totalorder %s180, %s182
    %p189 = scmp.eq.s32.totalorder %s20, 1
    %p190 = por %p188, %p189
    %p191 = scmp.ne.s32.totalorder %s182, %s183
    %p192 = scmp.eq.s32.totalorder %s20, 0
    %p193 = por %p191, %p192
    %p194 = scmp.ne.s32.totalorder %s182, %s183
    %p195 = scmp.eq.s32.totalorder %s21, 1
    %p196 = por %p194, %p195
    %p198 = scmp.ne.s32.totalorder %s183, %s197
    %p199 = scmp.eq.s32.totalorder %s21, 0
    %p200 = por %p198, %p199
    %s202 = sadd.s32 %s201, 1
    %p205 = scmp.eq.s32.totalorder %s15, 1
    %p206 = scmp.ne.s32.totalorder %s201, %s203
    %p207 = scmp.eq.s32.totalorder %s15, 0
    %p208 = por %p206, %p207
    %p209 = scmp.ne.s32.totalorder %s201, %s203
    %p210 = scmp.eq.s32.totalorder %s20, 1
    %p211 = por %p209, %p210
    %p212 = scmp.ne.s32.totalorder %s203, %s204
    %p213 = scmp.eq.s32.totalorder %s20, 0
    %p214 = por %p212, %p213
    %p215 = scmp.ne.s32.totalorder %s203, %s204
    %p216 = scmp.eq.s32.totalorder %s21, 1
    %p217 = por %p215, %p216
    %p219 = scmp.ne.s32.totalorder %s204, %s218
    %p220 = scmp.eq.s32.totalorder %s21, 0
    %p221 = por %p219, %p220
    %s222 = ssub.s32 %s15, %s22
    %p223 = scmp.eq.s32.totalorder %s222, 0
    %s225 = sadd.s32 %s224, 1
    %s226 = scalar_select %p223, %s224, %s225
    %p229 = pneg %p223
    %p230 = scmp.eq.s32.totalorder %s15, 1
    %p231 = por %p229, %p230
    %p232 = scmp.ne.s32.totalorder %s224, %s227
    %p233 = scmp.eq.s32.totalorder %s15, 0
    %p234 = por %p232, %p233
    %p235 = scmp.ne.s32.totalorder %s224, %s227
    %p236 = scmp.eq.s32.totalorder %s20, 1
    %p237 = por %p235, %p236
    %p238 = scmp.ne.s32.totalorder %s227, %s228
    %p239 = scmp.eq.s32.totalorder %s20, 0
    %p240 = por %p238, %p239
    %p241 = scmp.ne.s32.totalorder %s227, %s228
    %p242 = scmp.eq.s32.totalorder %s21, 1
    %p243 = por %p241, %p242
    %p245 = scmp.ne.s32.totalorder %s228, %s244
    %p246 = scmp.eq.s32.totalorder %s21, 0
    %p247 = por %p245, %p246
    %p248 = scmp.le.s32.totalorder 1, %s15
    %p249 = scmp.lt.s32.totalorder %s15, 3
    %p250 = pnand %p248, %p249
    %p251 = pneg %p250
    // Predicated region
    $region9: #{edgeconv_forward.3} parent=5 // pred_check
      _
    $region10: #{edgeconv_forward.3} parent=5 // pred_check_branch
      %253 = sbr.rel (%p250) target = $region12
    $region11: #{edgeconv_forward.3} parent=5 // pred_region
      %s254 = ssub.s32 %s15, 1
      // Predicated region
      $region13: #{edgeconv_forward.3} parent=11 // pred_check
        %p255 = pneg %p88
      $region14: #{edgeconv_forward.3} parent=11 // pred_check_branch
        %257 = sbr.rel (%p255) target = $region16
      $region15: #{edgeconv_forward.3} parent=11 // pred_region
        _
      $region16: #{edgeconv_forward.3} parent=11 // pred_fallthru
        _
      // Predicated region
      $region17: #{edgeconv_forward.3} parent=11 // pred_check
        %p258 = pneg %p109
      $region18: #{edgeconv_forward.3} parent=11 // pred_check_branch
        %260 = sbr.rel (%p258) target = $region20
      $region19: #{edgeconv_forward.3} parent=11 // pred_region
        _
      $region20: #{edgeconv_forward.3} parent=11 // pred_fallthru
        _
      // Predicated region
      $region21: #{edgeconv_forward.3} parent=11 // pred_check
        %p261 = pneg %p130
      $region22: #{edgeconv_forward.3} parent=11 // pred_check_branch
        %263 = sbr.rel (%p261) target = $region24
      $region23: #{edgeconv_forward.3} parent=11 // pred_region
        _
      $region24: #{edgeconv_forward.3} parent=11 // pred_fallthru
        _
      // Predicated region
      $region25: #{edgeconv_forward.3} parent=11 // pred_check
        %p264 = pneg %p151
      $region26: #{edgeconv_forward.3} parent=11 // pred_check_branch
        %266 = sbr.rel (%p264) target = $region28
      $region27: #{edgeconv_forward.3} parent=11 // pred_region
        _
      $region28: #{edgeconv_forward.3} parent=11 // pred_fallthru
        _
      // Predicated region
      $region29: #{edgeconv_forward.3} parent=11 // pred_check
        %p267 = pneg %p172
      $region30: #{edgeconv_forward.3} parent=11 // pred_check_branch
        %269 = sbr.rel (%p267) target = $region32
      $region31: #{edgeconv_forward.3} parent=11 // pred_region
        _
      $region32: #{edgeconv_forward.3} parent=11 // pred_fallthru
        _
      // Predicated region
      $region33: #{edgeconv_forward.3} parent=11 // pred_check
        %p270 = pneg %p193
      $region34: #{edgeconv_forward.3} parent=11 // pred_check_branch
        %272 = sbr.rel (%p270) target = $region36
      $region35: #{edgeconv_forward.3} parent=11 // pred_region
        _
      $region36: #{edgeconv_forward.3} parent=11 // pred_fallthru
        _
      // Predicated region
      $region37: #{edgeconv_forward.3} parent=11 // pred_check
        %p273 = pneg %p214
      $region38: #{edgeconv_forward.3} parent=11 // pred_check_branch
        %275 = sbr.rel (%p273) target = $region40
      $region39: #{edgeconv_forward.3} parent=11 // pred_region
        _
      $region40: #{edgeconv_forward.3} parent=11 // pred_fallthru
        _
    $region12: #{edgeconv_forward.3} parent=5 // pred_fallthru
      _
    %p276 = scmp.lt.s32.totalorder %s15, 2
    // Predicated region
    $region41: #{edgeconv_forward.3} parent=5 // pred_check
      %p277 = pneg %p276
    $region42: #{edgeconv_forward.3} parent=5 // pred_check_branch
      %279 = sbr.rel (%p277) target = $region44
    $region43: #{edgeconv_forward.3} parent=5 // pred_region
      // Predicated region
      $region45: #{edgeconv_forward.3} parent=43 // pred_check
        %p280 = pneg %p35
      $region46: #{edgeconv_forward.3} parent=43 // pred_check_branch
        %282 = sbr.rel (%p280) target = $region48
      $region47: #{edgeconv_forward.3} parent=43 // pred_region
        %p283 = scmp.lt.s32.totalorder %s15, 1
        %s284 = scalar_select %p283, %s15, 1
        %s285 = smul.addr %s284, 3
        %s286 = smul.addr %s285, 2
        %s287 = scalar_lea.vmem %s0, %s286
      $region48: #{edgeconv_forward.3} parent=43 // pred_fallthru
        _
      // Predicated region
      $region49: #{edgeconv_forward.3} parent=43 // pred_check
        %p288 = pneg %p61
      $region50: #{edgeconv_forward.3} parent=43 // pred_check_branch
        %290 = sbr.rel (%p288) target = $region52
      $region51: #{edgeconv_forward.3} parent=43 // pred_region
        %p291 = scmp.lt.s32.totalorder %s15, 1
        %s292 = scalar_select %p291, %s15, 1
        %s293 = smul.addr %s292, 9
        %s294 = smul.addr %s293, 2
        %s295 = scalar_lea.vmem %s1, %s294
      $region52: #{edgeconv_forward.3} parent=43 // pred_fallthru
        _
    $region44: #{edgeconv_forward.3} parent=5 // pred_fallthru
      _
    %p296 = scmp.le.s32.totalorder 1, %s15
    %p297 = scmp.lt.s32.totalorder %s15, 3
    %p298 = pnand %p296, %p297
    %p299 = pneg %p298
    // Predicated region
    $region53: #{edgeconv_forward.3} parent=5 // pred_check
      _
    $region54: #{edgeconv_forward.3} parent=5 // pred_check_branch
      %301 = sbr.rel (%p298) target = $region56
    $region55: #{edgeconv_forward.3} parent=5 // pred_region
      %s302 = ssub.s32 %s15, 1
      %p303 = scmp.lt.s32.totalorder %s20, 1
      %s304 = scalar_select %p303, %s20, 1
      %s305 = smul.addr %s304, 3
      %s306 = smul.addr %s305, 2
      %s307 = scalar_lea.vmem %s0, %s306
      %p308 = pneg %p41
      %p309 = pneg %p38
      %p310 = scmp.lt.s32.totalorder %s20, 1
      %s311 = scalar_select %p310, %s20, 1
      %s312 = smul.addr %s311, 9
      %s313 = smul.addr %s312, 2
      %s314 = scalar_lea.vmem %s1, %s313
      %p315 = pneg %p67
      %p316 = pneg %p64
      %p317 = pneg %p88
      %p318 = pneg %p85
      %p319 = pneg %p109
      %p320 = pneg %p106
      %p321 = pneg %p130
      %p322 = pneg %p127
      %p323 = pneg %p151
      %p324 = pneg %p148
      %p325 = pneg %p172
      %p326 = pneg %p169
      %p327 = pneg %p193
      %p328 = pneg %p190
      %p329 = pneg %p214
      %p330 = pneg %p211
      %p331 = pneg %p240
      %p332 = pneg %p237
      %p333 = scmp.lt.s32.totalorder %s20, 1
      %s334 = scalar_select %p333, %s20, 1
      %s335 = smul.addr %s334, 3
      %s336 = smul.addr %s335, 8
      %s337 = scalar_lea.vmem %s9, %s336
      %p338 = scmp.lt.s32.totalorder %s20, 1
      %s339 = scalar_select %p338, %s20, 1
      %s340 = smul.addr %s339, 3
      %s341 = smul.addr %s340, 2
      %s342 = scalar_lea.vmem %s0, %s341
      %p343 = scmp.lt.s32.totalorder %s20, 1
      %s344 = scalar_select %p343, %s20, 1
      %s345 = smul.addr %s344, 9
      %s346 = smul.addr %s345, 2
      %s347 = scalar_lea.vmem %s1, %s346
      %p348 = scmp.lt.s32.totalorder %s20, 1
      %s349 = scalar_select %p348, %s20, 1
      %s350 = smul.addr %s349, 3
      %s351 = smul.addr %s350, 8
      %s352 = scalar_lea.vmem %s9, %s351
      %v354 = vld [vmem:[%s5] sm:$0xff]
      %v355 = vld [vmem:[%s3] sm:$0xf]
      %v356 = vld [vmem:[%s347] sm:$0x3f]
      %v357 = vld [vmem:[%s2] sm:$0xf]
      %v358 = vld [vmem:[%s342] sm:$0x3]
      %vm359 = vcmask 23552
      %v361 = vsel %vm359, %v357, 0
      %vm363 = vcmask 1040384
      %vm364 = vcmask 1041408
      %v365 = vsel %vm363, 4294967295, 65535
      %v366 = vsel %vm364, %v365, 0
      %v368 = vand.u32 %v358, %v366
      %370 = vmatprep.subr.bf16.mxu0 0
      %371 = vmatpush1.bf16.msra.mxu0 %v368
      %372 = vmatprep.subr.bf16.mxu0 0
      %373 = vmatpush1.bf16.msra.mxu0 0
      %374 = vmatprep.subr.bf16.mxu0 0
      %375 = vmatpush1.bf16.msra.mxu0 0
      %376 = vmatprep.subr.bf16.mxu0 0
      %377 = vmatpush1.bf16.msra.mxu0 0
      %378 = vmatprep.subr.bf16.mxu0 0
      %379 = vmatpush1.bf16.msra.mxu0 0
      %380 = vmatprep.subr.bf16.mxu0 0
      %381 = vmatpush1.bf16.msra.mxu0 0
      %382 = vmatprep.subr.bf16.mxu0 0
      %383 = vmatpush1.bf16.msra.mxu0 0
      %384 = vmatprep.subr.bf16.mxu0 0
      %385 = vmatpush1.bf16.msra.mxu0 0
      %386 = vmatprep.subr.bf16.mxu0 0
      %387 = vmatpush1.bf16.msra.mxu0 0
      %388 = vmatprep.subr.bf16.mxu0 0
      %389 = vmatpush1.bf16.msra.mxu0 0
      %390 = vmatprep.subr.bf16.mxu0 0
      %391 = vmatpush1.bf16.msra.mxu0 0
      %392 = vmatprep.subr.bf16.mxu0 0
      %393 = vmatpush1.bf16.msra.mxu0 0
      %394 = vmatprep.subr.bf16.mxu0 0
      %395 = vmatpush1.bf16.msra.mxu0 0
      %396 = vmatprep.subr.bf16.mxu0 0
      %397 = vmatpush1.bf16.msra.mxu0 0
      %398 = vmatprep.subr.bf16.mxu0 0
      %399 = vmatpush1.bf16.msra.mxu0 0
      %400 = vmatprep.subr.bf16.mxu0 0
      %401 = vmatpush1.bf16.msra.mxu0 0
      %402 = vmatprep.mubr.bf16.mxu0 0
      %403 = vmatmul.mubr.bf16.gmra.mrb[0].mxu0 %v361
      %v404 = vpop.f32.mrb[0].mxu0
      %v405 = vadd.f32 0.0, %v404
      %v406 = vpop.f32.mrb[0].mxu0
      %v407 = vpop.f32.mrb[0].mxu0
      %v408 = vpop.f32.mrb[0].mxu0
      %409 = vdwg.mxu0
      %v411 = vcombine.high %v356, %v356
      %v413 = vunpack.c.l.s4 1983009808
      %v414 = vunpack.c.0.s8 %v413
      %v415 = vlaneseq
      %v416 = vshrl.u32 %v415, 7
      %v417 = vsub.s32 %v414, %v416
      %v418 = vrot.slane %v356, %v417
      %v420 = vunpack.c.l.s4 1983009808
      %v421 = vunpack.c.0.s8 %v420
      %v422 = vlaneseq
      %v423 = vshrl.u32 %v422, 7
      %v424 = vsub.s32 %v421, %v423
      %v425 = vrot.slane %v411, %v424
      %v426 = vcombine.high %v418, %v418
      %v428 = vsel %vm359, %v355, 0
      %v431 = vand.u32 %v418, %v366
      %v434 = vand.u32 %v426, %v366
      %v437 = vand.u32 %v425, %v366
      %439 = vmatprep.subr.bf16.mxu0 %v434
      %440 = vmatpush1.bf16.msra.mxu0 %v431
      %441 = vmatprep.subr.bf16.mxu0 0
      %442 = vmatpush1.bf16.msra.mxu0 0
      %443 = vmatprep.subr.bf16.mxu0 0
      %444 = vmatpush1.bf16.msra.mxu0 0
      %445 = vmatprep.subr.bf16.mxu0 0
      %446 = vmatpush1.bf16.msra.mxu0 0
      %447 = vmatprep.subr.bf16.mxu0 0
      %448 = vmatpush1.bf16.msra.mxu0 0
      %449 = vmatprep.subr.bf16.mxu0 0
      %450 = vmatpush1.bf16.msra.mxu0 0
      %451 = vmatprep.subr.bf16.mxu0 0
      %452 = vmatpush1.bf16.msra.mxu0 0
      %453 = vmatprep.subr.bf16.mxu0 0
      %454 = vmatpush1.bf16.msra.mxu0 0
      %455 = vmatprep.subr.bf16.mxu0 0
      %456 = vmatpush1.bf16.msra.mxu0 0
      %457 = vmatprep.subr.bf16.mxu0 0
      %458 = vmatpush1.bf16.msra.mxu0 0
      %459 = vmatprep.subr.bf16.mxu0 0
      %460 = vmatpush1.bf16.msra.mxu0 0
      %461 = vmatprep.subr.bf16.mxu0 0
      %462 = vmatpush1.bf16.msra.mxu0 0
      %463 = vmatprep.subr.bf16.mxu0 0
      %464 = vmatpush1.bf16.msra.mxu0 0
      %465 = vmatprep.subr.bf16.mxu0 0
      %466 = vmatpush1.bf16.msra.mxu0 0
      %467 = vmatprep.subr.bf16.mxu0 0
      %468 = vmatpush1.bf16.msra.mxu0 0
      %469 = vmatprep.subr.bf16.mxu0 0
      %470 = vmatpush1.bf16.msra.mxu0 0
      %471 = vmatprep.mubr.bf16.mxu0 0
      %472 = vmatmul.mubr.bf16.gmra.mrb[0].mxu0 %v428
      %v473 = vpop.f32.mrb[0].mxu0
      %v474 = vadd.f32 %v405, %v473
      %v475 = vpop.f32.mrb[0].mxu0
      %v476 = vadd.f32 %v405, %v475
      %v477 = vpop.f32.mrb[0].mxu0
      %v478 = vpop.f32.mrb[0].mxu0
      %479 = vdwg.mxu0
      %480 = vmatprep.subr.bf16.mxu0 0
      %481 = vmatpush1.bf16.msra.mxu0 %v437
      %482 = vmatprep.subr.bf16.mxu0 0
      %483 = vmatpush1.bf16.msra.mxu0 0
      %484 = vmatprep.subr.bf16.mxu0 0
      %485 = vmatpush1.bf16.msra.mxu0 0
      %486 = vmatprep.subr.bf16.mxu0 0
      %487 = vmatpush1.bf16.msra.mxu0 0
      %488 = vmatprep.subr.bf16.mxu0 0
      %489 = vmatpush1.bf16.msra.mxu0 0
      %490 = vmatprep.subr.bf16.mxu0 0
      %491 = vmatpush1.bf16.msra.mxu0 0
      %492 = vmatprep.subr.bf16.mxu0 0
      %493 = vmatpush1.bf16.msra.mxu0 0
      %494 = vmatprep.subr.bf16.mxu0 0
      %495 = vmatpush1.bf16.msra.mxu0 0
      %496 = vmatprep.subr.bf16.mxu0 0
      %497 = vmatpush1.bf16.msra.mxu0 0
      %498 = vmatprep.subr.bf16.mxu0 0
      %499 = vmatpush1.bf16.msra.mxu0 0
      %500 = vmatprep.subr.bf16.mxu0 0
      %501 = vmatpush1.bf16.msra.mxu0 0
      %502 = vmatprep.subr.bf16.mxu0 0
      %503 = vmatpush1.bf16.msra.mxu0 0
      %504 = vmatprep.subr.bf16.mxu0 0
      %505 = vmatpush1.bf16.msra.mxu0 0
      %506 = vmatprep.subr.bf16.mxu0 0
      %507 = vmatpush1.bf16.msra.mxu0 0
      %508 = vmatprep.subr.bf16.mxu0 0
      %509 = vmatpush1.bf16.msra.mxu0 0
      %510 = vmatprep.subr.bf16.mxu0 0
      %511 = vmatpush1.bf16.msra.mxu0 0
      %512 = vmatprep.mubr.bf16.mxu0 0
      %513 = vmatmul.mubr.bf16.gmra.mrb[0].mxu0 %v428
      %v514 = vpop.f32.mrb[0].mxu0
      %v515 = vadd.f32 %v405, %v514
      %v516 = vpop.f32.mrb[0].mxu0
      %v517 = vpop.f32.mrb[0].mxu0
      %v518 = vpop.f32.mrb[0].mxu0
      %519 = vdwg.mxu0
      %521 = vset.pattern.permute.xlu0 0
      %522 = vperm.xlu0 %521, %v354
      %v523 = vpop.permute.xlu0 %522
      %v525 = vmul.f32 %v474, %v523
      %v526 = vmul.f32 %v476, %v523
      %v527 = vmul.f32 %v515, %v523
      %528 = vset.pattern.permute.xlu0 1
      %529 = vperm.xlu0 %528, %v354
      %v530 = vpop.permute.xlu0 %529
      %v532 = vadd.f32 %v525, %v530
      %v533 = vadd.f32 %v526, %v530
      %v534 = vadd.f32 %v527, %v530
      %v535 = vmax.f32 %v532, 0.0
      %v536 = vmax.f32 %v533, 0.0
      %v537 = vmax.f32 %v534, 0.0
      %v538 = vpack.c.bf16 %v535, %v535
      %v539 = vpack.c.bf16 %v536, %v536
      %v540 = vpack.c.bf16 %v537, %v537
      %v544 = vunpack.c.l.b16 %v538
      %v545 = vunpack.c.l.b16 %v539
      %v546 = vunpack.c.l.b16 %v540
      %v547 = vpack.c.b16 %v545, %v544
      %v548 = vpack.c.b16 %v546, %v546
      %551 = vst [vmem:[#allocation2] sm:$0xff] %v547
      %552 = vst [vmem:[#allocation2 + $0x8] sm:$0xf] %v548
      %v553 = vld [vmem:[%s3] sm:$0xf]
      %v554 = vld [vmem:[%s347 + $0x6] sm:$0x3f]
      %v555 = vld [vmem:[%s2] sm:$0xf]
      %v556 = vld [vmem:[%s342 + $0x2] sm:$0x3]
      %v558 = vsel %vm359, %v555, 0
      %v561 = vand.u32 %v556, %v366
      %563 = vmatprep.subr.bf16.mxu0 0
      %564 = vmatpush1.bf16.msra.mxu0 %v561
      %565 = vmatprep.subr.bf16.mxu0 0
      %566 = vmatpush1.bf16.msra.mxu0 0
      %567 = vmatprep.subr.bf16.mxu0 0
      %568 = vmatpush1.bf16.msra.mxu0 0
      %569 = vmatprep.subr.bf16.mxu0 0
      %570 = vmatpush1.bf16.msra.mxu0 0
      %571 = vmatprep.subr.bf16.mxu0 0
      %572 = vmatpush1.bf16.msra.mxu0 0
      %573 = vmatprep.subr.bf16.mxu0 0
      %574 = vmatpush1.bf16.msra.mxu0 0
      %575 = vmatprep.subr.bf16.mxu0 0
      %576 = vmatpush1.bf16.msra.mxu0 0
      %577 = vmatprep.subr.bf16.mxu0 0
      %578 = vmatpush1.bf16.msra.mxu0 0
      %579 = vmatprep.subr.bf16.mxu0 0
      %580 = vmatpush1.bf16.msra.mxu0 0
      %581 = vmatprep.subr.bf16.mxu0 0
      %582 = vmatpush1.bf16.msra.mxu0 0
      %583 = vmatprep.subr.bf16.mxu0 0
      %584 = vmatpush1.bf16.msra.mxu0 0
      %585 = vmatprep.subr.bf16.mxu0 0
      %586 = vmatpush1.bf16.msra.mxu0 0
      %587 = vmatprep.subr.bf16.mxu0 0
      %588 = vmatpush1.bf16.msra.mxu0 0
      %589 = vmatprep.subr.bf16.mxu0 0
      %590 = vmatpush1.bf16.msra.mxu0 0
      %591 = vmatprep.subr.bf16.mxu0 0
      %592 = vmatpush1.bf16.msra.mxu0 0
      %593 = vmatprep.subr.bf16.mxu0 0
      %594 = vmatpush1.bf16.msra.mxu0 0
      %595 = vmatprep.mubr.bf16.mxu0 0
      %596 = vmatmul.mubr.bf16.gmra.mrb[0].mxu0 %v558
      %v597 = vpop.f32.mrb[0].mxu0
      %v598 = vadd.f32 0.0, %v597
      %v599 = vpop.f32.mrb[0].mxu0
      %v600 = vpop.f32.mrb[0].mxu0
      %v601 = vpop.f32.mrb[0].mxu0
      %602 = vdwg.mxu0
      %v604 = vcombine.high %v554, %v554
      %v606 = vunpack.c.l.s4 1983009808
      %v607 = vunpack.c.0.s8 %v606
      %v608 = vlaneseq
      %v609 = vshrl.u32 %v608, 7
      %v610 = vsub.s32 %v607, %v609
      %v611 = vrot.slane %v554, %v610
      %v613 = vunpack.c.l.s4 1983009808
      %v614 = vunpack.c.0.s8 %v613
      %v615 = vlaneseq
      %v616 = vshrl.u32 %v615, 7
      %v617 = vsub.s32 %v614, %v616
      %v618 = vrot.slane %v604, %v617
      %v619 = vcombine.high %v611, %v611
      %v621 = vsel %vm359, %v553, 0
      %v624 = vand.u32 %v611, %v366
      %v627 = vand.u32 %v619, %v366
      %v630 = vand.u32 %v618, %v366
      %632 = vmatprep.subr.bf16.mxu0 %v627
      %633 = vmatpush1.bf16.msra.mxu0 %v624
      %634 = vmatprep.subr.bf16.mxu0 0
      %635 = vmatpush1.bf16.msra.mxu0 0
      %636 = vmatprep.subr.bf16.mxu0 0
      %637 = vmatpush1.bf16.msra.mxu0 0
      %638 = vmatprep.subr.bf16.mxu0 0
      %639 = vmatpush1.bf16.msra.mxu0 0
      %640 = vmatprep.subr.bf16.mxu0 0
      %641 = vmatpush1.bf16.msra.mxu0 0
      %642 = vmatprep.subr.bf16.mxu0 0
      %643 = vmatpush1.bf16.msra.mxu0 0
      %644 = vmatprep.subr.bf16.mxu0 0
      %645 = vmatpush1.bf16.msra.mxu0 0
      %646 = vmatprep.subr.bf16.mxu0 0
      %647 = vmatpush1.bf16.msra.mxu0 0
      %648 = vmatprep.subr.bf16.mxu0 0
      %649 = vmatpush1.bf16.msra.mxu0 0
      %650 = vmatprep.subr.bf16.mxu0 0
      %651 = vmatpush1.bf16.msra.mxu0 0
      %652 = vmatprep.subr.bf16.mxu0 0
      %653 = vmatpush1.bf16.msra.mxu0 0
      %654 = vmatprep.subr.bf16.mxu0 0
      %655 = vmatpush1.bf16.msra.mxu0 0
      %656 = vmatprep.subr.bf16.mxu0 0
      %657 = vmatpush1.bf16.msra.mxu0 0
      %658 = vmatprep.subr.bf16.mxu0 0
      %659 = vmatpush1.bf16.msra.mxu0 0
      %660 = vmatprep.subr.bf16.mxu0 0
      %661 = vmatpush1.bf16.msra.mxu0 0
      %662 = vmatprep.subr.bf16.mxu0 0
      %663 = vmatpush1.bf16.msra.mxu0 0
      %664 = vmatprep.mubr.bf16.mxu0 0
      %665 = vmatmul.mubr.bf16.gmra.mrb[0].mxu0 %v621
      %v666 = vpop.f32.mrb[0].mxu0
      %v667 = vadd.f32 %v598, %v666
      %v668 = vpop.f32.mrb[0].mxu0
      %v669 = vadd.f32 %v598, %v668
      %v670 = vpop.f32.mrb[0].mxu0
      %v671 = vpop.f32.mrb[0].mxu0
      %672 = vdwg.mxu0
      %673 = vmatprep.subr.bf16.mxu0 0
      %674 = vmatpush1.bf16.msra.mxu0 %v630
      %675 = vmatprep.subr.bf16.mxu0 0
      %676 = vmatpush1.bf16.msra.mxu0 0
      %677 = vmatprep.subr.bf16.mxu0 0
      %678 = vmatpush1.bf16.msra.mxu0 0
      %679 = vmatprep.subr.bf16.mxu0 0
      %680 = vmatpush1.bf16.msra.mxu0 0
      %681 = vmatprep.subr.bf16.mxu0 0
      %682 = vmatpush1.bf16.msra.mxu0 0
      %683 = vmatprep.subr.bf16.mxu0 0
      %684 = vmatpush1.bf16.msra.mxu0 0
      %685 = vmatprep.subr.bf16.mxu0 0
      %686 = vmatpush1.bf16.msra.mxu0 0
      %687 = vmatprep.subr.bf16.mxu0 0
      %688 = vmatpush1.bf16.msra.mxu0 0
      %689 = vmatprep.subr.bf16.mxu0 0
      %690 = vmatpush1.bf16.msra.mxu0 0
      %691 = vmatprep.subr.bf16.mxu0 0
      %692 = vmatpush1.bf16.msra.mxu0 0
      %693 = vmatprep.subr.bf16.mxu0 0
      %694 = vmatpush1.bf16.msra.mxu0 0
      %695 = vmatprep.subr.bf16.mxu0 0
      %696 = vmatpush1.bf16.msra.mxu0 0
      %697 = vmatprep.subr.bf16.mxu0 0
      %698 = vmatpush1.bf16.msra.mxu0 0
      %699 = vmatprep.subr.bf16.mxu0 0
      %700 = vmatpush1.bf16.msra.mxu0 0
      %701 = vmatprep.subr.bf16.mxu0 0
      %702 = vmatpush1.bf16.msra.mxu0 0
      %703 = vmatprep.subr.bf16.mxu0 0
      %704 = vmatpush1.bf16.msra.mxu0 0
      %705 = vmatprep.mubr.bf16.mxu0 0
      %706 = vmatmul.mubr.bf16.gmra.mrb[0].mxu0 %v621
      %v707 = vpop.f32.mrb[0].mxu0
      %v708 = vadd.f32 %v598, %v707
      %v709 = vpop.f32.mrb[0].mxu0
      %v710 = vpop.f32.mrb[0].mxu0
      %v711 = vpop.f32.mrb[0].mxu0
      %712 = vdwg.mxu0
      %v713 = vmul.f32 %v667, %v523
      %v714 = vmul.f32 %v669, %v523
      %v715 = vmul.f32 %v708, %v523
      %v716 = vadd.f32 %v713, %v530
      %v717 = vadd.f32 %v714, %v530
      %v718 = vadd.f32 %v715, %v530
      %v719 = vmax.f32 %v716, 0.0
      %v720 = vmax.f32 %v717, 0.0
      %v721 = vmax.f32 %v718, 0.0
      %v722 = vpack.c.bf16 %v719, %v719
      %v723 = vpack.c.bf16 %v720, %v720
      %v724 = vpack.c.bf16 %v721, %v721
      %v728 = vunpack.c.l.b16 %v722
      %v729 = vunpack.c.l.b16 %v723
      %v730 = vunpack.c.l.b16 %v724
      %v731 = vpack.c.b16 %v729, %v728
      %v732 = vpack.c.b16 %v730, %v730
      %735 = vst [vmem:[#allocation2 + $0xc] sm:$0xff] %v731
      %736 = vst [vmem:[#allocation2 + $0x14] sm:$0xf] %v732
      %v737 = vld [vmem:[%s3] sm:$0xf]
      %v738 = vld [vmem:[%s347 + $0xc] sm:$0x3f]
      %v739 = vld [vmem:[%s2] sm:$0xf]
      %v740 = vld [vmem:[%s342 + $0x4] sm:$0x3]
      %v742 = vsel %vm359, %v739, 0
      %v745 = vand.u32 %v740, %v366
      %747 = vmatprep.subr.bf16.mxu0 0
      %748 = vmatpush1.bf16.msra.mxu0 %v745
      %749 = vmatprep.subr.bf16.mxu0 0
      %750 = vmatpush1.bf16.msra.mxu0 0
      %751 = vmatprep.subr.bf16.mxu0 0
      %752 = vmatpush1.bf16.msra.mxu0 0
      %753 = vmatprep.subr.bf16.mxu0 0
      %754 = vmatpush1.bf16.msra.mxu0 0
      %755 = vmatprep.subr.bf16.mxu0 0
      %756 = vmatpush1.bf16.msra.mxu0 0
      %757 = vmatprep.subr.bf16.mxu0 0
      %758 = vmatpush1.bf16.msra.mxu0 0
      %759 = vmatprep.subr.bf16.mxu0 0
      %760 = vmatpush1.bf16.msra.mxu0 0
      %761 = vmatprep.subr.bf16.mxu0 0
      %762 = vmatpush1.bf16.msra.mxu0 0
      %763 = vmatprep.subr.bf16.mxu0 0
      %764 = vmatpush1.bf16.msra.mxu0 0
      %765 = vmatprep.subr.bf16.mxu0 0
      %766 = vmatpush1.bf16.msra.mxu0 0
      %767 = vmatprep.subr.bf16.mxu0 0
      %768 = vmatpush1.bf16.msra.mxu0 0
      %769 = vmatprep.subr.bf16.mxu0 0
      %770 = vmatpush1.bf16.msra.mxu0 0
      %771 = vmatprep.subr.bf16.mxu0 0
      %772 = vmatpush1.bf16.msra.mxu0 0
      %773 = vmatprep.subr.bf16.mxu0 0
      %774 = vmatpush1.bf16.msra.mxu0 0
      %775 = vmatprep.subr.bf16.mxu0 0
      %776 = vmatpush1.bf16.msra.mxu0 0
      %777 = vmatprep.subr.bf16.mxu0 0
      %778 = vmatpush1.bf16.msra.mxu0 0
      %779 = vmatprep.mubr.bf16.mxu0 0
      %780 = vmatmul.mubr.bf16.gmra.mrb[0].mxu0 %v742
      %v781 = vpop.f32.mrb[0].mxu0
      %v782 = vadd.f32 0.0, %v781
      %v783 = vpop.f32.mrb[0].mxu0
      %v784 = vpop.f32.mrb[0].mxu0
      %v785 = vpop.f32.mrb[0].mxu0
      %786 = vdwg.mxu0
      %v788 = vcombine.high %v738, %v738
      %v790 = vunpack.c.l.s4 1983009808
      %v791 = vunpack.c.0.s8 %v790
      %v792 = vlaneseq
      %v793 = vshrl.u32 %v792, 7
      %v794 = vsub.s32 %v791, %v793
      %v795 = vrot.slane %v738, %v794
      %v797 = vunpack.c.l.s4 1983009808
      %v798 = vunpack.c.0.s8 %v797
      %v799 = vlaneseq
      %v800 = vshrl.u32 %v799, 7
      %v801 = vsub.s32 %v798, %v800
      %v802 = vrot.slane %v788, %v801
      %v803 = vcombine.high %v795, %v795
      %v805 = vsel %vm359, %v737, 0
      %v808 = vand.u32 %v795, %v366
      %v811 = vand.u32 %v803, %v366
      %v814 = vand.u32 %v802, %v366
      %816 = vmatprep.subr.bf16.mxu0 %v811
      %817 = vmatpush1.bf16.msra.mxu0 %v808
      %818 = vmatprep.subr.bf16.mxu0 0
      %819 = vmatpush1.bf16.msra.mxu0 0
      %820 = vmatprep.subr.bf16.mxu0 0
      %821 = vmatpush1.bf16.msra.mxu0 0
      %822 = vmatprep.subr.bf16.mxu0 0
      %823 = vmatpush1.bf16.msra.mxu0 0
      %824 = vmatprep.subr.bf16.mxu0 0
      %825 = vmatpush1.bf16.msra.mxu0 0
      %826 = vmatprep.subr.bf16.mxu0 0
      %827 = vmatpush1.bf16.msra.mxu0 0
      %828 = vmatprep.subr.bf16.mxu0 0
      %829 = vmatpush1.bf16.msra.mxu0 0
      %830 = vmatprep.subr.bf16.mxu0 0
      %831 = vmatpush1.bf16.msra.mxu0 0
      %832 = vmatprep.subr.bf16.mxu0 0
      %833 = vmatpush1.bf16.msra.mxu0 0
      %834 = vmatprep.subr.bf16.mxu0 0
      %835 = vmatpush1.bf16.msra.mxu0 0
      %836 = vmatprep.subr.bf16.mxu0 0
      %837 = vmatpush1.bf16.msra.mxu0 0
      %838 = vmatprep.subr.bf16.mxu0 0
      %839 = vmatpush1.bf16.msra.mxu0 0
      %840 = vmatprep.subr.bf16.mxu0 0
      %841 = vmatpush1.bf16.msra.mxu0 0
      %842 = vmatprep.subr.bf16.mxu0 0
      %843 = vmatpush1.bf16.msra.mxu0 0
      %844 = vmatprep.subr.bf16.mxu0 0
      %845 = vmatpush1.bf16.msra.mxu0 0
      %846 = vmatprep.subr.bf16.mxu0 0
      %847 = vmatpush1.bf16.msra.mxu0 0
      %848 = vmatprep.mubr.bf16.mxu0 0
      %849 = vmatmul.mubr.bf16.gmra.mrb[0].mxu0 %v805
      %v850 = vpop.f32.mrb[0].mxu0
      %v851 = vadd.f32 %v782, %v850
      %v852 = vpop.f32.mrb[0].mxu0
      %v853 = vadd.f32 %v782, %v852
      %v854 = vpop.f32.mrb[0].mxu0
      %v855 = vpop.f32.mrb[0].mxu0
      %856 = vdwg.mxu0
      %857 = vmatprep.subr.bf16.mxu0 0
      %858 = vmatpush1.bf16.msra.mxu0 %v814
      %859 = vmatprep.subr.bf16.mxu0 0
      %860 = vmatpush1.bf16.msra.mxu0 0
      %861 = vmatprep.subr.bf16.mxu0 0
      %862 = vmatpush1.bf16.msra.mxu0 0
      %863 = vmatprep.subr.bf16.mxu0 0
      %864 = vmatpush1.bf16.msra.mxu0 0
      %865 = vmatprep.subr.bf16.mxu0 0
      %866 = vmatpush1.bf16.msra.mxu0 0
      %867 = vmatprep.subr.bf16.mxu0 0
      %868 = vmatpush1.bf16.msra.mxu0 0
      %869 = vmatprep.subr.bf16.mxu0 0
      %870 = vmatpush1.bf16.msra.mxu0 0
      %871 = vmatprep.subr.bf16.mxu0 0
      %872 = vmatpush1.bf16.msra.mxu0 0
      %873 = vmatprep.subr.bf16.mxu0 0
      %874 = vmatpush1.bf16.msra.mxu0 0
      %875 = vmatprep.subr.bf16.mxu0 0
      %876 = vmatpush1.bf16.msra.mxu0 0
      %877 = vmatprep.subr.bf16.mxu0 0
      %878 = vmatpush1.bf16.msra.mxu0 0
      %879 = vmatprep.subr.bf16.mxu0 0
      %880 = vmatpush1.bf16.msra.mxu0 0
      %881 = vmatprep.subr.bf16.mxu0 0
      %882 = vmatpush1.bf16.msra.mxu0 0
      %883 = vmatprep.subr.bf16.mxu0 0
      %884 = vmatpush1.bf16.msra.mxu0 0
      %885 = vmatprep.subr.bf16.mxu0 0
      %886 = vmatpush1.bf16.msra.mxu0 0
      %887 = vmatprep.subr.bf16.mxu0 0
      %888 = vmatpush1.bf16.msra.mxu0 0
      %889 = vmatprep.mubr.bf16.mxu0 0
      %890 = vmatmul.mubr.bf16.gmra.mrb[0].mxu0 %v805
      %v891 = vpop.f32.mrb[0].mxu0
      %v892 = vadd.f32 %v782, %v891
      %v893 = vpop.f32.mrb[0].mxu0
      %v894 = vpop.f32.mrb[0].mxu0
      %v895 = vpop.f32.mrb[0].mxu0
      %896 = vdwg.mxu0
      %v897 = vmul.f32 %v851, %v523
      %v898 = vmul.f32 %v853, %v523
      %v899 = vmul.f32 %v892, %v523
      %v900 = vadd.f32 %v897, %v530
      %v901 = vadd.f32 %v898, %v530
      %v902 = vadd.f32 %v899, %v530
      %v903 = vmax.f32 %v900, 0.0
      %v904 = vmax.f32 %v901, 0.0
      %v905 = vmax.f32 %v902, 0.0
      %v906 = vpack.c.bf16 %v903, %v903
      %v907 = vpack.c.bf16 %v904, %v904
      %v908 = vpack.c.bf16 %v905, %v905
      %v912 = vunpack.c.l.b16 %v906
      %v913 = vunpack.c.l.b16 %v907
      %v914 = vunpack.c.l.b16 %v908
      %v915 = vpack.c.b16 %v913, %v912
      %v916 = vpack.c.b16 %v914, %v914
      %919 = vst [vmem:[#allocation2 + $0x18] sm:$0xff] %v915
      %920 = vst [vmem:[#allocation2 + $0x20] sm:$0xf] %v916
      %s921 = scalar_lea.vmem %s4, 4
      %v922 = vld [vmem:[%s921] sm:$0xf]
      %v923 = vld [vmem:[#allocation2] sm:$0xff]
      %v924 = vld [vmem:[#allocation2 + $0x8] sm:$0xf]
      %s925 = scalar_lea.vmem %s4, 8
      %v926 = vld [vmem:[%s925] sm:$0xf]
      %v927 = vld [vmem:[#allocation2 + $0xc] sm:$0xff]
      %v928 = vld [vmem:[#allocation2 + $0x14] sm:$0xf]
      %v931 = vunpack.c.l.b16 %v927
      %v932 = vunpack.c.h.b16 %v927
      %v933 = vunpack.c.l.b16 %v928
      %v934 = vpack.c.b16 %v931, %v931
      %v935 = vpack.c.b16 %v932, %v932
      %v936 = vpack.c.b16 %v933, %v933
      %vm937 = vcmask 64512
      %v939 = vsel %vm937, %v926, 0
      %vm941 = vcmask 1043456
      %v943 = vsel %vm941, %v934, 0
      %v946 = vsel %vm941, %v935, 0
      %v949 = vsel %vm941, %v936, 0
      %951 = vmatprep.subr.bf16.mxu0 %v946
      %952 = vmatpush1.bf16.msra.mxu0 %v943
      %953 = vmatprep.subr.bf16.mxu0 0
      %954 = vmatpush1.bf16.msra.mxu0 0
      %955 = vmatprep.subr.bf16.mxu0 0
      %956 = vmatpush1.bf16.msra.mxu0 0
      %957 = vmatprep.subr.bf16.mxu0 0
      %958 = vmatpush1.bf16.msra.mxu0 0
      %959 = vmatprep.subr.bf16.mxu0 0
      %960 = vmatpush1.bf16.msra.mxu0 0
      %961 = vmatprep.subr.bf16.mxu0 0
      %962 = vmatpush1.bf16.msra.mxu0 0
      %963 = vmatprep.subr.bf16.mxu0 0
      %964 = vmatpush1.bf16.msra.mxu0 0
      %965 = vmatprep.subr.bf16.mxu0 0
      %966 = vmatpush1.bf16.msra.mxu0 0
      %967 = vmatprep.subr.bf16.mxu0 0
      %968 = vmatpush1.bf16.msra.mxu0 0
      %969 = vmatprep.subr.bf16.mxu0 0
      %970 = vmatpush1.bf16.msra.mxu0 0
      %971 = vmatprep.subr.bf16.mxu0 0
      %972 = vmatpush1.bf16.msra.mxu0 0
      %973 = vmatprep.subr.bf16.mxu0 0
      %974 = vmatpush1.bf16.msra.mxu0 0
      %975 = vmatprep.subr.bf16.mxu0 0
      %976 = vmatpush1.bf16.msra.mxu0 0
      %977 = vmatprep.subr.bf16.mxu0 0
      %978 = vmatpush1.bf16.msra.mxu0 0
      %979 = vmatprep.subr.bf16.mxu0 0
      %980 = vmatpush1.bf16.msra.mxu0 0
      %981 = vmatprep.subr.bf16.mxu0 0
      %982 = vmatpush1.bf16.msra.mxu0 0
      %983 = vmatprep.mubr.bf16.mxu0 0
      %984 = vmatmul.mubr.bf16.gmra.mrb[0].mxu0 %v939
      %v985 = vpop.f32.mrb[0].mxu0
      %v986 = vadd.f32 0.0, %v985
      %v987 = vpop.f32.mrb[0].mxu0
      %v988 = vadd.f32 0.0, %v987
      %v989 = vpop.f32.mrb[0].mxu0
      %v990 = vpop.f32.mrb[0].mxu0
      %991 = vdwg.mxu0
      %992 = vmatprep.subr.bf16.mxu0 0
      %993 = vmatpush1.bf16.msra.mxu0 %v949
      %994 = vmatprep.subr.bf16.mxu0 0
      %995 = vmatpush1.bf16.msra.mxu0 0
      %996 = vmatprep.subr.bf16.mxu0 0
      %997 = vmatpush1.bf16.msra.mxu0 0
      %998 = vmatprep.subr.bf16.mxu0 0
      %999 = vmatpush1.bf16.msra.mxu0 0
      %1000 = vmatprep.subr.bf16.mxu0 0
      %1001 = vmatpush1.bf16.msra.mxu0 0
      %1002 = vmatprep.subr.bf16.mxu0 0
      %1003 = vmatpush1.bf16.msra.mxu0 0
      %1004 = vmatprep.subr.bf16.mxu0 0
      %1005 = vmatpush1.bf16.msra.mxu0 0
      %1006 = vmatprep.subr.bf16.mxu0 0
      %1007 = vmatpush1.bf16.msra.mxu0 0
      %1008 = vmatprep.subr.bf16.mxu0 0
      %1009 = vmatpush1.bf16.msra.mxu0 0
      %1010 = vmatprep.subr.bf16.mxu0 0
      %1011 = vmatpush1.bf16.msra.mxu0 0
      %1012 = vmatprep.subr.bf16.mxu0 0
      %1013 = vmatpush1.bf16.msra.mxu0 0
      %1014 = vmatprep.subr.bf16.mxu0 0
      %1015 = vmatpush1.bf16.msra.mxu0 0
      %1016 = vmatprep.subr.bf16.mxu0 0
      %1017 = vmatpush1.bf16.msra.mxu0 0
      %1018 = vmatprep.subr.bf16.mxu0 0
      %1019 = vmatpush1.bf16.msra.mxu0 0
      %1020 = vmatprep.subr.bf16.mxu0 0
      %1021 = vmatpush1.bf16.msra.mxu0 0
      %1022 = vmatprep.subr.bf16.mxu0 0
      %1023 = vmatpush1.bf16.msra.mxu0 0
      %1024 = vmatprep.mubr.bf16.mxu0 0
      %1025 = vmatmul.mubr.bf16.gmra.mrb[0].mxu0 %v939
      %v1026 = vpop.f32.mrb[0].mxu0
      %v1027 = vadd.f32 0.0, %v1026
      %v1028 = vpop.f32.mrb[0].mxu0
      %v1029 = vpop.f32.mrb[0].mxu0
      %v1030 = vpop.f32.mrb[0].mxu0
      %1031 = vdwg.mxu0
      %v1034 = vunpack.c.l.b16 %v923
      %v1035 = vunpack.c.h.b16 %v923
      %v1036 = vunpack.c.l.b16 %v924
      %v1037 = vpack.c.b16 %v1034, %v1034
      %v1038 = vpack.c.b16 %v1035, %v1035
      %v1039 = vpack.c.b16 %v1036, %v1036
      %v1041 = vsel %vm937, %v922, 0
      %v1044 = vsel %vm941, %v1037, 0
      %v1047 = vsel %vm941, %v1038, 0
      %v1050 = vsel %vm941, %v1039, 0
      %1052 = vmatprep.subr.bf16.mxu0 %v1047
      %1053 = vmatpush1.bf16.msra.mxu0 %v1044
      %1054 = vmatprep.subr.bf16.mxu0 0
      %1055 = vmatpush1.bf16.msra.mxu0 0
      %1056 = vmatprep.subr.bf16.mxu0 0
      %1057 = vmatpush1.bf16.msra.mxu0 0
      %1058 = vmatprep.subr.bf16.mxu0 0
      %1059 = vmatpush1.bf16.msra.mxu0 0
      %1060 = vmatprep.subr.bf16.mxu0 0
      %1061 = vmatpush1.bf16.msra.mxu0 0
      %1062 = vmatprep.subr.bf16.mxu0 0
      %1063 = vmatpush1.bf16.msra.mxu0 0
      %1064 = vmatprep.subr.bf16.mxu0 0
      %1065 = vmatpush1.bf16.msra.mxu0 0
      %1066 = vmatprep.subr.bf16.mxu0 0
      %1067 = vmatpush1.bf16.msra.mxu0 0
      %1068 = vmatprep.subr.bf16.mxu0 0
      %1069 = vmatpush1.bf16.msra.mxu0 0
      %1070 = vmatprep.subr.bf16.mxu0 0
      %1071 = vmatpush1.bf16.msra.mxu0 0
      %1072 = vmatprep.subr.bf16.mxu0 0
      %1073 = vmatpush1.bf16.msra.mxu0 0
      %1074 = vmatprep.subr.bf16.mxu0 0
      %1075 = vmatpush1.bf16.msra.mxu0 0
      %1076 = vmatprep.subr.bf16.mxu0 0
      %1077 = vmatpush1.bf16.msra.mxu0 0
      %1078 = vmatprep.subr.bf16.mxu0 0
      %1079 = vmatpush1.bf16.msra.mxu0 0
      %1080 = vmatprep.subr.bf16.mxu0 0
      %1081 = vmatpush1.bf16.msra.mxu0 0
      %1082 = vmatprep.subr.bf16.mxu0 0
      %1083 = vmatpush1.bf16.msra.mxu0 0
      %1084 = vmatprep.mubr.bf16.mxu0 0
      %1085 = vmatmul.mubr.bf16.gmra.mrb[0].mxu0 %v1041
      %v1086 = vpop.f32.mrb[0].mxu0
      %v1087 = vadd.f32 %v986, %v1086
      %v1088 = vpop.f32.mrb[0].mxu0
      %v1089 = vadd.f32 %v988, %v1088
      %v1090 = vpop.f32.mrb[0].mxu0
      %v1091 = vpop.f32.mrb[0].mxu0
      %1092 = vdwg.mxu0
      %1093 = vmatprep.subr.bf16.mxu0 0
      %1094 = vmatpush1.bf16.msra.mxu0 %v1050
      %1095 = vmatprep.subr.bf16.mxu0 0
      %1096 = vmatpush1.bf16.msra.mxu0 0
      %1097 = vmatprep.subr.bf16.mxu0 0
      %1098 = vmatpush1.bf16.msra.mxu0 0
      %1099 = vmatprep.subr.bf16.mxu0 0
      %1100 = vmatpush1.bf16.msra.mxu0 0
      %1101 = vmatprep.subr.bf16.mxu0 0
      %1102 = vmatpush1.bf16.msra.mxu0 0
      %1103 = vmatprep.subr.bf16.mxu0 0
      %1104 = vmatpush1.bf16.msra.mxu0 0
      %1105 = vmatprep.subr.bf16.mxu0 0
      %1106 = vmatpush1.bf16.msra.mxu0 0
      %1107 = vmatprep.subr.bf16.mxu0 0
      %1108 = vmatpush1.bf16.msra.mxu0 0
      %1109 = vmatprep.subr.bf16.mxu0 0
      %1110 = vmatpush1.bf16.msra.mxu0 0
      %1111 = vmatprep.subr.bf16.mxu0 0
      %1112 = vmatpush1.bf16.msra.mxu0 0
      %1113 = vmatprep.subr.bf16.mxu0 0
      %1114 = vmatpush1.bf16.msra.mxu0 0
      %1115 = vmatprep.subr.bf16.mxu0 0
      %1116 = vmatpush1.bf16.msra.mxu0 0
      %1117 = vmatprep.subr.bf16.mxu0 0
      %1118 = vmatpush1.bf16.msra.mxu0 0
      %1119 = vmatprep.subr.bf16.mxu0 0
      %1120 = vmatpush1.bf16.msra.mxu0 0
      %1121 = vmatprep.subr.bf16.mxu0 0
      %1122 = vmatpush1.bf16.msra.mxu0 0
      %1123 = vmatprep.subr.bf16.mxu0 0
      %1124 = vmatpush1.bf16.msra.mxu0 0
      %1125 = vmatprep.mubr.bf16.mxu0 0
      %1126 = vmatmul.mubr.bf16.gmra.mrb[0].mxu0 %v1041
      %v1127 = vpop.f32.mrb[0].mxu0
      %v1128 = vadd.f32 %v1027, %v1127
      %v1129 = vpop.f32.mrb[0].mxu0
      %v1130 = vpop.f32.mrb[0].mxu0
      %v1131 = vpop.f32.mrb[0].mxu0
      %1132 = vdwg.mxu0
      %1133 = vset.pattern.permute.xlu0 2
      %1134 = vperm.xlu0 %1133, %v354
      %v1135 = vpop.permute.xlu0 %1134
      %v1137 = vmul.f32 %v1087, %v1135
      %v1138 = vmul.f32 %v1089, %v1135
      %v1139 = vmul.f32 %v1128, %v1135
      %1140 = vset.pattern.permute.xlu0 3
      %1141 = vperm.xlu0 %1140, %v354
      %v1142 = vpop.permute.xlu0 %1141
      %v1144 = vadd.f32 %v1137, %v1142
      %v1145 = vadd.f32 %v1138, %v1142
      %v1146 = vadd.f32 %v1139, %v1142
      %v1147 = vmax.f32 %v1144, 0.0
      %v1148 = vmax.f32 %v1145, 0.0
      %v1149 = vmax.f32 %v1146, 0.0
      %v1150 = vpack.c.bf16 %v1147, %v1147
      %v1151 = vpack.c.bf16 %v1148, %v1148
      %v1152 = vpack.c.bf16 %v1149, %v1149
      %v1156 = vunpack.c.l.b16 %v1150
      %v1157 = vunpack.c.l.b16 %v1151
      %v1158 = vunpack.c.l.b16 %v1152
      %v1159 = vpack.c.b16 %v1157, %v1156
      %v1160 = vpack.c.b16 %v1158, %v1158
      %1163 = vst [vmem:[#allocation3] sm:$0xff] %v1159
      %1164 = vst [vmem:[#allocation3 + $0x8] sm:$0xf] %v1160
      %v1165 = vld [vmem:[%s4] sm:$0xf]
      %v1166 = vld [vmem:[#allocation2] sm:$0xff]
      %v1167 = vld [vmem:[#allocation2 + $0x8] sm:$0xf]
      %v1168 = vld [vmem:[%s921] sm:$0xf]
      %v1169 = vld [vmem:[#allocation2 + $0xc] sm:$0xff]
      %v1170 = vld [vmem:[#allocation2 + $0x14] sm:$0xf]
      %v1173 = vunpack.c.l.b16 %v1169
      %v1174 = vunpack.c.h.b16 %v1169
      %v1175 = vunpack.c.l.b16 %v1170
      %v1176 = vpack.c.b16 %v1173, %v1173
      %v1177 = vpack.c.b16 %v1174, %v1174
      %v1178 = vpack.c.b16 %v1175, %v1175
      %v1180 = vsel %vm937, %v1168, 0
      %v1183 = vsel %vm941, %v1176, 0
      %v1186 = vsel %vm941, %v1177, 0
      %v1189 = vsel %vm941, %v1178, 0
      %1191 = vmatprep.subr.bf16.mxu0 %v1186
      %1192 = vmatpush1.bf16.msra.mxu0 %v1183
      %1193 = vmatprep.subr.bf16.mxu0 0
      %1194 = vmatpush1.bf16.msra.mxu0 0
      %1195 = vmatprep.subr.bf16.mxu0 0
      %1196 = vmatpush1.bf16.msra.mxu0 0
      %1197 = vmatprep.subr.bf16.mxu0 0
      %1198 = vmatpush1.bf16.msra.mxu0 0
      %1199 = vmatprep.subr.bf16.mxu0 0
      %1200 = vmatpush1.bf16.msra.mxu0 0
      %1201 = vmatprep.subr.bf16.mxu0 0
      %1202 = vmatpush1.bf16.msra.mxu0 0
      %1203 = vmatprep.subr.bf16.mxu0 0
      %1204 = vmatpush1.bf16.msra.mxu0 0
      %1205 = vmatprep.subr.bf16.mxu0 0
      %1206 = vmatpush1.bf16.msra.mxu0 0
      %1207 = vmatprep.subr.bf16.mxu0 0
      %1208 = vmatpush1.bf16.msra.mxu0 0
      %1209 = vmatprep.subr.bf16.mxu0 0
      %1210 = vmatpush1.bf16.msra.mxu0 0
      %1211 = vmatprep.subr.bf16.mxu0 0
      %1212 = vmatpush1.bf16.msra.mxu0 0
      %1213 = vmatprep.subr.bf16.mxu0 0
      %1214 = vmatpush1.bf16.msra.mxu0 0
      %1215 = vmatprep.subr.bf16.mxu0 0
      %1216 = vmatpush1.bf16.msra.mxu0 0
      %1217 = vmatprep.subr.bf16.mxu0 0
      %1218 = vmatpush1.bf16.msra.mxu0 0
      %1219 = vmatprep.subr.bf16.mxu0 0
      %1220 = vmatpush1.bf16.msra.mxu0 0
      %1221 = vmatprep.subr.bf16.mxu0 0
      %1222 = vmatpush1.bf16.msra.mxu0 0
      %1223 = vmatprep.mubr.bf16.mxu0 0
      %1224 = vmatmul.mubr.bf16.gmra.mrb[0].mxu0 %v1180
      %v1225 = vpop.f32.mrb[0].mxu0
      %v1226 = vadd.f32 0.0, %v1225
      %v1227 = vpop.f32.mrb[0].mxu0
      %v1228 = vadd.f32 0.0, %v1227
      %v1229 = vpop.f32.mrb[0].mxu0
      %v1230 = vpop.f32.mrb[0].mxu0
      %1231 = vdwg.mxu0
      %1232 = vmatprep.subr.bf16.mxu0 0
      %1233 = vmatpush1.bf16.msra.mxu0 %v1189
      %1234 = vmatprep.subr.bf16.mxu0 0
      %1235 = vmatpush1.bf16.msra.mxu0 0
      %1236 = vmatprep.subr.bf16.mxu0 0
      %1237 = vmatpush1.bf16.msra.mxu0 0
      %1238 = vmatprep.subr.bf16.mxu0 0
      %1239 = vmatpush1.bf16.msra.mxu0 0
      %1240 = vmatprep.subr.bf16.mxu0 0
      %1241 = vmatpush1.bf16.msra.mxu0 0
      %1242 = vmatprep.subr.bf16.mxu0 0
      %1243 = vmatpush1.bf16.msra.mxu0 0
      %1244 = vmatprep.subr.bf16.mxu0 0
      %1245 = vmatpush1.bf16.msra.mxu0 0
      %1246 = vmatprep.subr.bf16.mxu0 0
      %1247 = vmatpush1.bf16.msra.mxu0 0
      %1248 = vmatprep.subr.bf16.mxu0 0
      %1249 = vmatpush1.bf16.msra.mxu0 0
      %1250 = vmatprep.subr.bf16.mxu0 0
      %1251 = vmatpush1.bf16.msra.mxu0 0
      %1252 = vmatprep.subr.bf16.mxu0 0
      %1253 = vmatpush1.bf16.msra.mxu0 0
      %1254 = vmatprep.subr.bf16.mxu0 0
      %1255 = vmatpush1.bf16.msra.mxu0 0
      %1256 = vmatprep.subr.bf16.mxu0 0
      %1257 = vmatpush1.bf16.msra.mxu0 0
      %1258 = vmatprep.subr.bf16.mxu0 0
      %1259 = vmatpush1.bf16.msra.mxu0 0
      %1260 = vmatprep.subr.bf16.mxu0 0
      %1261 = vmatpush1.bf16.msra.mxu0 0
      %1262 = vmatprep.subr.bf16.mxu0 0
      %1263 = vmatpush1.bf16.msra.mxu0 0
      %1264 = vmatprep.mubr.bf16.mxu0 0
      %1265 = vmatmul.mubr.bf16.gmra.mrb[0].mxu0 %v1180
      %v1266 = vpop.f32.mrb[0].mxu0
      %v1267 = vadd.f32 0.0, %v1266
      %v1268 = vpop.f32.mrb[0].mxu0
      %v1269 = vpop.f32.mrb[0].mxu0
      %v1270 = vpop.f32.mrb[0].mxu0
      %1271 = vdwg.mxu0
      %v1274 = vunpack.c.l.b16 %v1166
      %v1275 = vunpack.c.h.b16 %v1166
      %v1276 = vunpack.c.l.b16 %v1167
      %v1277 = vpack.c.b16 %v1274, %v1274
      %v1278 = vpack.c.b16 %v1275, %v1275
      %v1279 = vpack.c.b16 %v1276, %v1276
      %v1281 = vsel %vm937, %v1165, 0
      %v1284 = vsel %vm941, %v1277, 0
      %v1287 = vsel %vm941, %v1278, 0
      %v1290 = vsel %vm941, %v1279, 0
      %1292 = vmatprep.subr.bf16.mxu0 %v1287
      %1293 = vmatpush1.bf16.msra.mxu0 %v1284
      %1294 = vmatprep.subr.bf16.mxu0 0
      %1295 = vmatpush1.bf16.msra.mxu0 0
      %1296 = vmatprep.subr.bf16.mxu0 0
      %1297 = vmatpush1.bf16.msra.mxu0 0
      %1298 = vmatprep.subr.bf16.mxu0 0
      %1299 = vmatpush1.bf16.msra.mxu0 0
      %1300 = vmatprep.subr.bf16.mxu0 0
      %1301 = vmatpush1.bf16.msra.mxu0 0
      %1302 = vmatprep.subr.bf16.mxu0 0
      %1303 = vmatpush1.bf16.msra.mxu0 0
      %1304 = vmatprep.subr.bf16.mxu0 0
      %1305 = vmatpush1.bf16.msra.mxu0 0
      %1306 = vmatprep.subr.bf16.mxu0 0
      %1307 = vmatpush1.bf16.msra.mxu0 0
      %1308 = vmatprep.subr.bf16.mxu0 0
      %1309 = vmatpush1.bf16.msra.mxu0 0
      %1310 = vmatprep.subr.bf16.mxu0 0
      %1311 = vmatpush1.bf16.msra.mxu0 0
      %1312 = vmatprep.subr.bf16.mxu0 0
      %1313 = vmatpush1.bf16.msra.mxu0 0
      %1314 = vmatprep.subr.bf16.mxu0 0
      %1315 = vmatpush1.bf16.msra.mxu0 0
      %1316 = vmatprep.subr.bf16.mxu0 0
      %1317 = vmatpush1.bf16.msra.mxu0 0
      %1318 = vmatprep.subr.bf16.mxu0 0
      %1319 = vmatpush1.bf16.msra.mxu0 0
      %1320 = vmatprep.subr.bf16.mxu0 0
      %1321 = vmatpush1.bf16.msra.mxu0 0
      %1322 = vmatprep.subr.bf16.mxu0 0
      %1323 = vmatpush1.bf16.msra.mxu0 0
      %1324 = vmatprep.mubr.bf16.mxu0 0
      %1325 = vmatmul.mubr.bf16.gmra.mrb[0].mxu0 %v1281
      %v1326 = vpop.f32.mrb[0].mxu0
      %v1327 = vadd.f32 %v1226, %v1326
      %v1328 = vpop.f32.mrb[0].mxu0
      %v1329 = vadd.f32 %v1228, %v1328
      %v1330 = vpop.f32.mrb[0].mxu0
      %v1331 = vpop.f32.mrb[0].mxu0
      %1332 = vdwg.mxu0
      %1333 = vmatprep.subr.bf16.mxu0 0
      %1334 = vmatpush1.bf16.msra.mxu0 %v1290
      %1335 = vmatprep.subr.bf16.mxu0 0
      %1336 = vmatpush1.bf16.msra.mxu0 0
      %1337 = vmatprep.subr.bf16.mxu0 0
      %1338 = vmatpush1.bf16.msra.mxu0 0
      %1339 = vmatprep.subr.bf16.mxu0 0
      %1340 = vmatpush1.bf16.msra.mxu0 0
      %1341 = vmatprep.subr.bf16.mxu0 0
      %1342 = vmatpush1.bf16.msra.mxu0 0
      %1343 = vmatprep.subr.bf16.mxu0 0
      %1344 = vmatpush1.bf16.msra.mxu0 0
      %1345 = vmatprep.subr.bf16.mxu0 0
      %1346 = vmatpush1.bf16.msra.mxu0 0
      %1347 = vmatprep.subr.bf16.mxu0 0
      %1348 = vmatpush1.bf16.msra.mxu0 0
      %1349 = vmatprep.subr.bf16.mxu0 0
      %1350 = vmatpush1.bf16.msra.mxu0 0
      %1351 = vmatprep.subr.bf16.mxu0 0
      %1352 = vmatpush1.bf16.msra.mxu0 0
      %1353 = vmatprep.subr.bf16.mxu0 0
      %1354 = vmatpush1.bf16.msra.mxu0 0
      %1355 = vmatprep.subr.bf16.mxu0 0
      %1356 = vmatpush1.bf16.msra.mxu0 0
      %1357 = vmatprep.subr.bf16.mxu0 0
      %1358 = vmatpush1.bf16.msra.mxu0 0
      %1359 = vmatprep.subr.bf16.mxu0 0
      %1360 = vmatpush1.bf16.msra.mxu0 0
      %1361 = vmatprep.subr.bf16.mxu0 0
      %1362 = vmatpush1.bf16.msra.mxu0 0
      %1363 = vmatprep.subr.bf16.mxu0 0
      %1364 = vmatpush1.bf16.msra.mxu0 0
      %1365 = vmatprep.mubr.bf16.mxu0 0
      %1366 = vmatmul.mubr.bf16.gmra.mrb[0].mxu0 %v1281
      %v1367 = vpop.f32.mrb[0].mxu0
      %v1368 = vadd.f32 %v1267, %v1367
      %v1369 = vpop.f32.mrb[0].mxu0
      %v1370 = vpop.f32.mrb[0].mxu0
      %v1371 = vpop.f32.mrb[0].mxu0
      %1372 = vdwg.mxu0
      %v1373 = vld [vmem:[%s925] sm:$0xf]
      %v1374 = vld [vmem:[#allocation2 + $0x18] sm:$0xff]
      %v1375 = vld [vmem:[#allocation2 + $0x20] sm:$0xf]
      %v1378 = vunpack.c.l.b16 %v1374
      %v1379 = vunpack.c.h.b16 %v1374
      %v1380 = vunpack.c.l.b16 %v1375
      %v1381 = vpack.c.b16 %v1378, %v1378
      %v1382 = vpack.c.b16 %v1379, %v1379
      %v1383 = vpack.c.b16 %v1380, %v1380
      %v1385 = vsel %vm937, %v1373, 0
      %v1388 = vsel %vm941, %v1381, 0
      %v1391 = vsel %vm941, %v1382, 0
      %v1394 = vsel %vm941, %v1383, 0
      %1396 = vmatprep.subr.bf16.mxu0 %v1391
      %1397 = vmatpush1.bf16.msra.mxu0 %v1388
      %1398 = vmatprep.subr.bf16.mxu0 0
      %1399 = vmatpush1.bf16.msra.mxu0 0
      %1400 = vmatprep.subr.bf16.mxu0 0
      %1401 = vmatpush1.bf16.msra.mxu0 0
      %1402 = vmatprep.subr.bf16.mxu0 0
      %1403 = vmatpush1.bf16.msra.mxu0 0
      %1404 = vmatprep.subr.bf16.mxu0 0
      %1405 = vmatpush1.bf16.msra.mxu0 0
      %1406 = vmatprep.subr.bf16.mxu0 0
      %1407 = vmatpush1.bf16.msra.mxu0 0
      %1408 = vmatprep.subr.bf16.mxu0 0
      %1409 = vmatpush1.bf16.msra.mxu0 0
      %1410 = vmatprep.subr.bf16.mxu0 0
      %1411 = vmatpush1.bf16.msra.mxu0 0
      %1412 = vmatprep.subr.bf16.mxu0 0
      %1413 = vmatpush1.bf16.msra.mxu0 0
      %1414 = vmatprep.subr.bf16.mxu0 0
      %1415 = vmatpush1.bf16.msra.mxu0 0
      %1416 = vmatprep.subr.bf16.mxu0 0
      %1417 = vmatpush1.bf16.msra.mxu0 0
      %1418 = vmatprep.subr.bf16.mxu0 0
      %1419 = vmatpush1.bf16.msra.mxu0 0
      %1420 = vmatprep.subr.bf16.mxu0 0
      %1421 = vmatpush1.bf16.msra.mxu0 0
      %1422 = vmatprep.subr.bf16.mxu0 0
      %1423 = vmatpush1.bf16.msra.mxu0 0
      %1424 = vmatprep.subr.bf16.mxu0 0
      %1425 = vmatpush1.bf16.msra.mxu0 0
      %1426 = vmatprep.subr.bf16.mxu0 0
      %1427 = vmatpush1.bf16.msra.mxu0 0
      %1428 = vmatprep.mubr.bf16.mxu0 0
      %1429 = vmatmul.mubr.bf16.gmra.mrb[0].mxu0 %v1385
      %v1430 = vpop.f32.mrb[0].mxu0
      %v1431 = vadd.f32 0.0, %v1430
      %v1432 = vpop.f32.mrb[0].mxu0
      %v1433 = vadd.f32 0.0, %v1432
      %v1434 = vpop.f32.mrb[0].mxu0
      %v1435 = vpop.f32.mrb[0].mxu0
      %1436 = vdwg.mxu0
      %1437 = vmatprep.subr.bf16.mxu0 0
      %1438 = vmatpush1.bf16.msra.mxu0 %v1394
      %1439 = vmatprep.subr.bf16.mxu0 0
      %1440 = vmatpush1.bf16.msra.mxu0 0
      %1441 = vmatprep.subr.bf16.mxu0 0
      %1442 = vmatpush1.bf16.msra.mxu0 0
      %1443 = vmatprep.subr.bf16.mxu0 0
      %1444 = vmatpush1.bf16.msra.mxu0 0
      %1445 = vmatprep.subr.bf16.mxu0 0
      %1446 = vmatpush1.bf16.msra.mxu0 0
      %1447 = vmatprep.subr.bf16.mxu0 0
      %1448 = vmatpush1.bf16.msra.mxu0 0
      %1449 = vmatprep.subr.bf16.mxu0 0
      %1450 = vmatpush1.bf16.msra.mxu0 0
      %1451 = vmatprep.subr.bf16.mxu0 0
      %1452 = vmatpush1.bf16.msra.mxu0 0
      %1453 = vmatprep.subr.bf16.mxu0 0
      %1454 = vmatpush1.bf16.msra.mxu0 0
      %1455 = vmatprep.subr.bf16.mxu0 0
      %1456 = vmatpush1.bf16.msra.mxu0 0
      %1457 = vmatprep.subr.bf16.mxu0 0
      %1458 = vmatpush1.bf16.msra.mxu0 0
      %1459 = vmatprep.subr.bf16.mxu0 0
      %1460 = vmatpush1.bf16.msra.mxu0 0
      %1461 = vmatprep.subr.bf16.mxu0 0
      %1462 = vmatpush1.bf16.msra.mxu0 0
      %1463 = vmatprep.subr.bf16.mxu0 0
      %1464 = vmatpush1.bf16.msra.mxu0 0
      %1465 = vmatprep.subr.bf16.mxu0 0
      %1466 = vmatpush1.bf16.msra.mxu0 0
      %1467 = vmatprep.subr.bf16.mxu0 0
      %1468 = vmatpush1.bf16.msra.mxu0 0
      %1469 = vmatprep.mubr.bf16.mxu0 0
      %1470 = vmatmul.mubr.bf16.gmra.mrb[0].mxu0 %v1385
      %v1471 = vpop.f32.mrb[0].mxu0
      %v1472 = vadd.f32 0.0, %v1471
      %v1473 = vpop.f32.mrb[0].mxu0
      %v1474 = vpop.f32.mrb[0].mxu0
      %v1475 = vpop.f32.mrb[0].mxu0
      %1476 = vdwg.mxu0
      %v1477 = vadd.f32 %v1327, %v1431
      %v1478 = vadd.f32 %v1329, %v1433
      %v1479 = vadd.f32 %v1368, %v1472
      %v1480 = vmul.f32 %v1477, %v1135
      %v1481 = vmul.f32 %v1478, %v1135
      %v1482 = vmul.f32 %v1479, %v1135
      %v1483 = vadd.f32 %v1480, %v1142
      %v1484 = vadd.f32 %v1481, %v1142
      %v1485 = vadd.f32 %v1482, %v1142
      %v1486 = vmax.f32 %v1483, 0.0
      %v1487 = vmax.f32 %v1484, 0.0
      %v1488 = vmax.f32 %v1485, 0.0
      %v1489 = vpack.c.bf16 %v1486, %v1486
      %v1490 = vpack.c.bf16 %v1487, %v1487
      %v1491 = vpack.c.bf16 %v1488, %v1488
      %v1495 = vunpack.c.l.b16 %v1489
      %v1496 = vunpack.c.l.b16 %v1490
      %v1497 = vunpack.c.l.b16 %v1491
      %v1498 = vpack.c.b16 %v1496, %v1495
      %v1499 = vpack.c.b16 %v1497, %v1497
      %1502 = vst [vmem:[#allocation3 + $0xc] sm:$0xff] %v1498
      %1503 = vst [vmem:[#allocation3 + $0x14] sm:$0xf] %v1499
      %v1504 = vld [vmem:[%s4] sm:$0xf]
      %v1505 = vld [vmem:[#allocation2 + $0xc] sm:$0xff]
      %v1506 = vld [vmem:[#allocation2 + $0x14] sm:$0xf]
      %v1507 = vld [vmem:[%s921] sm:$0xf]
      %v1508 = vld [vmem:[#allocation2 + $0x18] sm:$0xff]
      %v1509 = vld [vmem:[#allocation2 + $0x20] sm:$0xf]
      %v1512 = vunpack.c.l.b16 %v1508
      %v1513 = vunpack.c.h.b16 %v1508
      %v1514 = vunpack.c.l.b16 %v1509
      %v1515 = vpack.c.b16 %v1512, %v1512
      %v1516 = vpack.c.b16 %v1513, %v1513
      %v1517 = vpack.c.b16 %v1514, %v1514
      %v1519 = vsel %vm937, %v1507, 0
      %v1522 = vsel %vm941, %v1515, 0
      %v1525 = vsel %vm941, %v1516, 0
      %v1528 = vsel %vm941, %v1517, 0
      %1530 = vmatprep.subr.bf16.mxu0 %v1525
      %1531 = vmatpush1.bf16.msra.mxu0 %v1522
      %1532 = vmatprep.subr.bf16.mxu0 0
      %1533 = vmatpush1.bf16.msra.mxu0 0
      %1534 = vmatprep.subr.bf16.mxu0 0
      %1535 = vmatpush1.bf16.msra.mxu0 0
      %1536 = vmatprep.subr.bf16.mxu0 0
      %1537 = vmatpush1.bf16.msra.mxu0 0
      %1538 = vmatprep.subr.bf16.mxu0 0
      %1539 = vmatpush1.bf16.msra.mxu0 0
      %1540 = vmatprep.subr.bf16.mxu0 0
      %1541 = vmatpush1.bf16.msra.mxu0 0
      %1542 = vmatprep.subr.bf16.mxu0 0
      %1543 = vmatpush1.bf16.msra.mxu0 0
      %1544 = vmatprep.subr.bf16.mxu0 0
      %1545 = vmatpush1.bf16.msra.mxu0 0
      %1546 = vmatprep.subr.bf16.mxu0 0
      %1547 = vmatpush1.bf16.msra.mxu0 0
      %1548 = vmatprep.subr.bf16.mxu0 0
      %1549 = vmatpush1.bf16.msra.mxu0 0
      %1550 = vmatprep.subr.bf16.mxu0 0
      %1551 = vmatpush1.bf16.msra.mxu0 0
      %1552 = vmatprep.subr.bf16.mxu0 0
      %1553 = vmatpush1.bf16.msra.mxu0 0
      %1554 = vmatprep.subr.bf16.mxu0 0
      %1555 = vmatpush1.bf16.msra.mxu0 0
      %1556 = vmatprep.subr.bf16.mxu0 0
      %1557 = vmatpush1.bf16.msra.mxu0 0
      %1558 = vmatprep.subr.bf16.mxu0 0
      %1559 = vmatpush1.bf16.msra.mxu0 0
      %1560 = vmatprep.subr.bf16.mxu0 0
      %1561 = vmatpush1.bf16.msra.mxu0 0
      %1562 = vmatprep.mubr.bf16.mxu0 0
      %1563 = vmatmul.mubr.bf16.gmra.mrb[0].mxu0 %v1519
      %v1564 = vpop.f32.mrb[0].mxu0
      %v1565 = vadd.f32 0.0, %v1564
      %v1566 = vpop.f32.mrb[0].mxu0
      %v1567 = vadd.f32 0.0, %v1566
      %v1568 = vpop.f32.mrb[0].mxu0
      %v1569 = vpop.f32.mrb[0].mxu0
      %1570 = vdwg.mxu0
      %1571 = vmatprep.subr.bf16.mxu0 0
      %1572 = vmatpush1.bf16.msra.mxu0 %v1528
      %1573 = vmatprep.subr.bf16.mxu0 0
      %1574 = vmatpush1.bf16.msra.mxu0 0
      %1575 = vmatprep.subr.bf16.mxu0 0
      %1576 = vmatpush1.bf16.msra.mxu0 0
      %1577 = vmatprep.subr.bf16.mxu0 0
      %1578 = vmatpush1.bf16.msra.mxu0 0
      %1579 = vmatprep.subr.bf16.mxu0 0
      %1580 = vmatpush1.bf16.msra.mxu0 0
      %1581 = vmatprep.subr.bf16.mxu0 0
      %1582 = vmatpush1.bf16.msra.mxu0 0
      %1583 = vmatprep.subr.bf16.mxu0 0
      %1584 = vmatpush1.bf16.msra.mxu0 0
      %1585 = vmatprep.subr.bf16.mxu0 0
      %1586 = vmatpush1.bf16.msra.mxu0 0
      %1587 = vmatprep.subr.bf16.mxu0 0
      %1588 = vmatpush1.bf16.msra.mxu0 0
      %1589 = vmatprep.subr.bf16.mxu0 0
      %1590 = vmatpush1.bf16.msra.mxu0 0
      %1591 = vmatprep.subr.bf16.mxu0 0
      %1592 = vmatpush1.bf16.msra.mxu0 0
      %1593 = vmatprep.subr.bf16.mxu0 0
      %1594 = vmatpush1.bf16.msra.mxu0 0
      %1595 = vmatprep.subr.bf16.mxu0 0
      %1596 = vmatpush1.bf16.msra.mxu0 0
      %1597 = vmatprep.subr.bf16.mxu0 0
      %1598 = vmatpush1.bf16.msra.mxu0 0
      %1599 = vmatprep.subr.bf16.mxu0 0
      %1600 = vmatpush1.bf16.msra.mxu0 0
      %1601 = vmatprep.subr.bf16.mxu0 0
      %1602 = vmatpush1.bf16.msra.mxu0 0
      %1603 = vmatprep.mubr.bf16.mxu0 0
      %1604 = vmatmul.mubr.bf16.gmra.mrb[0].mxu0 %v1519
      %v1605 = vpop.f32.mrb[0].mxu0
      %v1606 = vadd.f32 0.0, %v1605
      %v1607 = vpop.f32.mrb[0].mxu0
      %v1608 = vpop.f32.mrb[0].mxu0
      %v1609 = vpop.f32.mrb[0].mxu0
      %1610 = vdwg.mxu0
      %v1613 = vunpack.c.l.b16 %v1505
      %v1614 = vunpack.c.h.b16 %v1505
      %v1615 = vunpack.c.l.b16 %v1506
      %v1616 = vpack.c.b16 %v1613, %v1613
      %v1617 = vpack.c.b16 %v1614, %v1614
      %v1618 = vpack.c.b16 %v1615, %v1615
      %v1620 = vsel %vm937, %v1504, 0
      %v1623 = vsel %vm941, %v1616, 0
      %v1626 = vsel %vm941, %v1617, 0
      %v1629 = vsel %vm941, %v1618, 0
      %1631 = vmatprep.subr.bf16.mxu0 %v1626
      %1632 = vmatpush1.bf16.msra.mxu0 %v1623
      %1633 = vmatprep.subr.bf16.mxu0 0
      %1634 = vmatpush1.bf16.msra.mxu0 0
      %1635 = vmatprep.subr.bf16.mxu0 0
      %1636 = vmatpush1.bf16.msra.mxu0 0
      %1637 = vmatprep.subr.bf16.mxu0 0
      %1638 = vmatpush1.bf16.msra.mxu0 0
      %1639 = vmatprep.subr.bf16.mxu0 0
      %1640 = vmatpush1.bf16.msra.mxu0 0
      %1641 = vmatprep.subr.bf16.mxu0 0
      %1642 = vmatpush1.bf16.msra.mxu0 0
      %1643 = vmatprep.subr.bf16.mxu0 0
      %1644 = vmatpush1.bf16.msra.mxu0 0
      %1645 = vmatprep.subr.bf16.mxu0 0
      %1646 = vmatpush1.bf16.msra.mxu0 0
      %1647 = vmatprep.subr.bf16.mxu0 0
      %1648 = vmatpush1.bf16.msra.mxu0 0
      %1649 = vmatprep.subr.bf16.mxu0 0
      %1650 = vmatpush1.bf16.msra.mxu0 0
      %1651 = vmatprep.subr.bf16.mxu0 0
      %1652 = vmatpush1.bf16.msra.mxu0 0
      %1653 = vmatprep.subr.bf16.mxu0 0
      %1654 = vmatpush1.bf16.msra.mxu0 0
      %1655 = vmatprep.subr.bf16.mxu0 0
      %1656 = vmatpush1.bf16.msra.mxu0 0
      %1657 = vmatprep.subr.bf16.mxu0 0
      %1658 = vmatpush1.bf16.msra.mxu0 0
      %1659 = vmatprep.subr.bf16.mxu0 0
      %1660 = vmatpush1.bf16.msra.mxu0 0
      %1661 = vmatprep.subr.bf16.mxu0 0
      %1662 = vmatpush1.bf16.msra.mxu0 0
      %1663 = vmatprep.mubr.bf16.mxu0 0
      %1664 = vmatmul.mubr.bf16.gmra.mrb[0].mxu0 %v1620
      %v1665 = vpop.f32.mrb[0].mxu0
      %v1666 = vadd.f32 %v1565, %v1665
      %v1667 = vpop.f32.mrb[0].mxu0
      %v1668 = vadd.f32 %v1567, %v1667
      %v1669 = vpop.f32.mrb[0].mxu0
      %v1670 = vpop.f32.mrb[0].mxu0
      %1671 = vdwg.mxu0
      %1672 = vmatprep.subr.bf16.mxu0 0
      %1673 = vmatpush1.bf16.msra.mxu0 %v1629
      %1674 = vmatprep.subr.bf16.mxu0 0
      %1675 = vmatpush1.bf16.msra.mxu0 0
      %1676 = vmatprep.subr.bf16.mxu0 0
      %1677 = vmatpush1.bf16.msra.mxu0 0
      %1678 = vmatprep.subr.bf16.mxu0 0
      %1679 = vmatpush1.bf16.msra.mxu0 0
      %1680 = vmatprep.subr.bf16.mxu0 0
      %1681 = vmatpush1.bf16.msra.mxu0 0
      %1682 = vmatprep.subr.bf16.mxu0 0
      %1683 = vmatpush1.bf16.msra.mxu0 0
      %1684 = vmatprep.subr.bf16.mxu0 0
      %1685 = vmatpush1.bf16.msra.mxu0 0
      %1686 = vmatprep.subr.bf16.mxu0 0
      %1687 = vmatpush1.bf16.msra.mxu0 0
      %1688 = vmatprep.subr.bf16.mxu0 0
      %1689 = vmatpush1.bf16.msra.mxu0 0
      %1690 = vmatprep.subr.bf16.mxu0 0
      %1691 = vmatpush1.bf16.msra.mxu0 0
      %1692 = vmatprep.subr.bf16.mxu0 0
      %1693 = vmatpush1.bf16.msra.mxu0 0
      %1694 = vmatprep.subr.bf16.mxu0 0
      %1695 = vmatpush1.bf16.msra.mxu0 0
      %1696 = vmatprep.subr.bf16.mxu0 0
      %1697 = vmatpush1.bf16.msra.mxu0 0
      %1698 = vmatprep.subr.bf16.mxu0 0
      %1699 = vmatpush1.bf16.msra.mxu0 0
      %1700 = vmatprep.subr.bf16.mxu0 0
      %1701 = vmatpush1.bf16.msra.mxu0 0
      %1702 = vmatprep.subr.bf16.mxu0 0
      %1703 = vmatpush1.bf16.msra.mxu0 0
      %1704 = vmatprep.mubr.bf16.mxu0 0
      %1705 = vmatmul.mubr.bf16.gmra.mrb[0].mxu0 %v1620
      %v1706 = vpop.f32.mrb[0].mxu0
      %v1707 = vadd.f32 %v1606, %v1706
      %v1708 = vpop.f32.mrb[0].mxu0
      %v1709 = vpop.f32.mrb[0].mxu0
      %v1710 = vpop.f32.mrb[0].mxu0
      %1711 = vdwg.mxu0
      %v1712 = vmul.f32 %v1666, %v1135
      %v1713 = vmul.f32 %v1668, %v1135
      %v1714 = vmul.f32 %v1707, %v1135
      %v1715 = vadd.f32 %v1712, %v1142
      %v1716 = vadd.f32 %v1713, %v1142
      %v1717 = vadd.f32 %v1714, %v1142
      %v1718 = vmax.f32 %v1715, 0.0
      %v1719 = vmax.f32 %v1716, 0.0
      %v1720 = vmax.f32 %v1717, 0.0
      %v1721 = vpack.c.bf16 %v1718, %v1718
      %v1722 = vpack.c.bf16 %v1719, %v1719
      %v1723 = vpack.c.bf16 %v1720, %v1720
      %v1727 = vunpack.c.l.b16 %v1721
      %v1728 = vunpack.c.l.b16 %v1722
      %v1729 = vunpack.c.l.b16 %v1723
      %v1730 = vpack.c.b16 %v1728, %v1727
      %v1731 = vpack.c.b16 %v1729, %v1729
      %1734 = vst [vmem:[#allocation3 + $0x18] sm:$0xff] %v1730
      %1735 = vst [vmem:[#allocation3 + $0x20] sm:$0xf] %v1731
      %v1736 = vld [vmem:[%s8] sm:$0xff]
      %v1737 = vld [vmem:[%s6] sm:$0xf]
      %v1738 = vld [vmem:[#allocation3] sm:$0xff]
      %v1739 = vld [vmem:[#allocation3 + $0x8] sm:$0xf]
      %v1742 = vunpack.c.l.b16 %v1738
      %v1743 = vunpack.c.h.b16 %v1738
      %v1744 = vunpack.c.l.b16 %v1739
      %v1745 = vpack.c.b16 %v1742, %v1742
      %v1746 = vpack.c.b16 %v1743, %v1743
      %v1747 = vpack.c.b16 %v1744, %v1744
      %v1749 = vsel %vm937, %v1737, 0
      %v1752 = vsel %vm941, %v1745, 0
      %v1755 = vsel %vm941, %v1746, 0
      %v1758 = vsel %vm941, %v1747, 0
      %1760 = vmatprep.subr.bf16.mxu0 %v1755
      %1761 = vmatpush1.bf16.msra.mxu0 %v1752
      %1762 = vmatprep.subr.bf16.mxu0 0
      %1763 = vmatpush1.bf16.msra.mxu0 0
      %1764 = vmatprep.subr.bf16.mxu0 0
      %1765 = vmatpush1.bf16.msra.mxu0 0
      %1766 = vmatprep.subr.bf16.mxu0 0
      %1767 = vmatpush1.bf16.msra.mxu0 0
      %1768 = vmatprep.subr.bf16.mxu0 0
      %1769 = vmatpush1.bf16.msra.mxu0 0
      %1770 = vmatprep.subr.bf16.mxu0 0
      %1771 = vmatpush1.bf16.msra.mxu0 0
      %1772 = vmatprep.subr.bf16.mxu0 0
      %1773 = vmatpush1.bf16.msra.mxu0 0
      %1774 = vmatprep.subr.bf16.mxu0 0
      %1775 = vmatpush1.bf16.msra.mxu0 0
      %1776 = vmatprep.subr.bf16.mxu0 0
      %1777 = vmatpush1.bf16.msra.mxu0 0
      %1778 = vmatprep.subr.bf16.mxu0 0
      %1779 = vmatpush1.bf16.msra.mxu0 0
      %1780 = vmatprep.subr.bf16.mxu0 0
      %1781 = vmatpush1.bf16.msra.mxu0 0
      %1782 = vmatprep.subr.bf16.mxu0 0
      %1783 = vmatpush1.bf16.msra.mxu0 0
      %1784 = vmatprep.subr.bf16.mxu0 0
      %1785 = vmatpush1.bf16.msra.mxu0 0
      %1786 = vmatprep.subr.bf16.mxu0 0
      %1787 = vmatpush1.bf16.msra.mxu0 0
      %1788 = vmatprep.subr.bf16.mxu0 0
      %1789 = vmatpush1.bf16.msra.mxu0 0
      %1790 = vmatprep.subr.bf16.mxu0 0
      %1791 = vmatpush1.bf16.msra.mxu0 0
      %1792 = vmatprep.mubr.bf16.mxu0 0
      %1793 = vmatmul.mubr.bf16.gmra.mrb[0].mxu0 %v1749
      %v1794 = vpop.f32.mrb[0].mxu0
      %v1795 = vadd.f32 0.0, %v1794
      %v1796 = vpop.f32.mrb[0].mxu0
      %v1797 = vadd.f32 0.0, %v1796
      %v1798 = vpop.f32.mrb[0].mxu0
      %v1799 = vpop.f32.mrb[0].mxu0
      %1800 = vdwg.mxu0
      %1801 = vmatprep.subr.bf16.mxu0 0
      %1802 = vmatpush1.bf16.msra.mxu0 %v1758
      %1803 = vmatprep.subr.bf16.mxu0 0
      %1804 = vmatpush1.bf16.msra.mxu0 0
      %1805 = vmatprep.subr.bf16.mxu0 0
      %1806 = vmatpush1.bf16.msra.mxu0 0
      %1807 = vmatprep.subr.bf16.mxu0 0
      %1808 = vmatpush1.bf16.msra.mxu0 0
      %1809 = vmatprep.subr.bf16.mxu0 0
      %1810 = vmatpush1.bf16.msra.mxu0 0
      %1811 = vmatprep.subr.bf16.mxu0 0
      %1812 = vmatpush1.bf16.msra.mxu0 0
      %1813 = vmatprep.subr.bf16.mxu0 0
      %1814 = vmatpush1.bf16.msra.mxu0 0
      %1815 = vmatprep.subr.bf16.mxu0 0
      %1816 = vmatpush1.bf16.msra.mxu0 0
      %1817 = vmatprep.subr.bf16.mxu0 0
      %1818 = vmatpush1.bf16.msra.mxu0 0
      %1819 = vmatprep.subr.bf16.mxu0 0
      %1820 = vmatpush1.bf16.msra.mxu0 0
      %1821 = vmatprep.subr.bf16.mxu0 0
      %1822 = vmatpush1.bf16.msra.mxu0 0
      %1823 = vmatprep.subr.bf16.mxu0 0
      %1824 = vmatpush1.bf16.msra.mxu0 0
      %1825 = vmatprep.subr.bf16.mxu0 0
      %1826 = vmatpush1.bf16.msra.mxu0 0
      %1827 = vmatprep.subr.bf16.mxu0 0
      %1828 = vmatpush1.bf16.msra.mxu0 0
      %1829 = vmatprep.subr.bf16.mxu0 0
      %1830 = vmatpush1.bf16.msra.mxu0 0
      %1831 = vmatprep.subr.bf16.mxu0 0
      %1832 = vmatpush1.bf16.msra.mxu0 0
      %1833 = vmatprep.mubr.bf16.mxu0 0
      %1834 = vmatmul.mubr.bf16.gmra.mrb[0].mxu0 %v1749
      %v1835 = vpop.f32.mrb[0].mxu0
      %v1836 = vadd.f32 0.0, %v1835
      %v1837 = vpop.f32.mrb[0].mxu0
      %v1838 = vpop.f32.mrb[0].mxu0
      %v1839 = vpop.f32.mrb[0].mxu0
      %1840 = vdwg.mxu0
      %1842 = vset.pattern.permute.xlu0 0
      %1843 = vperm.xlu0 %1842, %v1736
      %v1844 = vpop.permute.xlu0 %1843
      %v1846 = vmul.f32 %v1795, %v1844
      %v1847 = vmul.f32 %v1797, %v1844
      %v1848 = vmul.f32 %v1836, %v1844
      %1849 = vset.pattern.permute.xlu0 1
      %1850 = vperm.xlu0 %1849, %v1736
      %v1851 = vpop.permute.xlu0 %1850
      %v1853 = vadd.f32 %v1846, %v1851
      %v1854 = vadd.f32 %v1847, %v1851
      %v1855 = vadd.f32 %v1848, %v1851
      %v1856 = vmax.f32 %v1853, 0.0
      %v1857 = vmax.f32 %v1854, 0.0
      %v1858 = vmax.f32 %v1855, 0.0
      %v1859 = vpack.c.bf16 %v1856, %v1856
      %v1860 = vpack.c.bf16 %v1857, %v1857
      %v1861 = vpack.c.bf16 %v1858, %v1858
      %v1865 = vunpack.c.l.b16 %v1859
      %v1866 = vunpack.c.l.b16 %v1860
      %v1867 = vunpack.c.l.b16 %v1861
      %v1868 = vpack.c.b16 %v1866, %v1865
      %v1869 = vpack.c.b16 %v1867, %v1867
      %1872 = vst [vmem:[#allocation2] sm:$0xff] %v1868
      %1873 = vst [vmem:[#allocation2 + $0x8] sm:$0xf] %v1869
      %v1874 = vld [vmem:[%s6] sm:$0xf]
      %v1875 = vld [vmem:[#allocation3 + $0xc] sm:$0xff]
      %v1876 = vld [vmem:[#allocation3 + $0x14] sm:$0xf]
      %v1879 = vunpack.c.l.b16 %v1875
      %v1880 = vunpack.c.h.b16 %v1875
      %v1881 = vunpack.c.l.b16 %v1876
      %v1882 = vpack.c.b16 %v1879, %v1879
      %v1883 = vpack.c.b16 %v1880, %v1880
      %v1884 = vpack.c.b16 %v1881, %v1881
      %v1886 = vsel %vm937, %v1874, 0
      %v1889 = vsel %vm941, %v1882, 0
      %v1892 = vsel %vm941, %v1883, 0
      %v1895 = vsel %vm941, %v1884, 0
      %1897 = vmatprep.subr.bf16.mxu0 %v1892
      %1898 = vmatpush1.bf16.msra.mxu0 %v1889
      %1899 = vmatprep.subr.bf16.mxu0 0
      %1900 = vmatpush1.bf16.msra.mxu0 0
      %1901 = vmatprep.subr.bf16.mxu0 0
      %1902 = vmatpush1.bf16.msra.mxu0 0
      %1903 = vmatprep.subr.bf16.mxu0 0
      %1904 = vmatpush1.bf16.msra.mxu0 0
      %1905 = vmatprep.subr.bf16.mxu0 0
      %1906 = vmatpush1.bf16.msra.mxu0 0
      %1907 = vmatprep.subr.bf16.mxu0 0
      %1908 = vmatpush1.bf16.msra.mxu0 0
      %1909 = vmatprep.subr.bf16.mxu0 0
      %1910 = vmatpush1.bf16.msra.mxu0 0
      %1911 = vmatprep.subr.bf16.mxu0 0
      %1912 = vmatpush1.bf16.msra.mxu0 0
      %1913 = vmatprep.subr.bf16.mxu0 0
      %1914 = vmatpush1.bf16.msra.mxu0 0
      %1915 = vmatprep.subr.bf16.mxu0 0
      %1916 = vmatpush1.bf16.msra.mxu0 0
      %1917 = vmatprep.subr.bf16.mxu0 0
      %1918 = vmatpush1.bf16.msra.mxu0 0
      %1919 = vmatprep.subr.bf16.mxu0 0
      %1920 = vmatpush1.bf16.msra.mxu0 0
      %1921 = vmatprep.subr.bf16.mxu0 0
      %1922 = vmatpush1.bf16.msra.mxu0 0
      %1923 = vmatprep.subr.bf16.mxu0 0
      %1924 = vmatpush1.bf16.msra.mxu0 0
      %1925 = vmatprep.subr.bf16.mxu0 0
      %1926 = vmatpush1.bf16.msra.mxu0 0
      %1927 = vmatprep.subr.bf16.mxu0 0
      %1928 = vmatpush1.bf16.msra.mxu0 0
      %1929 = vmatprep.mubr.bf16.mxu0 0
      %1930 = vmatmul.mubr.bf16.gmra.mrb[0].mxu0 %v1886
      %v1931 = vpop.f32.mrb[0].mxu0
      %v1932 = vadd.f32 0.0, %v1931
      %v1933 = vpop.f32.mrb[0].mxu0
      %v1934 = vadd.f32 0.0, %v1933
      %v1935 = vpop.f32.mrb[0].mxu0
      %v1936 = vpop.f32.mrb[0].mxu0
      %1937 = vdwg.mxu0
      %1938 = vmatprep.subr.bf16.mxu0 0
      %1939 = vmatpush1.bf16.msra.mxu0 %v1895
      %1940 = vmatprep.subr.bf16.mxu0 0
      %1941 = vmatpush1.bf16.msra.mxu0 0
      %1942 = vmatprep.subr.bf16.mxu0 0
      %1943 = vmatpush1.bf16.msra.mxu0 0
      %1944 = vmatprep.subr.bf16.mxu0 0
      %1945 = vmatpush1.bf16.msra.mxu0 0
      %1946 = vmatprep.subr.bf16.mxu0 0
      %1947 = vmatpush1.bf16.msra.mxu0 0
      %1948 = vmatprep.subr.bf16.mxu0 0
      %1949 = vmatpush1.bf16.msra.mxu0 0
      %1950 = vmatprep.subr.bf16.mxu0 0
      %1951 = vmatpush1.bf16.msra.mxu0 0
      %1952 = vmatprep.subr.bf16.mxu0 0
      %1953 = vmatpush1.bf16.msra.mxu0 0
      %1954 = vmatprep.subr.bf16.mxu0 0
      %1955 = vmatpush1.bf16.msra.mxu0 0
      %1956 = vmatprep.subr.bf16.mxu0 0
      %1957 = vmatpush1.bf16.msra.mxu0 0
      %1958 = vmatprep.subr.bf16.mxu0 0
      %1959 = vmatpush1.bf16.msra.mxu0 0
      %1960 = vmatprep.subr.bf16.mxu0 0
      %1961 = vmatpush1.bf16.msra.mxu0 0
      %1962 = vmatprep.subr.bf16.mxu0 0
      %1963 = vmatpush1.bf16.msra.mxu0 0
      %1964 = vmatprep.subr.bf16.mxu0 0
      %1965 = vmatpush1.bf16.msra.mxu0 0
      %1966 = vmatprep.subr.bf16.mxu0 0
      %1967 = vmatpush1.bf16.msra.mxu0 0
      %1968 = vmatprep.subr.bf16.mxu0 0
      %1969 = vmatpush1.bf16.msra.mxu0 0
      %1970 = vmatprep.mubr.bf16.mxu0 0
      %1971 = vmatmul.mubr.bf16.gmra.mrb[0].mxu0 %v1886
      %v1972 = vpop.f32.mrb[0].mxu0
      %v1973 = vadd.f32 0.0, %v1972
      %v1974 = vpop.f32.mrb[0].mxu0
      %v1975 = vpop.f32.mrb[0].mxu0
      %v1976 = vpop.f32.mrb[0].mxu0
      %1977 = vdwg.mxu0
      %v1978 = vmul.f32 %v1932, %v1844
      %v1979 = vmul.f32 %v1934, %v1844
      %v1980 = vmul.f32 %v1973, %v1844
      %v1981 = vadd.f32 %v1978, %v1851
      %v1982 = vadd.f32 %v1979, %v1851
      %v1983 = vadd.f32 %v1980, %v1851
      %v1984 = vmax.f32 %v1981, 0.0
      %v1985 = vmax.f32 %v1982, 0.0
      %v1986 = vmax.f32 %v1983, 0.0
      %v1987 = vpack.c.bf16 %v1984, %v1984
      %v1988 = vpack.c.bf16 %v1985, %v1985
      %v1989 = vpack.c.bf16 %v1986, %v1986
      %v1993 = vunpack.c.l.b16 %v1987
      %v1994 = vunpack.c.l.b16 %v1988
      %v1995 = vunpack.c.l.b16 %v1989
      %v1996 = vpack.c.b16 %v1994, %v1993
      %v1997 = vpack.c.b16 %v1995, %v1995
      %2000 = vst [vmem:[#allocation2 + $0xc] sm:$0xff] %v1996
      %2001 = vst [vmem:[#allocation2 + $0x14] sm:$0xf] %v1997
      %v2002 = vld [vmem:[%s6] sm:$0xf]
      %v2003 = vld [vmem:[#allocation3 + $0x18] sm:$0xff]
      %v2004 = vld [vmem:[#allocation3 + $0x20] sm:$0xf]
      %v2007 = vunpack.c.l.b16 %v2003
      %v2008 = vunpack.c.h.b16 %v2003
      %v2009 = vunpack.c.l.b16 %v2004
      %v2010 = vpack.c.b16 %v2007, %v2007
      %v2011 = vpack.c.b16 %v2008, %v2008
      %v2012 = vpack.c.b16 %v2009, %v2009
      %v2014 = vsel %vm937, %v2002, 0
      %v2017 = vsel %vm941, %v2010, 0
      %v2020 = vsel %vm941, %v2011, 0
      %v2023 = vsel %vm941, %v2012, 0
      %2025 = vmatprep.subr.bf16.mxu0 %v2020
      %2026 = vmatpush1.bf16.msra.mxu0 %v2017
      %2027 = vmatprep.subr.bf16.mxu0 0
      %2028 = vmatpush1.bf16.msra.mxu0 0
      %2029 = vmatprep.subr.bf16.mxu0 0
      %2030 = vmatpush1.bf16.msra.mxu0 0
      %2031 = vmatprep.subr.bf16.mxu0 0
      %2032 = vmatpush1.bf16.msra.mxu0 0
      %2033 = vmatprep.subr.bf16.mxu0 0
      %2034 = vmatpush1.bf16.msra.mxu0 0
      %2035 = vmatprep.subr.bf16.mxu0 0
      %2036 = vmatpush1.bf16.msra.mxu0 0
      %2037 = vmatprep.subr.bf16.mxu0 0
      %2038 = vmatpush1.bf16.msra.mxu0 0
      %2039 = vmatprep.subr.bf16.mxu0 0
      %2040 = vmatpush1.bf16.msra.mxu0 0
      %2041 = vmatprep.subr.bf16.mxu0 0
      %2042 = vmatpush1.bf16.msra.mxu0 0
      %2043 = vmatprep.subr.bf16.mxu0 0
      %2044 = vmatpush1.bf16.msra.mxu0 0
      %2045 = vmatprep.subr.bf16.mxu0 0
      %2046 = vmatpush1.bf16.msra.mxu0 0
      %2047 = vmatprep.subr.bf16.mxu0 0
      %2048 = vmatpush1.bf16.msra.mxu0 0
      %2049 = vmatprep.subr.bf16.mxu0 0
      %2050 = vmatpush1.bf16.msra.mxu0 0
      %2051 = vmatprep.subr.bf16.mxu0 0
      %2052 = vmatpush1.bf16.msra.mxu0 0
      %2053 = vmatprep.subr.bf16.mxu0 0
      %2054 = vmatpush1.bf16.msra.mxu0 0
      %2055 = vmatprep.subr.bf16.mxu0 0
      %2056 = vmatpush1.bf16.msra.mxu0 0
      %2057 = vmatprep.mubr.bf16.mxu0 0
      %2058 = vmatmul.mubr.bf16.gmra.mrb[0].mxu0 %v2014
      %v2059 = vpop.f32.mrb[0].mxu0
      %v2060 = vadd.f32 0.0, %v2059
      %v2061 = vpop.f32.mrb[0].mxu0
      %v2062 = vadd.f32 0.0, %v2061
      %v2063 = vpop.f32.mrb[0].mxu0
      %v2064 = vpop.f32.mrb[0].mxu0
      %2065 = vdwg.mxu0
      %2066 = vmatprep.subr.bf16.mxu0 0
      %2067 = vmatpush1.bf16.msra.mxu0 %v2023
      %2068 = vmatprep.subr.bf16.mxu0 0
      %2069 = vmatpush1.bf16.msra.mxu0 0
      %2070 = vmatprep.subr.bf16.mxu0 0
      %2071 = vmatpush1.bf16.msra.mxu0 0
      %2072 = vmatprep.subr.bf16.mxu0 0
      %2073 = vmatpush1.bf16.msra.mxu0 0
      %2074 = vmatprep.subr.bf16.mxu0 0
      %2075 = vmatpush1.bf16.msra.mxu0 0
      %2076 = vmatprep.subr.bf16.mxu0 0
      %2077 = vmatpush1.bf16.msra.mxu0 0
      %2078 = vmatprep.subr.bf16.mxu0 0
      %2079 = vmatpush1.bf16.msra.mxu0 0
      %2080 = vmatprep.subr.bf16.mxu0 0
      %2081 = vmatpush1.bf16.msra.mxu0 0
      %2082 = vmatprep.subr.bf16.mxu0 0
      %2083 = vmatpush1.bf16.msra.mxu0 0
      %2084 = vmatprep.subr.bf16.mxu0 0
      %2085 = vmatpush1.bf16.msra.mxu0 0
      %2086 = vmatprep.subr.bf16.mxu0 0
      %2087 = vmatpush1.bf16.msra.mxu0 0
      %2088 = vmatprep.subr.bf16.mxu0 0
      %2089 = vmatpush1.bf16.msra.mxu0 0
      %2090 = vmatprep.subr.bf16.mxu0 0
      %2091 = vmatpush1.bf16.msra.mxu0 0
      %2092 = vmatprep.subr.bf16.mxu0 0
      %2093 = vmatpush1.bf16.msra.mxu0 0
      %2094 = vmatprep.subr.bf16.mxu0 0
      %2095 = vmatpush1.bf16.msra.mxu0 0
      %2096 = vmatprep.subr.bf16.mxu0 0
      %2097 = vmatpush1.bf16.msra.mxu0 0
      %2098 = vmatprep.mubr.bf16.mxu0 0
      %2099 = vmatmul.mubr.bf16.gmra.mrb[0].mxu0 %v2014
      %v2100 = vpop.f32.mrb[0].mxu0
      %v2101 = vadd.f32 0.0, %v2100
      %v2102 = vpop.f32.mrb[0].mxu0
      %v2103 = vpop.f32.mrb[0].mxu0
      %v2104 = vpop.f32.mrb[0].mxu0
      %2105 = vdwg.mxu0
      %v2106 = vmul.f32 %v2060, %v1844
      %v2107 = vmul.f32 %v2062, %v1844
      %v2108 = vmul.f32 %v2101, %v1844
      %v2109 = vadd.f32 %v2106, %v1851
      %v2110 = vadd.f32 %v2107, %v1851
      %v2111 = vadd.f32 %v2108, %v1851
      %v2112 = vmax.f32 %v2109, 0.0
      %v2113 = vmax.f32 %v2110, 0.0
      %v2114 = vmax.f32 %v2111, 0.0
      %v2115 = vpack.c.bf16 %v2112, %v2112
      %v2116 = vpack.c.bf16 %v2113, %v2113
      %v2117 = vpack.c.bf16 %v2114, %v2114
      %v2121 = vunpack.c.l.b16 %v2115
      %v2122 = vunpack.c.l.b16 %v2116
      %v2123 = vunpack.c.l.b16 %v2117
      %v2124 = vpack.c.b16 %v2122, %v2121
      %v2125 = vpack.c.b16 %v2123, %v2123
      %2128 = vst [vmem:[#allocation2 + $0x18] sm:$0xff] %v2124
      %2129 = vst [vmem:[#allocation2 + $0x20] sm:$0xf] %v2125
      %s2130 = scalar_lea.vmem %s7, 4
      %v2131 = vld [vmem:[%s2130] sm:$0xf]
      %v2132 = vld [vmem:[#allocation2] sm:$0xff]
      %v2133 = vld [vmem:[#allocation2 + $0x8] sm:$0xf]
      %s2134 = scalar_lea.vmem %s7, 8
      %v2135 = vld [vmem:[%s2134] sm:$0xf]
      %v2136 = vld [vmem:[#allocation2 + $0xc] sm:$0xff]
      %v2137 = vld [vmem:[#allocation2 + $0x14] sm:$0xf]
      %v2140 = vunpack.c.l.b16 %v2136
      %v2141 = vunpack.c.h.b16 %v2136
      %v2142 = vunpack.c.l.b16 %v2137
      %v2143 = vpack.c.b16 %v2140, %v2140
      %v2144 = vpack.c.b16 %v2141, %v2141
      %v2145 = vpack.c.b16 %v2142, %v2142
      %v2147 = vsel %vm937, %v2135, 0
      %v2150 = vsel %vm941, %v2143, 0
      %v2153 = vsel %vm941, %v2144, 0
      %v2156 = vsel %vm941, %v2145, 0
      %2158 = vmatprep.subr.bf16.mxu0 %v2153
      %2159 = vmatpush1.bf16.msra.mxu0 %v2150
      %2160 = vmatprep.subr.bf16.mxu0 0
      %2161 = vmatpush1.bf16.msra.mxu0 0
      %2162 = vmatprep.subr.bf16.mxu0 0
      %2163 = vmatpush1.bf16.msra.mxu0 0
      %2164 = vmatprep.subr.bf16.mxu0 0
      %2165 = vmatpush1.bf16.msra.mxu0 0
      %2166 = vmatprep.subr.bf16.mxu0 0
      %2167 = vmatpush1.bf16.msra.mxu0 0
      %2168 = vmatprep.subr.bf16.mxu0 0
      %2169 = vmatpush1.bf16.msra.mxu0 0
      %2170 = vmatprep.subr.bf16.mxu0 0
      %2171 = vmatpush1.bf16.msra.mxu0 0
      %2172 = vmatprep.subr.bf16.mxu0 0
      %2173 = vmatpush1.bf16.msra.mxu0 0
      %2174 = vmatprep.subr.bf16.mxu0 0
      %2175 = vmatpush1.bf16.msra.mxu0 0
      %2176 = vmatprep.subr.bf16.mxu0 0
      %2177 = vmatpush1.bf16.msra.mxu0 0
      %2178 = vmatprep.subr.bf16.mxu0 0
      %2179 = vmatpush1.bf16.msra.mxu0 0
      %2180 = vmatprep.subr.bf16.mxu0 0
      %2181 = vmatpush1.bf16.msra.mxu0 0
      %2182 = vmatprep.subr.bf16.mxu0 0
      %2183 = vmatpush1.bf16.msra.mxu0 0
      %2184 = vmatprep.subr.bf16.mxu0 0
      %2185 = vmatpush1.bf16.msra.mxu0 0
      %2186 = vmatprep.subr.bf16.mxu0 0
      %2187 = vmatpush1.bf16.msra.mxu0 0
      %2188 = vmatprep.subr.bf16.mxu0 0
      %2189 = vmatpush1.bf16.msra.mxu0 0
      %2190 = vmatprep.mubr.bf16.mxu0 0
      %2191 = vmatmul.mubr.bf16.gmra.mrb[0].mxu0 %v2147
      %v2192 = vpop.f32.mrb[0].mxu0
      %v2193 = vadd.f32 0.0, %v2192
      %v2194 = vpop.f32.mrb[0].mxu0
      %v2195 = vadd.f32 0.0, %v2194
      %v2196 = vpop.f32.mrb[0].mxu0
      %v2197 = vpop.f32.mrb[0].mxu0
      %2198 = vdwg.mxu0
      %2199 = vmatprep.subr.bf16.mxu0 0
      %2200 = vmatpush1.bf16.msra.mxu0 %v2156
      %2201 = vmatprep.subr.bf16.mxu0 0
      %2202 = vmatpush1.bf16.msra.mxu0 0
      %2203 = vmatprep.subr.bf16.mxu0 0
      %2204 = vmatpush1.bf16.msra.mxu0 0
      %2205 = vmatprep.subr.bf16.mxu0 0
      %2206 = vmatpush1.bf16.msra.mxu0 0
      %2207 = vmatprep.subr.bf16.mxu0 0
      %2208 = vmatpush1.bf16.msra.mxu0 0
      %2209 = vmatprep.subr.bf16.mxu0 0
      %2210 = vmatpush1.bf16.msra.mxu0 0
      %2211 = vmatprep.subr.bf16.mxu0 0
      %2212 = vmatpush1.bf16.msra.mxu0 0
      %2213 = vmatprep.subr.bf16.mxu0 0
      %2214 = vmatpush1.bf16.msra.mxu0 0
      %2215 = vmatprep.subr.bf16.mxu0 0
      %2216 = vmatpush1.bf16.msra.mxu0 0
      %2217 = vmatprep.subr.bf16.mxu0 0
      %2218 = vmatpush1.bf16.msra.mxu0 0
      %2219 = vmatprep.subr.bf16.mxu0 0
      %2220 = vmatpush1.bf16.msra.mxu0 0
      %2221 = vmatprep.subr.bf16.mxu0 0
      %2222 = vmatpush1.bf16.msra.mxu0 0
      %2223 = vmatprep.subr.bf16.mxu0 0
      %2224 = vmatpush1.bf16.msra.mxu0 0
      %2225 = vmatprep.subr.bf16.mxu0 0
      %2226 = vmatpush1.bf16.msra.mxu0 0
      %2227 = vmatprep.subr.bf16.mxu0 0
      %2228 = vmatpush1.bf16.msra.mxu0 0
      %2229 = vmatprep.subr.bf16.mxu0 0
      %2230 = vmatpush1.bf16.msra.mxu0 0
      %2231 = vmatprep.mubr.bf16.mxu0 0
      %2232 = vmatmul.mubr.bf16.gmra.mrb[0].mxu0 %v2147
      %v2233 = vpop.f32.mrb[0].mxu0
      %v2234 = vadd.f32 0.0, %v2233
      %v2235 = vpop.f32.mrb[0].mxu0
      %v2236 = vpop.f32.mrb[0].mxu0
      %v2237 = vpop.f32.mrb[0].mxu0
      %2238 = vdwg.mxu0
      %v2241 = vunpack.c.l.b16 %v2132
      %v2242 = vunpack.c.h.b16 %v2132
      %v2243 = vunpack.c.l.b16 %v2133
      %v2244 = vpack.c.b16 %v2241, %v2241
      %v2245 = vpack.c.b16 %v2242, %v2242
      %v2246 = vpack.c.b16 %v2243, %v2243
      %v2248 = vsel %vm937, %v2131, 0
      %v2251 = vsel %vm941, %v2244, 0
      %v2254 = vsel %vm941, %v2245, 0
      %v2257 = vsel %vm941, %v2246, 0
      %2259 = vmatprep.subr.bf16.mxu0 %v2254
      %2260 = vmatpush1.bf16.msra.mxu0 %v2251
      %2261 = vmatprep.subr.bf16.mxu0 0
      %2262 = vmatpush1.bf16.msra.mxu0 0
      %2263 = vmatprep.subr.bf16.mxu0 0
      %2264 = vmatpush1.bf16.msra.mxu0 0
      %2265 = vmatprep.subr.bf16.mxu0 0
      %2266 = vmatpush1.bf16.msra.mxu0 0
      %2267 = vmatprep.subr.bf16.mxu0 0
      %2268 = vmatpush1.bf16.msra.mxu0 0
      %2269 = vmatprep.subr.bf16.mxu0 0
      %2270 = vmatpush1.bf16.msra.mxu0 0
      %2271 = vmatprep.subr.bf16.mxu0 0
      %2272 = vmatpush1.bf16.msra.mxu0 0
      %2273 = vmatprep.subr.bf16.mxu0 0
      %2274 = vmatpush1.bf16.msra.mxu0 0
      %2275 = vmatprep.subr.bf16.mxu0 0
      %2276 = vmatpush1.bf16.msra.mxu0 0
      %2277 = vmatprep.subr.bf16.mxu0 0
      %2278 = vmatpush1.bf16.msra.mxu0 0
      %2279 = vmatprep.subr.bf16.mxu0 0
      %2280 = vmatpush1.bf16.msra.mxu0 0
      %2281 = vmatprep.subr.bf16.mxu0 0
      %2282 = vmatpush1.bf16.msra.mxu0 0
      %2283 = vmatprep.subr.bf16.mxu0 0
      %2284 = vmatpush1.bf16.msra.mxu0 0
      %2285 = vmatprep.subr.bf16.mxu0 0
      %2286 = vmatpush1.bf16.msra.mxu0 0
      %2287 = vmatprep.subr.bf16.mxu0 0
      %2288 = vmatpush1.bf16.msra.mxu0 0
      %2289 = vmatprep.subr.bf16.mxu0 0
      %2290 = vmatpush1.bf16.msra.mxu0 0
      %2291 = vmatprep.mubr.bf16.mxu0 0
      %2292 = vmatmul.mubr.bf16.gmra.mrb[0].mxu0 %v2248
      %v2293 = vpop.f32.mrb[0].mxu0
      %v2294 = vadd.f32 %v2193, %v2293
      %v2295 = vpop.f32.mrb[0].mxu0
      %v2296 = vadd.f32 %v2195, %v2295
      %v2297 = vpop.f32.mrb[0].mxu0
      %v2298 = vpop.f32.mrb[0].mxu0
      %2299 = vdwg.mxu0
      %2300 = vmatprep.subr.bf16.mxu0 0
      %2301 = vmatpush1.bf16.msra.mxu0 %v2257
      %2302 = vmatprep.subr.bf16.mxu0 0
      %2303 = vmatpush1.bf16.msra.mxu0 0
      %2304 = vmatprep.subr.bf16.mxu0 0
      %2305 = vmatpush1.bf16.msra.mxu0 0
      %2306 = vmatprep.subr.bf16.mxu0 0
      %2307 = vmatpush1.bf16.msra.mxu0 0
      %2308 = vmatprep.subr.bf16.mxu0 0
      %2309 = vmatpush1.bf16.msra.mxu0 0
      %2310 = vmatprep.subr.bf16.mxu0 0
      %2311 = vmatpush1.bf16.msra.mxu0 0
      %2312 = vmatprep.subr.bf16.mxu0 0
      %2313 = vmatpush1.bf16.msra.mxu0 0
      %2314 = vmatprep.subr.bf16.mxu0 0
      %2315 = vmatpush1.bf16.msra.mxu0 0
      %2316 = vmatprep.subr.bf16.mxu0 0
      %2317 = vmatpush1.bf16.msra.mxu0 0
      %2318 = vmatprep.subr.bf16.mxu0 0
      %2319 = vmatpush1.bf16.msra.mxu0 0
      %2320 = vmatprep.subr.bf16.mxu0 0
      %2321 = vmatpush1.bf16.msra.mxu0 0
      %2322 = vmatprep.subr.bf16.mxu0 0
      %2323 = vmatpush1.bf16.msra.mxu0 0
      %2324 = vmatprep.subr.bf16.mxu0 0
      %2325 = vmatpush1.bf16.msra.mxu0 0
      %2326 = vmatprep.subr.bf16.mxu0 0
      %2327 = vmatpush1.bf16.msra.mxu0 0
      %2328 = vmatprep.subr.bf16.mxu0 0
      %2329 = vmatpush1.bf16.msra.mxu0 0
      %2330 = vmatprep.subr.bf16.mxu0 0
      %2331 = vmatpush1.bf16.msra.mxu0 0
      %2332 = vmatprep.mubr.bf16.mxu0 0
      %2333 = vmatmul.mubr.bf16.gmra.mrb[0].mxu0 %v2248
      %v2334 = vpop.f32.mrb[0].mxu0
      %v2335 = vadd.f32 %v2234, %v2334
      %v2336 = vpop.f32.mrb[0].mxu0
      %v2337 = vpop.f32.mrb[0].mxu0
      %v2338 = vpop.f32.mrb[0].mxu0
      %2339 = vdwg.mxu0
      %2340 = vset.pattern.permute.xlu0 2
      %2341 = vperm.xlu0 %2340, %v1736
      %v2342 = vpop.permute.xlu0 %2341
      %v2344 = vmul.f32 %v2294, %v2342
      %v2345 = vmul.f32 %v2296, %v2342
      %v2346 = vmul.f32 %v2335, %v2342
      %2347 = vset.pattern.permute.xlu0 3
      %2348 = vperm.xlu0 %2347, %v1736
      %v2349 = vpop.permute.xlu0 %2348
      %v2351 = vadd.f32 %v2344, %v2349
      %v2352 = vadd.f32 %v2345, %v2349
      %v2353 = vadd.f32 %v2346, %v2349
      %v2354 = vmax.f32 %v2351, 0.0
      %v2355 = vmax.f32 %v2352, 0.0
      %v2356 = vmax.f32 %v2353, 0.0
      %v2357 = vmax.f32 %v2354, %v2355
      %v2358 = vmax.f32 %v2357, %v2356
      %2359 = vst [vmem:[%s352] sm:$0xff] %v2358
      %v2360 = vld [vmem:[%s7] sm:$0xf]
      %v2361 = vld [vmem:[#allocation2] sm:$0xff]
      %v2362 = vld [vmem:[#allocation2 + $0x8] sm:$0xf]
      %v2363 = vld [vmem:[%s2130] sm:$0xf]
      %v2364 = vld [vmem:[#allocation2 + $0xc] sm:$0xff]
      %v2365 = vld [vmem:[#allocation2 + $0x14] sm:$0xf]
      %v2368 = vunpack.c.l.b16 %v2364
      %v2369 = vunpack.c.h.b16 %v2364
      %v2370 = vunpack.c.l.b16 %v2365
      %v2371 = vpack.c.b16 %v2368, %v2368
      %v2372 = vpack.c.b16 %v2369, %v2369
      %v2373 = vpack.c.b16 %v2370, %v2370
      %v2375 = vsel %vm937, %v2363, 0
      %v2378 = vsel %vm941, %v2371, 0
      %v2381 = vsel %vm941, %v2372, 0
      %v2384 = vsel %vm941, %v2373, 0
      %2386 = vmatprep.subr.bf16.mxu0 %v2381
      %2387 = vmatpush1.bf16.msra.mxu0 %v2378
      %2388 = vmatprep.subr.bf16.mxu0 0
      %2389 = vmatpush1.bf16.msra.mxu0 0
      %2390 = vmatprep.subr.bf16.mxu0 0
      %2391 = vmatpush1.bf16.msra.mxu0 0
      %2392 = vmatprep.subr.bf16.mxu0 0
      %2393 = vmatpush1.bf16.msra.mxu0 0
      %2394 = vmatprep.subr.bf16.mxu0 0
      %2395 = vmatpush1.bf16.msra.mxu0 0
      %2396 = vmatprep.subr.bf16.mxu0 0
      %2397 = vmatpush1.bf16.msra.mxu0 0
      %2398 = vmatprep.subr.bf16.mxu0 0
      %2399 = vmatpush1.bf16.msra.mxu0 0
      %2400 = vmatprep.subr.bf16.mxu0 0
      %2401 = vmatpush1.bf16.msra.mxu0 0
      %2402 = vmatprep.subr.bf16.mxu0 0
      %2403 = vmatpush1.bf16.msra.mxu0 0
      %2404 = vmatprep.subr.bf16.mxu0 0
      %2405 = vmatpush1.bf16.msra.mxu0 0
      %2406 = vmatprep.subr.bf16.mxu0 0
      %2407 = vmatpush1.bf16.msra.mxu0 0
      %2408 = vmatprep.subr.bf16.mxu0 0
      %2409 = vmatpush1.bf16.msra.mxu0 0
      %2410 = vmatprep.subr.bf16.mxu0 0
      %2411 = vmatpush1.bf16.msra.mxu0 0
      %2412 = vmatprep.subr.bf16.mxu0 0
      %2413 = vmatpush1.bf16.msra.mxu0 0
      %2414 = vmatprep.subr.bf16.mxu0 0
      %2415 = vmatpush1.bf16.msra.mxu0 0
      %2416 = vmatprep.subr.bf16.mxu0 0
      %2417 = vmatpush1.bf16.msra.mxu0 0
      %2418 = vmatprep.mubr.bf16.mxu0 0
      %2419 = vmatmul.mubr.bf16.gmra.mrb[0].mxu0 %v2375
      %v2420 = vpop.f32.mrb[0].mxu0
      %v2421 = vadd.f32 0.0, %v2420
      %v2422 = vpop.f32.mrb[0].mxu0
      %v2423 = vadd.f32 0.0, %v2422
      %v2424 = vpop.f32.mrb[0].mxu0
      %v2425 = vpop.f32.mrb[0].mxu0
      %2426 = vdwg.mxu0
      %2427 = vmatprep.subr.bf16.mxu0 0
      %2428 = vmatpush1.bf16.msra.mxu0 %v2384
      %2429 = vmatprep.subr.bf16.mxu0 0
      %2430 = vmatpush1.bf16.msra.mxu0 0
      %2431 = vmatprep.subr.bf16.mxu0 0
      %2432 = vmatpush1.bf16.msra.mxu0 0
      %2433 = vmatprep.subr.bf16.mxu0 0
      %2434 = vmatpush1.bf16.msra.mxu0 0
      %2435 = vmatprep.subr.bf16.mxu0 0
      %2436 = vmatpush1.bf16.msra.mxu0 0
      %2437 = vmatprep.subr.bf16.mxu0 0
      %2438 = vmatpush1.bf16.msra.mxu0 0
      %2439 = vmatprep.subr.bf16.mxu0 0
      %2440 = vmatpush1.bf16.msra.mxu0 0
      %2441 = vmatprep.subr.bf16.mxu0 0
      %2442 = vmatpush1.bf16.msra.mxu0 0
      %2443 = vmatprep.subr.bf16.mxu0 0
      %2444 = vmatpush1.bf16.msra.mxu0 0
      %2445 = vmatprep.subr.bf16.mxu0 0
      %2446 = vmatpush1.bf16.msra.mxu0 0
      %2447 = vmatprep.subr.bf16.mxu0 0
      %2448 = vmatpush1.bf16.msra.mxu0 0
      %2449 = vmatprep.subr.bf16.mxu0 0
      %2450 = vmatpush1.bf16.msra.mxu0 0
      %2451 = vmatprep.subr.bf16.mxu0 0
      %2452 = vmatpush1.bf16.msra.mxu0 0
      %2453 = vmatprep.subr.bf16.mxu0 0
      %2454 = vmatpush1.bf16.msra.mxu0 0
      %2455 = vmatprep.subr.bf16.mxu0 0
      %2456 = vmatpush1.bf16.msra.mxu0 0
      %2457 = vmatprep.subr.bf16.mxu0 0
      %2458 = vmatpush1.bf16.msra.mxu0 0
      %2459 = vmatprep.mubr.bf16.mxu0 0
      %2460 = vmatmul.mubr.bf16.gmra.mrb[0].mxu0 %v2375
      %v2461 = vpop.f32.mrb[0].mxu0
      %v2462 = vadd.f32 0.0, %v2461
      %v2463 = vpop.f32.mrb[0].mxu0
      %v2464 = vpop.f32.mrb[0].mxu0
      %v2465 = vpop.f32.mrb[0].mxu0
      %2466 = vdwg.mxu0
      %v2469 = vunpack.c.l.b16 %v2361
      %v2470 = vunpack.c.h.b16 %v2361
      %v2471 = vunpack.c.l.b16 %v2362
      %v2472 = vpack.c.b16 %v2469, %v2469
      %v2473 = vpack.c.b16 %v2470, %v2470
      %v2474 = vpack.c.b16 %v2471, %v2471
      %v2476 = vsel %vm937, %v2360, 0
      %v2479 = vsel %vm941, %v2472, 0
      %v2482 = vsel %vm941, %v2473, 0
      %v2485 = vsel %vm941, %v2474, 0
      %2487 = vmatprep.subr.bf16.mxu0 %v2482
      %2488 = vmatpush1.bf16.msra.mxu0 %v2479
      %2489 = vmatprep.subr.bf16.mxu0 0
      %2490 = vmatpush1.bf16.msra.mxu0 0
      %2491 = vmatprep.subr.bf16.mxu0 0
      %2492 = vmatpush1.bf16.msra.mxu0 0
      %2493 = vmatprep.subr.bf16.mxu0 0
      %2494 = vmatpush1.bf16.msra.mxu0 0
      %2495 = vmatprep.subr.bf16.mxu0 0
      %2496 = vmatpush1.bf16.msra.mxu0 0
      %2497 = vmatprep.subr.bf16.mxu0 0
      %2498 = vmatpush1.bf16.msra.mxu0 0
      %2499 = vmatprep.subr.bf16.mxu0 0
      %2500 = vmatpush1.bf16.msra.mxu0 0
      %2501 = vmatprep.subr.bf16.mxu0 0
      %2502 = vmatpush1.bf16.msra.mxu0 0
      %2503 = vmatprep.subr.bf16.mxu0 0
      %2504 = vmatpush1.bf16.msra.mxu0 0
      %2505 = vmatprep.subr.bf16.mxu0 0
      %2506 = vmatpush1.bf16.msra.mxu0 0
      %2507 = vmatprep.subr.bf16.mxu0 0
      %2508 = vmatpush1.bf16.msra.mxu0 0
      %2509 = vmatprep.subr.bf16.mxu0 0
      %2510 = vmatpush1.bf16.msra.mxu0 0
      %2511 = vmatprep.subr.bf16.mxu0 0
      %2512 = vmatpush1.bf16.msra.mxu0 0
      %2513 = vmatprep.subr.bf16.mxu0 0
      %2514 = vmatpush1.bf16.msra.mxu0 0
      %2515 = vmatprep.subr.bf16.mxu0 0
      %2516 = vmatpush1.bf16.msra.mxu0 0
      %2517 = vmatprep.subr.bf16.mxu0 0
      %2518 = vmatpush1.bf16.msra.mxu0 0
      %2519 = vmatprep.mubr.bf16.mxu0 0
      %2520 = vmatmul.mubr.bf16.gmra.mrb[0].mxu0 %v2476
      %v2521 = vpop.f32.mrb[0].mxu0
      %v2522 = vadd.f32 %v2421, %v2521
      %v2523 = vpop.f32.mrb[0].mxu0
      %v2524 = vadd.f32 %v2423, %v2523
      %v2525 = vpop.f32.mrb[0].mxu0
      %v2526 = vpop.f32.mrb[0].mxu0
      %2527 = vdwg.mxu0
      %2528 = vmatprep.subr.bf16.mxu0 0
      %2529 = vmatpush1.bf16.msra.mxu0 %v2485
      %2530 = vmatprep.subr.bf16.mxu0 0
      %2531 = vmatpush1.bf16.msra.mxu0 0
      %2532 = vmatprep.subr.bf16.mxu0 0
      %2533 = vmatpush1.bf16.msra.mxu0 0
      %2534 = vmatprep.subr.bf16.mxu0 0
      %2535 = vmatpush1.bf16.msra.mxu0 0
      %2536 = vmatprep.subr.bf16.mxu0 0
      %2537 = vmatpush1.bf16.msra.mxu0 0
      %2538 = vmatprep.subr.bf16.mxu0 0
      %2539 = vmatpush1.bf16.msra.mxu0 0
      %2540 = vmatprep.subr.bf16.mxu0 0
      %2541 = vmatpush1.bf16.msra.mxu0 0
      %2542 = vmatprep.subr.bf16.mxu0 0
      %2543 = vmatpush1.bf16.msra.mxu0 0
      %2544 = vmatprep.subr.bf16.mxu0 0
      %2545 = vmatpush1.bf16.msra.mxu0 0
      %2546 = vmatprep.subr.bf16.mxu0 0
      %2547 = vmatpush1.bf16.msra.mxu0 0
      %2548 = vmatprep.subr.bf16.mxu0 0
      %2549 = vmatpush1.bf16.msra.mxu0 0
      %2550 = vmatprep.subr.bf16.mxu0 0
      %2551 = vmatpush1.bf16.msra.mxu0 0
      %2552 = vmatprep.subr.bf16.mxu0 0
      %2553 = vmatpush1.bf16.msra.mxu0 0
      %2554 = vmatprep.subr.bf16.mxu0 0
      %2555 = vmatpush1.bf16.msra.mxu0 0
      %2556 = vmatprep.subr.bf16.mxu0 0
      %2557 = vmatpush1.bf16.msra.mxu0 0
      %2558 = vmatprep.subr.bf16.mxu0 0
      %2559 = vmatpush1.bf16.msra.mxu0 0
      %2560 = vmatprep.mubr.bf16.mxu0 0
      %2561 = vmatmul.mubr.bf16.gmra.mrb[0].mxu0 %v2476
      %v2562 = vpop.f32.mrb[0].mxu0
      %v2563 = vadd.f32 %v2462, %v2562
      %v2564 = vpop.f32.mrb[0].mxu0
      %v2565 = vpop.f32.mrb[0].mxu0
      %v2566 = vpop.f32.mrb[0].mxu0
      %2567 = vdwg.mxu0
      %v2568 = vld [vmem:[%s2134] sm:$0xf]
      %v2569 = vld [vmem:[#allocation2 + $0x18] sm:$0xff]
      %v2570 = vld [vmem:[#allocation2 + $0x20] sm:$0xf]
      %v2573 = vunpack.c.l.b16 %v2569
      %v2574 = vunpack.c.h.b16 %v2569
      %v2575 = vunpack.c.l.b16 %v2570
      %v2576 = vpack.c.b16 %v2573, %v2573
      %v2577 = vpack.c.b16 %v2574, %v2574
      %v2578 = vpack.c.b16 %v2575, %v2575
      %v2580 = vsel %vm937, %v2568, 0
      %v2583 = vsel %vm941, %v2576, 0
      %v2586 = vsel %vm941, %v2577, 0
      %v2589 = vsel %vm941, %v2578, 0
      %2591 = vmatprep.subr.bf16.mxu0 %v2586
      %2592 = vmatpush1.bf16.msra.mxu0 %v2583
      %2593 = vmatprep.subr.bf16.mxu0 0
      %2594 = vmatpush1.bf16.msra.mxu0 0
      %2595 = vmatprep.subr.bf16.mxu0 0
      %2596 = vmatpush1.bf16.msra.mxu0 0
      %2597 = vmatprep.subr.bf16.mxu0 0
      %2598 = vmatpush1.bf16.msra.mxu0 0
      %2599 = vmatprep.subr.bf16.mxu0 0
      %2600 = vmatpush1.bf16.msra.mxu0 0
      %2601 = vmatprep.subr.bf16.mxu0 0
      %2602 = vmatpush1.bf16.msra.mxu0 0
      %2603 = vmatprep.subr.bf16.mxu0 0
      %2604 = vmatpush1.bf16.msra.mxu0 0
      %2605 = vmatprep.subr.bf16.mxu0 0
      %2606 = vmatpush1.bf16.msra.mxu0 0
      %2607 = vmatprep.subr.bf16.mxu0 0
      %2608 = vmatpush1.bf16.msra.mxu0 0
      %2609 = vmatprep.subr.bf16.mxu0 0
      %2610 = vmatpush1.bf16.msra.mxu0 0
      %2611 = vmatprep.subr.bf16.mxu0 0
      %2612 = vmatpush1.bf16.msra.mxu0 0
      %2613 = vmatprep.subr.bf16.mxu0 0
      %2614 = vmatpush1.bf16.msra.mxu0 0
      %2615 = vmatprep.subr.bf16.mxu0 0
      %2616 = vmatpush1.bf16.msra.mxu0 0
      %2617 = vmatprep.subr.bf16.mxu0 0
      %2618 = vmatpush1.bf16.msra.mxu0 0
      %2619 = vmatprep.subr.bf16.mxu0 0
      %2620 = vmatpush1.bf16.msra.mxu0 0
      %2621 = vmatprep.subr.bf16.mxu0 0
      %2622 = vmatpush1.bf16.msra.mxu0 0
      %2623 = vmatprep.mubr.bf16.mxu0 0
      %2624 = vmatmul.mubr.bf16.gmra.mrb[0].mxu0 %v2580
      %v2625 = vpop.f32.mrb[0].mxu0
      %v2626 = vadd.f32 0.0, %v2625
      %v2627 = vpop.f32.mrb[0].mxu0
      %v2628 = vadd.f32 0.0, %v2627
      %v2629 = vpop.f32.mrb[0].mxu0
      %v2630 = vpop.f32.mrb[0].mxu0
      %2631 = vdwg.mxu0
      %2632 = vmatprep.subr.bf16.mxu0 0
      %2633 = vmatpush1.bf16.msra.mxu0 %v2589
      %2634 = vmatprep.subr.bf16.mxu0 0
      %2635 = vmatpush1.bf16.msra.mxu0 0
      %2636 = vmatprep.subr.bf16.mxu0 0
      %2637 = vmatpush1.bf16.msra.mxu0 0
      %2638 = vmatprep.subr.bf16.mxu0 0
      %2639 = vmatpush1.bf16.msra.mxu0 0
      %2640 = vmatprep.subr.bf16.mxu0 0
      %2641 = vmatpush1.bf16.msra.mxu0 0
      %2642 = vmatprep.subr.bf16.mxu0 0
      %2643 = vmatpush1.bf16.msra.mxu0 0
      %2644 = vmatprep.subr.bf16.mxu0 0
      %2645 = vmatpush1.bf16.msra.mxu0 0
      %2646 = vmatprep.subr.bf16.mxu0 0
      %2647 = vmatpush1.bf16.msra.mxu0 0
      %2648 = vmatprep.subr.bf16.mxu0 0
      %2649 = vmatpush1.bf16.msra.mxu0 0
      %2650 = vmatprep.subr.bf16.mxu0 0
      %2651 = vmatpush1.bf16.msra.mxu0 0
      %2652 = vmatprep.subr.bf16.mxu0 0
      %2653 = vmatpush1.bf16.msra.mxu0 0
      %2654 = vmatprep.subr.bf16.mxu0 0
      %2655 = vmatpush1.bf16.msra.mxu0 0
      %2656 = vmatprep.subr.bf16.mxu0 0
      %2657 = vmatpush1.bf16.msra.mxu0 0
      %2658 = vmatprep.subr.bf16.mxu0 0
      %2659 = vmatpush1.bf16.msra.mxu0 0
      %2660 = vmatprep.subr.bf16.mxu0 0
      %2661 = vmatpush1.bf16.msra.mxu0 0
      %2662 = vmatprep.subr.bf16.mxu0 0
      %2663 = vmatpush1.bf16.msra.mxu0 0
      %2664 = vmatprep.mubr.bf16.mxu0 0
      %2665 = vmatmul.mubr.bf16.gmra.mrb[0].mxu0 %v2580
      %v2666 = vpop.f32.mrb[0].mxu0
      %v2667 = vadd.f32 0.0, %v2666
      %v2668 = vpop.f32.mrb[0].mxu0
      %v2669 = vpop.f32.mrb[0].mxu0
      %v2670 = vpop.f32.mrb[0].mxu0
      %2671 = vdwg.mxu0
      %v2672 = vadd.f32 %v2522, %v2626
      %v2673 = vadd.f32 %v2524, %v2628
      %v2674 = vadd.f32 %v2563, %v2667
      %v2675 = vmul.f32 %v2672, %v2342
      %v2676 = vmul.f32 %v2673, %v2342
      %v2677 = vmul.f32 %v2674, %v2342
      %v2678 = vadd.f32 %v2675, %v2349
      %v2679 = vadd.f32 %v2676, %v2349
      %v2680 = vadd.f32 %v2677, %v2349
      %v2681 = vmax.f32 %v2678, 0.0
      %v2682 = vmax.f32 %v2679, 0.0
      %v2683 = vmax.f32 %v2680, 0.0
      %v2684 = vmax.f32 %v2681, %v2682
      %v2685 = vmax.f32 %v2684, %v2683
      %s2686 = scalar_lea.vmem %s352, 8
      %2687 = vst [vmem:[%s2686] sm:$0xff] %v2685
      %v2688 = vld [vmem:[%s7] sm:$0xf]
      %v2689 = vld [vmem:[#allocation2 + $0xc] sm:$0xff]
      %v2690 = vld [vmem:[#allocation2 + $0x14] sm:$0xf]
      %v2691 = vld [vmem:[%s2130] sm:$0xf]
      %v2692 = vld [vmem:[#allocation2 + $0x18] sm:$0xff]
      %v2693 = vld [vmem:[#allocation2 + $0x20] sm:$0xf]
      %v2696 = vunpack.c.l.b16 %v2692
      %v2697 = vunpack.c.h.b16 %v2692
      %v2698 = vunpack.c.l.b16 %v2693
      %v2699 = vpack.c.b16 %v2696, %v2696
      %v2700 = vpack.c.b16 %v2697, %v2697
      %v2701 = vpack.c.b16 %v2698, %v2698
      %v2703 = vsel %vm937, %v2691, 0
      %v2706 = vsel %vm941, %v2699, 0
      %v2709 = vsel %vm941, %v2700, 0
      %v2712 = vsel %vm941, %v2701, 0
      %2714 = vmatprep.subr.bf16.mxu0 %v2709
      %2715 = vmatpush1.bf16.msra.mxu0 %v2706
      %2716 = vmatprep.subr.bf16.mxu0 0
      %2717 = vmatpush1.bf16.msra.mxu0 0
      %2718 = vmatprep.subr.bf16.mxu0 0
      %2719 = vmatpush1.bf16.msra.mxu0 0
      %2720 = vmatprep.subr.bf16.mxu0 0
      %2721 = vmatpush1.bf16.msra.mxu0 0
      %2722 = vmatprep.subr.bf16.mxu0 0
      %2723 = vmatpush1.bf16.msra.mxu0 0
      %2724 = vmatprep.subr.bf16.mxu0 0
      %2725 = vmatpush1.bf16.msra.mxu0 0
      %2726 = vmatprep.subr.bf16.mxu0 0
      %2727 = vmatpush1.bf16.msra.mxu0 0
      %2728 = vmatprep.subr.bf16.mxu0 0
      %2729 = vmatpush1.bf16.msra.mxu0 0
      %2730 = vmatprep.subr.bf16.mxu0 0
      %2731 = vmatpush1.bf16.msra.mxu0 0
      %2732 = vmatprep.subr.bf16.mxu0 0
      %2733 = vmatpush1.bf16.msra.mxu0 0
      %2734 = vmatprep.subr.bf16.mxu0 0
      %2735 = vmatpush1.bf16.msra.mxu0 0
      %2736 = vmatprep.subr.bf16.mxu0 0
      %2737 = vmatpush1.bf16.msra.mxu0 0
      %2738 = vmatprep.subr.bf16.mxu0 0
      %2739 = vmatpush1.bf16.msra.mxu0 0
      %2740 = vmatprep.subr.bf16.mxu0 0
      %2741 = vmatpush1.bf16.msra.mxu0 0
      %2742 = vmatprep.subr.bf16.mxu0 0
      %2743 = vmatpush1.bf16.msra.mxu0 0
      %2744 = vmatprep.subr.bf16.mxu0 0
      %2745 = vmatpush1.bf16.msra.mxu0 0
      %2746 = vmatprep.mubr.bf16.mxu0 0
      %2747 = vmatmul.mubr.bf16.gmra.mrb[0].mxu0 %v2703
      %v2748 = vpop.f32.mrb[0].mxu0
      %v2749 = vadd.f32 0.0, %v2748
      %v2750 = vpop.f32.mrb[0].mxu0
      %v2751 = vadd.f32 0.0, %v2750
      %v2752 = vpop.f32.mrb[0].mxu0
      %v2753 = vpop.f32.mrb[0].mxu0
      %2754 = vdwg.mxu0
      %2755 = vmatprep.subr.bf16.mxu0 0
      %2756 = vmatpush1.bf16.msra.mxu0 %v2712
      %2757 = vmatprep.subr.bf16.mxu0 0
      %2758 = vmatpush1.bf16.msra.mxu0 0
      %2759 = vmatprep.subr.bf16.mxu0 0
      %2760 = vmatpush1.bf16.msra.mxu0 0
      %2761 = vmatprep.subr.bf16.mxu0 0
      %2762 = vmatpush1.bf16.msra.mxu0 0
      %2763 = vmatprep.subr.bf16.mxu0 0
      %2764 = vmatpush1.bf16.msra.mxu0 0
      %2765 = vmatprep.subr.bf16.mxu0 0
      %2766 = vmatpush1.bf16.msra.mxu0 0
      %2767 = vmatprep.subr.bf16.mxu0 0
      %2768 = vmatpush1.bf16.msra.mxu0 0
      %2769 = vmatprep.subr.bf16.mxu0 0
      %2770 = vmatpush1.bf16.msra.mxu0 0
      %2771 = vmatprep.subr.bf16.mxu0 0
      %2772 = vmatpush1.bf16.msra.mxu0 0
      %2773 = vmatprep.subr.bf16.mxu0 0
      %2774 = vmatpush1.bf16.msra.mxu0 0
      %2775 = vmatprep.subr.bf16.mxu0 0
      %2776 = vmatpush1.bf16.msra.mxu0 0
      %2777 = vmatprep.subr.bf16.mxu0 0
      %2778 = vmatpush1.bf16.msra.mxu0 0
      %2779 = vmatprep.subr.bf16.mxu0 0
      %2780 = vmatpush1.bf16.msra.mxu0 0
      %2781 = vmatprep.subr.bf16.mxu0 0
      %2782 = vmatpush1.bf16.msra.mxu0 0
      %2783 = vmatprep.subr.bf16.mxu0 0
      %2784 = vmatpush1.bf16.msra.mxu0 0
      %2785 = vmatprep.subr.bf16.mxu0 0
      %2786 = vmatpush1.bf16.msra.mxu0 0
      %2787 = vmatprep.mubr.bf16.mxu0 0
      %2788 = vmatmul.mubr.bf16.gmra.mrb[0].mxu0 %v2703
      %v2789 = vpop.f32.mrb[0].mxu0
      %v2790 = vadd.f32 0.0, %v2789
      %v2791 = vpop.f32.mrb[0].mxu0
      %v2792 = vpop.f32.mrb[0].mxu0
      %v2793 = vpop.f32.mrb[0].mxu0
      %2794 = vdwg.mxu0
      %v2797 = vunpack.c.l.b16 %v2689
      %v2798 = vunpack.c.h.b16 %v2689
      %v2799 = vunpack.c.l.b16 %v2690
      %v2800 = vpack.c.b16 %v2797, %v2797
      %v2801 = vpack.c.b16 %v2798, %v2798
      %v2802 = vpack.c.b16 %v2799, %v2799
      %v2804 = vsel %vm937, %v2688, 0
      %v2807 = vsel %vm941, %v2800, 0
      %v2810 = vsel %vm941, %v2801, 0
      %v2813 = vsel %vm941, %v2802, 0
      %2815 = vmatprep.subr.bf16.mxu0 %v2810
      %2816 = vmatpush1.bf16.msra.mxu0 %v2807
      %2817 = vmatprep.subr.bf16.mxu0 0
      %2818 = vmatpush1.bf16.msra.mxu0 0
      %2819 = vmatprep.subr.bf16.mxu0 0
      %2820 = vmatpush1.bf16.msra.mxu0 0
      %2821 = vmatprep.subr.bf16.mxu0 0
      %2822 = vmatpush1.bf16.msra.mxu0 0
      %2823 = vmatprep.subr.bf16.mxu0 0
      %2824 = vmatpush1.bf16.msra.mxu0 0
      %2825 = vmatprep.subr.bf16.mxu0 0
      %2826 = vmatpush1.bf16.msra.mxu0 0
      %2827 = vmatprep.subr.bf16.mxu0 0
      %2828 = vmatpush1.bf16.msra.mxu0 0
      %2829 = vmatprep.subr.bf16.mxu0 0
      %2830 = vmatpush1.bf16.msra.mxu0 0
      %2831 = vmatprep.subr.bf16.mxu0 0
      %2832 = vmatpush1.bf16.msra.mxu0 0
      %2833 = vmatprep.subr.bf16.mxu0 0
      %2834 = vmatpush1.bf16.msra.mxu0 0
      %2835 = vmatprep.subr.bf16.mxu0 0
      %2836 = vmatpush1.bf16.msra.mxu0 0
      %2837 = vmatprep.subr.bf16.mxu0 0
      %2838 = vmatpush1.bf16.msra.mxu0 0
      %2839 = vmatprep.subr.bf16.mxu0 0
      %2840 = vmatpush1.bf16.msra.mxu0 0
      %2841 = vmatprep.subr.bf16.mxu0 0
      %2842 = vmatpush1.bf16.msra.mxu0 0
      %2843 = vmatprep.subr.bf16.mxu0 0
      %2844 = vmatpush1.bf16.msra.mxu0 0
      %2845 = vmatprep.subr.bf16.mxu0 0
      %2846 = vmatpush1.bf16.msra.mxu0 0
      %2847 = vmatprep.mubr.bf16.mxu0 0
      %2848 = vmatmul.mubr.bf16.gmra.mrb[0].mxu0 %v2804
      %v2849 = vpop.f32.mrb[0].mxu0
      %v2850 = vadd.f32 %v2749, %v2849
      %v2851 = vpop.f32.mrb[0].mxu0
      %v2852 = vadd.f32 %v2751, %v2851
      %v2853 = vpop.f32.mrb[0].mxu0
      %v2854 = vpop.f32.mrb[0].mxu0
      %2855 = vdwg.mxu0
      %2856 = vmatprep.subr.bf16.mxu0 0
      %2857 = vmatpush1.bf16.msra.mxu0 %v2813
      %2858 = vmatprep.subr.bf16.mxu0 0
      %2859 = vmatpush1.bf16.msra.mxu0 0
      %2860 = vmatprep.subr.bf16.mxu0 0
      %2861 = vmatpush1.bf16.msra.mxu0 0
      %2862 = vmatprep.subr.bf16.mxu0 0
      %2863 = vmatpush1.bf16.msra.mxu0 0
      %2864 = vmatprep.subr.bf16.mxu0 0
      %2865 = vmatpush1.bf16.msra.mxu0 0
      %2866 = vmatprep.subr.bf16.mxu0 0
      %2867 = vmatpush1.bf16.msra.mxu0 0
      %2868 = vmatprep.subr.bf16.mxu0 0
      %2869 = vmatpush1.bf16.msra.mxu0 0
      %2870 = vmatprep.subr.bf16.mxu0 0
      %2871 = vmatpush1.bf16.msra.mxu0 0
      %2872 = vmatprep.subr.bf16.mxu0 0
      %2873 = vmatpush1.bf16.msra.mxu0 0
      %2874 = vmatprep.subr.bf16.mxu0 0
      %2875 = vmatpush1.bf16.msra.mxu0 0
      %2876 = vmatprep.subr.bf16.mxu0 0
      %2877 = vmatpush1.bf16.msra.mxu0 0
      %2878 = vmatprep.subr.bf16.mxu0 0
      %2879 = vmatpush1.bf16.msra.mxu0 0
      %2880 = vmatprep.subr.bf16.mxu0 0
      %2881 = vmatpush1.bf16.msra.mxu0 0
      %2882 = vmatprep.subr.bf16.mxu0 0
      %2883 = vmatpush1.bf16.msra.mxu0 0
      %2884 = vmatprep.subr.bf16.mxu0 0
      %2885 = vmatpush1.bf16.msra.mxu0 0
      %2886 = vmatprep.subr.bf16.mxu0 0
      %2887 = vmatpush1.bf16.msra.mxu0 0
      %2888 = vmatprep.mubr.bf16.mxu0 0
      %2889 = vmatmul.mubr.bf16.gmra.mrb[0].mxu0 %v2804
      %v2890 = vpop.f32.mrb[0].mxu0
      %v2891 = vadd.f32 %v2790, %v2890
      %v2892 = vpop.f32.mrb[0].mxu0
      %v2893 = vpop.f32.mrb[0].mxu0
      %v2894 = vpop.f32.mrb[0].mxu0
      %2895 = vdwg.mxu0
      %v2896 = vmul.f32 %v2850, %v2342
      %v2897 = vmul.f32 %v2852, %v2342
      %v2898 = vmul.f32 %v2891, %v2342
      %v2899 = vadd.f32 %v2896, %v2349
      %v2900 = vadd.f32 %v2897, %v2349
      %v2901 = vadd.f32 %v2898, %v2349
      %v2902 = vmax.f32 %v2899, 0.0
      %v2903 = vmax.f32 %v2900, 0.0
      %v2904 = vmax.f32 %v2901, 0.0
      %v2905 = vmax.f32 %v2902, %v2903
      %v2906 = vmax.f32 %v2905, %v2904
      %s2907 = scalar_lea.vmem %s352, 16
      %2908 = vst [vmem:[%s2907] sm:$0xff] %v2906
      %p2909 = scmp.lt.s32.totalorder %s20, 1
      %s2910 = scalar_select %p2909, %s20, 1
      %s2911 = smul.addr %s2910, 3
      %s2912 = smul.addr %s2911, 8
      %s2913 = scalar_lea.vmem %s9, %s2912
      // Predicated region
      $region57: #{edgeconv_forward.3} parent=55 // pred_check
        %p2914 = pneg %p237
      $region58: #{edgeconv_forward.3} parent=55 // pred_check_branch
        %2916 = sbr.rel (%p2914) target = $region60
      $region59: #{edgeconv_forward.3} parent=55 // pred_region
        _
      $region60: #{edgeconv_forward.3} parent=55 // pred_fallthru
        _
    $region56: #{edgeconv_forward.3} parent=5 // pred_fallthru
      _
    %p2917 = scmp.le.s32.totalorder 2, %s15
    // Predicated region
    $region61: #{edgeconv_forward.3} parent=5 // pred_check
      %p2918 = pneg %p2917
    $region62: #{edgeconv_forward.3} parent=5 // pred_check_branch
      %2920 = sbr.rel (%p2918) target = $region64
    $region63: #{edgeconv_forward.3} parent=5 // pred_region
      %s2921 = ssub.s32 %s15, 2
      // Predicated region
      $region65: #{edgeconv_forward.3} parent=63 // pred_check
        %p2922 = pneg %p243
      $region66: #{edgeconv_forward.3} parent=63 // pred_check_branch
        %2924 = sbr.rel (%p2922) target = $region68
      $region67: #{edgeconv_forward.3} parent=63 // pred_region
        %p2925 = scmp.lt.s32.totalorder %s21, 1
        %s2926 = scalar_select %p2925, %s21, 1
        %s2927 = smul.addr %s2926, 3
        %s2928 = smul.addr %s2927, 8
        %s2929 = scalar_lea.vmem %s9, %s2928
      $region68: #{edgeconv_forward.3} parent=63 // pred_fallthru
        _
    $region64: #{edgeconv_forward.3} parent=5 // pred_fallthru
      _
  $region6: #{edgeconv_forward.3} parent=0 // loop_footer
    %s19 = sadd.s32 1, %s15
  $region7: #{edgeconv_forward.3} parent=0 // loop_footer_branch
    %14 = sbr.rel target = $region3
  $region8: #{edgeconv_forward.3} parent=0 // loop_exit
    _

</llo_original>
